<compile_context>
chip_gen: v7x
topology: tpu7x:2x2x1
jax: 0.10.0
libtpu: 0.0.40
codegen_flags: <defaults>
</compile_context>

<pallas_src>
import functools

import jax
import jax.numpy as jnp
from jax.experimental import pallas as pl
from jax.experimental.pallas import tpu as pltpu

HIDDEN = 100          # nn.LSTM(hidden_size=100)
INPUT_SIZE = 4        # nn.LSTM(input_size=4)
NUM_LAYERS = 2        # nn.LSTM(num_layers=2), bidirectional

HP = 128              # hidden padded to a full lane tile
HP2 = 2 * HP          # bidirectional hidden (fwd | rev lanes)
G = 4 * HP            # four gates (i, f, g, o), lane-concatenated -> 512 lanes
GG = 2 * G            # both directions' gates (fwd block | rev block)
KIN = 8               # layer-0 input K dim: 4 real channels padded to 8 sublanes


# ----------------------------------------------------------------------------
# Fused Pallas kernel: 2-layer BiLSTM + Linear + LogSoftmax
# ----------------------------------------------------------------------------
def lstm_b1_kernel(x_ref, wih0_ref, b0_ref, whh0_ref, wih1_ref, b1_ref,
                   whh1f_ref, hw_ref, hb_ref, out_ref, logp_ref,
                   xw0_sc, act_sc, xw1_sc, *, T, classes):
    """All shapes are lane/sublane padded; i/f/o gate columns are pre-scaled by
    0.5 in the packed weights/biases so sigmoid(z) == 0.5*tanh(packed_z) + 0.5.

    x_ref    : (T*BP, KIN)   f32  time-major input, rows [t*BP, t*BP+BP)
    wih0_ref : (KIN, GG)     f32  layer-0 input->gate weights, cols [fwd G | rev G]
    b0_ref   : (1, GG)       f32  layer-0 fused b_ih+b_hh, same column layout
    whh0_ref : (HP2, GG)     bf16 block-diag hidden->gate weights (fwd, rev)
    wih1_ref : (2, HP2, G)   bf16 layer-1 input->gate weights (fwd, rev)
    b1_ref   : (2, 1, G)     f32  layer-1 fused biases
    whh1f_ref: (HP, G)       bf16 layer-1 FORWARD hidden->gate weights
    hw_ref   : (HP2, CP)     bf16 classifier weight
    hb_ref   : (1, CP)       f32  classifier bias
    out_ref  : (BP, CP)      f32  logits
    logp_ref : (BP, CP)      f32  log-softmax over the first `classes` lanes
    xw0_sc   : (T*BP, GG)    f32  layer-0 hoisted input projection (both dirs)
    act_sc   : (T*BP, HP2)   f32  layer-0 bidirectional output sequence
    xw1_sc   : (T*BP, G)     f32  layer-1 forward hoisted input projection
    """
    BP = x_ref.shape[0] // T
    f32 = jnp.float32
    bf16 = jnp.bfloat16

    # ---------------- Layer 0: fused bidirectional recurrence ----------------
    # One hoisted projection for BOTH directions: (T*BP, 8) @ (8, 1024) + bias.
    xw0_sc[...] = (jnp.dot(x_ref[...], wih0_ref[...],
                           preferred_element_type=f32) + b0_ref[...])

    whh0 = whh0_ref[...]                       # bf16 (256, 1024) block-diagonal
    h = jnp.zeros((BP, HP2), f32)              # [fwd HP | rev HP]
    c = jnp.zeros((BP, HP2), f32)
    for s in range(T):                         # static unroll (small T)
        rf = s * BP                            # forward direction reads t = s
        rr = (T - 1 - s) * BP                  # reverse direction reads t = T-1-s
        xw_t = jnp.concatenate(
            [xw0_sc[rf:rf + BP, 0:G], xw0_sc[rr:rr + BP, G:GG]], axis=1)
        if s == 0:                             # h == 0 -> skip the hidden matmul
            pre = xw_t
        else:
            pre = xw_t + jnp.dot(h.astype(bf16), whh0,
                                 preferred_element_type=f32)
        t_all = jnp.tanh(pre)                  # ONE slab tanh for all 8 gates

        def gate(k):                           # (BP, 2*HP): [fwd_k | rev_k]
            return jnp.concatenate(
                [t_all[:, k * HP:(k + 1) * HP],
                 t_all[:, G + k * HP:G + (k + 1) * HP]], axis=1)

        i_all = 0.5 * gate(0) + 0.5            # sigmoid via pre-scaled tanh
        f_all = 0.5 * gate(1) + 0.5
        g_all = gate(2)
        o_all = 0.5 * gate(3) + 0.5
        # Padded gate lanes have zero weights/bias -> tanh(0)=0 -> i=f=o=0.5,
        # g=0, so padded c/h lanes stay exactly 0 (invariant relied on below).
        c = f_all * c + i_all * g_all
        h = o_all * jnp.tanh(c)
        act_sc[rf:rf + BP, 0:HP] = h[:, 0:HP]          # fwd output at t = s
        act_sc[rr:rr + BP, HP:HP2] = h[:, HP:HP2]      # rev output at t = T-1-s

    # ---------------- Layer 1 forward: full recurrence over act_sc -----------
    xw1_sc[...] = (jnp.dot(act_sc[...].astype(bf16), wih1_ref[0],
                           preferred_element_type=f32) + b1_ref[0])
    whh1 = whh1f_ref[...]                      # bf16 (128, 512)
    h1 = jnp.zeros((BP, HP), f32)
    c1 = jnp.zeros((BP, HP), f32)
    for s in range(T):
        r = s * BP
        if s == 0:
            pre = xw1_sc[r:r + BP, :]
        else:
            pre = xw1_sc[r:r + BP, :] + jnp.dot(h1.astype(bf16), whh1,
                                                preferred_element_type=f32)
        tg = jnp.tanh(pre)
        i_g = 0.5 * tg[:, 0:HP] + 0.5
        f_g = 0.5 * tg[:, HP:2 * HP] + 0.5
        g_g = tg[:, 2 * HP:3 * HP]
        o_g = 0.5 * tg[:, 3 * HP:4 * HP] + 0.5
        c1 = f_g * c1 + i_g * g_g
        h1 = o_g * jnp.tanh(c1)
    h_f = h1

    # ---------------- Layer 1 reverse: single step at t = T-1 ----------------
    # Zero initial state -> the hidden matmul is identically zero; only the
    # projection of the last row block is needed.
    r = (T - 1) * BP
    pre_r = (jnp.dot(act_sc[r:r + BP, :].astype(bf16), wih1_ref[1],
                     preferred_element_type=f32) + b1_ref[1])
    tg = jnp.tanh(pre_r)
    i_g = 0.5 * tg[:, 0:HP] + 0.5
    g_g = tg[:, 2 * HP:3 * HP]
    o_g = 0.5 * tg[:, 3 * HP:4 * HP] + 0.5
    c_r = i_g * g_g                            # f * c0 == 0
    h_r = o_g * jnp.tanh(c_r)

    # ---------------- Head: single fused Linear(200 -> classes) --------------
    h_cat = jnp.concatenate([h_f, h_r], axis=1).astype(bf16)   # (BP, 256)
    logits = (jnp.dot(h_cat, hw_ref[...], preferred_element_type=f32)
              + hb_ref[...])
    out_ref[...] = logits

    # LogSoftmax over the `classes` valid lanes only (padded lanes masked out;
    # padded logp lanes contain junk and must never be consumed downstream).
    lane = jax.lax.broadcasted_iota(jnp.int32, logits.shape, 1)
    masked = jnp.where(lane < classes, logits, jnp.float32(-1e30))
    m = jnp.max(masked, axis=1, keepdims=True)
    shifted = masked - m
    lse = jnp.log(jnp.sum(jnp.exp(shifted), axis=1, keepdims=True))
    logp_ref[...] = shifted - lse


# ----------------------------------------------------------------------------
# Wrapper around pallas_call
# ----------------------------------------------------------------------------
def _vmem_spec():
    return pl.BlockSpec(memory_space=pltpu.MemorySpace.VMEM)


def lstm_b1_forward(sequence, packed, *, classes):
    """sequence: (B, 4, T) -> (logits (B, classes), log_probs (B, classes))."""
    B, _, T = sequence.shape
    BP = ((B + 7) // 8) * 8
    CP = packed["head_w"].shape[1]

    # torch does sequence.permute(0,2,1); we go time-major + pad batch to 8 and
    # channels 4 -> 8 (no 128-lane padding of the tiny input K dim).
    x = jnp.transpose(sequence, (2, 0, 1)).astype(jnp.float32)        # (T, B, 4)
    x_pad = (jnp.zeros((T, BP, KIN), jnp.float32)
             .at[:, :B, :INPUT_SIZE].set(x)
             .reshape(T * BP, KIN))

    kernel = functools.partial(lstm_b1_kernel, T=T, classes=classes)
    out_p, logp_p = pl.pallas_call(
        kernel,
        out_shape=(jax.ShapeDtypeStruct((BP, CP), jnp.float32),
                   jax.ShapeDtypeStruct((BP, CP), jnp.float32)),
        in_specs=[_vmem_spec()] * 9,
        out_specs=(_vmem_spec(), _vmem_spec()),
        scratch_shapes=[pltpu.VMEM((T * BP, GG), jnp.float32),
                        pltpu.VMEM((T * BP, HP2), jnp.float32),
                        pltpu.VMEM((T * BP, G), jnp.float32)],
    )(x_pad, packed["wih0"], packed["b0"], packed["whh0"],
      packed["wih1"], packed["b1"], packed["whh1f"],
      packed["head_w"], packed["head_b"])

    return out_p[:B, :classes], logp_p[:B, :classes]


# ----------------------------------------------------------------------------
# Parameters: PyTorch-layout raw weights + kernel-layout packing
# ----------------------------------------------------------------------------
def init_params(key, classes):
    bound = 1.0 / jnp.sqrt(jnp.float32(HIDDEN))

    def unif(k, shape):
        return jax.random.uniform(k, shape, jnp.float32, -bound, bound)

    keys = iter(jax.random.split(key, 32))
    raw = {}
    for layer in range(NUM_LAYERS):
        din = INPUT_SIZE if layer == 0 else 2 * HIDDEN
        d = {}
        for sfx in ("", "_r"):
            d["w_ih" + sfx] = unif(next(keys), (4 * HIDDEN, din))     # (4H, Din)
            d["w_hh" + sfx] = unif(next(keys), (4 * HIDDEN, HIDDEN))  # (4H, H)
            d["b_ih" + sfx] = unif(next(keys), (4 * HIDDEN,))
            d["b_hh" + sfx] = unif(next(keys), (4 * HIDDEN,))
        raw[f"l{layer}"] = d
    raw["linear_w"] = unif(next(keys), (classes, 2 * HIDDEN))
    raw["linear_b"] = unif(next(keys), (classes,))
    return raw


def _gate_scale(k):
    # i, f, o gates run through 0.5*tanh(0.5*z)+0.5; the 0.5 pre-scale is
    # folded into the packed weights/biases. g (k==2) keeps plain tanh.
    return 0.5 if k != 2 else 1.0


def pack_params(raw, classes, cp):
    H = HIDDEN
    l0, l1 = raw["l0"], raw["l1"]

    # ---- Layer 0: fused fwd+rev (columns [fwd G | rev G]) ----
    wih0 = jnp.zeros((KIN, GG), jnp.float32)
    b0 = jnp.zeros((1, GG), jnp.float32)
    whh0 = jnp.zeros((HP2, GG), jnp.float32)      # block-diagonal
    for d, sfx in enumerate(("", "_r")):
        wih = l0["w_ih" + sfx].reshape(4, H, INPUT_SIZE)
        whh = l0["w_hh" + sfx].reshape(4, H, H)
        b = (l0["b_ih" + sfx] + l0["b_hh" + sfx]).reshape(4, H)
        for k in range(4):
            sc = _gate_scale(k)
            col = d * G + k * HP
            wih0 = wih0.at[:INPUT_SIZE, col:col + H].set(sc * wih[k].T)
            whh0 = whh0.at[d * HP:d * HP + H, col:col + H].set(sc * whh[k].T)
            b0 = b0.at[0, col:col + H].set(sc * b[k])

    # ---- Layer 1: per-direction (input rows [fwd HP | rev HP]) ----
    wih1 = jnp.zeros((2, HP2, G), jnp.float32)
    b1 = jnp.zeros((2, 1, G), jnp.float32)
    for d, sfx in enumerate(("", "_r")):
        wih = l1["w_ih" + sfx].reshape(4, H, 2 * H)
        b = (l1["b_ih" + sfx] + l1["b_hh" + sfx]).reshape(4, H)
        for k in range(4):
            sc = _gate_scale(k)
            col = k * HP
            wih1 = wih1.at[d, :H, col:col + H].set(sc * wih[k, :, :H].T)
            wih1 = wih1.at[d, HP:HP + H, col:col + H].set(sc * wih[k, :, H:].T)
            b1 = b1.at[d, 0, col:col + H].set(sc * b[k])
    whh1f = jnp.zeros((HP, G), jnp.float32)       # only fwd recurrence needs it
    whh_f = l1["w_hh"].reshape(4, H, H)
    for k in range(4):
        sc = _gate_scale(k)
        whh1f = whh1f.at[:H, k * HP:k * HP + H].set(sc * whh_f[k].T)

    # ---- Head ----
    wlin = raw["linear_w"]                        # (classes, 2H)
    hw = jnp.zeros((HP2, cp), jnp.float32)
    hw = hw.at[:H, :classes].set(wlin[:, :H].T)
    hw = hw.at[HP:HP + H, :classes].set(wlin[:, H:].T)
    hb = jnp.zeros((1, cp), jnp.float32).at[0, :classes].set(raw["linear_b"])

    return dict(wih0=wih0, b0=b0,
                whh0=whh0.astype(jnp.bfloat16),
                wih1=wih1.astype(jnp.bfloat16), b1=b1,
                whh1f=whh1f.astype(jnp.bfloat16),
                head_w=hw.astype(jnp.bfloat16), head_b=hb)


# ----------------------------------------------------------------------------
# Pure-JAX reference (PyTorch semantics) for validation
# ----------------------------------------------------------------------------
def lstm_b1_reference(sequence, raw):
    x = jnp.transpose(sequence, (0, 2, 1)).astype(jnp.float32)   # (B, T, 4)
    B = x.shape[0]

    def run_dir(inp, w_ih, w_hh, b_ih, b_hh, reverse):
        xs = jnp.transpose(inp, (1, 0, 2))                        # (T, B, D)
        if reverse:
            xs = xs[::-1]

        def step(carry, x_t):
            h, c = carry
            gates = x_t @ w_ih.T + h @ w_hh.T + b_ih + b_hh
            i, f, g, o = jnp.split(gates, 4, axis=-1)
            i = jax.nn.sigmoid(i)
            f = jax.nn.sigmoid(f)
            g = jnp.tanh(g)
            o = jax.nn.sigmoid(o)
            c = f * c + i * g
            h = o * jnp.tanh(c)
            return (h, c), h

        init = (jnp.zeros((B, HIDDEN), jnp.float32),
                jnp.zeros((B, HIDDEN), jnp.float32))
        _, hs = jax.lax.scan(step, init, xs)
        if reverse:
            hs = hs[::-1]
        return jnp.transpose(hs, (1, 0, 2))                       # (B, T, H)

    seq = x
    for layer in range(NUM_LAYERS):
        p = raw[f"l{layer}"]
        hf = run_dir(seq, p["w_ih"], p["w_hh"], p["b_ih"], p["b_hh"], False)
        hr = run_dir(seq, p["w_ih_r"], p["w_hh_r"], p["b_ih_r"], p["b_hh_r"], True)
        seq = jnp.concatenate([hf, hr], axis=-1)
    last = seq[:, -1, :]
    logits = last @ raw["linear_w"].T + raw["linear_b"]
    return logits, jax.nn.log_softmax(logits, axis=1)


if __name__ == "__main__":
    key = jax.random.PRNGKey(0)
    kp, kx = jax.random.split(key)

    classes = 5
    B, C, T = 2, 4, 8                 # channels fixed to 4 by the module
    raw = init_params(kp, classes)
    CP = ((classes + 127) // 128) * 128
    packed = pack_params(raw, classes, CP)
    sequence = jax.random.normal(kx, (B, C, T), jnp.float32)

    fwd = jax.jit(functools.partial(lstm_b1_forward, classes=classes))
    out, logp = fwd(sequence, packed)
    jax.block_until_ready((out, logp))

    ref_out, ref_logp = jax.jit(lstm_b1_reference)(sequence, raw)
    jax.block_until_ready((ref_out, ref_logp))

    assert out.shape == (B, classes) and logp.shape == (B, classes)
    assert bool(jnp.all(jnp.isfinite(out))) and bool(jnp.all(jnp.isfinite(logp)))
    assert bool(jnp.allclose(out, ref_out, atol=2e-2, rtol=2e-2))
    assert bool(jnp.allclose(logp, ref_logp, atol=2e-2, rtol=2e-2))
    print("KERNEL_OK")
</pallas_src>

<mosaic_0001>
module attributes {stable_mosaic.version = 11 : i64} {
  func.func @lstm_b1_kernel(%arg0: memref<64x8xf32, #tpu.memory_space<vmem>>, %arg1: memref<8x1024xf32, #tpu.memory_space<vmem>>, %arg2: memref<1x1024xf32, #tpu.memory_space<vmem>>, %arg3: memref<256x1024xbf16, #tpu.memory_space<vmem>>, %arg4: memref<2x256x512xbf16, #tpu.memory_space<vmem>>, %arg5: memref<2x1x512xf32, #tpu.memory_space<vmem>>, %arg6: memref<128x512xbf16, #tpu.memory_space<vmem>>, %arg7: memref<256x128xbf16, #tpu.memory_space<vmem>>, %arg8: memref<1x128xf32, #tpu.memory_space<vmem>>, %arg9: memref<8x128xf32, #tpu.memory_space<vmem>>, %arg10: memref<8x128xf32, #tpu.memory_space<vmem>>, %arg11: memref<64x1024xf32, #tpu.memory_space<vmem>>, %arg12: memref<64x256xf32, #tpu.memory_space<vmem>>, %arg13: memref<64x512xf32, #tpu.memory_space<vmem>>) attributes {dimension_semantics = [], scalar_prefetch = 0 : i64, scratch_operands = 3 : i64, tpu.core_type = #tpu.core_type<tc>} {
    %c0 = arith.constant 0 : index
    %c0_0 = arith.constant 0 : index
    %0 = vector.load %arg0[%c0, %c0_0] : memref<64x8xf32, #tpu.memory_space<vmem>>, vector<64x8xf32>
    %c0_1 = arith.constant 0 : index
    %c0_2 = arith.constant 0 : index
    %1 = vector.load %arg1[%c0_1, %c0_2] : memref<8x1024xf32, #tpu.memory_space<vmem>>, vector<8x1024xf32>
    %cst = arith.constant dense<0.000000e+00> : vector<64x1024xf32>
    %2 = tpu.matmul %0, %1, %cst {dimension_numbers = #tpu.dot_dimension_numbers<[1], [0], [0], [1], [0, 0, 1, 1], [], []>} : vector<64x8xf32>, vector<8x1024xf32>, vector<64x1024xf32> -> vector<64x1024xf32>
    %c0_3 = arith.constant 0 : index
    %c0_4 = arith.constant 0 : index
    %3 = vector.load %arg2[%c0_3, %c0_4] : memref<1x1024xf32, #tpu.memory_space<vmem>>, vector<1x1024xf32>
    %4 = vector.broadcast %3 : vector<1x1024xf32> to vector<64x1024xf32>
    %5 = arith.addf %2, %4 : vector<64x1024xf32>
    %c0_5 = arith.constant 0 : index
    %c0_6 = arith.constant 0 : index
    %6 = vector.load %arg11[%c0_5, %c0_6] : memref<64x1024xf32, #tpu.memory_space<vmem>>, vector<64x1024xf32>
    tpu.vector_store %arg11[%c0_5, %c0_6], %5 {strides = array<i32>} : memref<64x1024xf32, #tpu.memory_space<vmem>>, vector<64x1024xf32>,
    %c0_7 = arith.constant 0 : index
    %c0_8 = arith.constant 0 : index
    %7 = vector.load %arg3[%c0_7, %c0_8] : memref<256x1024xbf16, #tpu.memory_space<vmem>>, vector<256x1024xbf16>
    %cst_9 = arith.constant 0.000000e+00 : f32
    %8 = vector.broadcast %cst_9 : f32 to vector<8x256xf32>
    %c0_10 = arith.constant 0 : index
    %c0_11 = arith.constant 0 : index
    %9 = vector.load %arg11[%c0_10, %c0_11] : memref<64x1024xf32, #tpu.memory_space<vmem>>, vector<8x512xf32>
    %c56 = arith.constant 56 : index
    %c512 = arith.constant 512 : index
    %10 = vector.load %arg11[%c56, %c512] : memref<64x1024xf32, #tpu.memory_space<vmem>>, vector<8x512xf32>
    %11 = tpu.concatenate %9, %10 in 1 : vector<8x512xf32>, vector<8x512xf32> -> vector<8x1024xf32>
    %12 = math.tanh %11 : vector<8x1024xf32>
    %13 = vector.extract_strided_slice %12 {offsets = [0, 0], sizes = [8, 128], strides = [1, 1]} : vector<8x1024xf32> to vector<8x128xf32>
    %14 = vector.extract_strided_slice %12 {offsets = [0, 512], sizes = [8, 128], strides = [1, 1]} : vector<8x1024xf32> to vector<8x128xf32>
    %15 = tpu.concatenate %13, %14 in 1 : vector<8x128xf32>, vector<8x128xf32> -> vector<8x256xf32>
    %cst_12 = arith.constant 5.000000e-01 : f32
    %16 = vector.broadcast %cst_12 : f32 to vector<8x256xf32>
    %17 = arith.mulf %16, %15 : vector<8x256xf32>
    %cst_13 = arith.constant 5.000000e-01 : f32
    %18 = vector.broadcast %cst_13 : f32 to vector<8x256xf32>
    %19 = arith.addf %17, %18 : vector<8x256xf32>
    %20 = vector.extract_strided_slice %12 {offsets = [0, 128], sizes = [8, 128], strides = [1, 1]} : vector<8x1024xf32> to vector<8x128xf32>
    %21 = vector.extract_strided_slice %12 {offsets = [0, 640], sizes = [8, 128], strides = [1, 1]} : vector<8x1024xf32> to vector<8x128xf32>
    %22 = tpu.concatenate %20, %21 in 1 : vector<8x128xf32>, vector<8x128xf32> -> vector<8x256xf32>
    %cst_14 = arith.constant 5.000000e-01 : f32
    %23 = vector.broadcast %cst_14 : f32 to vector<8x256xf32>
    %24 = arith.mulf %23, %22 : vector<8x256xf32>
    %cst_15 = arith.constant 5.000000e-01 : f32
    %25 = vector.broadcast %cst_15 : f32 to vector<8x256xf32>
    %26 = arith.addf %24, %25 : vector<8x256xf32>
    %27 = vector.extract_strided_slice %12 {offsets = [0, 256], sizes = [8, 128], strides = [1, 1]} : vector<8x1024xf32> to vector<8x128xf32>
    %28 = vector.extract_strided_slice %12 {offsets = [0, 768], sizes = [8, 128], strides = [1, 1]} : vector<8x1024xf32> to vector<8x128xf32>
    %29 = tpu.concatenate %27, %28 in 1 : vector<8x128xf32>, vector<8x128xf32> -> vector<8x256xf32>
    %30 = vector.extract_strided_slice %12 {offsets = [0, 384], sizes = [8, 128], strides = [1, 1]} : vector<8x1024xf32> to vector<8x128xf32>
    %31 = vector.extract_strided_slice %12 {offsets = [0, 896], sizes = [8, 128], strides = [1, 1]} : vector<8x1024xf32> to vector<8x128xf32>
    %32 = tpu.concatenate %30, %31 in 1 : vector<8x128xf32>, vector<8x128xf32> -> vector<8x256xf32>
    %cst_16 = arith.constant 5.000000e-01 : f32
    %33 = vector.broadcast %cst_16 : f32 to vector<8x256xf32>
    %34 = arith.mulf %33, %32 : vector<8x256xf32>
    %cst_17 = arith.constant 5.000000e-01 : f32
    %35 = vector.broadcast %cst_17 : f32 to vector<8x256xf32>
    %36 = arith.addf %34, %35 : vector<8x256xf32>
    %37 = arith.mulf %26, %8 : vector<8x256xf32>
    %38 = arith.mulf %19, %29 : vector<8x256xf32>
    %39 = arith.addf %37, %38 : vector<8x256xf32>
    %40 = math.tanh %39 : vector<8x256xf32>
    %41 = arith.mulf %36, %40 : vector<8x256xf32>
    %42 = vector.extract_strided_slice %41 {offsets = [0, 0], sizes = [8, 128], strides = [1, 1]} : vector<8x256xf32> to vector<8x128xf32>
    %c0_18 = arith.constant 0 : index
    %c0_19 = arith.constant 0 : index
    %43 = vector.load %arg12[%c0_18, %c0_19] : memref<64x256xf32, #tpu.memory_space<vmem>>, vector<8x128xf32>
    tpu.vector_store %arg12[%c0_18, %c0_19], %42 {strides = array<i32>} : memref<64x256xf32, #tpu.memory_space<vmem>>, vector<8x128xf32>,
    %44 = vector.extract_strided_slice %41 {offsets = [0, 128], sizes = [8, 128], strides = [1, 1]} : vector<8x256xf32> to vector<8x128xf32>
    %c56_20 = arith.constant 56 : index
    %c128 = arith.constant 128 : index
    %45 = vector.load %arg12[%c56_20, %c128] : memref<64x256xf32, #tpu.memory_space<vmem>>, vector<8x128xf32>
    tpu.vector_store %arg12[%c56_20, %c128], %44 {strides = array<i32>} : memref<64x256xf32, #tpu.memory_space<vmem>>, vector<8x128xf32>,
    %c8 = arith.constant 8 : index
    %c0_21 = arith.constant 0 : index
    %46 = vector.load %arg11[%c8, %c0_21] : memref<64x1024xf32, #tpu.memory_space<vmem>>, vector<8x512xf32>
    %c48 = arith.constant 48 : index
    %c512_22 = arith.constant 512 : index
    %47 = vector.load %arg11[%c48, %c512_22] : memref<64x1024xf32, #tpu.memory_space<vmem>>, vector<8x512xf32>
    %48 = tpu.concatenate %46, %47 in 1 : vector<8x512xf32>, vector<8x512xf32> -> vector<8x1024xf32>
    %49 = arith.truncf %41 : vector<8x256xf32> to vector<8x256xbf16>
    %cst_23 = arith.constant dense<0.000000e+00> : vector<8x1024xf32>
    %50 = tpu.matmul %49, %7, %cst_23 {dimension_numbers = #tpu.dot_dimension_numbers<[1], [0], [0], [1], [0, 0, 1, 1], [], []>} : vector<8x256xbf16>, vector<256x1024xbf16>, vector<8x1024xf32> -> vector<8x1024xf32>
    %51 = arith.addf %48, %50 : vector<8x1024xf32>
    %52 = math.tanh %51 : vector<8x1024xf32>
    %53 = vector.extract_strided_slice %52 {offsets = [0, 0], sizes = [8, 128], strides = [1, 1]} : vector<8x1024xf32> to vector<8x128xf32>
    %54 = vector.extract_strided_slice %52 {offsets = [0, 512], sizes = [8, 128], strides = [1, 1]} : vector<8x1024xf32> to vector<8x128xf32>
    %55 = tpu.concatenate %53, %54 in 1 : vector<8x128xf32>, vector<8x128xf32> -> vector<8x256xf32>
    %cst_24 = arith.constant 5.000000e-01 : f32
    %56 = vector.broadcast %cst_24 : f32 to vector<8x256xf32>
    %57 = arith.mulf %56, %55 : vector<8x256xf32>
    %cst_25 = arith.constant 5.000000e-01 : f32
    %58 = vector.broadcast %cst_25 : f32 to vector<8x256xf32>
    %59 = arith.addf %57, %58 : vector<8x256xf32>
    %60 = vector.extract_strided_slice %52 {offsets = [0, 128], sizes = [8, 128], strides = [1, 1]} : vector<8x1024xf32> to vector<8x128xf32>
    %61 = vector.extract_strided_slice %52 {offsets = [0, 640], sizes = [8, 128], strides = [1, 1]} : vector<8x1024xf32> to vector<8x128xf32>
    %62 = tpu.concatenate %60, %61 in 1 : vector<8x128xf32>, vector<8x128xf32> -> vector<8x256xf32>
    %cst_26 = arith.constant 5.000000e-01 : f32
    %63 = vector.broadcast %cst_26 : f32 to vector<8x256xf32>
    %64 = arith.mulf %63, %62 : vector<8x256xf32>
    %cst_27 = arith.constant 5.000000e-01 : f32
    %65 = vector.broadcast %cst_27 : f32 to vector<8x256xf32>
    %66 = arith.addf %64, %65 : vector<8x256xf32>
    %67 = vector.extract_strided_slice %52 {offsets = [0, 256], sizes = [8, 128], strides = [1, 1]} : vector<8x1024xf32> to vector<8x128xf32>
    %68 = vector.extract_strided_slice %52 {offsets = [0, 768], sizes = [8, 128], strides = [1, 1]} : vector<8x1024xf32> to vector<8x128xf32>
    %69 = tpu.concatenate %67, %68 in 1 : vector<8x128xf32>, vector<8x128xf32> -> vector<8x256xf32>
    %70 = vector.extract_strided_slice %52 {offsets = [0, 384], sizes = [8, 128], strides = [1, 1]} : vector<8x1024xf32> to vector<8x128xf32>
    %71 = vector.extract_strided_slice %52 {offsets = [0, 896], sizes = [8, 128], strides = [1, 1]} : vector<8x1024xf32> to vector<8x128xf32>
    %72 = tpu.concatenate %70, %71 in 1 : vector<8x128xf32>, vector<8x128xf32> -> vector<8x256xf32>
    %cst_28 = arith.constant 5.000000e-01 : f32
    %73 = vector.broadcast %cst_28 : f32 to vector<8x256xf32>
    %74 = arith.mulf %73, %72 : vector<8x256xf32>
    %cst_29 = arith.constant 5.000000e-01 : f32
    %75 = vector.broadcast %cst_29 : f32 to vector<8x256xf32>
    %76 = arith.addf %74, %75 : vector<8x256xf32>
    %77 = arith.mulf %66, %39 : vector<8x256xf32>
    %78 = arith.mulf %59, %69 : vector<8x256xf32>
    %79 = arith.addf %77, %78 : vector<8x256xf32>
    %80 = math.tanh %79 : vector<8x256xf32>
    %81 = arith.mulf %76, %80 : vector<8x256xf32>
    %82 = vector.extract_strided_slice %81 {offsets = [0, 0], sizes = [8, 128], strides = [1, 1]} : vector<8x256xf32> to vector<8x128xf32>
    %c8_30 = arith.constant 8 : index
    %c0_31 = arith.constant 0 : index
    %83 = vector.load %arg12[%c8_30, %c0_31] : memref<64x256xf32, #tpu.memory_space<vmem>>, vector<8x128xf32>
    tpu.vector_store %arg12[%c8_30, %c0_31], %82 {strides = array<i32>} : memref<64x256xf32, #tpu.memory_space<vmem>>, vector<8x128xf32>,
    %84 = vector.extract_strided_slice %81 {offsets = [0, 128], sizes = [8, 128], strides = [1, 1]} : vector<8x256xf32> to vector<8x128xf32>
    %c48_32 = arith.constant 48 : index
    %c128_33 = arith.constant 128 : index
    %85 = vector.load %arg12[%c48_32, %c128_33] : memref<64x256xf32, #tpu.memory_space<vmem>>, vector<8x128xf32>
    tpu.vector_store %arg12[%c48_32, %c128_33], %84 {strides = array<i32>} : memref<64x256xf32, #tpu.memory_space<vmem>>, vector<8x128xf32>,
    %c16 = arith.constant 16 : index
    %c0_34 = arith.constant 0 : index
    %86 = vector.load %arg11[%c16, %c0_34] : memref<64x1024xf32, #tpu.memory_space<vmem>>, vector<8x512xf32>
    %c40 = arith.constant 40 : index
    %c512_35 = arith.constant 512 : index
    %87 = vector.load %arg11[%c40, %c512_35] : memref<64x1024xf32, #tpu.memory_space<vmem>>, vector<8x512xf32>
    %88 = tpu.concatenate %86, %87 in 1 : vector<8x512xf32>, vector<8x512xf32> -> vector<8x1024xf32>
    %89 = arith.truncf %81 : vector<8x256xf32> to vector<8x256xbf16>
    %cst_36 = arith.constant dense<0.000000e+00> : vector<8x1024xf32>
    %90 = tpu.matmul %89, %7, %cst_36 {dimension_numbers = #tpu.dot_dimension_numbers<[1], [0], [0], [1], [0, 0, 1, 1], [], []>} : vector<8x256xbf16>, vector<256x1024xbf16>, vector<8x1024xf32> -> vector<8x1024xf32>
    %91 = arith.addf %88, %90 : vector<8x1024xf32>
    %92 = math.tanh %91 : vector<8x1024xf32>
    %93 = vector.extract_strided_slice %92 {offsets = [0, 0], sizes = [8, 128], strides = [1, 1]} : vector<8x1024xf32> to vector<8x128xf32>
    %94 = vector.extract_strided_slice %92 {offsets = [0, 512], sizes = [8, 128], strides = [1, 1]} : vector<8x1024xf32> to vector<8x128xf32>
    %95 = tpu.concatenate %93, %94 in 1 : vector<8x128xf32>, vector<8x128xf32> -> vector<8x256xf32>
    %cst_37 = arith.constant 5.000000e-01 : f32
    %96 = vector.broadcast %cst_37 : f32 to vector<8x256xf32>
    %97 = arith.mulf %96, %95 : vector<8x256xf32>
    %cst_38 = arith.constant 5.000000e-01 : f32
    %98 = vector.broadcast %cst_38 : f32 to vector<8x256xf32>
    %99 = arith.addf %97, %98 : vector<8x256xf32>
    %100 = vector.extract_strided_slice %92 {offsets = [0, 128], sizes = [8, 128], strides = [1, 1]} : vector<8x1024xf32> to vector<8x128xf32>
    %101 = vector.extract_strided_slice %92 {offsets = [0, 640], sizes = [8, 128], strides = [1, 1]} : vector<8x1024xf32> to vector<8x128xf32>
    %102 = tpu.concatenate %100, %101 in 1 : vector<8x128xf32>, vector<8x128xf32> -> vector<8x256xf32>
    %cst_39 = arith.constant 5.000000e-01 : f32
    %103 = vector.broadcast %cst_39 : f32 to vector<8x256xf32>
    %104 = arith.mulf %103, %102 : vector<8x256xf32>
    %cst_40 = arith.constant 5.000000e-01 : f32
    %105 = vector.broadcast %cst_40 : f32 to vector<8x256xf32>
    %106 = arith.addf %104, %105 : vector<8x256xf32>
    %107 = vector.extract_strided_slice %92 {offsets = [0, 256], sizes = [8, 128], strides = [1, 1]} : vector<8x1024xf32> to vector<8x128xf32>
    %108 = vector.extract_strided_slice %92 {offsets = [0, 768], sizes = [8, 128], strides = [1, 1]} : vector<8x1024xf32> to vector<8x128xf32>
    %109 = tpu.concatenate %107, %108 in 1 : vector<8x128xf32>, vector<8x128xf32> -> vector<8x256xf32>
    %110 = vector.extract_strided_slice %92 {offsets = [0, 384], sizes = [8, 128], strides = [1, 1]} : vector<8x1024xf32> to vector<8x128xf32>
    %111 = vector.extract_strided_slice %92 {offsets = [0, 896], sizes = [8, 128], strides = [1, 1]} : vector<8x1024xf32> to vector<8x128xf32>
    %112 = tpu.concatenate %110, %111 in 1 : vector<8x128xf32>, vector<8x128xf32> -> vector<8x256xf32>
    %cst_41 = arith.constant 5.000000e-01 : f32
    %113 = vector.broadcast %cst_41 : f32 to vector<8x256xf32>
    %114 = arith.mulf %113, %112 : vector<8x256xf32>
    %cst_42 = arith.constant 5.000000e-01 : f32
    %115 = vector.broadcast %cst_42 : f32 to vector<8x256xf32>
    %116 = arith.addf %114, %115 : vector<8x256xf32>
    %117 = arith.mulf %106, %79 : vector<8x256xf32>
    %118 = arith.mulf %99, %109 : vector<8x256xf32>
    %119 = arith.addf %117, %118 : vector<8x256xf32>
    %120 = math.tanh %119 : vector<8x256xf32>
    %121 = arith.mulf %116, %120 : vector<8x256xf32>
    %122 = vector.extract_strided_slice %121 {offsets = [0, 0], sizes = [8, 128], strides = [1, 1]} : vector<8x256xf32> to vector<8x128xf32>
    %c16_43 = arith.constant 16 : index
    %c0_44 = arith.constant 0 : index
    %123 = vector.load %arg12[%c16_43, %c0_44] : memref<64x256xf32, #tpu.memory_space<vmem>>, vector<8x128xf32>
    tpu.vector_store %arg12[%c16_43, %c0_44], %122 {strides = array<i32>} : memref<64x256xf32, #tpu.memory_space<vmem>>, vector<8x128xf32>,
    %124 = vector.extract_strided_slice %121 {offsets = [0, 128], sizes = [8, 128], strides = [1, 1]} : vector<8x256xf32> to vector<8x128xf32>
    %c40_45 = arith.constant 40 : index
    %c128_46 = arith.constant 128 : index
    %125 = vector.load %arg12[%c40_45, %c128_46] : memref<64x256xf32, #tpu.memory_space<vmem>>, vector<8x128xf32>
    tpu.vector_store %arg12[%c40_45, %c128_46], %124 {strides = array<i32>} : memref<64x256xf32, #tpu.memory_space<vmem>>, vector<8x128xf32>,
    %c24 = arith.constant 24 : index
    %c0_47 = arith.constant 0 : index
    %126 = vector.load %arg11[%c24, %c0_47] : memref<64x1024xf32, #tpu.memory_space<vmem>>, vector<8x512xf32>
    %c32 = arith.constant 32 : index
    %c512_48 = arith.constant 512 : index
    %127 = vector.load %arg11[%c32, %c512_48] : memref<64x1024xf32, #tpu.memory_space<vmem>>, vector<8x512xf32>
    %128 = tpu.concatenate %126, %127 in 1 : vector<8x512xf32>, vector<8x512xf32> -> vector<8x1024xf32>
    %129 = arith.truncf %121 : vector<8x256xf32> to vector<8x256xbf16>
    %cst_49 = arith.constant dense<0.000000e+00> : vector<8x1024xf32>
    %130 = tpu.matmul %129, %7, %cst_49 {dimension_numbers = #tpu.dot_dimension_numbers<[1], [0], [0], [1], [0, 0, 1, 1], [], []>} : vector<8x256xbf16>, vector<256x1024xbf16>, vector<8x1024xf32> -> vector<8x1024xf32>
    %131 = arith.addf %128, %130 : vector<8x1024xf32>
    %132 = math.tanh %131 : vector<8x1024xf32>
    %133 = vector.extract_strided_slice %132 {offsets = [0, 0], sizes = [8, 128], strides = [1, 1]} : vector<8x1024xf32> to vector<8x128xf32>
    %134 = vector.extract_strided_slice %132 {offsets = [0, 512], sizes = [8, 128], strides = [1, 1]} : vector<8x1024xf32> to vector<8x128xf32>
    %135 = tpu.concatenate %133, %134 in 1 : vector<8x128xf32>, vector<8x128xf32> -> vector<8x256xf32>
    %cst_50 = arith.constant 5.000000e-01 : f32
    %136 = vector.broadcast %cst_50 : f32 to vector<8x256xf32>
    %137 = arith.mulf %136, %135 : vector<8x256xf32>
    %cst_51 = arith.constant 5.000000e-01 : f32
    %138 = vector.broadcast %cst_51 : f32 to vector<8x256xf32>
    %139 = arith.addf %137, %138 : vector<8x256xf32>
    %140 = vector.extract_strided_slice %132 {offsets = [0, 128], sizes = [8, 128], strides = [1, 1]} : vector<8x1024xf32> to vector<8x128xf32>
    %141 = vector.extract_strided_slice %132 {offsets = [0, 640], sizes = [8, 128], strides = [1, 1]} : vector<8x1024xf32> to vector<8x128xf32>
    %142 = tpu.concatenate %140, %141 in 1 : vector<8x128xf32>, vector<8x128xf32> -> vector<8x256xf32>
    %cst_52 = arith.constant 5.000000e-01 : f32
    %143 = vector.broadcast %cst_52 : f32 to vector<8x256xf32>
    %144 = arith.mulf %143, %142 : vector<8x256xf32>
    %cst_53 = arith.constant 5.000000e-01 : f32
    %145 = vector.broadcast %cst_53 : f32 to vector<8x256xf32>
    %146 = arith.addf %144, %145 : vector<8x256xf32>
    %147 = vector.extract_strided_slice %132 {offsets = [0, 256], sizes = [8, 128], strides = [1, 1]} : vector<8x1024xf32> to vector<8x128xf32>
    %148 = vector.extract_strided_slice %132 {offsets = [0, 768], sizes = [8, 128], strides = [1, 1]} : vector<8x1024xf32> to vector<8x128xf32>
    %149 = tpu.concatenate %147, %148 in 1 : vector<8x128xf32>, vector<8x128xf32> -> vector<8x256xf32>
    %150 = vector.extract_strided_slice %132 {offsets = [0, 384], sizes = [8, 128], strides = [1, 1]} : vector<8x1024xf32> to vector<8x128xf32>
    %151 = vector.extract_strided_slice %132 {offsets = [0, 896], sizes = [8, 128], strides = [1, 1]} : vector<8x1024xf32> to vector<8x128xf32>
    %152 = tpu.concatenate %150, %151 in 1 : vector<8x128xf32>, vector<8x128xf32> -> vector<8x256xf32>
    %cst_54 = arith.constant 5.000000e-01 : f32
    %153 = vector.broadcast %cst_54 : f32 to vector<8x256xf32>
    %154 = arith.mulf %153, %152 : vector<8x256xf32>
    %cst_55 = arith.constant 5.000000e-01 : f32
    %155 = vector.broadcast %cst_55 : f32 to vector<8x256xf32>
    %156 = arith.addf %154, %155 : vector<8x256xf32>
    %157 = arith.mulf %146, %119 : vector<8x256xf32>
    %158 = arith.mulf %139, %149 : vector<8x256xf32>
    %159 = arith.addf %157, %158 : vector<8x256xf32>
    %160 = math.tanh %159 : vector<8x256xf32>
    %161 = arith.mulf %156, %160 : vector<8x256xf32>
    %162 = vector.extract_strided_slice %161 {offsets = [0, 0], sizes = [8, 128], strides = [1, 1]} : vector<8x256xf32> to vector<8x128xf32>
    %c24_56 = arith.constant 24 : index
    %c0_57 = arith.constant 0 : index
    %163 = vector.load %arg12[%c24_56, %c0_57] : memref<64x256xf32, #tpu.memory_space<vmem>>, vector<8x128xf32>
    tpu.vector_store %arg12[%c24_56, %c0_57], %162 {strides = array<i32>} : memref<64x256xf32, #tpu.memory_space<vmem>>, vector<8x128xf32>,
    %164 = vector.extract_strided_slice %161 {offsets = [0, 128], sizes = [8, 128], strides = [1, 1]} : vector<8x256xf32> to vector<8x128xf32>
    %c32_58 = arith.constant 32 : index
    %c128_59 = arith.constant 128 : index
    %165 = vector.load %arg12[%c32_58, %c128_59] : memref<64x256xf32, #tpu.memory_space<vmem>>, vector<8x128xf32>
    tpu.vector_store %arg12[%c32_58, %c128_59], %164 {strides = array<i32>} : memref<64x256xf32, #tpu.memory_space<vmem>>, vector<8x128xf32>,
    %c32_60 = arith.constant 32 : index
    %c0_61 = arith.constant 0 : index
    %166 = vector.load %arg11[%c32_60, %c0_61] : memref<64x1024xf32, #tpu.memory_space<vmem>>, vector<8x512xf32>
    %c24_62 = arith.constant 24 : index
    %c512_63 = arith.constant 512 : index
    %167 = vector.load %arg11[%c24_62, %c512_63] : memref<64x1024xf32, #tpu.memory_space<vmem>>, vector<8x512xf32>
    %168 = tpu.concatenate %166, %167 in 1 : vector<8x512xf32>, vector<8x512xf32> -> vector<8x1024xf32>
    %169 = arith.truncf %161 : vector<8x256xf32> to vector<8x256xbf16>
    %cst_64 = arith.constant dense<0.000000e+00> : vector<8x1024xf32>
    %170 = tpu.matmul %169, %7, %cst_64 {dimension_numbers = #tpu.dot_dimension_numbers<[1], [0], [0], [1], [0, 0, 1, 1], [], []>} : vector<8x256xbf16>, vector<256x1024xbf16>, vector<8x1024xf32> -> vector<8x1024xf32>
    %171 = arith.addf %168, %170 : vector<8x1024xf32>
    %172 = math.tanh %171 : vector<8x1024xf32>
    %173 = vector.extract_strided_slice %172 {offsets = [0, 0], sizes = [8, 128], strides = [1, 1]} : vector<8x1024xf32> to vector<8x128xf32>
    %174 = vector.extract_strided_slice %172 {offsets = [0, 512], sizes = [8, 128], strides = [1, 1]} : vector<8x1024xf32> to vector<8x128xf32>
    %175 = tpu.concatenate %173, %174 in 1 : vector<8x128xf32>, vector<8x128xf32> -> vector<8x256xf32>
    %cst_65 = arith.constant 5.000000e-01 : f32
    %176 = vector.broadcast %cst_65 : f32 to vector<8x256xf32>
    %177 = arith.mulf %176, %175 : vector<8x256xf32>
    %cst_66 = arith.constant 5.000000e-01 : f32
    %178 = vector.broadcast %cst_66 : f32 to vector<8x256xf32>
    %179 = arith.addf %177, %178 : vector<8x256xf32>
    %180 = vector.extract_strided_slice %172 {offsets = [0, 128], sizes = [8, 128], strides = [1, 1]} : vector<8x1024xf32> to vector<8x128xf32>
    %181 = vector.extract_strided_slice %172 {offsets = [0, 640], sizes = [8, 128], strides = [1, 1]} : vector<8x1024xf32> to vector<8x128xf32>
    %182 = tpu.concatenate %180, %181 in 1 : vector<8x128xf32>, vector<8x128xf32> -> vector<8x256xf32>
    %cst_67 = arith.constant 5.000000e-01 : f32
    %183 = vector.broadcast %cst_67 : f32 to vector<8x256xf32>
    %184 = arith.mulf %183, %182 : vector<8x256xf32>
    %cst_68 = arith.constant 5.000000e-01 : f32
    %185 = vector.broadcast %cst_68 : f32 to vector<8x256xf32>
    %186 = arith.addf %184, %185 : vector<8x256xf32>
    %187 = vector.extract_strided_slice %172 {offsets = [0, 256], sizes = [8, 128], strides = [1, 1]} : vector<8x1024xf32> to vector<8x128xf32>
    %188 = vector.extract_strided_slice %172 {offsets = [0, 768], sizes = [8, 128], strides = [1, 1]} : vector<8x1024xf32> to vector<8x128xf32>
    %189 = tpu.concatenate %187, %188 in 1 : vector<8x128xf32>, vector<8x128xf32> -> vector<8x256xf32>
    %190 = vector.extract_strided_slice %172 {offsets = [0, 384], sizes = [8, 128], strides = [1, 1]} : vector<8x1024xf32> to vector<8x128xf32>
    %191 = vector.extract_strided_slice %172 {offsets = [0, 896], sizes = [8, 128], strides = [1, 1]} : vector<8x1024xf32> to vector<8x128xf32>
    %192 = tpu.concatenate %190, %191 in 1 : vector<8x128xf32>, vector<8x128xf32> -> vector<8x256xf32>
    %cst_69 = arith.constant 5.000000e-01 : f32
    %193 = vector.broadcast %cst_69 : f32 to vector<8x256xf32>
    %194 = arith.mulf %193, %192 : vector<8x256xf32>
    %cst_70 = arith.constant 5.000000e-01 : f32
    %195 = vector.broadcast %cst_70 : f32 to vector<8x256xf32>
    %196 = arith.addf %194, %195 : vector<8x256xf32>
    %197 = arith.mulf %186, %159 : vector<8x256xf32>
    %198 = arith.mulf %179, %189 : vector<8x256xf32>
    %199 = arith.addf %197, %198 : vector<8x256xf32>
    %200 = math.tanh %199 : vector<8x256xf32>
    %201 = arith.mulf %196, %200 : vector<8x256xf32>
    %202 = vector.extract_strided_slice %201 {offsets = [0, 0], sizes = [8, 128], strides = [1, 1]} : vector<8x256xf32> to vector<8x128xf32>
    %c32_71 = arith.constant 32 : index
    %c0_72 = arith.constant 0 : index
    %203 = vector.load %arg12[%c32_71, %c0_72] : memref<64x256xf32, #tpu.memory_space<vmem>>, vector<8x128xf32>
    tpu.vector_store %arg12[%c32_71, %c0_72], %202 {strides = array<i32>} : memref<64x256xf32, #tpu.memory_space<vmem>>, vector<8x128xf32>,
    %204 = vector.extract_strided_slice %201 {offsets = [0, 128], sizes = [8, 128], strides = [1, 1]} : vector<8x256xf32> to vector<8x128xf32>
    %c24_73 = arith.constant 24 : index
    %c128_74 = arith.constant 128 : index
    %205 = vector.load %arg12[%c24_73, %c128_74] : memref<64x256xf32, #tpu.memory_space<vmem>>, vector<8x128xf32>
    tpu.vector_store %arg12[%c24_73, %c128_74], %204 {strides = array<i32>} : memref<64x256xf32, #tpu.memory_space<vmem>>, vector<8x128xf32>,
    %c40_75 = arith.constant 40 : index
    %c0_76 = arith.constant 0 : index
    %206 = vector.load %arg11[%c40_75, %c0_76] : memref<64x1024xf32, #tpu.memory_space<vmem>>, vector<8x512xf32>
    %c16_77 = arith.constant 16 : index
    %c512_78 = arith.constant 512 : index
    %207 = vector.load %arg11[%c16_77, %c512_78] : memref<64x1024xf32, #tpu.memory_space<vmem>>, vector<8x512xf32>
    %208 = tpu.concatenate %206, %207 in 1 : vector<8x512xf32>, vector<8x512xf32> -> vector<8x1024xf32>
    %209 = arith.truncf %201 : vector<8x256xf32> to vector<8x256xbf16>
    %cst_79 = arith.constant dense<0.000000e+00> : vector<8x1024xf32>
    %210 = tpu.matmul %209, %7, %cst_79 {dimension_numbers = #tpu.dot_dimension_numbers<[1], [0], [0], [1], [0, 0, 1, 1], [], []>} : vector<8x256xbf16>, vector<256x1024xbf16>, vector<8x1024xf32> -> vector<8x1024xf32>
    %211 = arith.addf %208, %210 : vector<8x1024xf32>
    %212 = math.tanh %211 : vector<8x1024xf32>
    %213 = vector.extract_strided_slice %212 {offsets = [0, 0], sizes = [8, 128], strides = [1, 1]} : vector<8x1024xf32> to vector<8x128xf32>
    %214 = vector.extract_strided_slice %212 {offsets = [0, 512], sizes = [8, 128], strides = [1, 1]} : vector<8x1024xf32> to vector<8x128xf32>
    %215 = tpu.concatenate %213, %214 in 1 : vector<8x128xf32>, vector<8x128xf32> -> vector<8x256xf32>
    %cst_80 = arith.constant 5.000000e-01 : f32
    %216 = vector.broadcast %cst_80 : f32 to vector<8x256xf32>
    %217 = arith.mulf %216, %215 : vector<8x256xf32>
    %cst_81 = arith.constant 5.000000e-01 : f32
    %218 = vector.broadcast %cst_81 : f32 to vector<8x256xf32>
    %219 = arith.addf %217, %218 : vector<8x256xf32>
    %220 = vector.extract_strided_slice %212 {offsets = [0, 128], sizes = [8, 128], strides = [1, 1]} : vector<8x1024xf32> to vector<8x128xf32>
    %221 = vector.extract_strided_slice %212 {offsets = [0, 640], sizes = [8, 128], strides = [1, 1]} : vector<8x1024xf32> to vector<8x128xf32>
    %222 = tpu.concatenate %220, %221 in 1 : vector<8x128xf32>, vector<8x128xf32> -> vector<8x256xf32>
    %cst_82 = arith.constant 5.000000e-01 : f32
    %223 = vector.broadcast %cst_82 : f32 to vector<8x256xf32>
    %224 = arith.mulf %223, %222 : vector<8x256xf32>
    %cst_83 = arith.constant 5.000000e-01 : f32
    %225 = vector.broadcast %cst_83 : f32 to vector<8x256xf32>
    %226 = arith.addf %224, %225 : vector<8x256xf32>
    %227 = vector.extract_strided_slice %212 {offsets = [0, 256], sizes = [8, 128], strides = [1, 1]} : vector<8x1024xf32> to vector<8x128xf32>
    %228 = vector.extract_strided_slice %212 {offsets = [0, 768], sizes = [8, 128], strides = [1, 1]} : vector<8x1024xf32> to vector<8x128xf32>
    %229 = tpu.concatenate %227, %228 in 1 : vector<8x128xf32>, vector<8x128xf32> -> vector<8x256xf32>
    %230 = vector.extract_strided_slice %212 {offsets = [0, 384], sizes = [8, 128], strides = [1, 1]} : vector<8x1024xf32> to vector<8x128xf32>
    %231 = vector.extract_strided_slice %212 {offsets = [0, 896], sizes = [8, 128], strides = [1, 1]} : vector<8x1024xf32> to vector<8x128xf32>
    %232 = tpu.concatenate %230, %231 in 1 : vector<8x128xf32>, vector<8x128xf32> -> vector<8x256xf32>
    %cst_84 = arith.constant 5.000000e-01 : f32
    %233 = vector.broadcast %cst_84 : f32 to vector<8x256xf32>
    %234 = arith.mulf %233, %232 : vector<8x256xf32>
    %cst_85 = arith.constant 5.000000e-01 : f32
    %235 = vector.broadcast %cst_85 : f32 to vector<8x256xf32>
    %236 = arith.addf %234, %235 : vector<8x256xf32>
    %237 = arith.mulf %226, %199 : vector<8x256xf32>
    %238 = arith.mulf %219, %229 : vector<8x256xf32>
    %239 = arith.addf %237, %238 : vector<8x256xf32>
    %240 = math.tanh %239 : vector<8x256xf32>
    %241 = arith.mulf %236, %240 : vector<8x256xf32>
    %242 = vector.extract_strided_slice %241 {offsets = [0, 0], sizes = [8, 128], strides = [1, 1]} : vector<8x256xf32> to vector<8x128xf32>
    %c40_86 = arith.constant 40 : index
    %c0_87 = arith.constant 0 : index
    %243 = vector.load %arg12[%c40_86, %c0_87] : memref<64x256xf32, #tpu.memory_space<vmem>>, vector<8x128xf32>
    tpu.vector_store %arg12[%c40_86, %c0_87], %242 {strides = array<i32>} : memref<64x256xf32, #tpu.memory_space<vmem>>, vector<8x128xf32>,
    %244 = vector.extract_strided_slice %241 {offsets = [0, 128], sizes = [8, 128], strides = [1, 1]} : vector<8x256xf32> to vector<8x128xf32>
    %c16_88 = arith.constant 16 : index
    %c128_89 = arith.constant 128 : index
    %245 = vector.load %arg12[%c16_88, %c128_89] : memref<64x256xf32, #tpu.memory_space<vmem>>, vector<8x128xf32>
    tpu.vector_store %arg12[%c16_88, %c128_89], %244 {strides = array<i32>} : memref<64x256xf32, #tpu.memory_space<vmem>>, vector<8x128xf32>,
    %c48_90 = arith.constant 48 : index
    %c0_91 = arith.constant 0 : index
    %246 = vector.load %arg11[%c48_90, %c0_91] : memref<64x1024xf32, #tpu.memory_space<vmem>>, vector<8x512xf32>
    %c8_92 = arith.constant 8 : index
    %c512_93 = arith.constant 512 : index
    %247 = vector.load %arg11[%c8_92, %c512_93] : memref<64x1024xf32, #tpu.memory_space<vmem>>, vector<8x512xf32>
    %248 = tpu.concatenate %246, %247 in 1 : vector<8x512xf32>, vector<8x512xf32> -> vector<8x1024xf32>
    %249 = arith.truncf %241 : vector<8x256xf32> to vector<8x256xbf16>
    %cst_94 = arith.constant dense<0.000000e+00> : vector<8x1024xf32>
    %250 = tpu.matmul %249, %7, %cst_94 {dimension_numbers = #tpu.dot_dimension_numbers<[1], [0], [0], [1], [0, 0, 1, 1], [], []>} : vector<8x256xbf16>, vector<256x1024xbf16>, vector<8x1024xf32> -> vector<8x1024xf32>
    %251 = arith.addf %248, %250 : vector<8x1024xf32>
    %252 = math.tanh %251 : vector<8x1024xf32>
    %253 = vector.extract_strided_slice %252 {offsets = [0, 0], sizes = [8, 128], strides = [1, 1]} : vector<8x1024xf32> to vector<8x128xf32>
    %254 = vector.extract_strided_slice %252 {offsets = [0, 512], sizes = [8, 128], strides = [1, 1]} : vector<8x1024xf32> to vector<8x128xf32>
    %255 = tpu.concatenate %253, %254 in 1 : vector<8x128xf32>, vector<8x128xf32> -> vector<8x256xf32>
    %cst_95 = arith.constant 5.000000e-01 : f32
    %256 = vector.broadcast %cst_95 : f32 to vector<8x256xf32>
    %257 = arith.mulf %256, %255 : vector<8x256xf32>
    %cst_96 = arith.constant 5.000000e-01 : f32
    %258 = vector.broadcast %cst_96 : f32 to vector<8x256xf32>
    %259 = arith.addf %257, %258 : vector<8x256xf32>
    %260 = vector.extract_strided_slice %252 {offsets = [0, 128], sizes = [8, 128], strides = [1, 1]} : vector<8x1024xf32> to vector<8x128xf32>
    %261 = vector.extract_strided_slice %252 {offsets = [0, 640], sizes = [8, 128], strides = [1, 1]} : vector<8x1024xf32> to vector<8x128xf32>
    %262 = tpu.concatenate %260, %261 in 1 : vector<8x128xf32>, vector<8x128xf32> -> vector<8x256xf32>
    %cst_97 = arith.constant 5.000000e-01 : f32
    %263 = vector.broadcast %cst_97 : f32 to vector<8x256xf32>
    %264 = arith.mulf %263, %262 : vector<8x256xf32>
    %cst_98 = arith.constant 5.000000e-01 : f32
    %265 = vector.broadcast %cst_98 : f32 to vector<8x256xf32>
    %266 = arith.addf %264, %265 : vector<8x256xf32>
    %267 = vector.extract_strided_slice %252 {offsets = [0, 256], sizes = [8, 128], strides = [1, 1]} : vector<8x1024xf32> to vector<8x128xf32>
    %268 = vector.extract_strided_slice %252 {offsets = [0, 768], sizes = [8, 128], strides = [1, 1]} : vector<8x1024xf32> to vector<8x128xf32>
    %269 = tpu.concatenate %267, %268 in 1 : vector<8x128xf32>, vector<8x128xf32> -> vector<8x256xf32>
    %270 = vector.extract_strided_slice %252 {offsets = [0, 384], sizes = [8, 128], strides = [1, 1]} : vector<8x1024xf32> to vector<8x128xf32>
    %271 = vector.extract_strided_slice %252 {offsets = [0, 896], sizes = [8, 128], strides = [1, 1]} : vector<8x1024xf32> to vector<8x128xf32>
    %272 = tpu.concatenate %270, %271 in 1 : vector<8x128xf32>, vector<8x128xf32> -> vector<8x256xf32>
    %cst_99 = arith.constant 5.000000e-01 : f32
    %273 = vector.broadcast %cst_99 : f32 to vector<8x256xf32>
    %274 = arith.mulf %273, %272 : vector<8x256xf32>
    %cst_100 = arith.constant 5.000000e-01 : f32
    %275 = vector.broadcast %cst_100 : f32 to vector<8x256xf32>
    %276 = arith.addf %274, %275 : vector<8x256xf32>
    %277 = arith.mulf %266, %239 : vector<8x256xf32>
    %278 = arith.mulf %259, %269 : vector<8x256xf32>
    %279 = arith.addf %277, %278 : vector<8x256xf32>
    %280 = math.tanh %279 : vector<8x256xf32>
    %281 = arith.mulf %276, %280 : vector<8x256xf32>
    %282 = vector.extract_strided_slice %281 {offsets = [0, 0], sizes = [8, 128], strides = [1, 1]} : vector<8x256xf32> to vector<8x128xf32>
    %c48_101 = arith.constant 48 : index
    %c0_102 = arith.constant 0 : index
    %283 = vector.load %arg12[%c48_101, %c0_102] : memref<64x256xf32, #tpu.memory_space<vmem>>, vector<8x128xf32>
    tpu.vector_store %arg12[%c48_101, %c0_102], %282 {strides = array<i32>} : memref<64x256xf32, #tpu.memory_space<vmem>>, vector<8x128xf32>,
    %284 = vector.extract_strided_slice %281 {offsets = [0, 128], sizes = [8, 128], strides = [1, 1]} : vector<8x256xf32> to vector<8x128xf32>
    %c8_103 = arith.constant 8 : index
    %c128_104 = arith.constant 128 : index
    %285 = vector.load %arg12[%c8_103, %c128_104] : memref<64x256xf32, #tpu.memory_space<vmem>>, vector<8x128xf32>
    tpu.vector_store %arg12[%c8_103, %c128_104], %284 {strides = array<i32>} : memref<64x256xf32, #tpu.memory_space<vmem>>, vector<8x128xf32>,
    %c56_105 = arith.constant 56 : index
    %c0_106 = arith.constant 0 : index
    %286 = vector.load %arg11[%c56_105, %c0_106] : memref<64x1024xf32, #tpu.memory_space<vmem>>, vector<8x512xf32>
    %c0_107 = arith.constant 0 : index
    %c512_108 = arith.constant 512 : index
    %287 = vector.load %arg11[%c0_107, %c512_108] : memref<64x1024xf32, #tpu.memory_space<vmem>>, vector<8x512xf32>
    %288 = tpu.concatenate %286, %287 in 1 : vector<8x512xf32>, vector<8x512xf32> -> vector<8x1024xf32>
    %289 = arith.truncf %281 : vector<8x256xf32> to vector<8x256xbf16>
    %cst_109 = arith.constant dense<0.000000e+00> : vector<8x1024xf32>
    %290 = tpu.matmul %289, %7, %cst_109 {dimension_numbers = #tpu.dot_dimension_numbers<[1], [0], [0], [1], [0, 0, 1, 1], [], []>} : vector<8x256xbf16>, vector<256x1024xbf16>, vector<8x1024xf32> -> vector<8x1024xf32>
    %291 = arith.addf %288, %290 : vector<8x1024xf32>
    %292 = math.tanh %291 : vector<8x1024xf32>
    %293 = vector.extract_strided_slice %292 {offsets = [0, 0], sizes = [8, 128], strides = [1, 1]} : vector<8x1024xf32> to vector<8x128xf32>
    %294 = vector.extract_strided_slice %292 {offsets = [0, 512], sizes = [8, 128], strides = [1, 1]} : vector<8x1024xf32> to vector<8x128xf32>
    %295 = tpu.concatenate %293, %294 in 1 : vector<8x128xf32>, vector<8x128xf32> -> vector<8x256xf32>
    %cst_110 = arith.constant 5.000000e-01 : f32
    %296 = vector.broadcast %cst_110 : f32 to vector<8x256xf32>
    %297 = arith.mulf %296, %295 : vector<8x256xf32>
    %cst_111 = arith.constant 5.000000e-01 : f32
    %298 = vector.broadcast %cst_111 : f32 to vector<8x256xf32>
    %299 = arith.addf %297, %298 : vector<8x256xf32>
    %300 = vector.extract_strided_slice %292 {offsets = [0, 128], sizes = [8, 128], strides = [1, 1]} : vector<8x1024xf32> to vector<8x128xf32>
    %301 = vector.extract_strided_slice %292 {offsets = [0, 640], sizes = [8, 128], strides = [1, 1]} : vector<8x1024xf32> to vector<8x128xf32>
    %302 = tpu.concatenate %300, %301 in 1 : vector<8x128xf32>, vector<8x128xf32> -> vector<8x256xf32>
    %cst_112 = arith.constant 5.000000e-01 : f32
    %303 = vector.broadcast %cst_112 : f32 to vector<8x256xf32>
    %304 = arith.mulf %303, %302 : vector<8x256xf32>
    %cst_113 = arith.constant 5.000000e-01 : f32
    %305 = vector.broadcast %cst_113 : f32 to vector<8x256xf32>
    %306 = arith.addf %304, %305 : vector<8x256xf32>
    %307 = vector.extract_strided_slice %292 {offsets = [0, 256], sizes = [8, 128], strides = [1, 1]} : vector<8x1024xf32> to vector<8x128xf32>
    %308 = vector.extract_strided_slice %292 {offsets = [0, 768], sizes = [8, 128], strides = [1, 1]} : vector<8x1024xf32> to vector<8x128xf32>
    %309 = tpu.concatenate %307, %308 in 1 : vector<8x128xf32>, vector<8x128xf32> -> vector<8x256xf32>
    %310 = vector.extract_strided_slice %292 {offsets = [0, 384], sizes = [8, 128], strides = [1, 1]} : vector<8x1024xf32> to vector<8x128xf32>
    %311 = vector.extract_strided_slice %292 {offsets = [0, 896], sizes = [8, 128], strides = [1, 1]} : vector<8x1024xf32> to vector<8x128xf32>
    %312 = tpu.concatenate %310, %311 in 1 : vector<8x128xf32>, vector<8x128xf32> -> vector<8x256xf32>
    %cst_114 = arith.constant 5.000000e-01 : f32
    %313 = vector.broadcast %cst_114 : f32 to vector<8x256xf32>
    %314 = arith.mulf %313, %312 : vector<8x256xf32>
    %cst_115 = arith.constant 5.000000e-01 : f32
    %315 = vector.broadcast %cst_115 : f32 to vector<8x256xf32>
    %316 = arith.addf %314, %315 : vector<8x256xf32>
    %317 = arith.mulf %306, %279 : vector<8x256xf32>
    %318 = arith.mulf %299, %309 : vector<8x256xf32>
    %319 = arith.addf %317, %318 : vector<8x256xf32>
    %320 = math.tanh %319 : vector<8x256xf32>
    %321 = arith.mulf %316, %320 : vector<8x256xf32>
    %322 = vector.extract_strided_slice %321 {offsets = [0, 0], sizes = [8, 128], strides = [1, 1]} : vector<8x256xf32> to vector<8x128xf32>
    %c56_116 = arith.constant 56 : index
    %c0_117 = arith.constant 0 : index
    %323 = vector.load %arg12[%c56_116, %c0_117] : memref<64x256xf32, #tpu.memory_space<vmem>>, vector<8x128xf32>
    tpu.vector_store %arg12[%c56_116, %c0_117], %322 {strides = array<i32>} : memref<64x256xf32, #tpu.memory_space<vmem>>, vector<8x128xf32>,
    %324 = vector.extract_strided_slice %321 {offsets = [0, 128], sizes = [8, 128], strides = [1, 1]} : vector<8x256xf32> to vector<8x128xf32>
    %c0_118 = arith.constant 0 : index
    %c128_119 = arith.constant 128 : index
    %325 = vector.load %arg12[%c0_118, %c128_119] : memref<64x256xf32, #tpu.memory_space<vmem>>, vector<8x128xf32>
    tpu.vector_store %arg12[%c0_118, %c128_119], %324 {strides = array<i32>} : memref<64x256xf32, #tpu.memory_space<vmem>>, vector<8x128xf32>,
    %c0_120 = arith.constant 0 : index
    %c0_121 = arith.constant 0 : index
    %326 = vector.load %arg12[%c0_120, %c0_121] : memref<64x256xf32, #tpu.memory_space<vmem>>, vector<64x256xf32>
    %327 = arith.truncf %326 : vector<64x256xf32> to vector<64x256xbf16>
    %c0_122 = arith.constant 0 : index
    %c0_123 = arith.constant 0 : index
    %c0_124 = arith.constant 0 : index
    %328 = vector.load %arg4[%c0_122, %c0_123, %c0_124] : memref<2x256x512xbf16, #tpu.memory_space<vmem>>, vector<1x256x512xbf16>
    %329 = vector.shape_cast %328 : vector<1x256x512xbf16> to vector<256x512xbf16>
    %cst_125 = arith.constant dense<0.000000e+00> : vector<64x512xf32>
    %330 = tpu.matmul %327, %329, %cst_125 {dimension_numbers = #tpu.dot_dimension_numbers<[1], [0], [0], [1], [0, 0, 1, 1], [], []>} : vector<64x256xbf16>, vector<256x512xbf16>, vector<64x512xf32> -> vector<64x512xf32>
    %c0_126 = arith.constant 0 : index
    %c0_127 = arith.constant 0 : index
    %c0_128 = arith.constant 0 : index
    %331 = vector.load %arg5[%c0_126, %c0_127, %c0_128] : memref<2x1x512xf32, #tpu.memory_space<vmem>>, vector<1x1x512xf32>
    %332 = vector.shape_cast %331 : vector<1x1x512xf32> to vector<1x512xf32>
    %333 = vector.broadcast %332 : vector<1x512xf32> to vector<64x512xf32>
    %334 = arith.addf %330, %333 : vector<64x512xf32>
    %c0_129 = arith.constant 0 : index
    %c0_130 = arith.constant 0 : index
    %335 = vector.load %arg13[%c0_129, %c0_130] : memref<64x512xf32, #tpu.memory_space<vmem>>, vector<64x512xf32>
    tpu.vector_store %arg13[%c0_129, %c0_130], %334 {strides = array<i32>} : memref<64x512xf32, #tpu.memory_space<vmem>>, vector<64x512xf32>,
    %c0_131 = arith.constant 0 : index
    %c0_132 = arith.constant 0 : index
    %336 = vector.load %arg6[%c0_131, %c0_132] : memref<128x512xbf16, #tpu.memory_space<vmem>>, vector<128x512xbf16>
    %cst_133 = arith.constant 0.000000e+00 : f32
    %337 = vector.broadcast %cst_133 : f32 to vector<8x128xf32>
    %c0_134 = arith.constant 0 : index
    %c0_135 = arith.constant 0 : index
    %338 = vector.load %arg13[%c0_134, %c0_135] : memref<64x512xf32, #tpu.memory_space<vmem>>, vector<8x512xf32>
    %339 = math.tanh %338 : vector<8x512xf32>
    %340 = vector.extract_strided_slice %339 {offsets = [0, 0], sizes = [8, 128], strides = [1, 1]} : vector<8x512xf32> to vector<8x128xf32>
    %cst_136 = arith.constant 5.000000e-01 : f32
    %341 = vector.broadcast %cst_136 : f32 to vector<8x128xf32>
    %342 = arith.mulf %341, %340 : vector<8x128xf32>
    %cst_137 = arith.constant 5.000000e-01 : f32
    %343 = vector.broadcast %cst_137 : f32 to vector<8x128xf32>
    %344 = arith.addf %342, %343 : vector<8x128xf32>
    %345 = vector.extract_strided_slice %339 {offsets = [0, 128], sizes = [8, 128], strides = [1, 1]} : vector<8x512xf32> to vector<8x128xf32>
    %cst_138 = arith.constant 5.000000e-01 : f32
    %346 = vector.broadcast %cst_138 : f32 to vector<8x128xf32>
    %347 = arith.mulf %346, %345 : vector<8x128xf32>
    %cst_139 = arith.constant 5.000000e-01 : f32
    %348 = vector.broadcast %cst_139 : f32 to vector<8x128xf32>
    %349 = arith.addf %347, %348 : vector<8x128xf32>
    %350 = vector.extract_strided_slice %339 {offsets = [0, 256], sizes = [8, 128], strides = [1, 1]} : vector<8x512xf32> to vector<8x128xf32>
    %351 = vector.extract_strided_slice %339 {offsets = [0, 384], sizes = [8, 128], strides = [1, 1]} : vector<8x512xf32> to vector<8x128xf32>
    %cst_140 = arith.constant 5.000000e-01 : f32
    %352 = vector.broadcast %cst_140 : f32 to vector<8x128xf32>
    %353 = arith.mulf %352, %351 : vector<8x128xf32>
    %cst_141 = arith.constant 5.000000e-01 : f32
    %354 = vector.broadcast %cst_141 : f32 to vector<8x128xf32>
    %355 = arith.addf %353, %354 : vector<8x128xf32>
    %356 = arith.mulf %349, %337 : vector<8x128xf32>
    %357 = arith.mulf %344, %350 : vector<8x128xf32>
    %358 = arith.addf %356, %357 : vector<8x128xf32>
    %359 = math.tanh %358 : vector<8x128xf32>
    %360 = arith.mulf %355, %359 : vector<8x128xf32>
    %c8_142 = arith.constant 8 : index
    %c0_143 = arith.constant 0 : index
    %361 = vector.load %arg13[%c8_142, %c0_143] : memref<64x512xf32, #tpu.memory_space<vmem>>, vector<8x512xf32>
    %362 = arith.truncf %360 : vector<8x128xf32> to vector<8x128xbf16>
    %cst_144 = arith.constant dense<0.000000e+00> : vector<8x512xf32>
    %363 = tpu.matmul %362, %336, %cst_144 {dimension_numbers = #tpu.dot_dimension_numbers<[1], [0], [0], [1], [0, 0, 1, 1], [], []>} : vector<8x128xbf16>, vector<128x512xbf16>, vector<8x512xf32> -> vector<8x512xf32>
    %364 = arith.addf %361, %363 : vector<8x512xf32>
    %365 = math.tanh %364 : vector<8x512xf32>
    %366 = vector.extract_strided_slice %365 {offsets = [0, 0], sizes = [8, 128], strides = [1, 1]} : vector<8x512xf32> to vector<8x128xf32>
    %cst_145 = arith.constant 5.000000e-01 : f32
    %367 = vector.broadcast %cst_145 : f32 to vector<8x128xf32>
    %368 = arith.mulf %367, %366 : vector<8x128xf32>
    %cst_146 = arith.constant 5.000000e-01 : f32
    %369 = vector.broadcast %cst_146 : f32 to vector<8x128xf32>
    %370 = arith.addf %368, %369 : vector<8x128xf32>
    %371 = vector.extract_strided_slice %365 {offsets = [0, 128], sizes = [8, 128], strides = [1, 1]} : vector<8x512xf32> to vector<8x128xf32>
    %cst_147 = arith.constant 5.000000e-01 : f32
    %372 = vector.broadcast %cst_147 : f32 to vector<8x128xf32>
    %373 = arith.mulf %372, %371 : vector<8x128xf32>
    %cst_148 = arith.constant 5.000000e-01 : f32
    %374 = vector.broadcast %cst_148 : f32 to vector<8x128xf32>
    %375 = arith.addf %373, %374 : vector<8x128xf32>
    %376 = vector.extract_strided_slice %365 {offsets = [0, 256], sizes = [8, 128], strides = [1, 1]} : vector<8x512xf32> to vector<8x128xf32>
    %377 = vector.extract_strided_slice %365 {offsets = [0, 384], sizes = [8, 128], strides = [1, 1]} : vector<8x512xf32> to vector<8x128xf32>
    %cst_149 = arith.constant 5.000000e-01 : f32
    %378 = vector.broadcast %cst_149 : f32 to vector<8x128xf32>
    %379 = arith.mulf %378, %377 : vector<8x128xf32>
    %cst_150 = arith.constant 5.000000e-01 : f32
    %380 = vector.broadcast %cst_150 : f32 to vector<8x128xf32>
    %381 = arith.addf %379, %380 : vector<8x128xf32>
    %382 = arith.mulf %375, %358 : vector<8x128xf32>
    %383 = arith.mulf %370, %376 : vector<8x128xf32>
    %384 = arith.addf %382, %383 : vector<8x128xf32>
    %385 = math.tanh %384 : vector<8x128xf32>
    %386 = arith.mulf %381, %385 : vector<8x128xf32>
    %c16_151 = arith.constant 16 : index
    %c0_152 = arith.constant 0 : index
    %387 = vector.load %arg13[%c16_151, %c0_152] : memref<64x512xf32, #tpu.memory_space<vmem>>, vector<8x512xf32>
    %388 = arith.truncf %386 : vector<8x128xf32> to vector<8x128xbf16>
    %cst_153 = arith.constant dense<0.000000e+00> : vector<8x512xf32>
    %389 = tpu.matmul %388, %336, %cst_153 {dimension_numbers = #tpu.dot_dimension_numbers<[1], [0], [0], [1], [0, 0, 1, 1], [], []>} : vector<8x128xbf16>, vector<128x512xbf16>, vector<8x512xf32> -> vector<8x512xf32>
    %390 = arith.addf %387, %389 : vector<8x512xf32>
    %391 = math.tanh %390 : vector<8x512xf32>
    %392 = vector.extract_strided_slice %391 {offsets = [0, 0], sizes = [8, 128], strides = [1, 1]} : vector<8x512xf32> to vector<8x128xf32>
    %cst_154 = arith.constant 5.000000e-01 : f32
    %393 = vector.broadcast %cst_154 : f32 to vector<8x128xf32>
    %394 = arith.mulf %393, %392 : vector<8x128xf32>
    %cst_155 = arith.constant 5.000000e-01 : f32
    %395 = vector.broadcast %cst_155 : f32 to vector<8x128xf32>
    %396 = arith.addf %394, %395 : vector<8x128xf32>
    %397 = vector.extract_strided_slice %391 {offsets = [0, 128], sizes = [8, 128], strides = [1, 1]} : vector<8x512xf32> to vector<8x128xf32>
    %cst_156 = arith.constant 5.000000e-01 : f32
    %398 = vector.broadcast %cst_156 : f32 to vector<8x128xf32>
    %399 = arith.mulf %398, %397 : vector<8x128xf32>
    %cst_157 = arith.constant 5.000000e-01 : f32
    %400 = vector.broadcast %cst_157 : f32 to vector<8x128xf32>
    %401 = arith.addf %399, %400 : vector<8x128xf32>
    %402 = vector.extract_strided_slice %391 {offsets = [0, 256], sizes = [8, 128], strides = [1, 1]} : vector<8x512xf32> to vector<8x128xf32>
    %403 = vector.extract_strided_slice %391 {offsets = [0, 384], sizes = [8, 128], strides = [1, 1]} : vector<8x512xf32> to vector<8x128xf32>
    %cst_158 = arith.constant 5.000000e-01 : f32
    %404 = vector.broadcast %cst_158 : f32 to vector<8x128xf32>
    %405 = arith.mulf %404, %403 : vector<8x128xf32>
    %cst_159 = arith.constant 5.000000e-01 : f32
    %406 = vector.broadcast %cst_159 : f32 to vector<8x128xf32>
    %407 = arith.addf %405, %406 : vector<8x128xf32>
    %408 = arith.mulf %401, %384 : vector<8x128xf32>
    %409 = arith.mulf %396, %402 : vector<8x128xf32>
    %410 = arith.addf %408, %409 : vector<8x128xf32>
    %411 = math.tanh %410 : vector<8x128xf32>
    %412 = arith.mulf %407, %411 : vector<8x128xf32>
    %c24_160 = arith.constant 24 : index
    %c0_161 = arith.constant 0 : index
    %413 = vector.load %arg13[%c24_160, %c0_161] : memref<64x512xf32, #tpu.memory_space<vmem>>, vector<8x512xf32>
    %414 = arith.truncf %412 : vector<8x128xf32> to vector<8x128xbf16>
    %cst_162 = arith.constant dense<0.000000e+00> : vector<8x512xf32>
    %415 = tpu.matmul %414, %336, %cst_162 {dimension_numbers = #tpu.dot_dimension_numbers<[1], [0], [0], [1], [0, 0, 1, 1], [], []>} : vector<8x128xbf16>, vector<128x512xbf16>, vector<8x512xf32> -> vector<8x512xf32>
    %416 = arith.addf %413, %415 : vector<8x512xf32>
    %417 = math.tanh %416 : vector<8x512xf32>
    %418 = vector.extract_strided_slice %417 {offsets = [0, 0], sizes = [8, 128], strides = [1, 1]} : vector<8x512xf32> to vector<8x128xf32>
    %cst_163 = arith.constant 5.000000e-01 : f32
    %419 = vector.broadcast %cst_163 : f32 to vector<8x128xf32>
    %420 = arith.mulf %419, %418 : vector<8x128xf32>
    %cst_164 = arith.constant 5.000000e-01 : f32
    %421 = vector.broadcast %cst_164 : f32 to vector<8x128xf32>
    %422 = arith.addf %420, %421 : vector<8x128xf32>
    %423 = vector.extract_strided_slice %417 {offsets = [0, 128], sizes = [8, 128], strides = [1, 1]} : vector<8x512xf32> to vector<8x128xf32>
    %cst_165 = arith.constant 5.000000e-01 : f32
    %424 = vector.broadcast %cst_165 : f32 to vector<8x128xf32>
    %425 = arith.mulf %424, %423 : vector<8x128xf32>
    %cst_166 = arith.constant 5.000000e-01 : f32
    %426 = vector.broadcast %cst_166 : f32 to vector<8x128xf32>
    %427 = arith.addf %425, %426 : vector<8x128xf32>
    %428 = vector.extract_strided_slice %417 {offsets = [0, 256], sizes = [8, 128], strides = [1, 1]} : vector<8x512xf32> to vector<8x128xf32>
    %429 = vector.extract_strided_slice %417 {offsets = [0, 384], sizes = [8, 128], strides = [1, 1]} : vector<8x512xf32> to vector<8x128xf32>
    %cst_167 = arith.constant 5.000000e-01 : f32
    %430 = vector.broadcast %cst_167 : f32 to vector<8x128xf32>
    %431 = arith.mulf %430, %429 : vector<8x128xf32>
    %cst_168 = arith.constant 5.000000e-01 : f32
    %432 = vector.broadcast %cst_168 : f32 to vector<8x128xf32>
    %433 = arith.addf %431, %432 : vector<8x128xf32>
    %434 = arith.mulf %427, %410 : vector<8x128xf32>
    %435 = arith.mulf %422, %428 : vector<8x128xf32>
    %436 = arith.addf %434, %435 : vector<8x128xf32>
    %437 = math.tanh %436 : vector<8x128xf32>
    %438 = arith.mulf %433, %437 : vector<8x128xf32>
    %c32_169 = arith.constant 32 : index
    %c0_170 = arith.constant 0 : index
    %439 = vector.load %arg13[%c32_169, %c0_170] : memref<64x512xf32, #tpu.memory_space<vmem>>, vector<8x512xf32>
    %440 = arith.truncf %438 : vector<8x128xf32> to vector<8x128xbf16>
    %cst_171 = arith.constant dense<0.000000e+00> : vector<8x512xf32>
    %441 = tpu.matmul %440, %336, %cst_171 {dimension_numbers = #tpu.dot_dimension_numbers<[1], [0], [0], [1], [0, 0, 1, 1], [], []>} : vector<8x128xbf16>, vector<128x512xbf16>, vector<8x512xf32> -> vector<8x512xf32>
    %442 = arith.addf %439, %441 : vector<8x512xf32>
    %443 = math.tanh %442 : vector<8x512xf32>
    %444 = vector.extract_strided_slice %443 {offsets = [0, 0], sizes = [8, 128], strides = [1, 1]} : vector<8x512xf32> to vector<8x128xf32>
    %cst_172 = arith.constant 5.000000e-01 : f32
    %445 = vector.broadcast %cst_172 : f32 to vector<8x128xf32>
    %446 = arith.mulf %445, %444 : vector<8x128xf32>
    %cst_173 = arith.constant 5.000000e-01 : f32
    %447 = vector.broadcast %cst_173 : f32 to vector<8x128xf32>
    %448 = arith.addf %446, %447 : vector<8x128xf32>
    %449 = vector.extract_strided_slice %443 {offsets = [0, 128], sizes = [8, 128], strides = [1, 1]} : vector<8x512xf32> to vector<8x128xf32>
    %cst_174 = arith.constant 5.000000e-01 : f32
    %450 = vector.broadcast %cst_174 : f32 to vector<8x128xf32>
    %451 = arith.mulf %450, %449 : vector<8x128xf32>
    %cst_175 = arith.constant 5.000000e-01 : f32
    %452 = vector.broadcast %cst_175 : f32 to vector<8x128xf32>
    %453 = arith.addf %451, %452 : vector<8x128xf32>
    %454 = vector.extract_strided_slice %443 {offsets = [0, 256], sizes = [8, 128], strides = [1, 1]} : vector<8x512xf32> to vector<8x128xf32>
    %455 = vector.extract_strided_slice %443 {offsets = [0, 384], sizes = [8, 128], strides = [1, 1]} : vector<8x512xf32> to vector<8x128xf32>
    %cst_176 = arith.constant 5.000000e-01 : f32
    %456 = vector.broadcast %cst_176 : f32 to vector<8x128xf32>
    %457 = arith.mulf %456, %455 : vector<8x128xf32>
    %cst_177 = arith.constant 5.000000e-01 : f32
    %458 = vector.broadcast %cst_177 : f32 to vector<8x128xf32>
    %459 = arith.addf %457, %458 : vector<8x128xf32>
    %460 = arith.mulf %453, %436 : vector<8x128xf32>
    %461 = arith.mulf %448, %454 : vector<8x128xf32>
    %462 = arith.addf %460, %461 : vector<8x128xf32>
    %463 = math.tanh %462 : vector<8x128xf32>
    %464 = arith.mulf %459, %463 : vector<8x128xf32>
    %c40_178 = arith.constant 40 : index
    %c0_179 = arith.constant 0 : index
    %465 = vector.load %arg13[%c40_178, %c0_179] : memref<64x512xf32, #tpu.memory_space<vmem>>, vector<8x512xf32>
    %466 = arith.truncf %464 : vector<8x128xf32> to vector<8x128xbf16>
    %cst_180 = arith.constant dense<0.000000e+00> : vector<8x512xf32>
    %467 = tpu.matmul %466, %336, %cst_180 {dimension_numbers = #tpu.dot_dimension_numbers<[1], [0], [0], [1], [0, 0, 1, 1], [], []>} : vector<8x128xbf16>, vector<128x512xbf16>, vector<8x512xf32> -> vector<8x512xf32>
    %468 = arith.addf %465, %467 : vector<8x512xf32>
    %469 = math.tanh %468 : vector<8x512xf32>
    %470 = vector.extract_strided_slice %469 {offsets = [0, 0], sizes = [8, 128], strides = [1, 1]} : vector<8x512xf32> to vector<8x128xf32>
    %cst_181 = arith.constant 5.000000e-01 : f32
    %471 = vector.broadcast %cst_181 : f32 to vector<8x128xf32>
    %472 = arith.mulf %471, %470 : vector<8x128xf32>
    %cst_182 = arith.constant 5.000000e-01 : f32
    %473 = vector.broadcast %cst_182 : f32 to vector<8x128xf32>
    %474 = arith.addf %472, %473 : vector<8x128xf32>
    %475 = vector.extract_strided_slice %469 {offsets = [0, 128], sizes = [8, 128], strides = [1, 1]} : vector<8x512xf32> to vector<8x128xf32>
    %cst_183 = arith.constant 5.000000e-01 : f32
    %476 = vector.broadcast %cst_183 : f32 to vector<8x128xf32>
    %477 = arith.mulf %476, %475 : vector<8x128xf32>
    %cst_184 = arith.constant 5.000000e-01 : f32
    %478 = vector.broadcast %cst_184 : f32 to vector<8x128xf32>
    %479 = arith.addf %477, %478 : vector<8x128xf32>
    %480 = vector.extract_strided_slice %469 {offsets = [0, 256], sizes = [8, 128], strides = [1, 1]} : vector<8x512xf32> to vector<8x128xf32>
    %481 = vector.extract_strided_slice %469 {offsets = [0, 384], sizes = [8, 128], strides = [1, 1]} : vector<8x512xf32> to vector<8x128xf32>
    %cst_185 = arith.constant 5.000000e-01 : f32
    %482 = vector.broadcast %cst_185 : f32 to vector<8x128xf32>
    %483 = arith.mulf %482, %481 : vector<8x128xf32>
    %cst_186 = arith.constant 5.000000e-01 : f32
    %484 = vector.broadcast %cst_186 : f32 to vector<8x128xf32>
    %485 = arith.addf %483, %484 : vector<8x128xf32>
    %486 = arith.mulf %479, %462 : vector<8x128xf32>
    %487 = arith.mulf %474, %480 : vector<8x128xf32>
    %488 = arith.addf %486, %487 : vector<8x128xf32>
    %489 = math.tanh %488 : vector<8x128xf32>
    %490 = arith.mulf %485, %489 : vector<8x128xf32>
    %c48_187 = arith.constant 48 : index
    %c0_188 = arith.constant 0 : index
    %491 = vector.load %arg13[%c48_187, %c0_188] : memref<64x512xf32, #tpu.memory_space<vmem>>, vector<8x512xf32>
    %492 = arith.truncf %490 : vector<8x128xf32> to vector<8x128xbf16>
    %cst_189 = arith.constant dense<0.000000e+00> : vector<8x512xf32>
    %493 = tpu.matmul %492, %336, %cst_189 {dimension_numbers = #tpu.dot_dimension_numbers<[1], [0], [0], [1], [0, 0, 1, 1], [], []>} : vector<8x128xbf16>, vector<128x512xbf16>, vector<8x512xf32> -> vector<8x512xf32>
    %494 = arith.addf %491, %493 : vector<8x512xf32>
    %495 = math.tanh %494 : vector<8x512xf32>
    %496 = vector.extract_strided_slice %495 {offsets = [0, 0], sizes = [8, 128], strides = [1, 1]} : vector<8x512xf32> to vector<8x128xf32>
    %cst_190 = arith.constant 5.000000e-01 : f32
    %497 = vector.broadcast %cst_190 : f32 to vector<8x128xf32>
    %498 = arith.mulf %497, %496 : vector<8x128xf32>
    %cst_191 = arith.constant 5.000000e-01 : f32
    %499 = vector.broadcast %cst_191 : f32 to vector<8x128xf32>
    %500 = arith.addf %498, %499 : vector<8x128xf32>
    %501 = vector.extract_strided_slice %495 {offsets = [0, 128], sizes = [8, 128], strides = [1, 1]} : vector<8x512xf32> to vector<8x128xf32>
    %cst_192 = arith.constant 5.000000e-01 : f32
    %502 = vector.broadcast %cst_192 : f32 to vector<8x128xf32>
    %503 = arith.mulf %502, %501 : vector<8x128xf32>
    %cst_193 = arith.constant 5.000000e-01 : f32
    %504 = vector.broadcast %cst_193 : f32 to vector<8x128xf32>
    %505 = arith.addf %503, %504 : vector<8x128xf32>
    %506 = vector.extract_strided_slice %495 {offsets = [0, 256], sizes = [8, 128], strides = [1, 1]} : vector<8x512xf32> to vector<8x128xf32>
    %507 = vector.extract_strided_slice %495 {offsets = [0, 384], sizes = [8, 128], strides = [1, 1]} : vector<8x512xf32> to vector<8x128xf32>
    %cst_194 = arith.constant 5.000000e-01 : f32
    %508 = vector.broadcast %cst_194 : f32 to vector<8x128xf32>
    %509 = arith.mulf %508, %507 : vector<8x128xf32>
    %cst_195 = arith.constant 5.000000e-01 : f32
    %510 = vector.broadcast %cst_195 : f32 to vector<8x128xf32>
    %511 = arith.addf %509, %510 : vector<8x128xf32>
    %512 = arith.mulf %505, %488 : vector<8x128xf32>
    %513 = arith.mulf %500, %506 : vector<8x128xf32>
    %514 = arith.addf %512, %513 : vector<8x128xf32>
    %515 = math.tanh %514 : vector<8x128xf32>
    %516 = arith.mulf %511, %515 : vector<8x128xf32>
    %c56_196 = arith.constant 56 : index
    %c0_197 = arith.constant 0 : index
    %517 = vector.load %arg13[%c56_196, %c0_197] : memref<64x512xf32, #tpu.memory_space<vmem>>, vector<8x512xf32>
    %518 = arith.truncf %516 : vector<8x128xf32> to vector<8x128xbf16>
    %cst_198 = arith.constant dense<0.000000e+00> : vector<8x512xf32>
    %519 = tpu.matmul %518, %336, %cst_198 {dimension_numbers = #tpu.dot_dimension_numbers<[1], [0], [0], [1], [0, 0, 1, 1], [], []>} : vector<8x128xbf16>, vector<128x512xbf16>, vector<8x512xf32> -> vector<8x512xf32>
    %520 = arith.addf %517, %519 : vector<8x512xf32>
    %521 = math.tanh %520 : vector<8x512xf32>
    %522 = vector.extract_strided_slice %521 {offsets = [0, 0], sizes = [8, 128], strides = [1, 1]} : vector<8x512xf32> to vector<8x128xf32>
    %cst_199 = arith.constant 5.000000e-01 : f32
    %523 = vector.broadcast %cst_199 : f32 to vector<8x128xf32>
    %524 = arith.mulf %523, %522 : vector<8x128xf32>
    %cst_200 = arith.constant 5.000000e-01 : f32
    %525 = vector.broadcast %cst_200 : f32 to vector<8x128xf32>
    %526 = arith.addf %524, %525 : vector<8x128xf32>
    %527 = vector.extract_strided_slice %521 {offsets = [0, 128], sizes = [8, 128], strides = [1, 1]} : vector<8x512xf32> to vector<8x128xf32>
    %cst_201 = arith.constant 5.000000e-01 : f32
    %528 = vector.broadcast %cst_201 : f32 to vector<8x128xf32>
    %529 = arith.mulf %528, %527 : vector<8x128xf32>
    %cst_202 = arith.constant 5.000000e-01 : f32
    %530 = vector.broadcast %cst_202 : f32 to vector<8x128xf32>
    %531 = arith.addf %529, %530 : vector<8x128xf32>
    %532 = vector.extract_strided_slice %521 {offsets = [0, 256], sizes = [8, 128], strides = [1, 1]} : vector<8x512xf32> to vector<8x128xf32>
    %533 = vector.extract_strided_slice %521 {offsets = [0, 384], sizes = [8, 128], strides = [1, 1]} : vector<8x512xf32> to vector<8x128xf32>
    %cst_203 = arith.constant 5.000000e-01 : f32
    %534 = vector.broadcast %cst_203 : f32 to vector<8x128xf32>
    %535 = arith.mulf %534, %533 : vector<8x128xf32>
    %cst_204 = arith.constant 5.000000e-01 : f32
    %536 = vector.broadcast %cst_204 : f32 to vector<8x128xf32>
    %537 = arith.addf %535, %536 : vector<8x128xf32>
    %538 = arith.mulf %531, %514 : vector<8x128xf32>
    %539 = arith.mulf %526, %532 : vector<8x128xf32>
    %540 = arith.addf %538, %539 : vector<8x128xf32>
    %541 = math.tanh %540 : vector<8x128xf32>
    %542 = arith.mulf %537, %541 : vector<8x128xf32>
    %c56_205 = arith.constant 56 : index
    %c0_206 = arith.constant 0 : index
    %543 = vector.load %arg12[%c56_205, %c0_206] : memref<64x256xf32, #tpu.memory_space<vmem>>, vector<8x256xf32>
    %544 = arith.truncf %543 : vector<8x256xf32> to vector<8x256xbf16>
    %c1 = arith.constant 1 : index
    %c0_207 = arith.constant 0 : index
    %c0_208 = arith.constant 0 : index
    %545 = vector.load %arg4[%c1, %c0_207, %c0_208] : memref<2x256x512xbf16, #tpu.memory_space<vmem>>, vector<1x256x512xbf16>
    %546 = vector.shape_cast %545 : vector<1x256x512xbf16> to vector<256x512xbf16>
    %cst_209 = arith.constant dense<0.000000e+00> : vector<8x512xf32>
    %547 = tpu.matmul %544, %546, %cst_209 {dimension_numbers = #tpu.dot_dimension_numbers<[1], [0], [0], [1], [0, 0, 1, 1], [], []>} : vector<8x256xbf16>, vector<256x512xbf16>, vector<8x512xf32> -> vector<8x512xf32>
    %c1_210 = arith.constant 1 : index
    %c0_211 = arith.constant 0 : index
    %c0_212 = arith.constant 0 : index
    %548 = vector.load %arg5[%c1_210, %c0_211, %c0_212] : memref<2x1x512xf32, #tpu.memory_space<vmem>>, vector<1x1x512xf32>
    %549 = vector.shape_cast %548 : vector<1x1x512xf32> to vector<1x512xf32>
    %550 = vector.broadcast %549 : vector<1x512xf32> to vector<8x512xf32>
    %551 = arith.addf %547, %550 : vector<8x512xf32>
    %552 = math.tanh %551 : vector<8x512xf32>
    %553 = vector.extract_strided_slice %552 {offsets = [0, 0], sizes = [8, 128], strides = [1, 1]} : vector<8x512xf32> to vector<8x128xf32>
    %cst_213 = arith.constant 5.000000e-01 : f32
    %554 = vector.broadcast %cst_213 : f32 to vector<8x128xf32>
    %555 = arith.mulf %554, %553 : vector<8x128xf32>
    %cst_214 = arith.constant 5.000000e-01 : f32
    %556 = vector.broadcast %cst_214 : f32 to vector<8x128xf32>
    %557 = arith.addf %555, %556 : vector<8x128xf32>
    %558 = vector.extract_strided_slice %552 {offsets = [0, 256], sizes = [8, 128], strides = [1, 1]} : vector<8x512xf32> to vector<8x128xf32>
    %559 = vector.extract_strided_slice %552 {offsets = [0, 384], sizes = [8, 128], strides = [1, 1]} : vector<8x512xf32> to vector<8x128xf32>
    %cst_215 = arith.constant 5.000000e-01 : f32
    %560 = vector.broadcast %cst_215 : f32 to vector<8x128xf32>
    %561 = arith.mulf %560, %559 : vector<8x128xf32>
    %cst_216 = arith.constant 5.000000e-01 : f32
    %562 = vector.broadcast %cst_216 : f32 to vector<8x128xf32>
    %563 = arith.addf %561, %562 : vector<8x128xf32>
    %564 = arith.mulf %557, %558 : vector<8x128xf32>
    %565 = math.tanh %564 : vector<8x128xf32>
    %566 = arith.mulf %563, %565 : vector<8x128xf32>
    %567 = tpu.concatenate %542, %566 in 1 : vector<8x128xf32>, vector<8x128xf32> -> vector<8x256xf32>
    %568 = arith.truncf %567 : vector<8x256xf32> to vector<8x256xbf16>
    %c0_217 = arith.constant 0 : index
    %c0_218 = arith.constant 0 : index
    %569 = vector.load %arg7[%c0_217, %c0_218] : memref<256x128xbf16, #tpu.memory_space<vmem>>, vector<256x128xbf16>
    %cst_219 = arith.constant dense<0.000000e+00> : vector<8x128xf32>
    %570 = tpu.matmul %568, %569, %cst_219 {dimension_numbers = #tpu.dot_dimension_numbers<[1], [0], [0], [1], [0, 0, 1, 1], [], []>} : vector<8x256xbf16>, vector<256x128xbf16>, vector<8x128xf32> -> vector<8x128xf32>
    %c0_220 = arith.constant 0 : index
    %c0_221 = arith.constant 0 : index
    %571 = vector.load %arg8[%c0_220, %c0_221] : memref<1x128xf32, #tpu.memory_space<vmem>>, vector<1x128xf32>
    %572 = vector.broadcast %571 : vector<1x128xf32> to vector<8x128xf32>
    %573 = arith.addf %570, %572 : vector<8x128xf32>
    %c0_222 = arith.constant 0 : index
    %c0_223 = arith.constant 0 : index
    %574 = vector.load %arg9[%c0_222, %c0_223] : memref<8x128xf32, #tpu.memory_space<vmem>>, vector<8x128xf32>
    tpu.vector_store %arg9[%c0_222, %c0_223], %573 {strides = array<i32>} : memref<8x128xf32, #tpu.memory_space<vmem>>, vector<8x128xf32>,
    %575 = tpu.iota {dimensions = array<i32: 1>} : vector<8x128xi32>
    %c5_i32 = arith.constant 5 : i32
    %576 = vector.broadcast %c5_i32 : i32 to vector<8x128xi32>
    %577 = arith.cmpi slt, %575, %576 : vector<8x128xi32>
    %cst_224 = arith.constant -1.000000e+30 : f32
    %578 = vector.broadcast %cst_224 : f32 to vector<8x128xf32>
    %579 = arith.select %577, %573, %578 : vector<8x128xi1>, vector<8x128xf32>
    %cst_225 = arith.constant dense<0xFF800000> : vector<8xf32>
    %580 = vector.multi_reduction <maximumf>, %579, %cst_225 [1] : vector<8x128xf32> to vector<8xf32>
    %581 = vector.shape_cast %580 : vector<8xf32> to vector<8x1xf32>
    %582 = vector.broadcast %581 : vector<8x1xf32> to vector<8x128xf32>
    %583 = arith.subf %579, %582 : vector<8x128xf32>
    %584 = math.exp %583 : vector<8x128xf32>
    %cst_226 = arith.constant dense<0.000000e+00> : vector<8xf32>
    %585 = vector.multi_reduction <add>, %584, %cst_226 [1] : vector<8x128xf32> to vector<8xf32>
    %586 = vector.shape_cast %585 : vector<8xf32> to vector<8x1xf32>
    %587 = math.log %586 : vector<8x1xf32>
    %588 = vector.broadcast %587 : vector<8x1xf32> to vector<8x128xf32>
    %589 = arith.subf %583, %588 : vector<8x128xf32>
    %c0_227 = arith.constant 0 : index
    %c0_228 = arith.constant 0 : index
    %590 = vector.load %arg10[%c0_227, %c0_228] : memref<8x128xf32, #tpu.memory_space<vmem>>, vector<8x128xf32>
    tpu.vector_store %arg10[%c0_227, %c0_228], %589 {strides = array<i32>} : memref<8x128xf32, #tpu.memory_space<vmem>>, vector<8x128xf32>,
    return
  }
}

</mosaic_0001>

<llo_original>
// kernel: lstm_b1_forward.1
$region0: #{lstm_b1_forward.1}
  #allocation0 [shape = 'u32[]', space=smem, size = 0x4, offset = 0x4, fixed_abs, tag = 'smem constant byte address 0x4 - core index']
  #allocation1 [shape = 'u32[144,128]{1,0:T(1,128)}', space=vmem, size = 0x12000, scoped, tag = 'internal scratch']
  #allocation2 [shape = 'f32[64,1024]{1,0:T(8,128)}', space=vmem, size = 0x40000, scoped, tag = 'scratch operand']
  #allocation3 [shape = 'f32[64,256]{1,0:T(8,128)}', space=vmem, size = 0x10000, scoped, tag = 'scratch operand']
  #allocation4 [shape = 'f32[64,512]{1,0:T(8,128)}', space=vmem, size = 0x20000, scoped, tag = 'scratch operand']
  %s0 = inlined_call_operand.vmem [shape: f32[64,8], index: 0, kind: input, shape index: {}]
  %s1 = inlined_call_operand.vmem [shape: f32[8,1024], index: 1, kind: input, shape index: {}]
  %s2 = inlined_call_operand.vmem [shape: f32[1,1024], index: 2, kind: input, shape index: {}]
  %s3 = inlined_call_operand.hbm [shape: bf16[256,1024], index: 3, kind: input, shape index: {}]
  %s4 = inlined_call_operand.hbm [shape: bf16[2,256,512], index: 4, kind: input, shape index: {}]
  %s5 = inlined_call_operand.vmem [shape: f32[2,1,512], index: 5, kind: input, shape index: {}]
  %s6 = inlined_call_operand.hbm [shape: bf16[128,512], index: 6, kind: input, shape index: {}]
  %s7 = inlined_call_operand.hbm [shape: bf16[256,128], index: 7, kind: input, shape index: {}]
  %s8 = inlined_call_operand.vmem [shape: f32[1,128], index: 8, kind: input, shape index: {}]
  %s9 = inlined_call_operand.vmem [shape: f32[8,128], index: 9, kind: output, shape index: {0}]
  %s10 = inlined_call_operand.vmem [shape: f32[8,128], index: 10, kind: output, shape index: {1}]
  %11 = xla_tuple %s9, %s10
  %s12 = sld [smem:[#allocation0]]
  $region70: #{lstm_b1_forward.1} parent=0
    _
  %s14 = ssub.s32 1, %s12
  %s15 = scalar_select 0, %s14, %s12
  $region1: #{lstm_b1_forward.1} parent=0
    #allocation5 [shape = 'u8[524288]{0}', space=vmem, size = 0x80000, scoped, tag = 'input window, operand 3, single buffered']
    #allocation6 [shape = 's32[1]{0}', space=sflag, size = 0x4, scoped, tag = 'scoped memory for lstm_b1_forward.1']
    #allocation7 [shape = 'u8[524288]{0}', space=vmem, size = 0x80000, scoped, tag = 'input window, operand 4, single buffered']
    #allocation8 [shape = 's32[1]{0}', space=sflag, size = 0x4, scoped, tag = 'scoped memory for lstm_b1_forward.1']
    #allocation9 [shape = 'u8[131072]{0}', space=vmem, size = 0x20000, scoped, tag = 'input window, operand 6, single buffered']
    #allocation10 [shape = 'u8[65536]{0}', space=vmem, size = 0x10000, scoped, tag = 'input window, operand 7, single buffered']
    #allocation11 [shape = 's32[1]{0}', space=sflag, size = 0x4, scoped, tag = 'scoped memory for lstm_b1_forward.1']
    %16 = vsyncpa [#allocation6], 0
    %17 = vsyncpa [#allocation8], 0
    %18 = vsyncpa [#allocation11], 0
    // Predicated region
    $region2: #{lstm_b1_forward.1} parent=1 // pred_check
      _
    $region3: #{lstm_b1_forward.1} parent=1 // pred_check_branch
      %20 = sbr.rel (0) target = $region5
    $region4: #{lstm_b1_forward.1} parent=1 // pred_region
      _
    $region5: #{lstm_b1_forward.1} parent=1 // pred_fallthru
      _
    // Predicated region
    $region6: #{lstm_b1_forward.1} parent=1 // pred_check
      _
    $region7: #{lstm_b1_forward.1} parent=1 // pred_check_branch
      %22 = sbr.rel (0) target = $region9
    $region8: #{lstm_b1_forward.1} parent=1 // pred_region
      _
    $region9: #{lstm_b1_forward.1} parent=1 // pred_fallthru
      _
    // Predicated region
    $region10: #{lstm_b1_forward.1} parent=1 // pred_check
      _
    $region11: #{lstm_b1_forward.1} parent=1 // pred_check_branch
      %24 = sbr.rel (0) target = $region13
    $region12: #{lstm_b1_forward.1} parent=1 // pred_region
      _
    $region13: #{lstm_b1_forward.1} parent=1 // pred_fallthru
      _
    // Predicated region
    $region14: #{lstm_b1_forward.1} parent=1 // pred_check
      _
    $region15: #{lstm_b1_forward.1} parent=1 // pred_check_branch
      %26 = sbr.rel (0) target = $region17
    $region16: #{lstm_b1_forward.1} parent=1 // pred_region
      %s28 = ssub.s32 16384, 16384
      %29 = vsyncadd [#allocation6], %s28
      %s30 = sshll.u32 [#allocation5], 4
      %s31 = int_to_ptr.vmem [resolvable:$true] %s30
      %36 = dma.hbm_to_vmem [thread:$0]  %s3, 16384, %s31, [#allocation6], 512, 512, 32
    $region17: #{lstm_b1_forward.1} parent=1 // pred_fallthru
      _
    // Predicated region
    $region18: #{lstm_b1_forward.1} parent=1 // pred_check
      _
    $region19: #{lstm_b1_forward.1} parent=1 // pred_check_branch
      %38 = sbr.rel (0) target = $region21
    $region20: #{lstm_b1_forward.1} parent=1 // pred_region
      %s40 = ssub.s32 16384, 16384
      %41 = vsyncadd [#allocation8], %s40
      %s42 = sshll.u32 [#allocation7], 4
      %s43 = int_to_ptr.vmem [resolvable:$true] %s42
      %48 = dma.hbm_to_vmem [thread:$0]  %s4, 16384, %s43, [#allocation8], 256, 256, 16
    $region21: #{lstm_b1_forward.1} parent=1 // pred_fallthru
      _
    // Predicated region
    $region22: #{lstm_b1_forward.1} parent=1 // pred_check
      _
    $region23: #{lstm_b1_forward.1} parent=1 // pred_check_branch
      %50 = sbr.rel (0) target = $region25
    $region24: #{lstm_b1_forward.1} parent=1 // pred_region
      _
    $region25: #{lstm_b1_forward.1} parent=1 // pred_fallthru
      _
    // Predicated region
    $region26: #{lstm_b1_forward.1} parent=1 // pred_check
      _
    $region27: #{lstm_b1_forward.1} parent=1 // pred_check_branch
      %52 = sbr.rel (0) target = $region29
    $region28: #{lstm_b1_forward.1} parent=1 // pred_region
      %s54 = ssub.s32 4096, 4096
      %55 = vsyncadd [#allocation8], %s54
      %s56 = sshll.u32 [#allocation9], 4
      %s57 = int_to_ptr.vmem [resolvable:$true] %s56
      %62 = dma.hbm_to_vmem [thread:$0]  %s6, 4096, %s57, [#allocation8], 256, 256, 16
    $region29: #{lstm_b1_forward.1} parent=1 // pred_fallthru
      _
    // Predicated region
    $region30: #{lstm_b1_forward.1} parent=1 // pred_check
      _
    $region31: #{lstm_b1_forward.1} parent=1 // pred_check_branch
      %64 = sbr.rel (0) target = $region33
    $region32: #{lstm_b1_forward.1} parent=1 // pred_region
      %s66 = ssub.s32 2048, 2048
      %67 = vsyncadd [#allocation11], %s66
      %s68 = sshll.u32 [#allocation10], 4
      %s69 = int_to_ptr.vmem [resolvable:$true] %s68
      %74 = dma.hbm_to_vmem [thread:$0]  %s7, 2048, %s69, [#allocation11], 64, 64, 4
    $region33: #{lstm_b1_forward.1} parent=1 // pred_fallthru
      _
    // Predicated region
    $region34: #{lstm_b1_forward.1} parent=1 // pred_check
      _
    $region35: #{lstm_b1_forward.1} parent=1 // pred_check_branch
      %76 = sbr.rel (0) target = $region37
    $region36: #{lstm_b1_forward.1} parent=1 // pred_region
      _
    $region37: #{lstm_b1_forward.1} parent=1 // pred_fallthru
      _
    // Predicated region
    $region38: #{lstm_b1_forward.1} parent=1 // pred_check
      _
    $region39: #{lstm_b1_forward.1} parent=1 // pred_check_branch
      %78 = sbr.rel (0) target = $region41
    $region40: #{lstm_b1_forward.1} parent=1 // pred_region
      %79 = dma.done [#allocation6], 16384
    $region41: #{lstm_b1_forward.1} parent=1 // pred_fallthru
      _
    // Predicated region
    $region42: #{lstm_b1_forward.1} parent=1 // pred_check
      _
    $region43: #{lstm_b1_forward.1} parent=1 // pred_check_branch
      %81 = sbr.rel (0) target = $region45
    $region44: #{lstm_b1_forward.1} parent=1 // pred_region
      %82 = dma.done [#allocation8], 16384
    $region45: #{lstm_b1_forward.1} parent=1 // pred_fallthru
      _
    // Predicated region
    $region46: #{lstm_b1_forward.1} parent=1 // pred_check
      _
    $region47: #{lstm_b1_forward.1} parent=1 // pred_check_branch
      %84 = sbr.rel (0) target = $region49
    $region48: #{lstm_b1_forward.1} parent=1 // pred_region
      %85 = dma.done [#allocation8], 4096
    $region49: #{lstm_b1_forward.1} parent=1 // pred_fallthru
      _
    // Predicated region
    $region50: #{lstm_b1_forward.1} parent=1 // pred_check
      _
    $region51: #{lstm_b1_forward.1} parent=1 // pred_check_branch
      %87 = sbr.rel (0) target = $region53
    $region52: #{lstm_b1_forward.1} parent=1 // pred_region
      %88 = dma.done [#allocation11], 2048
    $region53: #{lstm_b1_forward.1} parent=1 // pred_fallthru
      _
    %v90 = vld [vmem:[%s0] sm:$0xff]
    %v91 = vld [vmem:[%s0 + $0x8] sm:$0xff]
    %v92 = vld [vmem:[%s0 + $0x10] sm:$0xff]
    %v93 = vld [vmem:[%s0 + $0x18] sm:$0xff]
    %v94 = vld [vmem:[%s0 + $0x20] sm:$0xff]
    %v95 = vld [vmem:[%s0 + $0x28] sm:$0xff]
    %v96 = vld [vmem:[%s0 + $0x30] sm:$0xff]
    %v97 = vld [vmem:[%s0 + $0x38] sm:$0xff]
    %v98 = vld [vmem:[%s1] sm:$0xff]
    %v99 = vld [vmem:[%s1 + $0x8] sm:$0xff]
    %v100 = vld [vmem:[%s1 + $0x10] sm:$0xff]
    %v101 = vld [vmem:[%s1 + $0x18] sm:$0xff]
    %v102 = vld [vmem:[%s1 + $0x20] sm:$0xff]
    %v103 = vld [vmem:[%s1 + $0x28] sm:$0xff]
    %v104 = vld [vmem:[%s1 + $0x30] sm:$0xff]
    %v105 = vld [vmem:[%s1 + $0x38] sm:$0xff]
    %v106 = vld [vmem:[%s2] sm:$0xff]
    %v108 = vlaneseq
    %v109 = vshrl.u32 %v108, 7
    %v110 = vsub.s32 0, %v109
    %v111 = vrot.slane %v106, %v110
    %v112 = vlaneseq
    %v113 = vshrl.u32 %v112, 7
    %v114 = vsub.s32 1, %v113
    %v115 = vrot.slane %v106, %v114
    %v116 = vlaneseq
    %v117 = vshrl.u32 %v116, 7
    %v118 = vsub.s32 2, %v117
    %v119 = vrot.slane %v106, %v118
    %v120 = vlaneseq
    %v121 = vshrl.u32 %v120, 7
    %v122 = vsub.s32 3, %v121
    %v123 = vrot.slane %v106, %v122
    %v124 = vlaneseq
    %v125 = vshrl.u32 %v124, 7
    %v126 = vsub.s32 4, %v125
    %v127 = vrot.slane %v106, %v126
    %v128 = vlaneseq
    %v129 = vshrl.u32 %v128, 7
    %v130 = vsub.s32 5, %v129
    %v131 = vrot.slane %v106, %v130
    %v132 = vlaneseq
    %v133 = vshrl.u32 %v132, 7
    %v134 = vsub.s32 6, %v133
    %v135 = vrot.slane %v106, %v134
    %v136 = vlaneseq
    %v137 = vshrl.u32 %v136, 7
    %v138 = vsub.s32 7, %v137
    %v139 = vrot.slane %v106, %v138
    %vm148 = vcmask 64512
    %v150 = vsel %vm148, %v90, 0
    %v153 = vsel %vm148, %v91, 0
    %v156 = vsel %vm148, %v92, 0
    %v159 = vsel %vm148, %v93, 0
    %v162 = vsel %vm148, %v94, 0
    %v165 = vsel %vm148, %v95, 0
    %v168 = vsel %vm148, %v96, 0
    %v171 = vsel %vm148, %v97, 0
    %173 = vmatprep.subr.mxu0 %v99
    %174 = vmatpush1.msra.mxu0 %v98
    %175 = vmatprep.subr.mxu0 0.0
    %176 = vmatpush1.msra.mxu0 0.0
    %177 = vmatprep.subr.mxu0 0.0
    %178 = vmatpush1.msra.mxu0 0.0
    %179 = vmatprep.subr.mxu0 0.0
    %180 = vmatpush1.msra.mxu0 0.0
    %181 = vmatprep.subr.mxu0 0.0
    %182 = vmatpush1.msra.mxu0 0.0
    %183 = vmatprep.subr.mxu0 0.0
    %184 = vmatpush1.msra.mxu0 0.0
    %185 = vmatprep.subr.mxu0 0.0
    %186 = vmatpush1.msra.mxu0 0.0
    %187 = vmatprep.subr.mxu0 0.0
    %188 = vmatpush1.msra.mxu0 0.0
    %189 = vmatprep.subr.mxu0 0.0
    %190 = vmatpush1.msra.mxu0 0.0
    %191 = vmatprep.subr.mxu0 0.0
    %192 = vmatpush1.msra.mxu0 0.0
    %193 = vmatprep.subr.mxu0 0.0
    %194 = vmatpush1.msra.mxu0 0.0
    %195 = vmatprep.subr.mxu0 0.0
    %196 = vmatpush1.msra.mxu0 0.0
    %197 = vmatprep.subr.mxu0 0.0
    %198 = vmatpush1.msra.mxu0 0.0
    %199 = vmatprep.subr.mxu0 0.0
    %200 = vmatpush1.msra.mxu0 0.0
    %201 = vmatprep.subr.mxu0 0.0
    %202 = vmatpush1.msra.mxu0 0.0
    %203 = vmatprep.subr.mxu0 0.0
    %204 = vmatpush1.msra.mxu0 0.0
    %205 = vmatprep.subr.mxu0 0.0
    %206 = vmatpush1.msra.mxu0 0.0
    %207 = vmatprep.subr.mxu0 0.0
    %208 = vmatpush1.msra.mxu0 0.0
    %209 = vmatprep.subr.mxu0 0.0
    %210 = vmatpush1.msra.mxu0 0.0
    %211 = vmatprep.subr.mxu0 0.0
    %212 = vmatpush1.msra.mxu0 0.0
    %213 = vmatprep.subr.mxu0 0.0
    %214 = vmatpush1.msra.mxu0 0.0
    %215 = vmatprep.subr.mxu0 0.0
    %216 = vmatpush1.msra.mxu0 0.0
    %217 = vmatprep.subr.mxu0 0.0
    %218 = vmatpush1.msra.mxu0 0.0
    %219 = vmatprep.subr.mxu0 0.0
    %220 = vmatpush1.msra.mxu0 0.0
    %221 = vmatprep.subr.mxu0 0.0
    %222 = vmatpush1.msra.mxu0 0.0
    %223 = vmatprep.subr.mxu0 0.0
    %224 = vmatpush1.msra.mxu0 0.0
    %225 = vmatprep.subr.mxu0 0.0
    %226 = vmatpush1.msra.mxu0 0.0
    %227 = vmatprep.subr.mxu0 0.0
    %228 = vmatpush1.msra.mxu0 0.0
    %229 = vmatprep.subr.mxu0 0.0
    %230 = vmatpush1.msra.mxu0 0.0
    %231 = vmatprep.subr.mxu0 0.0
    %232 = vmatpush1.msra.mxu0 0.0
    %233 = vmatprep.subr.mxu0 0.0
    %234 = vmatpush1.msra.mxu0 0.0
    %235 = vmatprep.subr.mxu0 0.0
    %236 = vmatpush1.msra.mxu0 0.0
    %237 = vmatprep.mubr.f32.mxu0 0.0
    %238 = vmatmul.mubr.f32.gmra.mrb[0].mxu0 %v150
    %v239 = vpop.f32.mrb[0].mxu0
    %v240 = vadd.f32 %v111, %v239
    %v241 = vpop.f32.mrb[0].mxu0
    %v242 = vadd.f32 %v115, %v241
    %243 = vmatprep.mubr.f32.mxu0 0.0
    %244 = vmatmul.mubr.f32.gmra.mrb[0].mxu0 %v153
    %v245 = vpop.f32.mrb[0].mxu0
    %v246 = vadd.f32 %v111, %v245
    %v247 = vpop.f32.mrb[0].mxu0
    %v248 = vadd.f32 %v115, %v247
    %249 = vmatprep.mubr.f32.mxu0 0.0
    %250 = vmatmul.mubr.f32.gmra.mrb[0].mxu0 %v156
    %v251 = vpop.f32.mrb[0].mxu0
    %v252 = vadd.f32 %v111, %v251
    %v253 = vpop.f32.mrb[0].mxu0
    %v254 = vadd.f32 %v115, %v253
    %255 = vmatprep.mubr.f32.mxu0 0.0
    %256 = vmatmul.mubr.f32.gmra.mrb[0].mxu0 %v159
    %v257 = vpop.f32.mrb[0].mxu0
    %v258 = vadd.f32 %v111, %v257
    %v259 = vpop.f32.mrb[0].mxu0
    %v260 = vadd.f32 %v115, %v259
    %261 = vmatprep.mubr.f32.mxu0 0.0
    %262 = vmatmul.mubr.f32.gmra.mrb[0].mxu0 %v162
    %v263 = vpop.f32.mrb[0].mxu0
    %v264 = vadd.f32 %v111, %v263
    %v265 = vpop.f32.mrb[0].mxu0
    %v266 = vadd.f32 %v115, %v265
    %267 = vmatprep.mubr.f32.mxu0 0.0
    %268 = vmatmul.mubr.f32.gmra.mrb[0].mxu0 %v165
    %v269 = vpop.f32.mrb[0].mxu0
    %v270 = vadd.f32 %v111, %v269
    %v271 = vpop.f32.mrb[0].mxu0
    %v272 = vadd.f32 %v115, %v271
    %273 = vmatprep.mubr.f32.mxu0 0.0
    %274 = vmatmul.mubr.f32.gmra.mrb[0].mxu0 %v168
    %v275 = vpop.f32.mrb[0].mxu0
    %v276 = vadd.f32 %v111, %v275
    %v277 = vpop.f32.mrb[0].mxu0
    %v278 = vadd.f32 %v115, %v277
    %279 = vmatprep.mubr.f32.mxu0 0.0
    %280 = vmatmul.mubr.f32.gmra.mrb[0].mxu0 %v171
    %v281 = vpop.f32.mrb[0].mxu0
    %v282 = vadd.f32 %v111, %v281
    %v283 = vpop.f32.mrb[0].mxu0
    %v284 = vadd.f32 %v115, %v283
    %285 = vdwg.mxu0
    %286 = vmatprep.subr.mxu0 %v101
    %287 = vmatpush1.msra.mxu0 %v100
    %288 = vmatprep.subr.mxu0 0.0
    %289 = vmatpush1.msra.mxu0 0.0
    %290 = vmatprep.subr.mxu0 0.0
    %291 = vmatpush1.msra.mxu0 0.0
    %292 = vmatprep.subr.mxu0 0.0
    %293 = vmatpush1.msra.mxu0 0.0
    %294 = vmatprep.subr.mxu0 0.0
    %295 = vmatpush1.msra.mxu0 0.0
    %296 = vmatprep.subr.mxu0 0.0
    %297 = vmatpush1.msra.mxu0 0.0
    %298 = vmatprep.subr.mxu0 0.0
    %299 = vmatpush1.msra.mxu0 0.0
    %300 = vmatprep.subr.mxu0 0.0
    %301 = vmatpush1.msra.mxu0 0.0
    %302 = vmatprep.subr.mxu0 0.0
    %303 = vmatpush1.msra.mxu0 0.0
    %304 = vmatprep.subr.mxu0 0.0
    %305 = vmatpush1.msra.mxu0 0.0
    %306 = vmatprep.subr.mxu0 0.0
    %307 = vmatpush1.msra.mxu0 0.0
    %308 = vmatprep.subr.mxu0 0.0
    %309 = vmatpush1.msra.mxu0 0.0
    %310 = vmatprep.subr.mxu0 0.0
    %311 = vmatpush1.msra.mxu0 0.0
    %312 = vmatprep.subr.mxu0 0.0
    %313 = vmatpush1.msra.mxu0 0.0
    %314 = vmatprep.subr.mxu0 0.0
    %315 = vmatpush1.msra.mxu0 0.0
    %316 = vmatprep.subr.mxu0 0.0
    %317 = vmatpush1.msra.mxu0 0.0
    %318 = vmatprep.subr.mxu0 0.0
    %319 = vmatpush1.msra.mxu0 0.0
    %320 = vmatprep.subr.mxu0 0.0
    %321 = vmatpush1.msra.mxu0 0.0
    %322 = vmatprep.subr.mxu0 0.0
    %323 = vmatpush1.msra.mxu0 0.0
    %324 = vmatprep.subr.mxu0 0.0
    %325 = vmatpush1.msra.mxu0 0.0
    %326 = vmatprep.subr.mxu0 0.0
    %327 = vmatpush1.msra.mxu0 0.0
    %328 = vmatprep.subr.mxu0 0.0
    %329 = vmatpush1.msra.mxu0 0.0
    %330 = vmatprep.subr.mxu0 0.0
    %331 = vmatpush1.msra.mxu0 0.0
    %332 = vmatprep.subr.mxu0 0.0
    %333 = vmatpush1.msra.mxu0 0.0
    %334 = vmatprep.subr.mxu0 0.0
    %335 = vmatpush1.msra.mxu0 0.0
    %336 = vmatprep.subr.mxu0 0.0
    %337 = vmatpush1.msra.mxu0 0.0
    %338 = vmatprep.subr.mxu0 0.0
    %339 = vmatpush1.msra.mxu0 0.0
    %340 = vmatprep.subr.mxu0 0.0
    %341 = vmatpush1.msra.mxu0 0.0
    %342 = vmatprep.subr.mxu0 0.0
    %343 = vmatpush1.msra.mxu0 0.0
    %344 = vmatprep.subr.mxu0 0.0
    %345 = vmatpush1.msra.mxu0 0.0
    %346 = vmatprep.subr.mxu0 0.0
    %347 = vmatpush1.msra.mxu0 0.0
    %348 = vmatprep.subr.mxu0 0.0
    %349 = vmatpush1.msra.mxu0 0.0
    %350 = vmatprep.mubr.f32.mxu0 0.0
    %351 = vmatmul.mubr.f32.gmra.mrb[0].mxu0 %v150
    %v352 = vpop.f32.mrb[0].mxu0
    %v353 = vadd.f32 %v119, %v352
    %v354 = vpop.f32.mrb[0].mxu0
    %v355 = vadd.f32 %v123, %v354
    %356 = vmatprep.mubr.f32.mxu0 0.0
    %357 = vmatmul.mubr.f32.gmra.mrb[0].mxu0 %v153
    %v358 = vpop.f32.mrb[0].mxu0
    %v359 = vadd.f32 %v119, %v358
    %v360 = vpop.f32.mrb[0].mxu0
    %v361 = vadd.f32 %v123, %v360
    %362 = vmatprep.mubr.f32.mxu0 0.0
    %363 = vmatmul.mubr.f32.gmra.mrb[0].mxu0 %v156
    %v364 = vpop.f32.mrb[0].mxu0
    %v365 = vadd.f32 %v119, %v364
    %v366 = vpop.f32.mrb[0].mxu0
    %v367 = vadd.f32 %v123, %v366
    %368 = vmatprep.mubr.f32.mxu0 0.0
    %369 = vmatmul.mubr.f32.gmra.mrb[0].mxu0 %v159
    %v370 = vpop.f32.mrb[0].mxu0
    %v371 = vadd.f32 %v119, %v370
    %v372 = vpop.f32.mrb[0].mxu0
    %v373 = vadd.f32 %v123, %v372
    %374 = vmatprep.mubr.f32.mxu0 0.0
    %375 = vmatmul.mubr.f32.gmra.mrb[0].mxu0 %v162
    %v376 = vpop.f32.mrb[0].mxu0
    %v377 = vadd.f32 %v119, %v376
    %v378 = vpop.f32.mrb[0].mxu0
    %v379 = vadd.f32 %v123, %v378
    %380 = vmatprep.mubr.f32.mxu0 0.0
    %381 = vmatmul.mubr.f32.gmra.mrb[0].mxu0 %v165
    %v382 = vpop.f32.mrb[0].mxu0
    %v383 = vadd.f32 %v119, %v382
    %v384 = vpop.f32.mrb[0].mxu0
    %v385 = vadd.f32 %v123, %v384
    %386 = vmatprep.mubr.f32.mxu0 0.0
    %387 = vmatmul.mubr.f32.gmra.mrb[0].mxu0 %v168
    %v388 = vpop.f32.mrb[0].mxu0
    %v389 = vadd.f32 %v119, %v388
    %v390 = vpop.f32.mrb[0].mxu0
    %v391 = vadd.f32 %v123, %v390
    %392 = vmatprep.mubr.f32.mxu0 0.0
    %393 = vmatmul.mubr.f32.gmra.mrb[0].mxu0 %v171
    %v394 = vpop.f32.mrb[0].mxu0
    %v395 = vadd.f32 %v119, %v394
    %v396 = vpop.f32.mrb[0].mxu0
    %v397 = vadd.f32 %v123, %v396
    %398 = vdwg.mxu0
    %399 = vmatprep.subr.mxu0 %v103
    %400 = vmatpush1.msra.mxu0 %v102
    %401 = vmatprep.subr.mxu0 0.0
    %402 = vmatpush1.msra.mxu0 0.0
    %403 = vmatprep.subr.mxu0 0.0
    %404 = vmatpush1.msra.mxu0 0.0
    %405 = vmatprep.subr.mxu0 0.0
    %406 = vmatpush1.msra.mxu0 0.0
    %407 = vmatprep.subr.mxu0 0.0
    %408 = vmatpush1.msra.mxu0 0.0
    %409 = vmatprep.subr.mxu0 0.0
    %410 = vmatpush1.msra.mxu0 0.0
    %411 = vmatprep.subr.mxu0 0.0
    %412 = vmatpush1.msra.mxu0 0.0
    %413 = vmatprep.subr.mxu0 0.0
    %414 = vmatpush1.msra.mxu0 0.0
    %415 = vmatprep.subr.mxu0 0.0
    %416 = vmatpush1.msra.mxu0 0.0
    %417 = vmatprep.subr.mxu0 0.0
    %418 = vmatpush1.msra.mxu0 0.0
    %419 = vmatprep.subr.mxu0 0.0
    %420 = vmatpush1.msra.mxu0 0.0
    %421 = vmatprep.subr.mxu0 0.0
    %422 = vmatpush1.msra.mxu0 0.0
    %423 = vmatprep.subr.mxu0 0.0
    %424 = vmatpush1.msra.mxu0 0.0
    %425 = vmatprep.subr.mxu0 0.0
    %426 = vmatpush1.msra.mxu0 0.0
    %427 = vmatprep.subr.mxu0 0.0
    %428 = vmatpush1.msra.mxu0 0.0
    %429 = vmatprep.subr.mxu0 0.0
    %430 = vmatpush1.msra.mxu0 0.0
    %431 = vmatprep.subr.mxu0 0.0
    %432 = vmatpush1.msra.mxu0 0.0
    %433 = vmatprep.subr.mxu0 0.0
    %434 = vmatpush1.msra.mxu0 0.0
    %435 = vmatprep.subr.mxu0 0.0
    %436 = vmatpush1.msra.mxu0 0.0
    %437 = vmatprep.subr.mxu0 0.0
    %438 = vmatpush1.msra.mxu0 0.0
    %439 = vmatprep.subr.mxu0 0.0
    %440 = vmatpush1.msra.mxu0 0.0
    %441 = vmatprep.subr.mxu0 0.0
    %442 = vmatpush1.msra.mxu0 0.0
    %443 = vmatprep.subr.mxu0 0.0
    %444 = vmatpush1.msra.mxu0 0.0
    %445 = vmatprep.subr.mxu0 0.0
    %446 = vmatpush1.msra.mxu0 0.0
    %447 = vmatprep.subr.mxu0 0.0
    %448 = vmatpush1.msra.mxu0 0.0
    %449 = vmatprep.subr.mxu0 0.0
    %450 = vmatpush1.msra.mxu0 0.0
    %451 = vmatprep.subr.mxu0 0.0
    %452 = vmatpush1.msra.mxu0 0.0
    %453 = vmatprep.subr.mxu0 0.0
    %454 = vmatpush1.msra.mxu0 0.0
    %455 = vmatprep.subr.mxu0 0.0
    %456 = vmatpush1.msra.mxu0 0.0
    %457 = vmatprep.subr.mxu0 0.0
    %458 = vmatpush1.msra.mxu0 0.0
    %459 = vmatprep.subr.mxu0 0.0
    %460 = vmatpush1.msra.mxu0 0.0
    %461 = vmatprep.subr.mxu0 0.0
    %462 = vmatpush1.msra.mxu0 0.0
    %463 = vmatprep.mubr.f32.mxu0 0.0
    %464 = vmatmul.mubr.f32.gmra.mrb[0].mxu0 %v150
    %v465 = vpop.f32.mrb[0].mxu0
    %v466 = vadd.f32 %v127, %v465
    %v467 = vpop.f32.mrb[0].mxu0
    %v468 = vadd.f32 %v131, %v467
    %469 = vmatprep.mubr.f32.mxu0 0.0
    %470 = vmatmul.mubr.f32.gmra.mrb[0].mxu0 %v153
    %v471 = vpop.f32.mrb[0].mxu0
    %v472 = vadd.f32 %v127, %v471
    %v473 = vpop.f32.mrb[0].mxu0
    %v474 = vadd.f32 %v131, %v473
    %475 = vmatprep.mubr.f32.mxu0 0.0
    %476 = vmatmul.mubr.f32.gmra.mrb[0].mxu0 %v156
    %v477 = vpop.f32.mrb[0].mxu0
    %v478 = vadd.f32 %v127, %v477
    %v479 = vpop.f32.mrb[0].mxu0
    %v480 = vadd.f32 %v131, %v479
    %481 = vmatprep.mubr.f32.mxu0 0.0
    %482 = vmatmul.mubr.f32.gmra.mrb[0].mxu0 %v159
    %v483 = vpop.f32.mrb[0].mxu0
    %v484 = vadd.f32 %v127, %v483
    %v485 = vpop.f32.mrb[0].mxu0
    %v486 = vadd.f32 %v131, %v485
    %487 = vmatprep.mubr.f32.mxu0 0.0
    %488 = vmatmul.mubr.f32.gmra.mrb[0].mxu0 %v162
    %v489 = vpop.f32.mrb[0].mxu0
    %v490 = vadd.f32 %v127, %v489
    %v491 = vpop.f32.mrb[0].mxu0
    %v492 = vadd.f32 %v131, %v491
    %493 = vmatprep.mubr.f32.mxu0 0.0
    %494 = vmatmul.mubr.f32.gmra.mrb[0].mxu0 %v165
    %v495 = vpop.f32.mrb[0].mxu0
    %v496 = vadd.f32 %v127, %v495
    %v497 = vpop.f32.mrb[0].mxu0
    %v498 = vadd.f32 %v131, %v497
    %499 = vmatprep.mubr.f32.mxu0 0.0
    %500 = vmatmul.mubr.f32.gmra.mrb[0].mxu0 %v168
    %v501 = vpop.f32.mrb[0].mxu0
    %v502 = vadd.f32 %v127, %v501
    %v503 = vpop.f32.mrb[0].mxu0
    %v504 = vadd.f32 %v131, %v503
    %505 = vmatprep.mubr.f32.mxu0 0.0
    %506 = vmatmul.mubr.f32.gmra.mrb[0].mxu0 %v171
    %v507 = vpop.f32.mrb[0].mxu0
    %v508 = vadd.f32 %v127, %v507
    %v509 = vpop.f32.mrb[0].mxu0
    %v510 = vadd.f32 %v131, %v509
    %511 = vdwg.mxu0
    %512 = vmatprep.subr.mxu0 %v105
    %513 = vmatpush1.msra.mxu0 %v104
    %514 = vmatprep.subr.mxu0 0.0
    %515 = vmatpush1.msra.mxu0 0.0
    %516 = vmatprep.subr.mxu0 0.0
    %517 = vmatpush1.msra.mxu0 0.0
    %518 = vmatprep.subr.mxu0 0.0
    %519 = vmatpush1.msra.mxu0 0.0
    %520 = vmatprep.subr.mxu0 0.0
    %521 = vmatpush1.msra.mxu0 0.0
    %522 = vmatprep.subr.mxu0 0.0
    %523 = vmatpush1.msra.mxu0 0.0
    %524 = vmatprep.subr.mxu0 0.0
    %525 = vmatpush1.msra.mxu0 0.0
    %526 = vmatprep.subr.mxu0 0.0
    %527 = vmatpush1.msra.mxu0 0.0
    %528 = vmatprep.subr.mxu0 0.0
    %529 = vmatpush1.msra.mxu0 0.0
    %530 = vmatprep.subr.mxu0 0.0
    %531 = vmatpush1.msra.mxu0 0.0
    %532 = vmatprep.subr.mxu0 0.0
    %533 = vmatpush1.msra.mxu0 0.0
    %534 = vmatprep.subr.mxu0 0.0
    %535 = vmatpush1.msra.mxu0 0.0
    %536 = vmatprep.subr.mxu0 0.0
    %537 = vmatpush1.msra.mxu0 0.0
    %538 = vmatprep.subr.mxu0 0.0
    %539 = vmatpush1.msra.mxu0 0.0
    %540 = vmatprep.subr.mxu0 0.0
    %541 = vmatpush1.msra.mxu0 0.0
    %542 = vmatprep.subr.mxu0 0.0
    %543 = vmatpush1.msra.mxu0 0.0
    %544 = vmatprep.subr.mxu0 0.0
    %545 = vmatpush1.msra.mxu0 0.0
    %546 = vmatprep.subr.mxu0 0.0
    %547 = vmatpush1.msra.mxu0 0.0
    %548 = vmatprep.subr.mxu0 0.0
    %549 = vmatpush1.msra.mxu0 0.0
    %550 = vmatprep.subr.mxu0 0.0
    %551 = vmatpush1.msra.mxu0 0.0
    %552 = vmatprep.subr.mxu0 0.0
    %553 = vmatpush1.msra.mxu0 0.0
    %554 = vmatprep.subr.mxu0 0.0
    %555 = vmatpush1.msra.mxu0 0.0
    %556 = vmatprep.subr.mxu0 0.0
    %557 = vmatpush1.msra.mxu0 0.0
    %558 = vmatprep.subr.mxu0 0.0
    %559 = vmatpush1.msra.mxu0 0.0
    %560 = vmatprep.subr.mxu0 0.0
    %561 = vmatpush1.msra.mxu0 0.0
    %562 = vmatprep.subr.mxu0 0.0
    %563 = vmatpush1.msra.mxu0 0.0
    %564 = vmatprep.subr.mxu0 0.0
    %565 = vmatpush1.msra.mxu0 0.0
    %566 = vmatprep.subr.mxu0 0.0
    %567 = vmatpush1.msra.mxu0 0.0
    %568 = vmatprep.subr.mxu0 0.0
    %569 = vmatpush1.msra.mxu0 0.0
    %570 = vmatprep.subr.mxu0 0.0
    %571 = vmatpush1.msra.mxu0 0.0
    %572 = vmatprep.subr.mxu0 0.0
    %573 = vmatpush1.msra.mxu0 0.0
    %574 = vmatprep.subr.mxu0 0.0
    %575 = vmatpush1.msra.mxu0 0.0
    %576 = vmatprep.mubr.f32.mxu0 0.0
    %577 = vmatmul.mubr.f32.gmra.mrb[0].mxu0 %v150
    %v578 = vpop.f32.mrb[0].mxu0
    %v579 = vadd.f32 %v135, %v578
    %v580 = vpop.f32.mrb[0].mxu0
    %v581 = vadd.f32 %v139, %v580
    %582 = vmatprep.mubr.f32.mxu0 0.0
    %583 = vmatmul.mubr.f32.gmra.mrb[0].mxu0 %v153
    %v584 = vpop.f32.mrb[0].mxu0
    %v585 = vadd.f32 %v135, %v584
    %v586 = vpop.f32.mrb[0].mxu0
    %v587 = vadd.f32 %v139, %v586
    %588 = vmatprep.mubr.f32.mxu0 0.0
    %589 = vmatmul.mubr.f32.gmra.mrb[0].mxu0 %v156
    %v590 = vpop.f32.mrb[0].mxu0
    %v591 = vadd.f32 %v135, %v590
    %v592 = vpop.f32.mrb[0].mxu0
    %v593 = vadd.f32 %v139, %v592
    %594 = vmatprep.mubr.f32.mxu0 0.0
    %595 = vmatmul.mubr.f32.gmra.mrb[0].mxu0 %v159
    %v596 = vpop.f32.mrb[0].mxu0
    %v597 = vadd.f32 %v135, %v596
    %v598 = vpop.f32.mrb[0].mxu0
    %v599 = vadd.f32 %v139, %v598
    %600 = vmatprep.mubr.f32.mxu0 0.0
    %601 = vmatmul.mubr.f32.gmra.mrb[0].mxu0 %v162
    %v602 = vpop.f32.mrb[0].mxu0
    %v603 = vadd.f32 %v135, %v602
    %v604 = vpop.f32.mrb[0].mxu0
    %v605 = vadd.f32 %v139, %v604
    %606 = vmatprep.mubr.f32.mxu0 0.0
    %607 = vmatmul.mubr.f32.gmra.mrb[0].mxu0 %v165
    %v608 = vpop.f32.mrb[0].mxu0
    %v609 = vadd.f32 %v135, %v608
    %v610 = vpop.f32.mrb[0].mxu0
    %v611 = vadd.f32 %v139, %v610
    %612 = vmatprep.mubr.f32.mxu0 0.0
    %613 = vmatmul.mubr.f32.gmra.mrb[0].mxu0 %v168
    %v614 = vpop.f32.mrb[0].mxu0
    %v615 = vadd.f32 %v135, %v614
    %v616 = vpop.f32.mrb[0].mxu0
    %v617 = vadd.f32 %v139, %v616
    %618 = vmatprep.mubr.f32.mxu0 0.0
    %619 = vmatmul.mubr.f32.gmra.mrb[0].mxu0 %v171
    %v620 = vpop.f32.mrb[0].mxu0
    %v621 = vadd.f32 %v135, %v620
    %v622 = vpop.f32.mrb[0].mxu0
    %v623 = vadd.f32 %v139, %v622
    %624 = vdwg.mxu0
    %625 = vst [vmem:[#allocation2] sm:$0xff] %v240
    %626 = vst [vmem:[#allocation2 + $0x8] sm:$0xff] %v242
    %627 = vst [vmem:[#allocation2 + $0x10] sm:$0xff] %v353
    %628 = vst [vmem:[#allocation2 + $0x18] sm:$0xff] %v355
    %629 = vst [vmem:[#allocation2 + $0x20] sm:$0xff] %v466
    %630 = vst [vmem:[#allocation2 + $0x28] sm:$0xff] %v468
    %631 = vst [vmem:[#allocation2 + $0x30] sm:$0xff] %v579
    %632 = vst [vmem:[#allocation2 + $0x38] sm:$0xff] %v581
    %633 = vst [vmem:[#allocation2 + $0x40] sm:$0xff] %v246
    %634 = vst [vmem:[#allocation2 + $0x48] sm:$0xff] %v248
    %635 = vst [vmem:[#allocation2 + $0x50] sm:$0xff] %v359
    %636 = vst [vmem:[#allocation2 + $0x58] sm:$0xff] %v361
    %637 = vst [vmem:[#allocation2 + $0x60] sm:$0xff] %v472
    %638 = vst [vmem:[#allocation2 + $0x68] sm:$0xff] %v474
    %639 = vst [vmem:[#allocation2 + $0x70] sm:$0xff] %v585
    %640 = vst [vmem:[#allocation2 + $0x78] sm:$0xff] %v587
    %641 = vst [vmem:[#allocation2 + $0x80] sm:$0xff] %v252
    %642 = vst [vmem:[#allocation2 + $0x88] sm:$0xff] %v254
    %643 = vst [vmem:[#allocation2 + $0x90] sm:$0xff] %v365
    %644 = vst [vmem:[#allocation2 + $0x98] sm:$0xff] %v367
    %645 = vst [vmem:[#allocation2 + $0xa0] sm:$0xff] %v478
    %646 = vst [vmem:[#allocation2 + $0xa8] sm:$0xff] %v480
    %647 = vst [vmem:[#allocation2 + $0xb0] sm:$0xff] %v591
    %648 = vst [vmem:[#allocation2 + $0xb8] sm:$0xff] %v593
    %649 = vst [vmem:[#allocation2 + $0xc0] sm:$0xff] %v258
    %650 = vst [vmem:[#allocation2 + $0xc8] sm:$0xff] %v260
    %651 = vst [vmem:[#allocation2 + $0xd0] sm:$0xff] %v371
    %652 = vst [vmem:[#allocation2 + $0xd8] sm:$0xff] %v373
    %653 = vst [vmem:[#allocation2 + $0xe0] sm:$0xff] %v484
    %654 = vst [vmem:[#allocation2 + $0xe8] sm:$0xff] %v486
    %655 = vst [vmem:[#allocation2 + $0xf0] sm:$0xff] %v597
    %656 = vst [vmem:[#allocation2 + $0xf8] sm:$0xff] %v599
    %657 = vst [vmem:[#allocation2 + $0x100] sm:$0xff] %v264
    %658 = vst [vmem:[#allocation2 + $0x108] sm:$0xff] %v266
    %659 = vst [vmem:[#allocation2 + $0x110] sm:$0xff] %v377
    %660 = vst [vmem:[#allocation2 + $0x118] sm:$0xff] %v379
    %661 = vst [vmem:[#allocation2 + $0x120] sm:$0xff] %v490
    %662 = vst [vmem:[#allocation2 + $0x128] sm:$0xff] %v492
    %663 = vst [vmem:[#allocation2 + $0x130] sm:$0xff] %v603
    %664 = vst [vmem:[#allocation2 + $0x138] sm:$0xff] %v605
    %665 = vst [vmem:[#allocation2 + $0x140] sm:$0xff] %v270
    %666 = vst [vmem:[#allocation2 + $0x148] sm:$0xff] %v272
    %667 = vst [vmem:[#allocation2 + $0x150] sm:$0xff] %v383
    %668 = vst [vmem:[#allocation2 + $0x158] sm:$0xff] %v385
    %669 = vst [vmem:[#allocation2 + $0x160] sm:$0xff] %v496
    %670 = vst [vmem:[#allocation2 + $0x168] sm:$0xff] %v498
    %671 = vst [vmem:[#allocation2 + $0x170] sm:$0xff] %v609
    %672 = vst [vmem:[#allocation2 + $0x178] sm:$0xff] %v611
    %673 = vst [vmem:[#allocation2 + $0x180] sm:$0xff] %v276
    %674 = vst [vmem:[#allocation2 + $0x188] sm:$0xff] %v278
    %675 = vst [vmem:[#allocation2 + $0x190] sm:$0xff] %v389
    %676 = vst [vmem:[#allocation2 + $0x198] sm:$0xff] %v391
    %677 = vst [vmem:[#allocation2 + $0x1a0] sm:$0xff] %v502
    %678 = vst [vmem:[#allocation2 + $0x1a8] sm:$0xff] %v504
    %679 = vst [vmem:[#allocation2 + $0x1b0] sm:$0xff] %v615
    %680 = vst [vmem:[#allocation2 + $0x1b8] sm:$0xff] %v617
    %681 = vst [vmem:[#allocation2 + $0x1c0] sm:$0xff] %v282
    %682 = vst [vmem:[#allocation2 + $0x1c8] sm:$0xff] %v284
    %683 = vst [vmem:[#allocation2 + $0x1d0] sm:$0xff] %v395
    %684 = vst [vmem:[#allocation2 + $0x1d8] sm:$0xff] %v397
    %685 = vst [vmem:[#allocation2 + $0x1e0] sm:$0xff] %v508
    %686 = vst [vmem:[#allocation2 + $0x1e8] sm:$0xff] %v510
    %687 = vst [vmem:[#allocation2 + $0x1f0] sm:$0xff] %v621
    %688 = vst [vmem:[#allocation2 + $0x1f8] sm:$0xff] %v623
    %v689 = vld [vmem:[#allocation5] sm:$0xff]
    %v690 = vld [vmem:[#allocation5 + $0x8] sm:$0xff]
    %v691 = vld [vmem:[#allocation5 + $0x10] sm:$0xff]
    %v692 = vld [vmem:[#allocation5 + $0x18] sm:$0xff]
    %v693 = vld [vmem:[#allocation5 + $0x20] sm:$0xff]
    %v694 = vld [vmem:[#allocation5 + $0x28] sm:$0xff]
    %v695 = vld [vmem:[#allocation5 + $0x30] sm:$0xff]
    %v696 = vld [vmem:[#allocation5 + $0x38] sm:$0xff]
    %v697 = vld [vmem:[#allocation5 + $0x40] sm:$0xff]
    %v698 = vld [vmem:[#allocation5 + $0x48] sm:$0xff]
    %v699 = vld [vmem:[#allocation5 + $0x50] sm:$0xff]
    %v700 = vld [vmem:[#allocation5 + $0x58] sm:$0xff]
    %v701 = vld [vmem:[#allocation5 + $0x60] sm:$0xff]
    %v702 = vld [vmem:[#allocation5 + $0x68] sm:$0xff]
    %v703 = vld [vmem:[#allocation5 + $0x70] sm:$0xff]
    %v704 = vld [vmem:[#allocation5 + $0x78] sm:$0xff]
    %v705 = vld [vmem:[#allocation5 + $0x80] sm:$0xff]
    %v706 = vld [vmem:[#allocation5 + $0x88] sm:$0xff]
    %v707 = vld [vmem:[#allocation5 + $0x90] sm:$0xff]
    %v708 = vld [vmem:[#allocation5 + $0x98] sm:$0xff]
    %v709 = vld [vmem:[#allocation5 + $0xa0] sm:$0xff]
    %v710 = vld [vmem:[#allocation5 + $0xa8] sm:$0xff]
    %v711 = vld [vmem:[#allocation5 + $0xb0] sm:$0xff]
    %v712 = vld [vmem:[#allocation5 + $0xb8] sm:$0xff]
    %v713 = vld [vmem:[#allocation5 + $0xc0] sm:$0xff]
    %v714 = vld [vmem:[#allocation5 + $0xc8] sm:$0xff]
    %v715 = vld [vmem:[#allocation5 + $0xd0] sm:$0xff]
    %v716 = vld [vmem:[#allocation5 + $0xd8] sm:$0xff]
    %v717 = vld [vmem:[#allocation5 + $0xe0] sm:$0xff]
    %v718 = vld [vmem:[#allocation5 + $0xe8] sm:$0xff]
    %v719 = vld [vmem:[#allocation5 + $0xf0] sm:$0xff]
    %v720 = vld [vmem:[#allocation5 + $0xf8] sm:$0xff]
    %v721 = vld [vmem:[#allocation5 + $0x100] sm:$0xff]
    %v722 = vld [vmem:[#allocation5 + $0x108] sm:$0xff]
    %v723 = vld [vmem:[#allocation5 + $0x110] sm:$0xff]
    %v724 = vld [vmem:[#allocation5 + $0x118] sm:$0xff]
    %v725 = vld [vmem:[#allocation5 + $0x120] sm:$0xff]
    %v726 = vld [vmem:[#allocation5 + $0x128] sm:$0xff]
    %v727 = vld [vmem:[#allocation5 + $0x130] sm:$0xff]
    %v728 = vld [vmem:[#allocation5 + $0x138] sm:$0xff]
    %v729 = vld [vmem:[#allocation5 + $0x140] sm:$0xff]
    %v730 = vld [vmem:[#allocation5 + $0x148] sm:$0xff]
    %v731 = vld [vmem:[#allocation5 + $0x150] sm:$0xff]
    %v732 = vld [vmem:[#allocation5 + $0x158] sm:$0xff]
    %v733 = vld [vmem:[#allocation5 + $0x160] sm:$0xff]
    %v734 = vld [vmem:[#allocation5 + $0x168] sm:$0xff]
    %v735 = vld [vmem:[#allocation5 + $0x170] sm:$0xff]
    %v736 = vld [vmem:[#allocation5 + $0x178] sm:$0xff]
    %v737 = vld [vmem:[#allocation5 + $0x180] sm:$0xff]
    %v738 = vld [vmem:[#allocation5 + $0x188] sm:$0xff]
    %v739 = vld [vmem:[#allocation5 + $0x190] sm:$0xff]
    %v740 = vld [vmem:[#allocation5 + $0x198] sm:$0xff]
    %v741 = vld [vmem:[#allocation5 + $0x1a0] sm:$0xff]
    %v742 = vld [vmem:[#allocation5 + $0x1a8] sm:$0xff]
    %v743 = vld [vmem:[#allocation5 + $0x1b0] sm:$0xff]
    %v744 = vld [vmem:[#allocation5 + $0x1b8] sm:$0xff]
    %v745 = vld [vmem:[#allocation5 + $0x1c0] sm:$0xff]
    %v746 = vld [vmem:[#allocation5 + $0x1c8] sm:$0xff]
    %v747 = vld [vmem:[#allocation5 + $0x1d0] sm:$0xff]
    %v748 = vld [vmem:[#allocation5 + $0x1d8] sm:$0xff]
    %v749 = vld [vmem:[#allocation5 + $0x1e0] sm:$0xff]
    %v750 = vld [vmem:[#allocation5 + $0x1e8] sm:$0xff]
    %v751 = vld [vmem:[#allocation5 + $0x1f0] sm:$0xff]
    %v752 = vld [vmem:[#allocation5 + $0x1f8] sm:$0xff]
    %v753 = vld [vmem:[#allocation5 + $0x200] sm:$0xff]
    %v754 = vld [vmem:[#allocation5 + $0x208] sm:$0xff]
    %v755 = vld [vmem:[#allocation5 + $0x210] sm:$0xff]
    %v756 = vld [vmem:[#allocation5 + $0x218] sm:$0xff]
    %v757 = vld [vmem:[#allocation5 + $0x220] sm:$0xff]
    %v758 = vld [vmem:[#allocation5 + $0x228] sm:$0xff]
    %v759 = vld [vmem:[#allocation5 + $0x230] sm:$0xff]
    %v760 = vld [vmem:[#allocation5 + $0x238] sm:$0xff]
    %v761 = vld [vmem:[#allocation5 + $0x240] sm:$0xff]
    %v762 = vld [vmem:[#allocation5 + $0x248] sm:$0xff]
    %v763 = vld [vmem:[#allocation5 + $0x250] sm:$0xff]
    %v764 = vld [vmem:[#allocation5 + $0x258] sm:$0xff]
    %v765 = vld [vmem:[#allocation5 + $0x260] sm:$0xff]
    %v766 = vld [vmem:[#allocation5 + $0x268] sm:$0xff]
    %v767 = vld [vmem:[#allocation5 + $0x270] sm:$0xff]
    %v768 = vld [vmem:[#allocation5 + $0x278] sm:$0xff]
    %v769 = vld [vmem:[#allocation5 + $0x280] sm:$0xff]
    %v770 = vld [vmem:[#allocation5 + $0x288] sm:$0xff]
    %v771 = vld [vmem:[#allocation5 + $0x290] sm:$0xff]
    %v772 = vld [vmem:[#allocation5 + $0x298] sm:$0xff]
    %v773 = vld [vmem:[#allocation5 + $0x2a0] sm:$0xff]
    %v774 = vld [vmem:[#allocation5 + $0x2a8] sm:$0xff]
    %v775 = vld [vmem:[#allocation5 + $0x2b0] sm:$0xff]
    %v776 = vld [vmem:[#allocation5 + $0x2b8] sm:$0xff]
    %v777 = vld [vmem:[#allocation5 + $0x2c0] sm:$0xff]
    %v778 = vld [vmem:[#allocation5 + $0x2c8] sm:$0xff]
    %v779 = vld [vmem:[#allocation5 + $0x2d0] sm:$0xff]
    %v780 = vld [vmem:[#allocation5 + $0x2d8] sm:$0xff]
    %v781 = vld [vmem:[#allocation5 + $0x2e0] sm:$0xff]
    %v782 = vld [vmem:[#allocation5 + $0x2e8] sm:$0xff]
    %v783 = vld [vmem:[#allocation5 + $0x2f0] sm:$0xff]
    %v784 = vld [vmem:[#allocation5 + $0x2f8] sm:$0xff]
    %v785 = vld [vmem:[#allocation5 + $0x300] sm:$0xff]
    %v786 = vld [vmem:[#allocation5 + $0x308] sm:$0xff]
    %v787 = vld [vmem:[#allocation5 + $0x310] sm:$0xff]
    %v788 = vld [vmem:[#allocation5 + $0x318] sm:$0xff]
    %v789 = vld [vmem:[#allocation5 + $0x320] sm:$0xff]
    %v790 = vld [vmem:[#allocation5 + $0x328] sm:$0xff]
    %v791 = vld [vmem:[#allocation5 + $0x330] sm:$0xff]
    %v792 = vld [vmem:[#allocation5 + $0x338] sm:$0xff]
    %v793 = vld [vmem:[#allocation5 + $0x340] sm:$0xff]
    %v794 = vld [vmem:[#allocation5 + $0x348] sm:$0xff]
    %v795 = vld [vmem:[#allocation5 + $0x350] sm:$0xff]
    %v796 = vld [vmem:[#allocation5 + $0x358] sm:$0xff]
    %v797 = vld [vmem:[#allocation5 + $0x360] sm:$0xff]
    %v798 = vld [vmem:[#allocation5 + $0x368] sm:$0xff]
    %v799 = vld [vmem:[#allocation5 + $0x370] sm:$0xff]
    %v800 = vld [vmem:[#allocation5 + $0x378] sm:$0xff]
    %v801 = vld [vmem:[#allocation5 + $0x380] sm:$0xff]
    %v802 = vld [vmem:[#allocation5 + $0x388] sm:$0xff]
    %v803 = vld [vmem:[#allocation5 + $0x390] sm:$0xff]
    %v804 = vld [vmem:[#allocation5 + $0x398] sm:$0xff]
    %v805 = vld [vmem:[#allocation5 + $0x3a0] sm:$0xff]
    %v806 = vld [vmem:[#allocation5 + $0x3a8] sm:$0xff]
    %v807 = vld [vmem:[#allocation5 + $0x3b0] sm:$0xff]
    %v808 = vld [vmem:[#allocation5 + $0x3b8] sm:$0xff]
    %v809 = vld [vmem:[#allocation5 + $0x3c0] sm:$0xff]
    %v810 = vld [vmem:[#allocation5 + $0x3c8] sm:$0xff]
    %v811 = vld [vmem:[#allocation5 + $0x3d0] sm:$0xff]
    %v812 = vld [vmem:[#allocation5 + $0x3d8] sm:$0xff]
    %v813 = vld [vmem:[#allocation5 + $0x3e0] sm:$0xff]
    %v814 = vld [vmem:[#allocation5 + $0x3e8] sm:$0xff]
    %v815 = vld [vmem:[#allocation5 + $0x3f0] sm:$0xff]
    %v816 = vld [vmem:[#allocation5 + $0x3f8] sm:$0xff]
    %v817 = vld [vmem:[#allocation2] sm:$0xff]
    %v818 = vld [vmem:[#allocation2 + $0x8] sm:$0xff]
    %v819 = vld [vmem:[#allocation2 + $0x10] sm:$0xff]
    %v820 = vld [vmem:[#allocation2 + $0x18] sm:$0xff]
    %v821 = vld [vmem:[#allocation2 + $0x1e0] sm:$0xff]
    %v822 = vld [vmem:[#allocation2 + $0x1e8] sm:$0xff]
    %v823 = vld [vmem:[#allocation2 + $0x1f0] sm:$0xff]
    %v824 = vld [vmem:[#allocation2 + $0x1f8] sm:$0xff]
    %v825 = vtanh.pop %v817
    %v826 = vtanh.pop %v818
    %v827 = vtanh.pop %v819
    %v828 = vtanh.pop %v820
    %v829 = vtanh.pop %v821
    %v830 = vtanh.pop %v822
    %v831 = vtanh.pop %v823
    %v832 = vtanh.pop %v824
    %v833 = vmul.f32 %v825, 0.5
    %v834 = vmul.f32 %v829, 0.5
    %v835 = vadd.f32 %v833, 0.5
    %v836 = vadd.f32 %v834, 0.5
    %v837 = vmul.f32 %v826, 0.5
    %v838 = vmul.f32 %v830, 0.5
    %v839 = vadd.f32 %v837, 0.5
    %v840 = vadd.f32 %v838, 0.5
    %v841 = vmul.f32 %v828, 0.5
    %v842 = vmul.f32 %v832, 0.5
    %v843 = vadd.f32 %v841, 0.5
    %v844 = vadd.f32 %v842, 0.5
    %v845 = vmul.f32 %v839, 0.0
    %v846 = vmul.f32 %v840, 0.0
    %v847 = vmul.f32 %v835, %v827
    %v848 = vmul.f32 %v836, %v831
    %v849 = vadd.f32 %v845, %v847
    %v850 = vadd.f32 %v846, %v848
    %v851 = vtanh.pop %v849
    %v852 = vtanh.pop %v850
    %v853 = vmul.f32 %v843, %v851
    %v854 = vmul.f32 %v844, %v852
    %855 = vst [vmem:[#allocation3] sm:$0xff] %v853
    %856 = vst [vmem:[#allocation3 + $0x78] sm:$0xff] %v854
    %v857 = vld [vmem:[#allocation2 + $0x40] sm:$0xff]
    %v858 = vld [vmem:[#allocation2 + $0x48] sm:$0xff]
    %v859 = vld [vmem:[#allocation2 + $0x50] sm:$0xff]
    %v860 = vld [vmem:[#allocation2 + $0x58] sm:$0xff]
    %v861 = vld [vmem:[#allocation2 + $0x1a0] sm:$0xff]
    %v862 = vld [vmem:[#allocation2 + $0x1a8] sm:$0xff]
    %v863 = vld [vmem:[#allocation2 + $0x1b0] sm:$0xff]
    %v864 = vld [vmem:[#allocation2 + $0x1b8] sm:$0xff]
    %v865 = vpack.c.bf16 %v853, %v853
    %v866 = vpack.c.bf16 %v854, %v854
    %v995 = vunpack.c.l.b16 %v689
    %v996 = vunpack.c.h.b16 %v689
    %v997 = vunpack.c.l.b16 %v690
    %v998 = vunpack.c.h.b16 %v690
    %v999 = vunpack.c.l.b16 %v691
    %v1000 = vunpack.c.h.b16 %v691
    %v1001 = vunpack.c.l.b16 %v692
    %v1002 = vunpack.c.h.b16 %v692
    %v1003 = vunpack.c.l.b16 %v693
    %v1004 = vunpack.c.h.b16 %v693
    %v1005 = vunpack.c.l.b16 %v694
    %v1006 = vunpack.c.h.b16 %v694
    %v1007 = vunpack.c.l.b16 %v695
    %v1008 = vunpack.c.h.b16 %v695
    %v1009 = vunpack.c.l.b16 %v696
    %v1010 = vunpack.c.h.b16 %v696
    %v1011 = vunpack.c.l.b16 %v697
    %v1012 = vunpack.c.h.b16 %v697
    %v1013 = vunpack.c.l.b16 %v698
    %v1014 = vunpack.c.h.b16 %v698
    %v1015 = vunpack.c.l.b16 %v699
    %v1016 = vunpack.c.h.b16 %v699
    %v1017 = vunpack.c.l.b16 %v700
    %v1018 = vunpack.c.h.b16 %v700
    %v1019 = vunpack.c.l.b16 %v701
    %v1020 = vunpack.c.h.b16 %v701
    %v1021 = vunpack.c.l.b16 %v702
    %v1022 = vunpack.c.h.b16 %v702
    %v1023 = vunpack.c.l.b16 %v703
    %v1024 = vunpack.c.h.b16 %v703
    %v1025 = vunpack.c.l.b16 %v704
    %v1026 = vunpack.c.h.b16 %v704
    %v1027 = vunpack.c.l.b16 %v705
    %v1028 = vunpack.c.h.b16 %v705
    %v1029 = vunpack.c.l.b16 %v706
    %v1030 = vunpack.c.h.b16 %v706
    %v1031 = vunpack.c.l.b16 %v707
    %v1032 = vunpack.c.h.b16 %v707
    %v1033 = vunpack.c.l.b16 %v708
    %v1034 = vunpack.c.h.b16 %v708
    %v1035 = vunpack.c.l.b16 %v709
    %v1036 = vunpack.c.h.b16 %v709
    %v1037 = vunpack.c.l.b16 %v710
    %v1038 = vunpack.c.h.b16 %v710
    %v1039 = vunpack.c.l.b16 %v711
    %v1040 = vunpack.c.h.b16 %v711
    %v1041 = vunpack.c.l.b16 %v712
    %v1042 = vunpack.c.h.b16 %v712
    %v1043 = vunpack.c.l.b16 %v713
    %v1044 = vunpack.c.h.b16 %v713
    %v1045 = vunpack.c.l.b16 %v714
    %v1046 = vunpack.c.h.b16 %v714
    %v1047 = vunpack.c.l.b16 %v715
    %v1048 = vunpack.c.h.b16 %v715
    %v1049 = vunpack.c.l.b16 %v716
    %v1050 = vunpack.c.h.b16 %v716
    %v1051 = vunpack.c.l.b16 %v717
    %v1052 = vunpack.c.h.b16 %v717
    %v1053 = vunpack.c.l.b16 %v718
    %v1054 = vunpack.c.h.b16 %v718
    %v1055 = vunpack.c.l.b16 %v719
    %v1056 = vunpack.c.h.b16 %v719
    %v1057 = vunpack.c.l.b16 %v720
    %v1058 = vunpack.c.h.b16 %v720
    %v1059 = vunpack.c.l.b16 %v721
    %v1060 = vunpack.c.h.b16 %v721
    %v1061 = vunpack.c.l.b16 %v722
    %v1062 = vunpack.c.h.b16 %v722
    %v1063 = vunpack.c.l.b16 %v723
    %v1064 = vunpack.c.h.b16 %v723
    %v1065 = vunpack.c.l.b16 %v724
    %v1066 = vunpack.c.h.b16 %v724
    %v1067 = vunpack.c.l.b16 %v725
    %v1068 = vunpack.c.h.b16 %v725
    %v1069 = vunpack.c.l.b16 %v726
    %v1070 = vunpack.c.h.b16 %v726
    %v1071 = vunpack.c.l.b16 %v727
    %v1072 = vunpack.c.h.b16 %v727
    %v1073 = vunpack.c.l.b16 %v728
    %v1074 = vunpack.c.h.b16 %v728
    %v1075 = vunpack.c.l.b16 %v729
    %v1076 = vunpack.c.h.b16 %v729
    %v1077 = vunpack.c.l.b16 %v730
    %v1078 = vunpack.c.h.b16 %v730
    %v1079 = vunpack.c.l.b16 %v731
    %v1080 = vunpack.c.h.b16 %v731
    %v1081 = vunpack.c.l.b16 %v732
    %v1082 = vunpack.c.h.b16 %v732
    %v1083 = vunpack.c.l.b16 %v733
    %v1084 = vunpack.c.h.b16 %v733
    %v1085 = vunpack.c.l.b16 %v734
    %v1086 = vunpack.c.h.b16 %v734
    %v1087 = vunpack.c.l.b16 %v735
    %v1088 = vunpack.c.h.b16 %v735
    %v1089 = vunpack.c.l.b16 %v736
    %v1090 = vunpack.c.h.b16 %v736
    %v1091 = vunpack.c.l.b16 %v737
    %v1092 = vunpack.c.h.b16 %v737
    %v1093 = vunpack.c.l.b16 %v738
    %v1094 = vunpack.c.h.b16 %v738
    %v1095 = vunpack.c.l.b16 %v739
    %v1096 = vunpack.c.h.b16 %v739
    %v1097 = vunpack.c.l.b16 %v740
    %v1098 = vunpack.c.h.b16 %v740
    %v1099 = vunpack.c.l.b16 %v741
    %v1100 = vunpack.c.h.b16 %v741
    %v1101 = vunpack.c.l.b16 %v742
    %v1102 = vunpack.c.h.b16 %v742
    %v1103 = vunpack.c.l.b16 %v743
    %v1104 = vunpack.c.h.b16 %v743
    %v1105 = vunpack.c.l.b16 %v744
    %v1106 = vunpack.c.h.b16 %v744
    %v1107 = vunpack.c.l.b16 %v745
    %v1108 = vunpack.c.h.b16 %v745
    %v1109 = vunpack.c.l.b16 %v746
    %v1110 = vunpack.c.h.b16 %v746
    %v1111 = vunpack.c.l.b16 %v747
    %v1112 = vunpack.c.h.b16 %v747
    %v1113 = vunpack.c.l.b16 %v748
    %v1114 = vunpack.c.h.b16 %v748
    %v1115 = vunpack.c.l.b16 %v749
    %v1116 = vunpack.c.h.b16 %v749
    %v1117 = vunpack.c.l.b16 %v750
    %v1118 = vunpack.c.h.b16 %v750
    %v1119 = vunpack.c.l.b16 %v751
    %v1120 = vunpack.c.h.b16 %v751
    %v1121 = vunpack.c.l.b16 %v752
    %v1122 = vunpack.c.h.b16 %v752
    %v1123 = vunpack.c.l.b16 %v753
    %v1124 = vunpack.c.h.b16 %v753
    %v1125 = vunpack.c.l.b16 %v754
    %v1126 = vunpack.c.h.b16 %v754
    %v1127 = vunpack.c.l.b16 %v755
    %v1128 = vunpack.c.h.b16 %v755
    %v1129 = vunpack.c.l.b16 %v756
    %v1130 = vunpack.c.h.b16 %v756
    %v1131 = vunpack.c.l.b16 %v757
    %v1132 = vunpack.c.h.b16 %v757
    %v1133 = vunpack.c.l.b16 %v758
    %v1134 = vunpack.c.h.b16 %v758
    %v1135 = vunpack.c.l.b16 %v759
    %v1136 = vunpack.c.h.b16 %v759
    %v1137 = vunpack.c.l.b16 %v760
    %v1138 = vunpack.c.h.b16 %v760
    %v1139 = vunpack.c.l.b16 %v761
    %v1140 = vunpack.c.h.b16 %v761
    %v1141 = vunpack.c.l.b16 %v762
    %v1142 = vunpack.c.h.b16 %v762
    %v1143 = vunpack.c.l.b16 %v763
    %v1144 = vunpack.c.h.b16 %v763
    %v1145 = vunpack.c.l.b16 %v764
    %v1146 = vunpack.c.h.b16 %v764
    %v1147 = vunpack.c.l.b16 %v765
    %v1148 = vunpack.c.h.b16 %v765
    %v1149 = vunpack.c.l.b16 %v766
    %v1150 = vunpack.c.h.b16 %v766
    %v1151 = vunpack.c.l.b16 %v767
    %v1152 = vunpack.c.h.b16 %v767
    %v1153 = vunpack.c.l.b16 %v768
    %v1154 = vunpack.c.h.b16 %v768
    %v1155 = vunpack.c.l.b16 %v769
    %v1156 = vunpack.c.h.b16 %v769
    %v1157 = vunpack.c.l.b16 %v770
    %v1158 = vunpack.c.h.b16 %v770
    %v1159 = vunpack.c.l.b16 %v771
    %v1160 = vunpack.c.h.b16 %v771
    %v1161 = vunpack.c.l.b16 %v772
    %v1162 = vunpack.c.h.b16 %v772
    %v1163 = vunpack.c.l.b16 %v773
    %v1164 = vunpack.c.h.b16 %v773
    %v1165 = vunpack.c.l.b16 %v774
    %v1166 = vunpack.c.h.b16 %v774
    %v1167 = vunpack.c.l.b16 %v775
    %v1168 = vunpack.c.h.b16 %v775
    %v1169 = vunpack.c.l.b16 %v776
    %v1170 = vunpack.c.h.b16 %v776
    %v1171 = vunpack.c.l.b16 %v777
    %v1172 = vunpack.c.h.b16 %v777
    %v1173 = vunpack.c.l.b16 %v778
    %v1174 = vunpack.c.h.b16 %v778
    %v1175 = vunpack.c.l.b16 %v779
    %v1176 = vunpack.c.h.b16 %v779
    %v1177 = vunpack.c.l.b16 %v780
    %v1178 = vunpack.c.h.b16 %v780
    %v1179 = vunpack.c.l.b16 %v781
    %v1180 = vunpack.c.h.b16 %v781
    %v1181 = vunpack.c.l.b16 %v782
    %v1182 = vunpack.c.h.b16 %v782
    %v1183 = vunpack.c.l.b16 %v783
    %v1184 = vunpack.c.h.b16 %v783
    %v1185 = vunpack.c.l.b16 %v784
    %v1186 = vunpack.c.h.b16 %v784
    %v1187 = vunpack.c.l.b16 %v785
    %v1188 = vunpack.c.h.b16 %v785
    %v1189 = vunpack.c.l.b16 %v786
    %v1190 = vunpack.c.h.b16 %v786
    %v1191 = vunpack.c.l.b16 %v787
    %v1192 = vunpack.c.h.b16 %v787
    %v1193 = vunpack.c.l.b16 %v788
    %v1194 = vunpack.c.h.b16 %v788
    %v1195 = vunpack.c.l.b16 %v789
    %v1196 = vunpack.c.h.b16 %v789
    %v1197 = vunpack.c.l.b16 %v790
    %v1198 = vunpack.c.h.b16 %v790
    %v1199 = vunpack.c.l.b16 %v791
    %v1200 = vunpack.c.h.b16 %v791
    %v1201 = vunpack.c.l.b16 %v792
    %v1202 = vunpack.c.h.b16 %v792
    %v1203 = vunpack.c.l.b16 %v793
    %v1204 = vunpack.c.h.b16 %v793
    %v1205 = vunpack.c.l.b16 %v794
    %v1206 = vunpack.c.h.b16 %v794
    %v1207 = vunpack.c.l.b16 %v795
    %v1208 = vunpack.c.h.b16 %v795
    %v1209 = vunpack.c.l.b16 %v796
    %v1210 = vunpack.c.h.b16 %v796
    %v1211 = vunpack.c.l.b16 %v797
    %v1212 = vunpack.c.h.b16 %v797
    %v1213 = vunpack.c.l.b16 %v798
    %v1214 = vunpack.c.h.b16 %v798
    %v1215 = vunpack.c.l.b16 %v799
    %v1216 = vunpack.c.h.b16 %v799
    %v1217 = vunpack.c.l.b16 %v800
    %v1218 = vunpack.c.h.b16 %v800
    %v1219 = vunpack.c.l.b16 %v801
    %v1220 = vunpack.c.h.b16 %v801
    %v1221 = vunpack.c.l.b16 %v802
    %v1222 = vunpack.c.h.b16 %v802
    %v1223 = vunpack.c.l.b16 %v803
    %v1224 = vunpack.c.h.b16 %v803
    %v1225 = vunpack.c.l.b16 %v804
    %v1226 = vunpack.c.h.b16 %v804
    %v1227 = vunpack.c.l.b16 %v805
    %v1228 = vunpack.c.h.b16 %v805
    %v1229 = vunpack.c.l.b16 %v806
    %v1230 = vunpack.c.h.b16 %v806
    %v1231 = vunpack.c.l.b16 %v807
    %v1232 = vunpack.c.h.b16 %v807
    %v1233 = vunpack.c.l.b16 %v808
    %v1234 = vunpack.c.h.b16 %v808
    %v1235 = vunpack.c.l.b16 %v809
    %v1236 = vunpack.c.h.b16 %v809
    %v1237 = vunpack.c.l.b16 %v810
    %v1238 = vunpack.c.h.b16 %v810
    %v1239 = vunpack.c.l.b16 %v811
    %v1240 = vunpack.c.h.b16 %v811
    %v1241 = vunpack.c.l.b16 %v812
    %v1242 = vunpack.c.h.b16 %v812
    %v1243 = vunpack.c.l.b16 %v813
    %v1244 = vunpack.c.h.b16 %v813
    %v1245 = vunpack.c.l.b16 %v814
    %v1246 = vunpack.c.h.b16 %v814
    %v1247 = vunpack.c.l.b16 %v815
    %v1248 = vunpack.c.h.b16 %v815
    %v1249 = vunpack.c.l.b16 %v816
    %v1250 = vunpack.c.h.b16 %v816
    %v1251 = vpack.c.b16 %v1003, %v995
    %v1252 = vpack.c.b16 %v1004, %v996
    %v1253 = vpack.c.b16 %v1005, %v997
    %v1254 = vpack.c.b16 %v1006, %v998
    %v1255 = vpack.c.b16 %v1007, %v999
    %v1256 = vpack.c.b16 %v1008, %v1000
    %v1257 = vpack.c.b16 %v1009, %v1001
    %v1258 = vpack.c.b16 %v1010, %v1002
    %v1259 = vpack.c.b16 %v1019, %v1011
    %v1260 = vpack.c.b16 %v1020, %v1012
    %v1261 = vpack.c.b16 %v1021, %v1013
    %v1262 = vpack.c.b16 %v1022, %v1014
    %v1263 = vpack.c.b16 %v1023, %v1015
    %v1264 = vpack.c.b16 %v1024, %v1016
    %v1265 = vpack.c.b16 %v1025, %v1017
    %v1266 = vpack.c.b16 %v1026, %v1018
    %v1267 = vpack.c.b16 %v1035, %v1027
    %v1268 = vpack.c.b16 %v1036, %v1028
    %v1269 = vpack.c.b16 %v1037, %v1029
    %v1270 = vpack.c.b16 %v1038, %v1030
    %v1271 = vpack.c.b16 %v1039, %v1031
    %v1272 = vpack.c.b16 %v1040, %v1032
    %v1273 = vpack.c.b16 %v1041, %v1033
    %v1274 = vpack.c.b16 %v1042, %v1034
    %v1275 = vpack.c.b16 %v1051, %v1043
    %v1276 = vpack.c.b16 %v1052, %v1044
    %v1277 = vpack.c.b16 %v1053, %v1045
    %v1278 = vpack.c.b16 %v1054, %v1046
    %v1279 = vpack.c.b16 %v1055, %v1047
    %v1280 = vpack.c.b16 %v1056, %v1048
    %v1281 = vpack.c.b16 %v1057, %v1049
    %v1282 = vpack.c.b16 %v1058, %v1050
    %v1283 = vpack.c.b16 %v1067, %v1059
    %v1284 = vpack.c.b16 %v1068, %v1060
    %v1285 = vpack.c.b16 %v1069, %v1061
    %v1286 = vpack.c.b16 %v1070, %v1062
    %v1287 = vpack.c.b16 %v1071, %v1063
    %v1288 = vpack.c.b16 %v1072, %v1064
    %v1289 = vpack.c.b16 %v1073, %v1065
    %v1290 = vpack.c.b16 %v1074, %v1066
    %v1291 = vpack.c.b16 %v1083, %v1075
    %v1292 = vpack.c.b16 %v1084, %v1076
    %v1293 = vpack.c.b16 %v1085, %v1077
    %v1294 = vpack.c.b16 %v1086, %v1078
    %v1295 = vpack.c.b16 %v1087, %v1079
    %v1296 = vpack.c.b16 %v1088, %v1080
    %v1297 = vpack.c.b16 %v1089, %v1081
    %v1298 = vpack.c.b16 %v1090, %v1082
    %v1299 = vpack.c.b16 %v1099, %v1091
    %v1300 = vpack.c.b16 %v1100, %v1092
    %v1301 = vpack.c.b16 %v1101, %v1093
    %v1302 = vpack.c.b16 %v1102, %v1094
    %v1303 = vpack.c.b16 %v1103, %v1095
    %v1304 = vpack.c.b16 %v1104, %v1096
    %v1305 = vpack.c.b16 %v1105, %v1097
    %v1306 = vpack.c.b16 %v1106, %v1098
    %v1307 = vpack.c.b16 %v1115, %v1107
    %v1308 = vpack.c.b16 %v1116, %v1108
    %v1309 = vpack.c.b16 %v1117, %v1109
    %v1310 = vpack.c.b16 %v1118, %v1110
    %v1311 = vpack.c.b16 %v1119, %v1111
    %v1312 = vpack.c.b16 %v1120, %v1112
    %v1313 = vpack.c.b16 %v1121, %v1113
    %v1314 = vpack.c.b16 %v1122, %v1114
    %v1315 = vpack.c.b16 %v1131, %v1123
    %v1316 = vpack.c.b16 %v1132, %v1124
    %v1317 = vpack.c.b16 %v1133, %v1125
    %v1318 = vpack.c.b16 %v1134, %v1126
    %v1319 = vpack.c.b16 %v1135, %v1127
    %v1320 = vpack.c.b16 %v1136, %v1128
    %v1321 = vpack.c.b16 %v1137, %v1129
    %v1322 = vpack.c.b16 %v1138, %v1130
    %v1323 = vpack.c.b16 %v1147, %v1139
    %v1324 = vpack.c.b16 %v1148, %v1140
    %v1325 = vpack.c.b16 %v1149, %v1141
    %v1326 = vpack.c.b16 %v1150, %v1142
    %v1327 = vpack.c.b16 %v1151, %v1143
    %v1328 = vpack.c.b16 %v1152, %v1144
    %v1329 = vpack.c.b16 %v1153, %v1145
    %v1330 = vpack.c.b16 %v1154, %v1146
    %v1331 = vpack.c.b16 %v1163, %v1155
    %v1332 = vpack.c.b16 %v1164, %v1156
    %v1333 = vpack.c.b16 %v1165, %v1157
    %v1334 = vpack.c.b16 %v1166, %v1158
    %v1335 = vpack.c.b16 %v1167, %v1159
    %v1336 = vpack.c.b16 %v1168, %v1160
    %v1337 = vpack.c.b16 %v1169, %v1161
    %v1338 = vpack.c.b16 %v1170, %v1162
    %v1339 = vpack.c.b16 %v1179, %v1171
    %v1340 = vpack.c.b16 %v1180, %v1172
    %v1341 = vpack.c.b16 %v1181, %v1173
    %v1342 = vpack.c.b16 %v1182, %v1174
    %v1343 = vpack.c.b16 %v1183, %v1175
    %v1344 = vpack.c.b16 %v1184, %v1176
    %v1345 = vpack.c.b16 %v1185, %v1177
    %v1346 = vpack.c.b16 %v1186, %v1178
    %v1347 = vpack.c.b16 %v1195, %v1187
    %v1348 = vpack.c.b16 %v1196, %v1188
    %v1349 = vpack.c.b16 %v1197, %v1189
    %v1350 = vpack.c.b16 %v1198, %v1190
    %v1351 = vpack.c.b16 %v1199, %v1191
    %v1352 = vpack.c.b16 %v1200, %v1192
    %v1353 = vpack.c.b16 %v1201, %v1193
    %v1354 = vpack.c.b16 %v1202, %v1194
    %v1355 = vpack.c.b16 %v1211, %v1203
    %v1356 = vpack.c.b16 %v1212, %v1204
    %v1357 = vpack.c.b16 %v1213, %v1205
    %v1358 = vpack.c.b16 %v1214, %v1206
    %v1359 = vpack.c.b16 %v1215, %v1207
    %v1360 = vpack.c.b16 %v1216, %v1208
    %v1361 = vpack.c.b16 %v1217, %v1209
    %v1362 = vpack.c.b16 %v1218, %v1210
    %v1363 = vpack.c.b16 %v1227, %v1219
    %v1364 = vpack.c.b16 %v1228, %v1220
    %v1365 = vpack.c.b16 %v1229, %v1221
    %v1366 = vpack.c.b16 %v1230, %v1222
    %v1367 = vpack.c.b16 %v1231, %v1223
    %v1368 = vpack.c.b16 %v1232, %v1224
    %v1369 = vpack.c.b16 %v1233, %v1225
    %v1370 = vpack.c.b16 %v1234, %v1226
    %v1371 = vpack.c.b16 %v1243, %v1235
    %v1372 = vpack.c.b16 %v1244, %v1236
    %v1373 = vpack.c.b16 %v1245, %v1237
    %v1374 = vpack.c.b16 %v1246, %v1238
    %v1375 = vpack.c.b16 %v1247, %v1239
    %v1376 = vpack.c.b16 %v1248, %v1240
    %v1377 = vpack.c.b16 %v1249, %v1241
    %v1378 = vpack.c.b16 %v1250, %v1242
    %1507 = vmatprep.subr.bf16.mxu0 %v1252
    %1508 = vmatpush1.bf16.msra.mxu0 %v1251
    %1509 = vmatprep.subr.bf16.mxu0 %v1260
    %1510 = vmatpush1.bf16.msra.mxu0 %v1259
    %1511 = vmatprep.subr.bf16.mxu0 %v1268
    %1512 = vmatpush1.bf16.msra.mxu0 %v1267
    %1513 = vmatprep.subr.bf16.mxu0 %v1276
    %1514 = vmatpush1.bf16.msra.mxu0 %v1275
    %1515 = vmatprep.subr.bf16.mxu0 %v1284
    %1516 = vmatpush1.bf16.msra.mxu0 %v1283
    %1517 = vmatprep.subr.bf16.mxu0 %v1292
    %1518 = vmatpush1.bf16.msra.mxu0 %v1291
    %1519 = vmatprep.subr.bf16.mxu0 %v1300
    %1520 = vmatpush1.bf16.msra.mxu0 %v1299
    %1521 = vmatprep.subr.bf16.mxu0 %v1308
    %1522 = vmatpush1.bf16.msra.mxu0 %v1307
    %1523 = vmatprep.subr.bf16.mxu0 %v1316
    %1524 = vmatpush1.bf16.msra.mxu0 %v1315
    %1525 = vmatprep.subr.bf16.mxu0 %v1324
    %1526 = vmatpush1.bf16.msra.mxu0 %v1323
    %1527 = vmatprep.subr.bf16.mxu0 %v1332
    %1528 = vmatpush1.bf16.msra.mxu0 %v1331
    %1529 = vmatprep.subr.bf16.mxu0 %v1340
    %1530 = vmatpush1.bf16.msra.mxu0 %v1339
    %1531 = vmatprep.subr.bf16.mxu0 %v1348
    %1532 = vmatpush1.bf16.msra.mxu0 %v1347
    %1533 = vmatprep.subr.bf16.mxu0 %v1356
    %1534 = vmatpush1.bf16.msra.mxu0 %v1355
    %1535 = vmatprep.subr.bf16.mxu0 %v1364
    %1536 = vmatpush1.bf16.msra.mxu0 %v1363
    %1537 = vmatprep.subr.bf16.mxu0 %v1372
    %1538 = vmatpush1.bf16.msra.mxu0 %v1371
    %1539 = vmatprep.mubr.bf16.mxu0 %v866
    %1540 = vmatmul.mubr.bf16.gmra.mrb[0].mxu0 %v865
    %v1541 = vpop.f32.mrb[0].mxu0
    %v1542 = vadd.f32 0.0, %v1541
    %v1543 = vpop.f32.mrb[0].mxu0
    %v1544 = vadd.f32 0.0, %v1543
    %v1545 = vpop.f32.mrb[0].mxu0
    %v1546 = vpop.f32.mrb[0].mxu0
    %1547 = vdwg.mxu0
    %1548 = vmatprep.subr.bf16.mxu0 %v1254
    %1549 = vmatpush1.bf16.msra.mxu0 %v1253
    %1550 = vmatprep.subr.bf16.mxu0 %v1262
    %1551 = vmatpush1.bf16.msra.mxu0 %v1261
    %1552 = vmatprep.subr.bf16.mxu0 %v1270
    %1553 = vmatpush1.bf16.msra.mxu0 %v1269
    %1554 = vmatprep.subr.bf16.mxu0 %v1278
    %1555 = vmatpush1.bf16.msra.mxu0 %v1277
    %1556 = vmatprep.subr.bf16.mxu0 %v1286
    %1557 = vmatpush1.bf16.msra.mxu0 %v1285
    %1558 = vmatprep.subr.bf16.mxu0 %v1294
    %1559 = vmatpush1.bf16.msra.mxu0 %v1293
    %1560 = vmatprep.subr.bf16.mxu0 %v1302
    %1561 = vmatpush1.bf16.msra.mxu0 %v1301
    %1562 = vmatprep.subr.bf16.mxu0 %v1310
    %1563 = vmatpush1.bf16.msra.mxu0 %v1309
    %1564 = vmatprep.subr.bf16.mxu0 %v1318
    %1565 = vmatpush1.bf16.msra.mxu0 %v1317
    %1566 = vmatprep.subr.bf16.mxu0 %v1326
    %1567 = vmatpush1.bf16.msra.mxu0 %v1325
    %1568 = vmatprep.subr.bf16.mxu0 %v1334
    %1569 = vmatpush1.bf16.msra.mxu0 %v1333
    %1570 = vmatprep.subr.bf16.mxu0 %v1342
    %1571 = vmatpush1.bf16.msra.mxu0 %v1341
    %1572 = vmatprep.subr.bf16.mxu0 %v1350
    %1573 = vmatpush1.bf16.msra.mxu0 %v1349
    %1574 = vmatprep.subr.bf16.mxu0 %v1358
    %1575 = vmatpush1.bf16.msra.mxu0 %v1357
    %1576 = vmatprep.subr.bf16.mxu0 %v1366
    %1577 = vmatpush1.bf16.msra.mxu0 %v1365
    %1578 = vmatprep.subr.bf16.mxu0 %v1374
    %1579 = vmatpush1.bf16.msra.mxu0 %v1373
    %1580 = vmatprep.mubr.bf16.mxu0 %v866
    %1581 = vmatmul.mubr.bf16.gmra.mrb[0].mxu0 %v865
    %v1582 = vpop.f32.mrb[0].mxu0
    %v1583 = vadd.f32 0.0, %v1582
    %v1584 = vpop.f32.mrb[0].mxu0
    %v1585 = vadd.f32 0.0, %v1584
    %v1586 = vpop.f32.mrb[0].mxu0
    %v1587 = vpop.f32.mrb[0].mxu0
    %1588 = vdwg.mxu0
    %1589 = vmatprep.subr.bf16.mxu0 %v1256
    %1590 = vmatpush1.bf16.msra.mxu0 %v1255
    %1591 = vmatprep.subr.bf16.mxu0 %v1264
    %1592 = vmatpush1.bf16.msra.mxu0 %v1263
    %1593 = vmatprep.subr.bf16.mxu0 %v1272
    %1594 = vmatpush1.bf16.msra.mxu0 %v1271
    %1595 = vmatprep.subr.bf16.mxu0 %v1280
    %1596 = vmatpush1.bf16.msra.mxu0 %v1279
    %1597 = vmatprep.subr.bf16.mxu0 %v1288
    %1598 = vmatpush1.bf16.msra.mxu0 %v1287
    %1599 = vmatprep.subr.bf16.mxu0 %v1296
    %1600 = vmatpush1.bf16.msra.mxu0 %v1295
    %1601 = vmatprep.subr.bf16.mxu0 %v1304
    %1602 = vmatpush1.bf16.msra.mxu0 %v1303
    %1603 = vmatprep.subr.bf16.mxu0 %v1312
    %1604 = vmatpush1.bf16.msra.mxu0 %v1311
    %1605 = vmatprep.subr.bf16.mxu0 %v1320
    %1606 = vmatpush1.bf16.msra.mxu0 %v1319
    %1607 = vmatprep.subr.bf16.mxu0 %v1328
    %1608 = vmatpush1.bf16.msra.mxu0 %v1327
    %1609 = vmatprep.subr.bf16.mxu0 %v1336
    %1610 = vmatpush1.bf16.msra.mxu0 %v1335
    %1611 = vmatprep.subr.bf16.mxu0 %v1344
    %1612 = vmatpush1.bf16.msra.mxu0 %v1343
    %1613 = vmatprep.subr.bf16.mxu0 %v1352
    %1614 = vmatpush1.bf16.msra.mxu0 %v1351
    %1615 = vmatprep.subr.bf16.mxu0 %v1360
    %1616 = vmatpush1.bf16.msra.mxu0 %v1359
    %1617 = vmatprep.subr.bf16.mxu0 %v1368
    %1618 = vmatpush1.bf16.msra.mxu0 %v1367
    %1619 = vmatprep.subr.bf16.mxu0 %v1376
    %1620 = vmatpush1.bf16.msra.mxu0 %v1375
    %1621 = vmatprep.mubr.bf16.mxu0 %v866
    %1622 = vmatmul.mubr.bf16.gmra.mrb[0].mxu0 %v865
    %v1623 = vpop.f32.mrb[0].mxu0
    %v1624 = vadd.f32 0.0, %v1623
    %v1625 = vpop.f32.mrb[0].mxu0
    %v1626 = vadd.f32 0.0, %v1625
    %v1627 = vpop.f32.mrb[0].mxu0
    %v1628 = vpop.f32.mrb[0].mxu0
    %1629 = vdwg.mxu0
    %1630 = vmatprep.subr.bf16.mxu0 %v1258
    %1631 = vmatpush1.bf16.msra.mxu0 %v1257
    %1632 = vmatprep.subr.bf16.mxu0 %v1266
    %1633 = vmatpush1.bf16.msra.mxu0 %v1265
    %1634 = vmatprep.subr.bf16.mxu0 %v1274
    %1635 = vmatpush1.bf16.msra.mxu0 %v1273
    %1636 = vmatprep.subr.bf16.mxu0 %v1282
    %1637 = vmatpush1.bf16.msra.mxu0 %v1281
    %1638 = vmatprep.subr.bf16.mxu0 %v1290
    %1639 = vmatpush1.bf16.msra.mxu0 %v1289
    %1640 = vmatprep.subr.bf16.mxu0 %v1298
    %1641 = vmatpush1.bf16.msra.mxu0 %v1297
    %1642 = vmatprep.subr.bf16.mxu0 %v1306
    %1643 = vmatpush1.bf16.msra.mxu0 %v1305
    %1644 = vmatprep.subr.bf16.mxu0 %v1314
    %1645 = vmatpush1.bf16.msra.mxu0 %v1313
    %1646 = vmatprep.subr.bf16.mxu0 %v1322
    %1647 = vmatpush1.bf16.msra.mxu0 %v1321
    %1648 = vmatprep.subr.bf16.mxu0 %v1330
    %1649 = vmatpush1.bf16.msra.mxu0 %v1329
    %1650 = vmatprep.subr.bf16.mxu0 %v1338
    %1651 = vmatpush1.bf16.msra.mxu0 %v1337
    %1652 = vmatprep.subr.bf16.mxu0 %v1346
    %1653 = vmatpush1.bf16.msra.mxu0 %v1345
    %1654 = vmatprep.subr.bf16.mxu0 %v1354
    %1655 = vmatpush1.bf16.msra.mxu0 %v1353
    %1656 = vmatprep.subr.bf16.mxu0 %v1362
    %1657 = vmatpush1.bf16.msra.mxu0 %v1361
    %1658 = vmatprep.subr.bf16.mxu0 %v1370
    %1659 = vmatpush1.bf16.msra.mxu0 %v1369
    %1660 = vmatprep.subr.bf16.mxu0 %v1378
    %1661 = vmatpush1.bf16.msra.mxu0 %v1377
    %1662 = vmatprep.mubr.bf16.mxu0 %v866
    %1663 = vmatmul.mubr.bf16.gmra.mrb[0].mxu0 %v865
    %v1664 = vpop.f32.mrb[0].mxu0
    %v1665 = vadd.f32 0.0, %v1664
    %v1666 = vpop.f32.mrb[0].mxu0
    %v1667 = vadd.f32 0.0, %v1666
    %v1668 = vpop.f32.mrb[0].mxu0
    %v1669 = vpop.f32.mrb[0].mxu0
    %1670 = vdwg.mxu0
    %v1671 = vadd.f32 %v857, %v1542
    %v1672 = vadd.f32 %v858, %v1544
    %v1673 = vadd.f32 %v859, %v1583
    %v1674 = vadd.f32 %v860, %v1585
    %v1675 = vadd.f32 %v861, %v1624
    %v1676 = vadd.f32 %v862, %v1626
    %v1677 = vadd.f32 %v863, %v1665
    %v1678 = vadd.f32 %v864, %v1667
    %v1679 = vtanh.pop %v1671
    %v1680 = vtanh.pop %v1672
    %v1681 = vtanh.pop %v1673
    %v1682 = vtanh.pop %v1674
    %v1683 = vtanh.pop %v1675
    %v1684 = vtanh.pop %v1676
    %v1685 = vtanh.pop %v1677
    %v1686 = vtanh.pop %v1678
    %v1687 = vmul.f32 %v1679, 0.5
    %v1688 = vmul.f32 %v1683, 0.5
    %v1689 = vadd.f32 %v1687, 0.5
    %v1690 = vadd.f32 %v1688, 0.5
    %v1691 = vmul.f32 %v1680, 0.5
    %v1692 = vmul.f32 %v1684, 0.5
    %v1693 = vadd.f32 %v1691, 0.5
    %v1694 = vadd.f32 %v1692, 0.5
    %v1695 = vmul.f32 %v1682, 0.5
    %v1696 = vmul.f32 %v1686, 0.5
    %v1697 = vadd.f32 %v1695, 0.5
    %v1698 = vadd.f32 %v1696, 0.5
    %v1699 = vmul.f32 %v1693, %v849
    %v1700 = vmul.f32 %v1694, %v850
    %v1701 = vmul.f32 %v1689, %v1681
    %v1702 = vmul.f32 %v1690, %v1685
    %v1703 = vadd.f32 %v1699, %v1701
    %v1704 = vadd.f32 %v1700, %v1702
    %v1705 = vtanh.pop %v1703
    %v1706 = vtanh.pop %v1704
    %v1707 = vmul.f32 %v1697, %v1705
    %v1708 = vmul.f32 %v1698, %v1706
    %1709 = vst [vmem:[#allocation3 + $0x10] sm:$0xff] %v1707
    %1710 = vst [vmem:[#allocation3 + $0x68] sm:$0xff] %v1708
    %v1711 = vld [vmem:[#allocation2 + $0x80] sm:$0xff]
    %v1712 = vld [vmem:[#allocation2 + $0x88] sm:$0xff]
    %v1713 = vld [vmem:[#allocation2 + $0x90] sm:$0xff]
    %v1714 = vld [vmem:[#allocation2 + $0x98] sm:$0xff]
    %v1715 = vld [vmem:[#allocation2 + $0x160] sm:$0xff]
    %v1716 = vld [vmem:[#allocation2 + $0x168] sm:$0xff]
    %v1717 = vld [vmem:[#allocation2 + $0x170] sm:$0xff]
    %v1718 = vld [vmem:[#allocation2 + $0x178] sm:$0xff]
    %v1719 = vpack.c.bf16 %v1707, %v1707
    %v1720 = vpack.c.bf16 %v1708, %v1708
    %1721 = vmatprep.subr.bf16.mxu0 %v1252
    %1722 = vmatpush1.bf16.msra.mxu0 %v1251
    %1723 = vmatprep.subr.bf16.mxu0 %v1260
    %1724 = vmatpush1.bf16.msra.mxu0 %v1259
    %1725 = vmatprep.subr.bf16.mxu0 %v1268
    %1726 = vmatpush1.bf16.msra.mxu0 %v1267
    %1727 = vmatprep.subr.bf16.mxu0 %v1276
    %1728 = vmatpush1.bf16.msra.mxu0 %v1275
    %1729 = vmatprep.subr.bf16.mxu0 %v1284
    %1730 = vmatpush1.bf16.msra.mxu0 %v1283
    %1731 = vmatprep.subr.bf16.mxu0 %v1292
    %1732 = vmatpush1.bf16.msra.mxu0 %v1291
    %1733 = vmatprep.subr.bf16.mxu0 %v1300
    %1734 = vmatpush1.bf16.msra.mxu0 %v1299
    %1735 = vmatprep.subr.bf16.mxu0 %v1308
    %1736 = vmatpush1.bf16.msra.mxu0 %v1307
    %1737 = vmatprep.subr.bf16.mxu0 %v1316
    %1738 = vmatpush1.bf16.msra.mxu0 %v1315
    %1739 = vmatprep.subr.bf16.mxu0 %v1324
    %1740 = vmatpush1.bf16.msra.mxu0 %v1323
    %1741 = vmatprep.subr.bf16.mxu0 %v1332
    %1742 = vmatpush1.bf16.msra.mxu0 %v1331
    %1743 = vmatprep.subr.bf16.mxu0 %v1340
    %1744 = vmatpush1.bf16.msra.mxu0 %v1339
    %1745 = vmatprep.subr.bf16.mxu0 %v1348
    %1746 = vmatpush1.bf16.msra.mxu0 %v1347
    %1747 = vmatprep.subr.bf16.mxu0 %v1356
    %1748 = vmatpush1.bf16.msra.mxu0 %v1355
    %1749 = vmatprep.subr.bf16.mxu0 %v1364
    %1750 = vmatpush1.bf16.msra.mxu0 %v1363
    %1751 = vmatprep.subr.bf16.mxu0 %v1372
    %1752 = vmatpush1.bf16.msra.mxu0 %v1371
    %1753 = vmatprep.mubr.bf16.mxu0 %v1720
    %1754 = vmatmul.mubr.bf16.gmra.mrb[0].mxu0 %v1719
    %v1755 = vpop.f32.mrb[0].mxu0
    %v1756 = vadd.f32 0.0, %v1755
    %v1757 = vpop.f32.mrb[0].mxu0
    %v1758 = vadd.f32 0.0, %v1757
    %v1759 = vpop.f32.mrb[0].mxu0
    %v1760 = vpop.f32.mrb[0].mxu0
    %1761 = vdwg.mxu0
    %1762 = vmatprep.subr.bf16.mxu0 %v1254
    %1763 = vmatpush1.bf16.msra.mxu0 %v1253
    %1764 = vmatprep.subr.bf16.mxu0 %v1262
    %1765 = vmatpush1.bf16.msra.mxu0 %v1261
    %1766 = vmatprep.subr.bf16.mxu0 %v1270
    %1767 = vmatpush1.bf16.msra.mxu0 %v1269
    %1768 = vmatprep.subr.bf16.mxu0 %v1278
    %1769 = vmatpush1.bf16.msra.mxu0 %v1277
    %1770 = vmatprep.subr.bf16.mxu0 %v1286
    %1771 = vmatpush1.bf16.msra.mxu0 %v1285
    %1772 = vmatprep.subr.bf16.mxu0 %v1294
    %1773 = vmatpush1.bf16.msra.mxu0 %v1293
    %1774 = vmatprep.subr.bf16.mxu0 %v1302
    %1775 = vmatpush1.bf16.msra.mxu0 %v1301
    %1776 = vmatprep.subr.bf16.mxu0 %v1310
    %1777 = vmatpush1.bf16.msra.mxu0 %v1309
    %1778 = vmatprep.subr.bf16.mxu0 %v1318
    %1779 = vmatpush1.bf16.msra.mxu0 %v1317
    %1780 = vmatprep.subr.bf16.mxu0 %v1326
    %1781 = vmatpush1.bf16.msra.mxu0 %v1325
    %1782 = vmatprep.subr.bf16.mxu0 %v1334
    %1783 = vmatpush1.bf16.msra.mxu0 %v1333
    %1784 = vmatprep.subr.bf16.mxu0 %v1342
    %1785 = vmatpush1.bf16.msra.mxu0 %v1341
    %1786 = vmatprep.subr.bf16.mxu0 %v1350
    %1787 = vmatpush1.bf16.msra.mxu0 %v1349
    %1788 = vmatprep.subr.bf16.mxu0 %v1358
    %1789 = vmatpush1.bf16.msra.mxu0 %v1357
    %1790 = vmatprep.subr.bf16.mxu0 %v1366
    %1791 = vmatpush1.bf16.msra.mxu0 %v1365
    %1792 = vmatprep.subr.bf16.mxu0 %v1374
    %1793 = vmatpush1.bf16.msra.mxu0 %v1373
    %1794 = vmatprep.mubr.bf16.mxu0 %v1720
    %1795 = vmatmul.mubr.bf16.gmra.mrb[0].mxu0 %v1719
    %v1796 = vpop.f32.mrb[0].mxu0
    %v1797 = vadd.f32 0.0, %v1796
    %v1798 = vpop.f32.mrb[0].mxu0
    %v1799 = vadd.f32 0.0, %v1798
    %v1800 = vpop.f32.mrb[0].mxu0
    %v1801 = vpop.f32.mrb[0].mxu0
    %1802 = vdwg.mxu0
    %1803 = vmatprep.subr.bf16.mxu0 %v1256
    %1804 = vmatpush1.bf16.msra.mxu0 %v1255
    %1805 = vmatprep.subr.bf16.mxu0 %v1264
    %1806 = vmatpush1.bf16.msra.mxu0 %v1263
    %1807 = vmatprep.subr.bf16.mxu0 %v1272
    %1808 = vmatpush1.bf16.msra.mxu0 %v1271
    %1809 = vmatprep.subr.bf16.mxu0 %v1280
    %1810 = vmatpush1.bf16.msra.mxu0 %v1279
    %1811 = vmatprep.subr.bf16.mxu0 %v1288
    %1812 = vmatpush1.bf16.msra.mxu0 %v1287
    %1813 = vmatprep.subr.bf16.mxu0 %v1296
    %1814 = vmatpush1.bf16.msra.mxu0 %v1295
    %1815 = vmatprep.subr.bf16.mxu0 %v1304
    %1816 = vmatpush1.bf16.msra.mxu0 %v1303
    %1817 = vmatprep.subr.bf16.mxu0 %v1312
    %1818 = vmatpush1.bf16.msra.mxu0 %v1311
    %1819 = vmatprep.subr.bf16.mxu0 %v1320
    %1820 = vmatpush1.bf16.msra.mxu0 %v1319
    %1821 = vmatprep.subr.bf16.mxu0 %v1328
    %1822 = vmatpush1.bf16.msra.mxu0 %v1327
    %1823 = vmatprep.subr.bf16.mxu0 %v1336
    %1824 = vmatpush1.bf16.msra.mxu0 %v1335
    %1825 = vmatprep.subr.bf16.mxu0 %v1344
    %1826 = vmatpush1.bf16.msra.mxu0 %v1343
    %1827 = vmatprep.subr.bf16.mxu0 %v1352
    %1828 = vmatpush1.bf16.msra.mxu0 %v1351
    %1829 = vmatprep.subr.bf16.mxu0 %v1360
    %1830 = vmatpush1.bf16.msra.mxu0 %v1359
    %1831 = vmatprep.subr.bf16.mxu0 %v1368
    %1832 = vmatpush1.bf16.msra.mxu0 %v1367
    %1833 = vmatprep.subr.bf16.mxu0 %v1376
    %1834 = vmatpush1.bf16.msra.mxu0 %v1375
    %1835 = vmatprep.mubr.bf16.mxu0 %v1720
    %1836 = vmatmul.mubr.bf16.gmra.mrb[0].mxu0 %v1719
    %v1837 = vpop.f32.mrb[0].mxu0
    %v1838 = vadd.f32 0.0, %v1837
    %v1839 = vpop.f32.mrb[0].mxu0
    %v1840 = vadd.f32 0.0, %v1839
    %v1841 = vpop.f32.mrb[0].mxu0
    %v1842 = vpop.f32.mrb[0].mxu0
    %1843 = vdwg.mxu0
    %1844 = vmatprep.subr.bf16.mxu0 %v1258
    %1845 = vmatpush1.bf16.msra.mxu0 %v1257
    %1846 = vmatprep.subr.bf16.mxu0 %v1266
    %1847 = vmatpush1.bf16.msra.mxu0 %v1265
    %1848 = vmatprep.subr.bf16.mxu0 %v1274
    %1849 = vmatpush1.bf16.msra.mxu0 %v1273
    %1850 = vmatprep.subr.bf16.mxu0 %v1282
    %1851 = vmatpush1.bf16.msra.mxu0 %v1281
    %1852 = vmatprep.subr.bf16.mxu0 %v1290
    %1853 = vmatpush1.bf16.msra.mxu0 %v1289
    %1854 = vmatprep.subr.bf16.mxu0 %v1298
    %1855 = vmatpush1.bf16.msra.mxu0 %v1297
    %1856 = vmatprep.subr.bf16.mxu0 %v1306
    %1857 = vmatpush1.bf16.msra.mxu0 %v1305
    %1858 = vmatprep.subr.bf16.mxu0 %v1314
    %1859 = vmatpush1.bf16.msra.mxu0 %v1313
    %1860 = vmatprep.subr.bf16.mxu0 %v1322
    %1861 = vmatpush1.bf16.msra.mxu0 %v1321
    %1862 = vmatprep.subr.bf16.mxu0 %v1330
    %1863 = vmatpush1.bf16.msra.mxu0 %v1329
    %1864 = vmatprep.subr.bf16.mxu0 %v1338
    %1865 = vmatpush1.bf16.msra.mxu0 %v1337
    %1866 = vmatprep.subr.bf16.mxu0 %v1346
    %1867 = vmatpush1.bf16.msra.mxu0 %v1345
    %1868 = vmatprep.subr.bf16.mxu0 %v1354
    %1869 = vmatpush1.bf16.msra.mxu0 %v1353
    %1870 = vmatprep.subr.bf16.mxu0 %v1362
    %1871 = vmatpush1.bf16.msra.mxu0 %v1361
    %1872 = vmatprep.subr.bf16.mxu0 %v1370
    %1873 = vmatpush1.bf16.msra.mxu0 %v1369
    %1874 = vmatprep.subr.bf16.mxu0 %v1378
    %1875 = vmatpush1.bf16.msra.mxu0 %v1377
    %1876 = vmatprep.mubr.bf16.mxu0 %v1720
    %1877 = vmatmul.mubr.bf16.gmra.mrb[0].mxu0 %v1719
    %v1878 = vpop.f32.mrb[0].mxu0
    %v1879 = vadd.f32 0.0, %v1878
    %v1880 = vpop.f32.mrb[0].mxu0
    %v1881 = vadd.f32 0.0, %v1880
    %v1882 = vpop.f32.mrb[0].mxu0
    %v1883 = vpop.f32.mrb[0].mxu0
    %1884 = vdwg.mxu0
    %v1885 = vadd.f32 %v1711, %v1756
    %v1886 = vadd.f32 %v1712, %v1758
    %v1887 = vadd.f32 %v1713, %v1797
    %v1888 = vadd.f32 %v1714, %v1799
    %v1889 = vadd.f32 %v1715, %v1838
    %v1890 = vadd.f32 %v1716, %v1840
    %v1891 = vadd.f32 %v1717, %v1879
    %v1892 = vadd.f32 %v1718, %v1881
    %v1893 = vtanh.pop %v1885
    %v1894 = vtanh.pop %v1886
    %v1895 = vtanh.pop %v1887
    %v1896 = vtanh.pop %v1888
    %v1897 = vtanh.pop %v1889
    %v1898 = vtanh.pop %v1890
    %v1899 = vtanh.pop %v1891
    %v1900 = vtanh.pop %v1892
    %v1901 = vmul.f32 %v1893, 0.5
    %v1902 = vmul.f32 %v1897, 0.5
    %v1903 = vadd.f32 %v1901, 0.5
    %v1904 = vadd.f32 %v1902, 0.5
    %v1905 = vmul.f32 %v1894, 0.5
    %v1906 = vmul.f32 %v1898, 0.5
    %v1907 = vadd.f32 %v1905, 0.5
    %v1908 = vadd.f32 %v1906, 0.5
    %v1909 = vmul.f32 %v1896, 0.5
    %v1910 = vmul.f32 %v1900, 0.5
    %v1911 = vadd.f32 %v1909, 0.5
    %v1912 = vadd.f32 %v1910, 0.5
    %v1913 = vmul.f32 %v1907, %v1703
    %v1914 = vmul.f32 %v1908, %v1704
    %v1915 = vmul.f32 %v1903, %v1895
    %v1916 = vmul.f32 %v1904, %v1899
    %v1917 = vadd.f32 %v1913, %v1915
    %v1918 = vadd.f32 %v1914, %v1916
    %v1919 = vtanh.pop %v1917
    %v1920 = vtanh.pop %v1918
    %v1921 = vmul.f32 %v1911, %v1919
    %v1922 = vmul.f32 %v1912, %v1920
    %1923 = vst [vmem:[#allocation3 + $0x20] sm:$0xff] %v1921
    %1924 = vst [vmem:[#allocation3 + $0x58] sm:$0xff] %v1922
    %v1925 = vld [vmem:[#allocation2 + $0xc0] sm:$0xff]
    %v1926 = vld [vmem:[#allocation2 + $0xc8] sm:$0xff]
    %v1927 = vld [vmem:[#allocation2 + $0xd0] sm:$0xff]
    %v1928 = vld [vmem:[#allocation2 + $0xd8] sm:$0xff]
    %v1929 = vld [vmem:[#allocation2 + $0x120] sm:$0xff]
    %v1930 = vld [vmem:[#allocation2 + $0x128] sm:$0xff]
    %v1931 = vld [vmem:[#allocation2 + $0x130] sm:$0xff]
    %v1932 = vld [vmem:[#allocation2 + $0x138] sm:$0xff]
    %v1933 = vpack.c.bf16 %v1921, %v1921
    %v1934 = vpack.c.bf16 %v1922, %v1922
    %1935 = vmatprep.subr.bf16.mxu0 %v1252
    %1936 = vmatpush1.bf16.msra.mxu0 %v1251
    %1937 = vmatprep.subr.bf16.mxu0 %v1260
    %1938 = vmatpush1.bf16.msra.mxu0 %v1259
    %1939 = vmatprep.subr.bf16.mxu0 %v1268
    %1940 = vmatpush1.bf16.msra.mxu0 %v1267
    %1941 = vmatprep.subr.bf16.mxu0 %v1276
    %1942 = vmatpush1.bf16.msra.mxu0 %v1275
    %1943 = vmatprep.subr.bf16.mxu0 %v1284
    %1944 = vmatpush1.bf16.msra.mxu0 %v1283
    %1945 = vmatprep.subr.bf16.mxu0 %v1292
    %1946 = vmatpush1.bf16.msra.mxu0 %v1291
    %1947 = vmatprep.subr.bf16.mxu0 %v1300
    %1948 = vmatpush1.bf16.msra.mxu0 %v1299
    %1949 = vmatprep.subr.bf16.mxu0 %v1308
    %1950 = vmatpush1.bf16.msra.mxu0 %v1307
    %1951 = vmatprep.subr.bf16.mxu0 %v1316
    %1952 = vmatpush1.bf16.msra.mxu0 %v1315
    %1953 = vmatprep.subr.bf16.mxu0 %v1324
    %1954 = vmatpush1.bf16.msra.mxu0 %v1323
    %1955 = vmatprep.subr.bf16.mxu0 %v1332
    %1956 = vmatpush1.bf16.msra.mxu0 %v1331
    %1957 = vmatprep.subr.bf16.mxu0 %v1340
    %1958 = vmatpush1.bf16.msra.mxu0 %v1339
    %1959 = vmatprep.subr.bf16.mxu0 %v1348
    %1960 = vmatpush1.bf16.msra.mxu0 %v1347
    %1961 = vmatprep.subr.bf16.mxu0 %v1356
    %1962 = vmatpush1.bf16.msra.mxu0 %v1355
    %1963 = vmatprep.subr.bf16.mxu0 %v1364
    %1964 = vmatpush1.bf16.msra.mxu0 %v1363
    %1965 = vmatprep.subr.bf16.mxu0 %v1372
    %1966 = vmatpush1.bf16.msra.mxu0 %v1371
    %1967 = vmatprep.mubr.bf16.mxu0 %v1934
    %1968 = vmatmul.mubr.bf16.gmra.mrb[0].mxu0 %v1933
    %v1969 = vpop.f32.mrb[0].mxu0
    %v1970 = vadd.f32 0.0, %v1969
    %v1971 = vpop.f32.mrb[0].mxu0
    %v1972 = vadd.f32 0.0, %v1971
    %v1973 = vpop.f32.mrb[0].mxu0
    %v1974 = vpop.f32.mrb[0].mxu0
    %1975 = vdwg.mxu0
    %1976 = vmatprep.subr.bf16.mxu0 %v1254
    %1977 = vmatpush1.bf16.msra.mxu0 %v1253
    %1978 = vmatprep.subr.bf16.mxu0 %v1262
    %1979 = vmatpush1.bf16.msra.mxu0 %v1261
    %1980 = vmatprep.subr.bf16.mxu0 %v1270
    %1981 = vmatpush1.bf16.msra.mxu0 %v1269
    %1982 = vmatprep.subr.bf16.mxu0 %v1278
    %1983 = vmatpush1.bf16.msra.mxu0 %v1277
    %1984 = vmatprep.subr.bf16.mxu0 %v1286
    %1985 = vmatpush1.bf16.msra.mxu0 %v1285
    %1986 = vmatprep.subr.bf16.mxu0 %v1294
    %1987 = vmatpush1.bf16.msra.mxu0 %v1293
    %1988 = vmatprep.subr.bf16.mxu0 %v1302
    %1989 = vmatpush1.bf16.msra.mxu0 %v1301
    %1990 = vmatprep.subr.bf16.mxu0 %v1310
    %1991 = vmatpush1.bf16.msra.mxu0 %v1309
    %1992 = vmatprep.subr.bf16.mxu0 %v1318
    %1993 = vmatpush1.bf16.msra.mxu0 %v1317
    %1994 = vmatprep.subr.bf16.mxu0 %v1326
    %1995 = vmatpush1.bf16.msra.mxu0 %v1325
    %1996 = vmatprep.subr.bf16.mxu0 %v1334
    %1997 = vmatpush1.bf16.msra.mxu0 %v1333
    %1998 = vmatprep.subr.bf16.mxu0 %v1342
    %1999 = vmatpush1.bf16.msra.mxu0 %v1341
    %2000 = vmatprep.subr.bf16.mxu0 %v1350
    %2001 = vmatpush1.bf16.msra.mxu0 %v1349
    %2002 = vmatprep.subr.bf16.mxu0 %v1358
    %2003 = vmatpush1.bf16.msra.mxu0 %v1357
    %2004 = vmatprep.subr.bf16.mxu0 %v1366
    %2005 = vmatpush1.bf16.msra.mxu0 %v1365
    %2006 = vmatprep.subr.bf16.mxu0 %v1374
    %2007 = vmatpush1.bf16.msra.mxu0 %v1373
    %2008 = vmatprep.mubr.bf16.mxu0 %v1934
    %2009 = vmatmul.mubr.bf16.gmra.mrb[0].mxu0 %v1933
    %v2010 = vpop.f32.mrb[0].mxu0
    %v2011 = vadd.f32 0.0, %v2010
    %v2012 = vpop.f32.mrb[0].mxu0
    %v2013 = vadd.f32 0.0, %v2012
    %v2014 = vpop.f32.mrb[0].mxu0
    %v2015 = vpop.f32.mrb[0].mxu0
    %2016 = vdwg.mxu0
    %2017 = vmatprep.subr.bf16.mxu0 %v1256
    %2018 = vmatpush1.bf16.msra.mxu0 %v1255
    %2019 = vmatprep.subr.bf16.mxu0 %v1264
    %2020 = vmatpush1.bf16.msra.mxu0 %v1263
    %2021 = vmatprep.subr.bf16.mxu0 %v1272
    %2022 = vmatpush1.bf16.msra.mxu0 %v1271
    %2023 = vmatprep.subr.bf16.mxu0 %v1280
    %2024 = vmatpush1.bf16.msra.mxu0 %v1279
    %2025 = vmatprep.subr.bf16.mxu0 %v1288
    %2026 = vmatpush1.bf16.msra.mxu0 %v1287
    %2027 = vmatprep.subr.bf16.mxu0 %v1296
    %2028 = vmatpush1.bf16.msra.mxu0 %v1295
    %2029 = vmatprep.subr.bf16.mxu0 %v1304
    %2030 = vmatpush1.bf16.msra.mxu0 %v1303
    %2031 = vmatprep.subr.bf16.mxu0 %v1312
    %2032 = vmatpush1.bf16.msra.mxu0 %v1311
    %2033 = vmatprep.subr.bf16.mxu0 %v1320
    %2034 = vmatpush1.bf16.msra.mxu0 %v1319
    %2035 = vmatprep.subr.bf16.mxu0 %v1328
    %2036 = vmatpush1.bf16.msra.mxu0 %v1327
    %2037 = vmatprep.subr.bf16.mxu0 %v1336
    %2038 = vmatpush1.bf16.msra.mxu0 %v1335
    %2039 = vmatprep.subr.bf16.mxu0 %v1344
    %2040 = vmatpush1.bf16.msra.mxu0 %v1343
    %2041 = vmatprep.subr.bf16.mxu0 %v1352
    %2042 = vmatpush1.bf16.msra.mxu0 %v1351
    %2043 = vmatprep.subr.bf16.mxu0 %v1360
    %2044 = vmatpush1.bf16.msra.mxu0 %v1359
    %2045 = vmatprep.subr.bf16.mxu0 %v1368
    %2046 = vmatpush1.bf16.msra.mxu0 %v1367
    %2047 = vmatprep.subr.bf16.mxu0 %v1376
    %2048 = vmatpush1.bf16.msra.mxu0 %v1375
    %2049 = vmatprep.mubr.bf16.mxu0 %v1934
    %2050 = vmatmul.mubr.bf16.gmra.mrb[0].mxu0 %v1933
    %v2051 = vpop.f32.mrb[0].mxu0
    %v2052 = vadd.f32 0.0, %v2051
    %v2053 = vpop.f32.mrb[0].mxu0
    %v2054 = vadd.f32 0.0, %v2053
    %v2055 = vpop.f32.mrb[0].mxu0
    %v2056 = vpop.f32.mrb[0].mxu0
    %2057 = vdwg.mxu0
    %2058 = vmatprep.subr.bf16.mxu0 %v1258
    %2059 = vmatpush1.bf16.msra.mxu0 %v1257
    %2060 = vmatprep.subr.bf16.mxu0 %v1266
    %2061 = vmatpush1.bf16.msra.mxu0 %v1265
    %2062 = vmatprep.subr.bf16.mxu0 %v1274
    %2063 = vmatpush1.bf16.msra.mxu0 %v1273
    %2064 = vmatprep.subr.bf16.mxu0 %v1282
    %2065 = vmatpush1.bf16.msra.mxu0 %v1281
    %2066 = vmatprep.subr.bf16.mxu0 %v1290
    %2067 = vmatpush1.bf16.msra.mxu0 %v1289
    %2068 = vmatprep.subr.bf16.mxu0 %v1298
    %2069 = vmatpush1.bf16.msra.mxu0 %v1297
    %2070 = vmatprep.subr.bf16.mxu0 %v1306
    %2071 = vmatpush1.bf16.msra.mxu0 %v1305
    %2072 = vmatprep.subr.bf16.mxu0 %v1314
    %2073 = vmatpush1.bf16.msra.mxu0 %v1313
    %2074 = vmatprep.subr.bf16.mxu0 %v1322
    %2075 = vmatpush1.bf16.msra.mxu0 %v1321
    %2076 = vmatprep.subr.bf16.mxu0 %v1330
    %2077 = vmatpush1.bf16.msra.mxu0 %v1329
    %2078 = vmatprep.subr.bf16.mxu0 %v1338
    %2079 = vmatpush1.bf16.msra.mxu0 %v1337
    %2080 = vmatprep.subr.bf16.mxu0 %v1346
    %2081 = vmatpush1.bf16.msra.mxu0 %v1345
    %2082 = vmatprep.subr.bf16.mxu0 %v1354
    %2083 = vmatpush1.bf16.msra.mxu0 %v1353
    %2084 = vmatprep.subr.bf16.mxu0 %v1362
    %2085 = vmatpush1.bf16.msra.mxu0 %v1361
    %2086 = vmatprep.subr.bf16.mxu0 %v1370
    %2087 = vmatpush1.bf16.msra.mxu0 %v1369
    %2088 = vmatprep.subr.bf16.mxu0 %v1378
    %2089 = vmatpush1.bf16.msra.mxu0 %v1377
    %2090 = vmatprep.mubr.bf16.mxu0 %v1934
    %2091 = vmatmul.mubr.bf16.gmra.mrb[0].mxu0 %v1933
    %v2092 = vpop.f32.mrb[0].mxu0
    %v2093 = vadd.f32 0.0, %v2092
    %v2094 = vpop.f32.mrb[0].mxu0
    %v2095 = vadd.f32 0.0, %v2094
    %v2096 = vpop.f32.mrb[0].mxu0
    %v2097 = vpop.f32.mrb[0].mxu0
    %2098 = vdwg.mxu0
    %v2099 = vadd.f32 %v1925, %v1970
    %v2100 = vadd.f32 %v1926, %v1972
    %v2101 = vadd.f32 %v1927, %v2011
    %v2102 = vadd.f32 %v1928, %v2013
    %v2103 = vadd.f32 %v1929, %v2052
    %v2104 = vadd.f32 %v1930, %v2054
    %v2105 = vadd.f32 %v1931, %v2093
    %v2106 = vadd.f32 %v1932, %v2095
    %v2107 = vtanh.pop %v2099
    %v2108 = vtanh.pop %v2100
    %v2109 = vtanh.pop %v2101
    %v2110 = vtanh.pop %v2102
    %v2111 = vtanh.pop %v2103
    %v2112 = vtanh.pop %v2104
    %v2113 = vtanh.pop %v2105
    %v2114 = vtanh.pop %v2106
    %v2115 = vmul.f32 %v2107, 0.5
    %v2116 = vmul.f32 %v2111, 0.5
    %v2117 = vadd.f32 %v2115, 0.5
    %v2118 = vadd.f32 %v2116, 0.5
    %v2119 = vmul.f32 %v2108, 0.5
    %v2120 = vmul.f32 %v2112, 0.5
    %v2121 = vadd.f32 %v2119, 0.5
    %v2122 = vadd.f32 %v2120, 0.5
    %v2123 = vmul.f32 %v2110, 0.5
    %v2124 = vmul.f32 %v2114, 0.5
    %v2125 = vadd.f32 %v2123, 0.5
    %v2126 = vadd.f32 %v2124, 0.5
    %v2127 = vmul.f32 %v2121, %v1917
    %v2128 = vmul.f32 %v2122, %v1918
    %v2129 = vmul.f32 %v2117, %v2109
    %v2130 = vmul.f32 %v2118, %v2113
    %v2131 = vadd.f32 %v2127, %v2129
    %v2132 = vadd.f32 %v2128, %v2130
    %v2133 = vtanh.pop %v2131
    %v2134 = vtanh.pop %v2132
    %v2135 = vmul.f32 %v2125, %v2133
    %v2136 = vmul.f32 %v2126, %v2134
    %2137 = vst [vmem:[#allocation3 + $0x30] sm:$0xff] %v2135
    %2138 = vst [vmem:[#allocation3 + $0x48] sm:$0xff] %v2136
    %v2139 = vld [vmem:[#allocation2 + $0x100] sm:$0xff]
    %v2140 = vld [vmem:[#allocation2 + $0x108] sm:$0xff]
    %v2141 = vld [vmem:[#allocation2 + $0x110] sm:$0xff]
    %v2142 = vld [vmem:[#allocation2 + $0x118] sm:$0xff]
    %v2143 = vld [vmem:[#allocation2 + $0xe0] sm:$0xff]
    %v2144 = vld [vmem:[#allocation2 + $0xe8] sm:$0xff]
    %v2145 = vld [vmem:[#allocation2 + $0xf0] sm:$0xff]
    %v2146 = vld [vmem:[#allocation2 + $0xf8] sm:$0xff]
    %v2147 = vpack.c.bf16 %v2135, %v2135
    %v2148 = vpack.c.bf16 %v2136, %v2136
    %2149 = vmatprep.subr.bf16.mxu0 %v1252
    %2150 = vmatpush1.bf16.msra.mxu0 %v1251
    %2151 = vmatprep.subr.bf16.mxu0 %v1260
    %2152 = vmatpush1.bf16.msra.mxu0 %v1259
    %2153 = vmatprep.subr.bf16.mxu0 %v1268
    %2154 = vmatpush1.bf16.msra.mxu0 %v1267
    %2155 = vmatprep.subr.bf16.mxu0 %v1276
    %2156 = vmatpush1.bf16.msra.mxu0 %v1275
    %2157 = vmatprep.subr.bf16.mxu0 %v1284
    %2158 = vmatpush1.bf16.msra.mxu0 %v1283
    %2159 = vmatprep.subr.bf16.mxu0 %v1292
    %2160 = vmatpush1.bf16.msra.mxu0 %v1291
    %2161 = vmatprep.subr.bf16.mxu0 %v1300
    %2162 = vmatpush1.bf16.msra.mxu0 %v1299
    %2163 = vmatprep.subr.bf16.mxu0 %v1308
    %2164 = vmatpush1.bf16.msra.mxu0 %v1307
    %2165 = vmatprep.subr.bf16.mxu0 %v1316
    %2166 = vmatpush1.bf16.msra.mxu0 %v1315
    %2167 = vmatprep.subr.bf16.mxu0 %v1324
    %2168 = vmatpush1.bf16.msra.mxu0 %v1323
    %2169 = vmatprep.subr.bf16.mxu0 %v1332
    %2170 = vmatpush1.bf16.msra.mxu0 %v1331
    %2171 = vmatprep.subr.bf16.mxu0 %v1340
    %2172 = vmatpush1.bf16.msra.mxu0 %v1339
    %2173 = vmatprep.subr.bf16.mxu0 %v1348
    %2174 = vmatpush1.bf16.msra.mxu0 %v1347
    %2175 = vmatprep.subr.bf16.mxu0 %v1356
    %2176 = vmatpush1.bf16.msra.mxu0 %v1355
    %2177 = vmatprep.subr.bf16.mxu0 %v1364
    %2178 = vmatpush1.bf16.msra.mxu0 %v1363
    %2179 = vmatprep.subr.bf16.mxu0 %v1372
    %2180 = vmatpush1.bf16.msra.mxu0 %v1371
    %2181 = vmatprep.mubr.bf16.mxu0 %v2148
    %2182 = vmatmul.mubr.bf16.gmra.mrb[0].mxu0 %v2147
    %v2183 = vpop.f32.mrb[0].mxu0
    %v2184 = vadd.f32 0.0, %v2183
    %v2185 = vpop.f32.mrb[0].mxu0
    %v2186 = vadd.f32 0.0, %v2185
    %v2187 = vpop.f32.mrb[0].mxu0
    %v2188 = vpop.f32.mrb[0].mxu0
    %2189 = vdwg.mxu0
    %2190 = vmatprep.subr.bf16.mxu0 %v1254
    %2191 = vmatpush1.bf16.msra.mxu0 %v1253
    %2192 = vmatprep.subr.bf16.mxu0 %v1262
    %2193 = vmatpush1.bf16.msra.mxu0 %v1261
    %2194 = vmatprep.subr.bf16.mxu0 %v1270
    %2195 = vmatpush1.bf16.msra.mxu0 %v1269
    %2196 = vmatprep.subr.bf16.mxu0 %v1278
    %2197 = vmatpush1.bf16.msra.mxu0 %v1277
    %2198 = vmatprep.subr.bf16.mxu0 %v1286
    %2199 = vmatpush1.bf16.msra.mxu0 %v1285
    %2200 = vmatprep.subr.bf16.mxu0 %v1294
    %2201 = vmatpush1.bf16.msra.mxu0 %v1293
    %2202 = vmatprep.subr.bf16.mxu0 %v1302
    %2203 = vmatpush1.bf16.msra.mxu0 %v1301
    %2204 = vmatprep.subr.bf16.mxu0 %v1310
    %2205 = vmatpush1.bf16.msra.mxu0 %v1309
    %2206 = vmatprep.subr.bf16.mxu0 %v1318
    %2207 = vmatpush1.bf16.msra.mxu0 %v1317
    %2208 = vmatprep.subr.bf16.mxu0 %v1326
    %2209 = vmatpush1.bf16.msra.mxu0 %v1325
    %2210 = vmatprep.subr.bf16.mxu0 %v1334
    %2211 = vmatpush1.bf16.msra.mxu0 %v1333
    %2212 = vmatprep.subr.bf16.mxu0 %v1342
    %2213 = vmatpush1.bf16.msra.mxu0 %v1341
    %2214 = vmatprep.subr.bf16.mxu0 %v1350
    %2215 = vmatpush1.bf16.msra.mxu0 %v1349
    %2216 = vmatprep.subr.bf16.mxu0 %v1358
    %2217 = vmatpush1.bf16.msra.mxu0 %v1357
    %2218 = vmatprep.subr.bf16.mxu0 %v1366
    %2219 = vmatpush1.bf16.msra.mxu0 %v1365
    %2220 = vmatprep.subr.bf16.mxu0 %v1374
    %2221 = vmatpush1.bf16.msra.mxu0 %v1373
    %2222 = vmatprep.mubr.bf16.mxu0 %v2148
    %2223 = vmatmul.mubr.bf16.gmra.mrb[0].mxu0 %v2147
    %v2224 = vpop.f32.mrb[0].mxu0
    %v2225 = vadd.f32 0.0, %v2224
    %v2226 = vpop.f32.mrb[0].mxu0
    %v2227 = vadd.f32 0.0, %v2226
    %v2228 = vpop.f32.mrb[0].mxu0
    %v2229 = vpop.f32.mrb[0].mxu0
    %2230 = vdwg.mxu0
    %2231 = vmatprep.subr.bf16.mxu0 %v1256
    %2232 = vmatpush1.bf16.msra.mxu0 %v1255
    %2233 = vmatprep.subr.bf16.mxu0 %v1264
    %2234 = vmatpush1.bf16.msra.mxu0 %v1263
    %2235 = vmatprep.subr.bf16.mxu0 %v1272
    %2236 = vmatpush1.bf16.msra.mxu0 %v1271
    %2237 = vmatprep.subr.bf16.mxu0 %v1280
    %2238 = vmatpush1.bf16.msra.mxu0 %v1279
    %2239 = vmatprep.subr.bf16.mxu0 %v1288
    %2240 = vmatpush1.bf16.msra.mxu0 %v1287
    %2241 = vmatprep.subr.bf16.mxu0 %v1296
    %2242 = vmatpush1.bf16.msra.mxu0 %v1295
    %2243 = vmatprep.subr.bf16.mxu0 %v1304
    %2244 = vmatpush1.bf16.msra.mxu0 %v1303
    %2245 = vmatprep.subr.bf16.mxu0 %v1312
    %2246 = vmatpush1.bf16.msra.mxu0 %v1311
    %2247 = vmatprep.subr.bf16.mxu0 %v1320
    %2248 = vmatpush1.bf16.msra.mxu0 %v1319
    %2249 = vmatprep.subr.bf16.mxu0 %v1328
    %2250 = vmatpush1.bf16.msra.mxu0 %v1327
    %2251 = vmatprep.subr.bf16.mxu0 %v1336
    %2252 = vmatpush1.bf16.msra.mxu0 %v1335
    %2253 = vmatprep.subr.bf16.mxu0 %v1344
    %2254 = vmatpush1.bf16.msra.mxu0 %v1343
    %2255 = vmatprep.subr.bf16.mxu0 %v1352
    %2256 = vmatpush1.bf16.msra.mxu0 %v1351
    %2257 = vmatprep.subr.bf16.mxu0 %v1360
    %2258 = vmatpush1.bf16.msra.mxu0 %v1359
    %2259 = vmatprep.subr.bf16.mxu0 %v1368
    %2260 = vmatpush1.bf16.msra.mxu0 %v1367
    %2261 = vmatprep.subr.bf16.mxu0 %v1376
    %2262 = vmatpush1.bf16.msra.mxu0 %v1375
    %2263 = vmatprep.mubr.bf16.mxu0 %v2148
    %2264 = vmatmul.mubr.bf16.gmra.mrb[0].mxu0 %v2147
    %v2265 = vpop.f32.mrb[0].mxu0
    %v2266 = vadd.f32 0.0, %v2265
    %v2267 = vpop.f32.mrb[0].mxu0
    %v2268 = vadd.f32 0.0, %v2267
    %v2269 = vpop.f32.mrb[0].mxu0
    %v2270 = vpop.f32.mrb[0].mxu0
    %2271 = vdwg.mxu0
    %2272 = vmatprep.subr.bf16.mxu0 %v1258
    %2273 = vmatpush1.bf16.msra.mxu0 %v1257
    %2274 = vmatprep.subr.bf16.mxu0 %v1266
    %2275 = vmatpush1.bf16.msra.mxu0 %v1265
    %2276 = vmatprep.subr.bf16.mxu0 %v1274
    %2277 = vmatpush1.bf16.msra.mxu0 %v1273
    %2278 = vmatprep.subr.bf16.mxu0 %v1282
    %2279 = vmatpush1.bf16.msra.mxu0 %v1281
    %2280 = vmatprep.subr.bf16.mxu0 %v1290
    %2281 = vmatpush1.bf16.msra.mxu0 %v1289
    %2282 = vmatprep.subr.bf16.mxu0 %v1298
    %2283 = vmatpush1.bf16.msra.mxu0 %v1297
    %2284 = vmatprep.subr.bf16.mxu0 %v1306
    %2285 = vmatpush1.bf16.msra.mxu0 %v1305
    %2286 = vmatprep.subr.bf16.mxu0 %v1314
    %2287 = vmatpush1.bf16.msra.mxu0 %v1313
    %2288 = vmatprep.subr.bf16.mxu0 %v1322
    %2289 = vmatpush1.bf16.msra.mxu0 %v1321
    %2290 = vmatprep.subr.bf16.mxu0 %v1330
    %2291 = vmatpush1.bf16.msra.mxu0 %v1329
    %2292 = vmatprep.subr.bf16.mxu0 %v1338
    %2293 = vmatpush1.bf16.msra.mxu0 %v1337
    %2294 = vmatprep.subr.bf16.mxu0 %v1346
    %2295 = vmatpush1.bf16.msra.mxu0 %v1345
    %2296 = vmatprep.subr.bf16.mxu0 %v1354
    %2297 = vmatpush1.bf16.msra.mxu0 %v1353
    %2298 = vmatprep.subr.bf16.mxu0 %v1362
    %2299 = vmatpush1.bf16.msra.mxu0 %v1361
    %2300 = vmatprep.subr.bf16.mxu0 %v1370
    %2301 = vmatpush1.bf16.msra.mxu0 %v1369
    %2302 = vmatprep.subr.bf16.mxu0 %v1378
    %2303 = vmatpush1.bf16.msra.mxu0 %v1377
    %2304 = vmatprep.mubr.bf16.mxu0 %v2148
    %2305 = vmatmul.mubr.bf16.gmra.mrb[0].mxu0 %v2147
    %v2306 = vpop.f32.mrb[0].mxu0
    %v2307 = vadd.f32 0.0, %v2306
    %v2308 = vpop.f32.mrb[0].mxu0
    %v2309 = vadd.f32 0.0, %v2308
    %v2310 = vpop.f32.mrb[0].mxu0
    %v2311 = vpop.f32.mrb[0].mxu0
    %2312 = vdwg.mxu0
    %v2313 = vadd.f32 %v2139, %v2184
    %v2314 = vadd.f32 %v2140, %v2186
    %v2315 = vadd.f32 %v2141, %v2225
    %v2316 = vadd.f32 %v2142, %v2227
    %v2317 = vadd.f32 %v2143, %v2266
    %v2318 = vadd.f32 %v2144, %v2268
    %v2319 = vadd.f32 %v2145, %v2307
    %v2320 = vadd.f32 %v2146, %v2309
    %v2321 = vtanh.pop %v2313
    %v2322 = vtanh.pop %v2314
    %v2323 = vtanh.pop %v2315
    %v2324 = vtanh.pop %v2316
    %v2325 = vtanh.pop %v2317
    %v2326 = vtanh.pop %v2318
    %v2327 = vtanh.pop %v2319
    %v2328 = vtanh.pop %v2320
    %v2329 = vmul.f32 %v2321, 0.5
    %v2330 = vmul.f32 %v2325, 0.5
    %v2331 = vadd.f32 %v2329, 0.5
    %v2332 = vadd.f32 %v2330, 0.5
    %v2333 = vmul.f32 %v2322, 0.5
    %v2334 = vmul.f32 %v2326, 0.5
    %v2335 = vadd.f32 %v2333, 0.5
    %v2336 = vadd.f32 %v2334, 0.5
    %v2337 = vmul.f32 %v2324, 0.5
    %v2338 = vmul.f32 %v2328, 0.5
    %v2339 = vadd.f32 %v2337, 0.5
    %v2340 = vadd.f32 %v2338, 0.5
    %v2341 = vmul.f32 %v2335, %v2131
    %v2342 = vmul.f32 %v2336, %v2132
    %v2343 = vmul.f32 %v2331, %v2323
    %v2344 = vmul.f32 %v2332, %v2327
    %v2345 = vadd.f32 %v2341, %v2343
    %v2346 = vadd.f32 %v2342, %v2344
    %v2347 = vtanh.pop %v2345
    %v2348 = vtanh.pop %v2346
    %v2349 = vmul.f32 %v2339, %v2347
    %v2350 = vmul.f32 %v2340, %v2348
    %2351 = vst [vmem:[#allocation3 + $0x40] sm:$0xff] %v2349
    %2352 = vst [vmem:[#allocation3 + $0x38] sm:$0xff] %v2350
    %v2353 = vld [vmem:[#allocation2 + $0x140] sm:$0xff]
    %v2354 = vld [vmem:[#allocation2 + $0x148] sm:$0xff]
    %v2355 = vld [vmem:[#allocation2 + $0x150] sm:$0xff]
    %v2356 = vld [vmem:[#allocation2 + $0x158] sm:$0xff]
    %v2357 = vld [vmem:[#allocation2 + $0xa0] sm:$0xff]
    %v2358 = vld [vmem:[#allocation2 + $0xa8] sm:$0xff]
    %v2359 = vld [vmem:[#allocation2 + $0xb0] sm:$0xff]
    %v2360 = vld [vmem:[#allocation2 + $0xb8] sm:$0xff]
    %v2361 = vpack.c.bf16 %v2349, %v2349
    %v2362 = vpack.c.bf16 %v2350, %v2350
    %2363 = vmatprep.subr.bf16.mxu0 %v1252
    %2364 = vmatpush1.bf16.msra.mxu0 %v1251
    %2365 = vmatprep.subr.bf16.mxu0 %v1260
    %2366 = vmatpush1.bf16.msra.mxu0 %v1259
    %2367 = vmatprep.subr.bf16.mxu0 %v1268
    %2368 = vmatpush1.bf16.msra.mxu0 %v1267
    %2369 = vmatprep.subr.bf16.mxu0 %v1276
    %2370 = vmatpush1.bf16.msra.mxu0 %v1275
    %2371 = vmatprep.subr.bf16.mxu0 %v1284
    %2372 = vmatpush1.bf16.msra.mxu0 %v1283
    %2373 = vmatprep.subr.bf16.mxu0 %v1292
    %2374 = vmatpush1.bf16.msra.mxu0 %v1291
    %2375 = vmatprep.subr.bf16.mxu0 %v1300
    %2376 = vmatpush1.bf16.msra.mxu0 %v1299
    %2377 = vmatprep.subr.bf16.mxu0 %v1308
    %2378 = vmatpush1.bf16.msra.mxu0 %v1307
    %2379 = vmatprep.subr.bf16.mxu0 %v1316
    %2380 = vmatpush1.bf16.msra.mxu0 %v1315
    %2381 = vmatprep.subr.bf16.mxu0 %v1324
    %2382 = vmatpush1.bf16.msra.mxu0 %v1323
    %2383 = vmatprep.subr.bf16.mxu0 %v1332
    %2384 = vmatpush1.bf16.msra.mxu0 %v1331
    %2385 = vmatprep.subr.bf16.mxu0 %v1340
    %2386 = vmatpush1.bf16.msra.mxu0 %v1339
    %2387 = vmatprep.subr.bf16.mxu0 %v1348
    %2388 = vmatpush1.bf16.msra.mxu0 %v1347
    %2389 = vmatprep.subr.bf16.mxu0 %v1356
    %2390 = vmatpush1.bf16.msra.mxu0 %v1355
    %2391 = vmatprep.subr.bf16.mxu0 %v1364
    %2392 = vmatpush1.bf16.msra.mxu0 %v1363
    %2393 = vmatprep.subr.bf16.mxu0 %v1372
    %2394 = vmatpush1.bf16.msra.mxu0 %v1371
    %2395 = vmatprep.mubr.bf16.mxu0 %v2362
    %2396 = vmatmul.mubr.bf16.gmra.mrb[0].mxu0 %v2361
    %v2397 = vpop.f32.mrb[0].mxu0
    %v2398 = vadd.f32 0.0, %v2397
    %v2399 = vpop.f32.mrb[0].mxu0
    %v2400 = vadd.f32 0.0, %v2399
    %v2401 = vpop.f32.mrb[0].mxu0
    %v2402 = vpop.f32.mrb[0].mxu0
    %2403 = vdwg.mxu0
    %2404 = vmatprep.subr.bf16.mxu0 %v1254
    %2405 = vmatpush1.bf16.msra.mxu0 %v1253
    %2406 = vmatprep.subr.bf16.mxu0 %v1262
    %2407 = vmatpush1.bf16.msra.mxu0 %v1261
    %2408 = vmatprep.subr.bf16.mxu0 %v1270
    %2409 = vmatpush1.bf16.msra.mxu0 %v1269
    %2410 = vmatprep.subr.bf16.mxu0 %v1278
    %2411 = vmatpush1.bf16.msra.mxu0 %v1277
    %2412 = vmatprep.subr.bf16.mxu0 %v1286
    %2413 = vmatpush1.bf16.msra.mxu0 %v1285
    %2414 = vmatprep.subr.bf16.mxu0 %v1294
    %2415 = vmatpush1.bf16.msra.mxu0 %v1293
    %2416 = vmatprep.subr.bf16.mxu0 %v1302
    %2417 = vmatpush1.bf16.msra.mxu0 %v1301
    %2418 = vmatprep.subr.bf16.mxu0 %v1310
    %2419 = vmatpush1.bf16.msra.mxu0 %v1309
    %2420 = vmatprep.subr.bf16.mxu0 %v1318
    %2421 = vmatpush1.bf16.msra.mxu0 %v1317
    %2422 = vmatprep.subr.bf16.mxu0 %v1326
    %2423 = vmatpush1.bf16.msra.mxu0 %v1325
    %2424 = vmatprep.subr.bf16.mxu0 %v1334
    %2425 = vmatpush1.bf16.msra.mxu0 %v1333
    %2426 = vmatprep.subr.bf16.mxu0 %v1342
    %2427 = vmatpush1.bf16.msra.mxu0 %v1341
    %2428 = vmatprep.subr.bf16.mxu0 %v1350
    %2429 = vmatpush1.bf16.msra.mxu0 %v1349
    %2430 = vmatprep.subr.bf16.mxu0 %v1358
    %2431 = vmatpush1.bf16.msra.mxu0 %v1357
    %2432 = vmatprep.subr.bf16.mxu0 %v1366
    %2433 = vmatpush1.bf16.msra.mxu0 %v1365
    %2434 = vmatprep.subr.bf16.mxu0 %v1374
    %2435 = vmatpush1.bf16.msra.mxu0 %v1373
    %2436 = vmatprep.mubr.bf16.mxu0 %v2362
    %2437 = vmatmul.mubr.bf16.gmra.mrb[0].mxu0 %v2361
    %v2438 = vpop.f32.mrb[0].mxu0
    %v2439 = vadd.f32 0.0, %v2438
    %v2440 = vpop.f32.mrb[0].mxu0
    %v2441 = vadd.f32 0.0, %v2440
    %v2442 = vpop.f32.mrb[0].mxu0
    %v2443 = vpop.f32.mrb[0].mxu0
    %2444 = vdwg.mxu0
    %2445 = vmatprep.subr.bf16.mxu0 %v1256
    %2446 = vmatpush1.bf16.msra.mxu0 %v1255
    %2447 = vmatprep.subr.bf16.mxu0 %v1264
    %2448 = vmatpush1.bf16.msra.mxu0 %v1263
    %2449 = vmatprep.subr.bf16.mxu0 %v1272
    %2450 = vmatpush1.bf16.msra.mxu0 %v1271
    %2451 = vmatprep.subr.bf16.mxu0 %v1280
    %2452 = vmatpush1.bf16.msra.mxu0 %v1279
    %2453 = vmatprep.subr.bf16.mxu0 %v1288
    %2454 = vmatpush1.bf16.msra.mxu0 %v1287
    %2455 = vmatprep.subr.bf16.mxu0 %v1296
    %2456 = vmatpush1.bf16.msra.mxu0 %v1295
    %2457 = vmatprep.subr.bf16.mxu0 %v1304
    %2458 = vmatpush1.bf16.msra.mxu0 %v1303
    %2459 = vmatprep.subr.bf16.mxu0 %v1312
    %2460 = vmatpush1.bf16.msra.mxu0 %v1311
    %2461 = vmatprep.subr.bf16.mxu0 %v1320
    %2462 = vmatpush1.bf16.msra.mxu0 %v1319
    %2463 = vmatprep.subr.bf16.mxu0 %v1328
    %2464 = vmatpush1.bf16.msra.mxu0 %v1327
    %2465 = vmatprep.subr.bf16.mxu0 %v1336
    %2466 = vmatpush1.bf16.msra.mxu0 %v1335
    %2467 = vmatprep.subr.bf16.mxu0 %v1344
    %2468 = vmatpush1.bf16.msra.mxu0 %v1343
    %2469 = vmatprep.subr.bf16.mxu0 %v1352
    %2470 = vmatpush1.bf16.msra.mxu0 %v1351
    %2471 = vmatprep.subr.bf16.mxu0 %v1360
    %2472 = vmatpush1.bf16.msra.mxu0 %v1359
    %2473 = vmatprep.subr.bf16.mxu0 %v1368
    %2474 = vmatpush1.bf16.msra.mxu0 %v1367
    %2475 = vmatprep.subr.bf16.mxu0 %v1376
    %2476 = vmatpush1.bf16.msra.mxu0 %v1375
    %2477 = vmatprep.mubr.bf16.mxu0 %v2362
    %2478 = vmatmul.mubr.bf16.gmra.mrb[0].mxu0 %v2361
    %v2479 = vpop.f32.mrb[0].mxu0
    %v2480 = vadd.f32 0.0, %v2479
    %v2481 = vpop.f32.mrb[0].mxu0
    %v2482 = vadd.f32 0.0, %v2481
    %v2483 = vpop.f32.mrb[0].mxu0
    %v2484 = vpop.f32.mrb[0].mxu0
    %2485 = vdwg.mxu0
    %2486 = vmatprep.subr.bf16.mxu0 %v1258
    %2487 = vmatpush1.bf16.msra.mxu0 %v1257
    %2488 = vmatprep.subr.bf16.mxu0 %v1266
    %2489 = vmatpush1.bf16.msra.mxu0 %v1265
    %2490 = vmatprep.subr.bf16.mxu0 %v1274
    %2491 = vmatpush1.bf16.msra.mxu0 %v1273
    %2492 = vmatprep.subr.bf16.mxu0 %v1282
    %2493 = vmatpush1.bf16.msra.mxu0 %v1281
    %2494 = vmatprep.subr.bf16.mxu0 %v1290
    %2495 = vmatpush1.bf16.msra.mxu0 %v1289
    %2496 = vmatprep.subr.bf16.mxu0 %v1298
    %2497 = vmatpush1.bf16.msra.mxu0 %v1297
    %2498 = vmatprep.subr.bf16.mxu0 %v1306
    %2499 = vmatpush1.bf16.msra.mxu0 %v1305
    %2500 = vmatprep.subr.bf16.mxu0 %v1314
    %2501 = vmatpush1.bf16.msra.mxu0 %v1313
    %2502 = vmatprep.subr.bf16.mxu0 %v1322
    %2503 = vmatpush1.bf16.msra.mxu0 %v1321
    %2504 = vmatprep.subr.bf16.mxu0 %v1330
    %2505 = vmatpush1.bf16.msra.mxu0 %v1329
    %2506 = vmatprep.subr.bf16.mxu0 %v1338
    %2507 = vmatpush1.bf16.msra.mxu0 %v1337
    %2508 = vmatprep.subr.bf16.mxu0 %v1346
    %2509 = vmatpush1.bf16.msra.mxu0 %v1345
    %2510 = vmatprep.subr.bf16.mxu0 %v1354
    %2511 = vmatpush1.bf16.msra.mxu0 %v1353
    %2512 = vmatprep.subr.bf16.mxu0 %v1362
    %2513 = vmatpush1.bf16.msra.mxu0 %v1361
    %2514 = vmatprep.subr.bf16.mxu0 %v1370
    %2515 = vmatpush1.bf16.msra.mxu0 %v1369
    %2516 = vmatprep.subr.bf16.mxu0 %v1378
    %2517 = vmatpush1.bf16.msra.mxu0 %v1377
    %2518 = vmatprep.mubr.bf16.mxu0 %v2362
    %2519 = vmatmul.mubr.bf16.gmra.mrb[0].mxu0 %v2361
    %v2520 = vpop.f32.mrb[0].mxu0
    %v2521 = vadd.f32 0.0, %v2520
    %v2522 = vpop.f32.mrb[0].mxu0
    %v2523 = vadd.f32 0.0, %v2522
    %v2524 = vpop.f32.mrb[0].mxu0
    %v2525 = vpop.f32.mrb[0].mxu0
    %2526 = vdwg.mxu0
    %v2527 = vadd.f32 %v2353, %v2398
    %v2528 = vadd.f32 %v2354, %v2400
    %v2529 = vadd.f32 %v2355, %v2439
    %v2530 = vadd.f32 %v2356, %v2441
    %v2531 = vadd.f32 %v2357, %v2480
    %v2532 = vadd.f32 %v2358, %v2482
    %v2533 = vadd.f32 %v2359, %v2521
    %v2534 = vadd.f32 %v2360, %v2523
    %v2535 = vtanh.pop %v2527
    %v2536 = vtanh.pop %v2528
    %v2537 = vtanh.pop %v2529
    %v2538 = vtanh.pop %v2530
    %v2539 = vtanh.pop %v2531
    %v2540 = vtanh.pop %v2532
    %v2541 = vtanh.pop %v2533
    %v2542 = vtanh.pop %v2534
    %v2543 = vmul.f32 %v2535, 0.5
    %v2544 = vmul.f32 %v2539, 0.5
    %v2545 = vadd.f32 %v2543, 0.5
    %v2546 = vadd.f32 %v2544, 0.5
    %v2547 = vmul.f32 %v2536, 0.5
    %v2548 = vmul.f32 %v2540, 0.5
    %v2549 = vadd.f32 %v2547, 0.5
    %v2550 = vadd.f32 %v2548, 0.5
    %v2551 = vmul.f32 %v2538, 0.5
    %v2552 = vmul.f32 %v2542, 0.5
    %v2553 = vadd.f32 %v2551, 0.5
    %v2554 = vadd.f32 %v2552, 0.5
    %v2555 = vmul.f32 %v2549, %v2345
    %v2556 = vmul.f32 %v2550, %v2346
    %v2557 = vmul.f32 %v2545, %v2537
    %v2558 = vmul.f32 %v2546, %v2541
    %v2559 = vadd.f32 %v2555, %v2557
    %v2560 = vadd.f32 %v2556, %v2558
    %v2561 = vtanh.pop %v2559
    %v2562 = vtanh.pop %v2560
    %v2563 = vmul.f32 %v2553, %v2561
    %v2564 = vmul.f32 %v2554, %v2562
    %2565 = vst [vmem:[#allocation3 + $0x50] sm:$0xff] %v2563
    %2566 = vst [vmem:[#allocation3 + $0x28] sm:$0xff] %v2564
    %v2567 = vld [vmem:[#allocation2 + $0x180] sm:$0xff]
    %v2568 = vld [vmem:[#allocation2 + $0x188] sm:$0xff]
    %v2569 = vld [vmem:[#allocation2 + $0x190] sm:$0xff]
    %v2570 = vld [vmem:[#allocation2 + $0x198] sm:$0xff]
    %v2571 = vld [vmem:[#allocation2 + $0x60] sm:$0xff]
    %v2572 = vld [vmem:[#allocation2 + $0x68] sm:$0xff]
    %v2573 = vld [vmem:[#allocation2 + $0x70] sm:$0xff]
    %v2574 = vld [vmem:[#allocation2 + $0x78] sm:$0xff]
    %v2575 = vpack.c.bf16 %v2563, %v2563
    %v2576 = vpack.c.bf16 %v2564, %v2564
    %2577 = vmatprep.subr.bf16.mxu0 %v1252
    %2578 = vmatpush1.bf16.msra.mxu0 %v1251
    %2579 = vmatprep.subr.bf16.mxu0 %v1260
    %2580 = vmatpush1.bf16.msra.mxu0 %v1259
    %2581 = vmatprep.subr.bf16.mxu0 %v1268
    %2582 = vmatpush1.bf16.msra.mxu0 %v1267
    %2583 = vmatprep.subr.bf16.mxu0 %v1276
    %2584 = vmatpush1.bf16.msra.mxu0 %v1275
    %2585 = vmatprep.subr.bf16.mxu0 %v1284
    %2586 = vmatpush1.bf16.msra.mxu0 %v1283
    %2587 = vmatprep.subr.bf16.mxu0 %v1292
    %2588 = vmatpush1.bf16.msra.mxu0 %v1291
    %2589 = vmatprep.subr.bf16.mxu0 %v1300
    %2590 = vmatpush1.bf16.msra.mxu0 %v1299
    %2591 = vmatprep.subr.bf16.mxu0 %v1308
    %2592 = vmatpush1.bf16.msra.mxu0 %v1307
    %2593 = vmatprep.subr.bf16.mxu0 %v1316
    %2594 = vmatpush1.bf16.msra.mxu0 %v1315
    %2595 = vmatprep.subr.bf16.mxu0 %v1324
    %2596 = vmatpush1.bf16.msra.mxu0 %v1323
    %2597 = vmatprep.subr.bf16.mxu0 %v1332
    %2598 = vmatpush1.bf16.msra.mxu0 %v1331
    %2599 = vmatprep.subr.bf16.mxu0 %v1340
    %2600 = vmatpush1.bf16.msra.mxu0 %v1339
    %2601 = vmatprep.subr.bf16.mxu0 %v1348
    %2602 = vmatpush1.bf16.msra.mxu0 %v1347
    %2603 = vmatprep.subr.bf16.mxu0 %v1356
    %2604 = vmatpush1.bf16.msra.mxu0 %v1355
    %2605 = vmatprep.subr.bf16.mxu0 %v1364
    %2606 = vmatpush1.bf16.msra.mxu0 %v1363
    %2607 = vmatprep.subr.bf16.mxu0 %v1372
    %2608 = vmatpush1.bf16.msra.mxu0 %v1371
    %2609 = vmatprep.mubr.bf16.mxu0 %v2576
    %2610 = vmatmul.mubr.bf16.gmra.mrb[0].mxu0 %v2575
    %v2611 = vpop.f32.mrb[0].mxu0
    %v2612 = vadd.f32 0.0, %v2611
    %v2613 = vpop.f32.mrb[0].mxu0
    %v2614 = vadd.f32 0.0, %v2613
    %v2615 = vpop.f32.mrb[0].mxu0
    %v2616 = vpop.f32.mrb[0].mxu0
    %2617 = vdwg.mxu0
    %2618 = vmatprep.subr.bf16.mxu0 %v1254
    %2619 = vmatpush1.bf16.msra.mxu0 %v1253
    %2620 = vmatprep.subr.bf16.mxu0 %v1262
    %2621 = vmatpush1.bf16.msra.mxu0 %v1261
    %2622 = vmatprep.subr.bf16.mxu0 %v1270
    %2623 = vmatpush1.bf16.msra.mxu0 %v1269
    %2624 = vmatprep.subr.bf16.mxu0 %v1278
    %2625 = vmatpush1.bf16.msra.mxu0 %v1277
    %2626 = vmatprep.subr.bf16.mxu0 %v1286
    %2627 = vmatpush1.bf16.msra.mxu0 %v1285
    %2628 = vmatprep.subr.bf16.mxu0 %v1294
    %2629 = vmatpush1.bf16.msra.mxu0 %v1293
    %2630 = vmatprep.subr.bf16.mxu0 %v1302
    %2631 = vmatpush1.bf16.msra.mxu0 %v1301
    %2632 = vmatprep.subr.bf16.mxu0 %v1310
    %2633 = vmatpush1.bf16.msra.mxu0 %v1309
    %2634 = vmatprep.subr.bf16.mxu0 %v1318
    %2635 = vmatpush1.bf16.msra.mxu0 %v1317
    %2636 = vmatprep.subr.bf16.mxu0 %v1326
    %2637 = vmatpush1.bf16.msra.mxu0 %v1325
    %2638 = vmatprep.subr.bf16.mxu0 %v1334
    %2639 = vmatpush1.bf16.msra.mxu0 %v1333
    %2640 = vmatprep.subr.bf16.mxu0 %v1342
    %2641 = vmatpush1.bf16.msra.mxu0 %v1341
    %2642 = vmatprep.subr.bf16.mxu0 %v1350
    %2643 = vmatpush1.bf16.msra.mxu0 %v1349
    %2644 = vmatprep.subr.bf16.mxu0 %v1358
    %2645 = vmatpush1.bf16.msra.mxu0 %v1357
    %2646 = vmatprep.subr.bf16.mxu0 %v1366
    %2647 = vmatpush1.bf16.msra.mxu0 %v1365
    %2648 = vmatprep.subr.bf16.mxu0 %v1374
    %2649 = vmatpush1.bf16.msra.mxu0 %v1373
    %2650 = vmatprep.mubr.bf16.mxu0 %v2576
    %2651 = vmatmul.mubr.bf16.gmra.mrb[0].mxu0 %v2575
    %v2652 = vpop.f32.mrb[0].mxu0
    %v2653 = vadd.f32 0.0, %v2652
    %v2654 = vpop.f32.mrb[0].mxu0
    %v2655 = vadd.f32 0.0, %v2654
    %v2656 = vpop.f32.mrb[0].mxu0
    %v2657 = vpop.f32.mrb[0].mxu0
    %2658 = vdwg.mxu0
    %2659 = vmatprep.subr.bf16.mxu0 %v1256
    %2660 = vmatpush1.bf16.msra.mxu0 %v1255
    %2661 = vmatprep.subr.bf16.mxu0 %v1264
    %2662 = vmatpush1.bf16.msra.mxu0 %v1263
    %2663 = vmatprep.subr.bf16.mxu0 %v1272
    %2664 = vmatpush1.bf16.msra.mxu0 %v1271
    %2665 = vmatprep.subr.bf16.mxu0 %v1280
    %2666 = vmatpush1.bf16.msra.mxu0 %v1279
    %2667 = vmatprep.subr.bf16.mxu0 %v1288
    %2668 = vmatpush1.bf16.msra.mxu0 %v1287
    %2669 = vmatprep.subr.bf16.mxu0 %v1296
    %2670 = vmatpush1.bf16.msra.mxu0 %v1295
    %2671 = vmatprep.subr.bf16.mxu0 %v1304
    %2672 = vmatpush1.bf16.msra.mxu0 %v1303
    %2673 = vmatprep.subr.bf16.mxu0 %v1312
    %2674 = vmatpush1.bf16.msra.mxu0 %v1311
    %2675 = vmatprep.subr.bf16.mxu0 %v1320
    %2676 = vmatpush1.bf16.msra.mxu0 %v1319
    %2677 = vmatprep.subr.bf16.mxu0 %v1328
    %2678 = vmatpush1.bf16.msra.mxu0 %v1327
    %2679 = vmatprep.subr.bf16.mxu0 %v1336
    %2680 = vmatpush1.bf16.msra.mxu0 %v1335
    %2681 = vmatprep.subr.bf16.mxu0 %v1344
    %2682 = vmatpush1.bf16.msra.mxu0 %v1343
    %2683 = vmatprep.subr.bf16.mxu0 %v1352
    %2684 = vmatpush1.bf16.msra.mxu0 %v1351
    %2685 = vmatprep.subr.bf16.mxu0 %v1360
    %2686 = vmatpush1.bf16.msra.mxu0 %v1359
    %2687 = vmatprep.subr.bf16.mxu0 %v1368
    %2688 = vmatpush1.bf16.msra.mxu0 %v1367
    %2689 = vmatprep.subr.bf16.mxu0 %v1376
    %2690 = vmatpush1.bf16.msra.mxu0 %v1375
    %2691 = vmatprep.mubr.bf16.mxu0 %v2576
    %2692 = vmatmul.mubr.bf16.gmra.mrb[0].mxu0 %v2575
    %v2693 = vpop.f32.mrb[0].mxu0
    %v2694 = vadd.f32 0.0, %v2693
    %v2695 = vpop.f32.mrb[0].mxu0
    %v2696 = vadd.f32 0.0, %v2695
    %v2697 = vpop.f32.mrb[0].mxu0
    %v2698 = vpop.f32.mrb[0].mxu0
    %2699 = vdwg.mxu0
    %2700 = vmatprep.subr.bf16.mxu0 %v1258
    %2701 = vmatpush1.bf16.msra.mxu0 %v1257
    %2702 = vmatprep.subr.bf16.mxu0 %v1266
    %2703 = vmatpush1.bf16.msra.mxu0 %v1265
    %2704 = vmatprep.subr.bf16.mxu0 %v1274
    %2705 = vmatpush1.bf16.msra.mxu0 %v1273
    %2706 = vmatprep.subr.bf16.mxu0 %v1282
    %2707 = vmatpush1.bf16.msra.mxu0 %v1281
    %2708 = vmatprep.subr.bf16.mxu0 %v1290
    %2709 = vmatpush1.bf16.msra.mxu0 %v1289
    %2710 = vmatprep.subr.bf16.mxu0 %v1298
    %2711 = vmatpush1.bf16.msra.mxu0 %v1297
    %2712 = vmatprep.subr.bf16.mxu0 %v1306
    %2713 = vmatpush1.bf16.msra.mxu0 %v1305
    %2714 = vmatprep.subr.bf16.mxu0 %v1314
    %2715 = vmatpush1.bf16.msra.mxu0 %v1313
    %2716 = vmatprep.subr.bf16.mxu0 %v1322
    %2717 = vmatpush1.bf16.msra.mxu0 %v1321
    %2718 = vmatprep.subr.bf16.mxu0 %v1330
    %2719 = vmatpush1.bf16.msra.mxu0 %v1329
    %2720 = vmatprep.subr.bf16.mxu0 %v1338
    %2721 = vmatpush1.bf16.msra.mxu0 %v1337
    %2722 = vmatprep.subr.bf16.mxu0 %v1346
    %2723 = vmatpush1.bf16.msra.mxu0 %v1345
    %2724 = vmatprep.subr.bf16.mxu0 %v1354
    %2725 = vmatpush1.bf16.msra.mxu0 %v1353
    %2726 = vmatprep.subr.bf16.mxu0 %v1362
    %2727 = vmatpush1.bf16.msra.mxu0 %v1361
    %2728 = vmatprep.subr.bf16.mxu0 %v1370
    %2729 = vmatpush1.bf16.msra.mxu0 %v1369
    %2730 = vmatprep.subr.bf16.mxu0 %v1378
    %2731 = vmatpush1.bf16.msra.mxu0 %v1377
    %2732 = vmatprep.mubr.bf16.mxu0 %v2576
    %2733 = vmatmul.mubr.bf16.gmra.mrb[0].mxu0 %v2575
    %v2734 = vpop.f32.mrb[0].mxu0
    %v2735 = vadd.f32 0.0, %v2734
    %v2736 = vpop.f32.mrb[0].mxu0
    %v2737 = vadd.f32 0.0, %v2736
    %v2738 = vpop.f32.mrb[0].mxu0
    %v2739 = vpop.f32.mrb[0].mxu0
    %2740 = vdwg.mxu0
    %v2741 = vadd.f32 %v2567, %v2612
    %v2742 = vadd.f32 %v2568, %v2614
    %v2743 = vadd.f32 %v2569, %v2653
    %v2744 = vadd.f32 %v2570, %v2655
    %v2745 = vadd.f32 %v2571, %v2694
    %v2746 = vadd.f32 %v2572, %v2696
    %v2747 = vadd.f32 %v2573, %v2735
    %v2748 = vadd.f32 %v2574, %v2737
    %v2749 = vtanh.pop %v2741
    %v2750 = vtanh.pop %v2742
    %v2751 = vtanh.pop %v2743
    %v2752 = vtanh.pop %v2744
    %v2753 = vtanh.pop %v2745
    %v2754 = vtanh.pop %v2746
    %v2755 = vtanh.pop %v2747
    %v2756 = vtanh.pop %v2748
    %v2757 = vmul.f32 %v2749, 0.5
    %v2758 = vmul.f32 %v2753, 0.5
    %v2759 = vadd.f32 %v2757, 0.5
    %v2760 = vadd.f32 %v2758, 0.5
    %v2761 = vmul.f32 %v2750, 0.5
    %v2762 = vmul.f32 %v2754, 0.5
    %v2763 = vadd.f32 %v2761, 0.5
    %v2764 = vadd.f32 %v2762, 0.5
    %v2765 = vmul.f32 %v2752, 0.5
    %v2766 = vmul.f32 %v2756, 0.5
    %v2767 = vadd.f32 %v2765, 0.5
    %v2768 = vadd.f32 %v2766, 0.5
    %v2769 = vmul.f32 %v2763, %v2559
    %v2770 = vmul.f32 %v2764, %v2560
    %v2771 = vmul.f32 %v2759, %v2751
    %v2772 = vmul.f32 %v2760, %v2755
    %v2773 = vadd.f32 %v2769, %v2771
    %v2774 = vadd.f32 %v2770, %v2772
    %v2775 = vtanh.pop %v2773
    %v2776 = vtanh.pop %v2774
    %v2777 = vmul.f32 %v2767, %v2775
    %v2778 = vmul.f32 %v2768, %v2776
    %2779 = vst [vmem:[#allocation3 + $0x60] sm:$0xff] %v2777
    %2780 = vst [vmem:[#allocation3 + $0x18] sm:$0xff] %v2778
    %v2781 = vld [vmem:[#allocation2 + $0x1c0] sm:$0xff]
    %v2782 = vld [vmem:[#allocation2 + $0x1c8] sm:$0xff]
    %v2783 = vld [vmem:[#allocation2 + $0x1d0] sm:$0xff]
    %v2784 = vld [vmem:[#allocation2 + $0x1d8] sm:$0xff]
    %v2785 = vld [vmem:[#allocation2 + $0x20] sm:$0xff]
    %v2786 = vld [vmem:[#allocation2 + $0x28] sm:$0xff]
    %v2787 = vld [vmem:[#allocation2 + $0x30] sm:$0xff]
    %v2788 = vld [vmem:[#allocation2 + $0x38] sm:$0xff]
    %v2789 = vpack.c.bf16 %v2777, %v2777
    %v2790 = vpack.c.bf16 %v2778, %v2778
    %2791 = vmatprep.subr.bf16.mxu0 %v1252
    %2792 = vmatpush1.bf16.msra.mxu0 %v1251
    %2793 = vmatprep.subr.bf16.mxu0 %v1260
    %2794 = vmatpush1.bf16.msra.mxu0 %v1259
    %2795 = vmatprep.subr.bf16.mxu0 %v1268
    %2796 = vmatpush1.bf16.msra.mxu0 %v1267
    %2797 = vmatprep.subr.bf16.mxu0 %v1276
    %2798 = vmatpush1.bf16.msra.mxu0 %v1275
    %2799 = vmatprep.subr.bf16.mxu0 %v1284
    %2800 = vmatpush1.bf16.msra.mxu0 %v1283
    %2801 = vmatprep.subr.bf16.mxu0 %v1292
    %2802 = vmatpush1.bf16.msra.mxu0 %v1291
    %2803 = vmatprep.subr.bf16.mxu0 %v1300
    %2804 = vmatpush1.bf16.msra.mxu0 %v1299
    %2805 = vmatprep.subr.bf16.mxu0 %v1308
    %2806 = vmatpush1.bf16.msra.mxu0 %v1307
    %2807 = vmatprep.subr.bf16.mxu0 %v1316
    %2808 = vmatpush1.bf16.msra.mxu0 %v1315
    %2809 = vmatprep.subr.bf16.mxu0 %v1324
    %2810 = vmatpush1.bf16.msra.mxu0 %v1323
    %2811 = vmatprep.subr.bf16.mxu0 %v1332
    %2812 = vmatpush1.bf16.msra.mxu0 %v1331
    %2813 = vmatprep.subr.bf16.mxu0 %v1340
    %2814 = vmatpush1.bf16.msra.mxu0 %v1339
    %2815 = vmatprep.subr.bf16.mxu0 %v1348
    %2816 = vmatpush1.bf16.msra.mxu0 %v1347
    %2817 = vmatprep.subr.bf16.mxu0 %v1356
    %2818 = vmatpush1.bf16.msra.mxu0 %v1355
    %2819 = vmatprep.subr.bf16.mxu0 %v1364
    %2820 = vmatpush1.bf16.msra.mxu0 %v1363
    %2821 = vmatprep.subr.bf16.mxu0 %v1372
    %2822 = vmatpush1.bf16.msra.mxu0 %v1371
    %2823 = vmatprep.mubr.bf16.mxu0 %v2790
    %2824 = vmatmul.mubr.bf16.gmra.mrb[0].mxu0 %v2789
    %v2825 = vpop.f32.mrb[0].mxu0
    %v2826 = vadd.f32 0.0, %v2825
    %v2827 = vpop.f32.mrb[0].mxu0
    %v2828 = vadd.f32 0.0, %v2827
    %v2829 = vpop.f32.mrb[0].mxu0
    %v2830 = vpop.f32.mrb[0].mxu0
    %2831 = vdwg.mxu0
    %2832 = vmatprep.subr.bf16.mxu0 %v1254
    %2833 = vmatpush1.bf16.msra.mxu0 %v1253
    %2834 = vmatprep.subr.bf16.mxu0 %v1262
    %2835 = vmatpush1.bf16.msra.mxu0 %v1261
    %2836 = vmatprep.subr.bf16.mxu0 %v1270
    %2837 = vmatpush1.bf16.msra.mxu0 %v1269
    %2838 = vmatprep.subr.bf16.mxu0 %v1278
    %2839 = vmatpush1.bf16.msra.mxu0 %v1277
    %2840 = vmatprep.subr.bf16.mxu0 %v1286
    %2841 = vmatpush1.bf16.msra.mxu0 %v1285
    %2842 = vmatprep.subr.bf16.mxu0 %v1294
    %2843 = vmatpush1.bf16.msra.mxu0 %v1293
    %2844 = vmatprep.subr.bf16.mxu0 %v1302
    %2845 = vmatpush1.bf16.msra.mxu0 %v1301
    %2846 = vmatprep.subr.bf16.mxu0 %v1310
    %2847 = vmatpush1.bf16.msra.mxu0 %v1309
    %2848 = vmatprep.subr.bf16.mxu0 %v1318
    %2849 = vmatpush1.bf16.msra.mxu0 %v1317
    %2850 = vmatprep.subr.bf16.mxu0 %v1326
    %2851 = vmatpush1.bf16.msra.mxu0 %v1325
    %2852 = vmatprep.subr.bf16.mxu0 %v1334
    %2853 = vmatpush1.bf16.msra.mxu0 %v1333
    %2854 = vmatprep.subr.bf16.mxu0 %v1342
    %2855 = vmatpush1.bf16.msra.mxu0 %v1341
    %2856 = vmatprep.subr.bf16.mxu0 %v1350
    %2857 = vmatpush1.bf16.msra.mxu0 %v1349
    %2858 = vmatprep.subr.bf16.mxu0 %v1358
    %2859 = vmatpush1.bf16.msra.mxu0 %v1357
    %2860 = vmatprep.subr.bf16.mxu0 %v1366
    %2861 = vmatpush1.bf16.msra.mxu0 %v1365
    %2862 = vmatprep.subr.bf16.mxu0 %v1374
    %2863 = vmatpush1.bf16.msra.mxu0 %v1373
    %2864 = vmatprep.mubr.bf16.mxu0 %v2790
    %2865 = vmatmul.mubr.bf16.gmra.mrb[0].mxu0 %v2789
    %v2866 = vpop.f32.mrb[0].mxu0
    %v2867 = vadd.f32 0.0, %v2866
    %v2868 = vpop.f32.mrb[0].mxu0
    %v2869 = vadd.f32 0.0, %v2868
    %v2870 = vpop.f32.mrb[0].mxu0
    %v2871 = vpop.f32.mrb[0].mxu0
    %2872 = vdwg.mxu0
    %2873 = vmatprep.subr.bf16.mxu0 %v1256
    %2874 = vmatpush1.bf16.msra.mxu0 %v1255
    %2875 = vmatprep.subr.bf16.mxu0 %v1264
    %2876 = vmatpush1.bf16.msra.mxu0 %v1263
    %2877 = vmatprep.subr.bf16.mxu0 %v1272
    %2878 = vmatpush1.bf16.msra.mxu0 %v1271
    %2879 = vmatprep.subr.bf16.mxu0 %v1280
    %2880 = vmatpush1.bf16.msra.mxu0 %v1279
    %2881 = vmatprep.subr.bf16.mxu0 %v1288
    %2882 = vmatpush1.bf16.msra.mxu0 %v1287
    %2883 = vmatprep.subr.bf16.mxu0 %v1296
    %2884 = vmatpush1.bf16.msra.mxu0 %v1295
    %2885 = vmatprep.subr.bf16.mxu0 %v1304
    %2886 = vmatpush1.bf16.msra.mxu0 %v1303
    %2887 = vmatprep.subr.bf16.mxu0 %v1312
    %2888 = vmatpush1.bf16.msra.mxu0 %v1311
    %2889 = vmatprep.subr.bf16.mxu0 %v1320
    %2890 = vmatpush1.bf16.msra.mxu0 %v1319
    %2891 = vmatprep.subr.bf16.mxu0 %v1328
    %2892 = vmatpush1.bf16.msra.mxu0 %v1327
    %2893 = vmatprep.subr.bf16.mxu0 %v1336
    %2894 = vmatpush1.bf16.msra.mxu0 %v1335
    %2895 = vmatprep.subr.bf16.mxu0 %v1344
    %2896 = vmatpush1.bf16.msra.mxu0 %v1343
    %2897 = vmatprep.subr.bf16.mxu0 %v1352
    %2898 = vmatpush1.bf16.msra.mxu0 %v1351
    %2899 = vmatprep.subr.bf16.mxu0 %v1360
    %2900 = vmatpush1.bf16.msra.mxu0 %v1359
    %2901 = vmatprep.subr.bf16.mxu0 %v1368
    %2902 = vmatpush1.bf16.msra.mxu0 %v1367
    %2903 = vmatprep.subr.bf16.mxu0 %v1376
    %2904 = vmatpush1.bf16.msra.mxu0 %v1375
    %2905 = vmatprep.mubr.bf16.mxu0 %v2790
    %2906 = vmatmul.mubr.bf16.gmra.mrb[0].mxu0 %v2789
    %v2907 = vpop.f32.mrb[0].mxu0
    %v2908 = vadd.f32 0.0, %v2907
    %v2909 = vpop.f32.mrb[0].mxu0
    %v2910 = vadd.f32 0.0, %v2909
    %v2911 = vpop.f32.mrb[0].mxu0
    %v2912 = vpop.f32.mrb[0].mxu0
    %2913 = vdwg.mxu0
    %2914 = vmatprep.subr.bf16.mxu0 %v1258
    %2915 = vmatpush1.bf16.msra.mxu0 %v1257
    %2916 = vmatprep.subr.bf16.mxu0 %v1266
    %2917 = vmatpush1.bf16.msra.mxu0 %v1265
    %2918 = vmatprep.subr.bf16.mxu0 %v1274
    %2919 = vmatpush1.bf16.msra.mxu0 %v1273
    %2920 = vmatprep.subr.bf16.mxu0 %v1282
    %2921 = vmatpush1.bf16.msra.mxu0 %v1281
    %2922 = vmatprep.subr.bf16.mxu0 %v1290
    %2923 = vmatpush1.bf16.msra.mxu0 %v1289
    %2924 = vmatprep.subr.bf16.mxu0 %v1298
    %2925 = vmatpush1.bf16.msra.mxu0 %v1297
    %2926 = vmatprep.subr.bf16.mxu0 %v1306
    %2927 = vmatpush1.bf16.msra.mxu0 %v1305
    %2928 = vmatprep.subr.bf16.mxu0 %v1314
    %2929 = vmatpush1.bf16.msra.mxu0 %v1313
    %2930 = vmatprep.subr.bf16.mxu0 %v1322
    %2931 = vmatpush1.bf16.msra.mxu0 %v1321
    %2932 = vmatprep.subr.bf16.mxu0 %v1330
    %2933 = vmatpush1.bf16.msra.mxu0 %v1329
    %2934 = vmatprep.subr.bf16.mxu0 %v1338
    %2935 = vmatpush1.bf16.msra.mxu0 %v1337
    %2936 = vmatprep.subr.bf16.mxu0 %v1346
    %2937 = vmatpush1.bf16.msra.mxu0 %v1345
    %2938 = vmatprep.subr.bf16.mxu0 %v1354
    %2939 = vmatpush1.bf16.msra.mxu0 %v1353
    %2940 = vmatprep.subr.bf16.mxu0 %v1362
    %2941 = vmatpush1.bf16.msra.mxu0 %v1361
    %2942 = vmatprep.subr.bf16.mxu0 %v1370
    %2943 = vmatpush1.bf16.msra.mxu0 %v1369
    %2944 = vmatprep.subr.bf16.mxu0 %v1378
    %2945 = vmatpush1.bf16.msra.mxu0 %v1377
    %2946 = vmatprep.mubr.bf16.mxu0 %v2790
    %2947 = vmatmul.mubr.bf16.gmra.mrb[0].mxu0 %v2789
    %v2948 = vpop.f32.mrb[0].mxu0
    %v2949 = vadd.f32 0.0, %v2948
    %v2950 = vpop.f32.mrb[0].mxu0
    %v2951 = vadd.f32 0.0, %v2950
    %v2952 = vpop.f32.mrb[0].mxu0
    %v2953 = vpop.f32.mrb[0].mxu0
    %2954 = vdwg.mxu0
    %v2955 = vadd.f32 %v2781, %v2826
    %v2956 = vadd.f32 %v2782, %v2828
    %v2957 = vadd.f32 %v2783, %v2867
    %v2958 = vadd.f32 %v2784, %v2869
    %v2959 = vadd.f32 %v2785, %v2908
    %v2960 = vadd.f32 %v2786, %v2910
    %v2961 = vadd.f32 %v2787, %v2949
    %v2962 = vadd.f32 %v2788, %v2951
    %v2963 = vtanh.pop %v2955
    %v2964 = vtanh.pop %v2956
    %v2965 = vtanh.pop %v2957
    %v2966 = vtanh.pop %v2958
    %v2967 = vtanh.pop %v2959
    %v2968 = vtanh.pop %v2960
    %v2969 = vtanh.pop %v2961
    %v2970 = vtanh.pop %v2962
    %v2971 = vmul.f32 %v2963, 0.5
    %v2972 = vmul.f32 %v2967, 0.5
    %v2973 = vadd.f32 %v2971, 0.5
    %v2974 = vadd.f32 %v2972, 0.5
    %v2975 = vmul.f32 %v2964, 0.5
    %v2976 = vmul.f32 %v2968, 0.5
    %v2977 = vadd.f32 %v2975, 0.5
    %v2978 = vadd.f32 %v2976, 0.5
    %v2979 = vmul.f32 %v2966, 0.5
    %v2980 = vmul.f32 %v2970, 0.5
    %v2981 = vadd.f32 %v2979, 0.5
    %v2982 = vadd.f32 %v2980, 0.5
    %v2983 = vmul.f32 %v2977, %v2773
    %v2984 = vmul.f32 %v2978, %v2774
    %v2985 = vmul.f32 %v2973, %v2965
    %v2986 = vmul.f32 %v2974, %v2969
    %v2987 = vadd.f32 %v2983, %v2985
    %v2988 = vadd.f32 %v2984, %v2986
    %v2989 = vtanh.pop %v2987
    %v2990 = vtanh.pop %v2988
    %v2991 = vmul.f32 %v2981, %v2989
    %v2992 = vmul.f32 %v2982, %v2990
    %2993 = vst [vmem:[#allocation3 + $0x70] sm:$0xff] %v2991
    %2994 = vst [vmem:[#allocation3 + $0x8] sm:$0xff] %v2992
    %v2995 = vld [vmem:[#allocation3] sm:$0xff]
    %v2996 = vld [vmem:[#allocation3 + $0x8] sm:$0xff]
    %v2997 = vld [vmem:[#allocation3 + $0x10] sm:$0xff]
    %v2998 = vld [vmem:[#allocation3 + $0x18] sm:$0xff]
    %v2999 = vld [vmem:[#allocation3 + $0x20] sm:$0xff]
    %v3000 = vld [vmem:[#allocation3 + $0x28] sm:$0xff]
    %v3001 = vld [vmem:[#allocation3 + $0x30] sm:$0xff]
    %v3002 = vld [vmem:[#allocation3 + $0x38] sm:$0xff]
    %v3003 = vld [vmem:[#allocation3 + $0x40] sm:$0xff]
    %v3004 = vld [vmem:[#allocation3 + $0x48] sm:$0xff]
    %v3005 = vld [vmem:[#allocation3 + $0x50] sm:$0xff]
    %v3006 = vld [vmem:[#allocation3 + $0x58] sm:$0xff]
    %v3007 = vld [vmem:[#allocation3 + $0x60] sm:$0xff]
    %v3008 = vld [vmem:[#allocation3 + $0x68] sm:$0xff]
    %v3009 = vld [vmem:[#allocation3 + $0x70] sm:$0xff]
    %v3010 = vld [vmem:[#allocation3 + $0x78] sm:$0xff]
    %v3011 = vpack.c.bf16 %v2997, %v2995
    %v3012 = vpack.c.bf16 %v2998, %v2996
    %v3013 = vpack.c.bf16 %v3001, %v2999
    %v3014 = vpack.c.bf16 %v3002, %v3000
    %v3015 = vpack.c.bf16 %v3005, %v3003
    %v3016 = vpack.c.bf16 %v3006, %v3004
    %v3017 = vpack.c.bf16 %v3009, %v3007
    %v3018 = vpack.c.bf16 %v3010, %v3008
    %v3019 = vld [vmem:[#allocation7] sm:$0xff]
    %v3020 = vld [vmem:[#allocation7 + $0x8] sm:$0xff]
    %v3021 = vld [vmem:[#allocation7 + $0x10] sm:$0xff]
    %v3022 = vld [vmem:[#allocation7 + $0x18] sm:$0xff]
    %v3023 = vld [vmem:[#allocation7 + $0x20] sm:$0xff]
    %v3024 = vld [vmem:[#allocation7 + $0x28] sm:$0xff]
    %v3025 = vld [vmem:[#allocation7 + $0x30] sm:$0xff]
    %v3026 = vld [vmem:[#allocation7 + $0x38] sm:$0xff]
    %v3027 = vld [vmem:[#allocation7 + $0x40] sm:$0xff]
    %v3028 = vld [vmem:[#allocation7 + $0x48] sm:$0xff]
    %v3029 = vld [vmem:[#allocation7 + $0x50] sm:$0xff]
    %v3030 = vld [vmem:[#allocation7 + $0x58] sm:$0xff]
    %v3031 = vld [vmem:[#allocation7 + $0x60] sm:$0xff]
    %v3032 = vld [vmem:[#allocation7 + $0x68] sm:$0xff]
    %v3033 = vld [vmem:[#allocation7 + $0x70] sm:$0xff]
    %v3034 = vld [vmem:[#allocation7 + $0x78] sm:$0xff]
    %v3035 = vld [vmem:[#allocation7 + $0x80] sm:$0xff]
    %v3036 = vld [vmem:[#allocation7 + $0x88] sm:$0xff]
    %v3037 = vld [vmem:[#allocation7 + $0x90] sm:$0xff]
    %v3038 = vld [vmem:[#allocation7 + $0x98] sm:$0xff]
    %v3039 = vld [vmem:[#allocation7 + $0xa0] sm:$0xff]
    %v3040 = vld [vmem:[#allocation7 + $0xa8] sm:$0xff]
    %v3041 = vld [vmem:[#allocation7 + $0xb0] sm:$0xff]
    %v3042 = vld [vmem:[#allocation7 + $0xb8] sm:$0xff]
    %v3043 = vld [vmem:[#allocation7 + $0xc0] sm:$0xff]
    %v3044 = vld [vmem:[#allocation7 + $0xc8] sm:$0xff]
    %v3045 = vld [vmem:[#allocation7 + $0xd0] sm:$0xff]
    %v3046 = vld [vmem:[#allocation7 + $0xd8] sm:$0xff]
    %v3047 = vld [vmem:[#allocation7 + $0xe0] sm:$0xff]
    %v3048 = vld [vmem:[#allocation7 + $0xe8] sm:$0xff]
    %v3049 = vld [vmem:[#allocation7 + $0xf0] sm:$0xff]
    %v3050 = vld [vmem:[#allocation7 + $0xf8] sm:$0xff]
    %v3051 = vld [vmem:[#allocation7 + $0x100] sm:$0xff]
    %v3052 = vld [vmem:[#allocation7 + $0x108] sm:$0xff]
    %v3053 = vld [vmem:[#allocation7 + $0x110] sm:$0xff]
    %v3054 = vld [vmem:[#allocation7 + $0x118] sm:$0xff]
    %v3055 = vld [vmem:[#allocation7 + $0x120] sm:$0xff]
    %v3056 = vld [vmem:[#allocation7 + $0x128] sm:$0xff]
    %v3057 = vld [vmem:[#allocation7 + $0x130] sm:$0xff]
    %v3058 = vld [vmem:[#allocation7 + $0x138] sm:$0xff]
    %v3059 = vld [vmem:[#allocation7 + $0x140] sm:$0xff]
    %v3060 = vld [vmem:[#allocation7 + $0x148] sm:$0xff]
    %v3061 = vld [vmem:[#allocation7 + $0x150] sm:$0xff]
    %v3062 = vld [vmem:[#allocation7 + $0x158] sm:$0xff]
    %v3063 = vld [vmem:[#allocation7 + $0x160] sm:$0xff]
    %v3064 = vld [vmem:[#allocation7 + $0x168] sm:$0xff]
    %v3065 = vld [vmem:[#allocation7 + $0x170] sm:$0xff]
    %v3066 = vld [vmem:[#allocation7 + $0x178] sm:$0xff]
    %v3067 = vld [vmem:[#allocation7 + $0x180] sm:$0xff]
    %v3068 = vld [vmem:[#allocation7 + $0x188] sm:$0xff]
    %v3069 = vld [vmem:[#allocation7 + $0x190] sm:$0xff]
    %v3070 = vld [vmem:[#allocation7 + $0x198] sm:$0xff]
    %v3071 = vld [vmem:[#allocation7 + $0x1a0] sm:$0xff]
    %v3072 = vld [vmem:[#allocation7 + $0x1a8] sm:$0xff]
    %v3073 = vld [vmem:[#allocation7 + $0x1b0] sm:$0xff]
    %v3074 = vld [vmem:[#allocation7 + $0x1b8] sm:$0xff]
    %v3075 = vld [vmem:[#allocation7 + $0x1c0] sm:$0xff]
    %v3076 = vld [vmem:[#allocation7 + $0x1c8] sm:$0xff]
    %v3077 = vld [vmem:[#allocation7 + $0x1d0] sm:$0xff]
    %v3078 = vld [vmem:[#allocation7 + $0x1d8] sm:$0xff]
    %v3079 = vld [vmem:[#allocation7 + $0x1e0] sm:$0xff]
    %v3080 = vld [vmem:[#allocation7 + $0x1e8] sm:$0xff]
    %v3081 = vld [vmem:[#allocation7 + $0x1f0] sm:$0xff]
    %v3082 = vld [vmem:[#allocation7 + $0x1f8] sm:$0xff]
    %v3083 = vld [vmem:[%s5] sm:$0xf]
    %v3085 = vlaneseq
    %v3086 = vshrl.u32 %v3085, 7
    %v3087 = vsub.s32 0, %v3086
    %v3088 = vrot.slane %v3083, %v3087
    %v3089 = vlaneseq
    %v3090 = vshrl.u32 %v3089, 7
    %v3091 = vsub.s32 1, %v3090
    %v3092 = vrot.slane %v3083, %v3091
    %v3093 = vlaneseq
    %v3094 = vshrl.u32 %v3093, 7
    %v3095 = vsub.s32 2, %v3094
    %v3096 = vrot.slane %v3083, %v3095
    %v3097 = vlaneseq
    %v3098 = vshrl.u32 %v3097, 7
    %v3099 = vsub.s32 3, %v3098
    %v3100 = vrot.slane %v3083, %v3099
    %v3169 = vunpack.c.l.b16 %v3019
    %v3170 = vunpack.c.h.b16 %v3019
    %v3171 = vunpack.c.l.b16 %v3020
    %v3172 = vunpack.c.h.b16 %v3020
    %v3173 = vunpack.c.l.b16 %v3021
    %v3174 = vunpack.c.h.b16 %v3021
    %v3175 = vunpack.c.l.b16 %v3022
    %v3176 = vunpack.c.h.b16 %v3022
    %v3177 = vunpack.c.l.b16 %v3023
    %v3178 = vunpack.c.h.b16 %v3023
    %v3179 = vunpack.c.l.b16 %v3024
    %v3180 = vunpack.c.h.b16 %v3024
    %v3181 = vunpack.c.l.b16 %v3025
    %v3182 = vunpack.c.h.b16 %v3025
    %v3183 = vunpack.c.l.b16 %v3026
    %v3184 = vunpack.c.h.b16 %v3026
    %v3185 = vunpack.c.l.b16 %v3027
    %v3186 = vunpack.c.h.b16 %v3027
    %v3187 = vunpack.c.l.b16 %v3028
    %v3188 = vunpack.c.h.b16 %v3028
    %v3189 = vunpack.c.l.b16 %v3029
    %v3190 = vunpack.c.h.b16 %v3029
    %v3191 = vunpack.c.l.b16 %v3030
    %v3192 = vunpack.c.h.b16 %v3030
    %v3193 = vunpack.c.l.b16 %v3031
    %v3194 = vunpack.c.h.b16 %v3031
    %v3195 = vunpack.c.l.b16 %v3032
    %v3196 = vunpack.c.h.b16 %v3032
    %v3197 = vunpack.c.l.b16 %v3033
    %v3198 = vunpack.c.h.b16 %v3033
    %v3199 = vunpack.c.l.b16 %v3034
    %v3200 = vunpack.c.h.b16 %v3034
    %v3201 = vunpack.c.l.b16 %v3035
    %v3202 = vunpack.c.h.b16 %v3035
    %v3203 = vunpack.c.l.b16 %v3036
    %v3204 = vunpack.c.h.b16 %v3036
    %v3205 = vunpack.c.l.b16 %v3037
    %v3206 = vunpack.c.h.b16 %v3037
    %v3207 = vunpack.c.l.b16 %v3038
    %v3208 = vunpack.c.h.b16 %v3038
    %v3209 = vunpack.c.l.b16 %v3039
    %v3210 = vunpack.c.h.b16 %v3039
    %v3211 = vunpack.c.l.b16 %v3040
    %v3212 = vunpack.c.h.b16 %v3040
    %v3213 = vunpack.c.l.b16 %v3041
    %v3214 = vunpack.c.h.b16 %v3041
    %v3215 = vunpack.c.l.b16 %v3042
    %v3216 = vunpack.c.h.b16 %v3042
    %v3217 = vunpack.c.l.b16 %v3043
    %v3218 = vunpack.c.h.b16 %v3043
    %v3219 = vunpack.c.l.b16 %v3044
    %v3220 = vunpack.c.h.b16 %v3044
    %v3221 = vunpack.c.l.b16 %v3045
    %v3222 = vunpack.c.h.b16 %v3045
    %v3223 = vunpack.c.l.b16 %v3046
    %v3224 = vunpack.c.h.b16 %v3046
    %v3225 = vunpack.c.l.b16 %v3047
    %v3226 = vunpack.c.h.b16 %v3047
    %v3227 = vunpack.c.l.b16 %v3048
    %v3228 = vunpack.c.h.b16 %v3048
    %v3229 = vunpack.c.l.b16 %v3049
    %v3230 = vunpack.c.h.b16 %v3049
    %v3231 = vunpack.c.l.b16 %v3050
    %v3232 = vunpack.c.h.b16 %v3050
    %v3233 = vunpack.c.l.b16 %v3051
    %v3234 = vunpack.c.h.b16 %v3051
    %v3235 = vunpack.c.l.b16 %v3052
    %v3236 = vunpack.c.h.b16 %v3052
    %v3237 = vunpack.c.l.b16 %v3053
    %v3238 = vunpack.c.h.b16 %v3053
    %v3239 = vunpack.c.l.b16 %v3054
    %v3240 = vunpack.c.h.b16 %v3054
    %v3241 = vunpack.c.l.b16 %v3055
    %v3242 = vunpack.c.h.b16 %v3055
    %v3243 = vunpack.c.l.b16 %v3056
    %v3244 = vunpack.c.h.b16 %v3056
    %v3245 = vunpack.c.l.b16 %v3057
    %v3246 = vunpack.c.h.b16 %v3057
    %v3247 = vunpack.c.l.b16 %v3058
    %v3248 = vunpack.c.h.b16 %v3058
    %v3249 = vunpack.c.l.b16 %v3059
    %v3250 = vunpack.c.h.b16 %v3059
    %v3251 = vunpack.c.l.b16 %v3060
    %v3252 = vunpack.c.h.b16 %v3060
    %v3253 = vunpack.c.l.b16 %v3061
    %v3254 = vunpack.c.h.b16 %v3061
    %v3255 = vunpack.c.l.b16 %v3062
    %v3256 = vunpack.c.h.b16 %v3062
    %v3257 = vunpack.c.l.b16 %v3063
    %v3258 = vunpack.c.h.b16 %v3063
    %v3259 = vunpack.c.l.b16 %v3064
    %v3260 = vunpack.c.h.b16 %v3064
    %v3261 = vunpack.c.l.b16 %v3065
    %v3262 = vunpack.c.h.b16 %v3065
    %v3263 = vunpack.c.l.b16 %v3066
    %v3264 = vunpack.c.h.b16 %v3066
    %v3265 = vunpack.c.l.b16 %v3067
    %v3266 = vunpack.c.h.b16 %v3067
    %v3267 = vunpack.c.l.b16 %v3068
    %v3268 = vunpack.c.h.b16 %v3068
    %v3269 = vunpack.c.l.b16 %v3069
    %v3270 = vunpack.c.h.b16 %v3069
    %v3271 = vunpack.c.l.b16 %v3070
    %v3272 = vunpack.c.h.b16 %v3070
    %v3273 = vunpack.c.l.b16 %v3071
    %v3274 = vunpack.c.h.b16 %v3071
    %v3275 = vunpack.c.l.b16 %v3072
    %v3276 = vunpack.c.h.b16 %v3072
    %v3277 = vunpack.c.l.b16 %v3073
    %v3278 = vunpack.c.h.b16 %v3073
    %v3279 = vunpack.c.l.b16 %v3074
    %v3280 = vunpack.c.h.b16 %v3074
    %v3281 = vunpack.c.l.b16 %v3075
    %v3282 = vunpack.c.h.b16 %v3075
    %v3283 = vunpack.c.l.b16 %v3076
    %v3284 = vunpack.c.h.b16 %v3076
    %v3285 = vunpack.c.l.b16 %v3077
    %v3286 = vunpack.c.h.b16 %v3077
    %v3287 = vunpack.c.l.b16 %v3078
    %v3288 = vunpack.c.h.b16 %v3078
    %v3289 = vunpack.c.l.b16 %v3079
    %v3290 = vunpack.c.h.b16 %v3079
    %v3291 = vunpack.c.l.b16 %v3080
    %v3292 = vunpack.c.h.b16 %v3080
    %v3293 = vunpack.c.l.b16 %v3081
    %v3294 = vunpack.c.h.b16 %v3081
    %v3295 = vunpack.c.l.b16 %v3082
    %v3296 = vunpack.c.h.b16 %v3082
    %v3297 = vpack.c.b16 %v3173, %v3169
    %v3298 = vpack.c.b16 %v3174, %v3170
    %v3299 = vpack.c.b16 %v3175, %v3171
    %v3300 = vpack.c.b16 %v3176, %v3172
    %v3301 = vpack.c.b16 %v3181, %v3177
    %v3302 = vpack.c.b16 %v3182, %v3178
    %v3303 = vpack.c.b16 %v3183, %v3179
    %v3304 = vpack.c.b16 %v3184, %v3180
    %v3305 = vpack.c.b16 %v3189, %v3185
    %v3306 = vpack.c.b16 %v3190, %v3186
    %v3307 = vpack.c.b16 %v3191, %v3187
    %v3308 = vpack.c.b16 %v3192, %v3188
    %v3309 = vpack.c.b16 %v3197, %v3193
    %v3310 = vpack.c.b16 %v3198, %v3194
    %v3311 = vpack.c.b16 %v3199, %v3195
    %v3312 = vpack.c.b16 %v3200, %v3196
    %v3313 = vpack.c.b16 %v3205, %v3201
    %v3314 = vpack.c.b16 %v3206, %v3202
    %v3315 = vpack.c.b16 %v3207, %v3203
    %v3316 = vpack.c.b16 %v3208, %v3204
    %v3317 = vpack.c.b16 %v3213, %v3209
    %v3318 = vpack.c.b16 %v3214, %v3210
    %v3319 = vpack.c.b16 %v3215, %v3211
    %v3320 = vpack.c.b16 %v3216, %v3212
    %v3321 = vpack.c.b16 %v3221, %v3217
    %v3322 = vpack.c.b16 %v3222, %v3218
    %v3323 = vpack.c.b16 %v3223, %v3219
    %v3324 = vpack.c.b16 %v3224, %v3220
    %v3325 = vpack.c.b16 %v3229, %v3225
    %v3326 = vpack.c.b16 %v3230, %v3226
    %v3327 = vpack.c.b16 %v3231, %v3227
    %v3328 = vpack.c.b16 %v3232, %v3228
    %v3329 = vpack.c.b16 %v3237, %v3233
    %v3330 = vpack.c.b16 %v3238, %v3234
    %v3331 = vpack.c.b16 %v3239, %v3235
    %v3332 = vpack.c.b16 %v3240, %v3236
    %v3333 = vpack.c.b16 %v3245, %v3241
    %v3334 = vpack.c.b16 %v3246, %v3242
    %v3335 = vpack.c.b16 %v3247, %v3243
    %v3336 = vpack.c.b16 %v3248, %v3244
    %v3337 = vpack.c.b16 %v3253, %v3249
    %v3338 = vpack.c.b16 %v3254, %v3250
    %v3339 = vpack.c.b16 %v3255, %v3251
    %v3340 = vpack.c.b16 %v3256, %v3252
    %v3341 = vpack.c.b16 %v3261, %v3257
    %v3342 = vpack.c.b16 %v3262, %v3258
    %v3343 = vpack.c.b16 %v3263, %v3259
    %v3344 = vpack.c.b16 %v3264, %v3260
    %v3345 = vpack.c.b16 %v3269, %v3265
    %v3346 = vpack.c.b16 %v3270, %v3266
    %v3347 = vpack.c.b16 %v3271, %v3267
    %v3348 = vpack.c.b16 %v3272, %v3268
    %v3349 = vpack.c.b16 %v3277, %v3273
    %v3350 = vpack.c.b16 %v3278, %v3274
    %v3351 = vpack.c.b16 %v3279, %v3275
    %v3352 = vpack.c.b16 %v3280, %v3276
    %v3353 = vpack.c.b16 %v3285, %v3281
    %v3354 = vpack.c.b16 %v3286, %v3282
    %v3355 = vpack.c.b16 %v3287, %v3283
    %v3356 = vpack.c.b16 %v3288, %v3284
    %v3357 = vpack.c.b16 %v3293, %v3289
    %v3358 = vpack.c.b16 %v3294, %v3290
    %v3359 = vpack.c.b16 %v3295, %v3291
    %v3360 = vpack.c.b16 %v3296, %v3292
    %3425 = vmatprep.subr.bf16.mxu0 %v3298
    %3426 = vmatpush1.bf16.msra.mxu0 %v3297
    %3427 = vmatprep.subr.bf16.mxu0 %v3302
    %3428 = vmatpush1.bf16.msra.mxu0 %v3301
    %3429 = vmatprep.subr.bf16.mxu0 %v3306
    %3430 = vmatpush1.bf16.msra.mxu0 %v3305
    %3431 = vmatprep.subr.bf16.mxu0 %v3310
    %3432 = vmatpush1.bf16.msra.mxu0 %v3309
    %3433 = vmatprep.subr.bf16.mxu0 %v3314
    %3434 = vmatpush1.bf16.msra.mxu0 %v3313
    %3435 = vmatprep.subr.bf16.mxu0 %v3318
    %3436 = vmatpush1.bf16.msra.mxu0 %v3317
    %3437 = vmatprep.subr.bf16.mxu0 %v3322
    %3438 = vmatpush1.bf16.msra.mxu0 %v3321
    %3439 = vmatprep.subr.bf16.mxu0 %v3326
    %3440 = vmatpush1.bf16.msra.mxu0 %v3325
    %3441 = vmatprep.subr.bf16.mxu0 %v3330
    %3442 = vmatpush1.bf16.msra.mxu0 %v3329
    %3443 = vmatprep.subr.bf16.mxu0 %v3334
    %3444 = vmatpush1.bf16.msra.mxu0 %v3333
    %3445 = vmatprep.subr.bf16.mxu0 %v3338
    %3446 = vmatpush1.bf16.msra.mxu0 %v3337
    %3447 = vmatprep.subr.bf16.mxu0 %v3342
    %3448 = vmatpush1.bf16.msra.mxu0 %v3341
    %3449 = vmatprep.subr.bf16.mxu0 %v3346
    %3450 = vmatpush1.bf16.msra.mxu0 %v3345
    %3451 = vmatprep.subr.bf16.mxu0 %v3350
    %3452 = vmatpush1.bf16.msra.mxu0 %v3349
    %3453 = vmatprep.subr.bf16.mxu0 %v3354
    %3454 = vmatpush1.bf16.msra.mxu0 %v3353
    %3455 = vmatprep.subr.bf16.mxu0 %v3358
    %3456 = vmatpush1.bf16.msra.mxu0 %v3357
    %3457 = vmatprep.mubr.bf16.mxu0 %v3012
    %3458 = vmatmul.mubr.bf16.gmra.mrb[0].mxu0 %v3011
    %v3459 = vpop.f32.mrb[0].mxu0
    %v3460 = vadd.f32 %v3088, %v3459
    %v3461 = vpop.f32.mrb[0].mxu0
    %v3462 = vadd.f32 %v3092, %v3461
    %v3463 = vpop.f32.mrb[0].mxu0
    %v3464 = vadd.f32 %v3088, %v3463
    %v3465 = vpop.f32.mrb[0].mxu0
    %v3466 = vadd.f32 %v3092, %v3465
    %3467 = vmatprep.mubr.bf16.mxu0 %v3014
    %3468 = vmatmul.mubr.bf16.gmra.mrb[0].mxu0 %v3013
    %v3469 = vpop.f32.mrb[0].mxu0
    %v3470 = vadd.f32 %v3088, %v3469
    %v3471 = vpop.f32.mrb[0].mxu0
    %v3472 = vadd.f32 %v3092, %v3471
    %v3473 = vpop.f32.mrb[0].mxu0
    %v3474 = vadd.f32 %v3088, %v3473
    %v3475 = vpop.f32.mrb[0].mxu0
    %v3476 = vadd.f32 %v3092, %v3475
    %3477 = vmatprep.mubr.bf16.mxu0 %v3016
    %3478 = vmatmul.mubr.bf16.gmra.mrb[0].mxu0 %v3015
    %v3479 = vpop.f32.mrb[0].mxu0
    %v3480 = vadd.f32 %v3088, %v3479
    %v3481 = vpop.f32.mrb[0].mxu0
    %v3482 = vadd.f32 %v3092, %v3481
    %v3483 = vpop.f32.mrb[0].mxu0
    %v3484 = vadd.f32 %v3088, %v3483
    %v3485 = vpop.f32.mrb[0].mxu0
    %v3486 = vadd.f32 %v3092, %v3485
    %3487 = vmatprep.mubr.bf16.mxu0 %v3018
    %3488 = vmatmul.mubr.bf16.gmra.mrb[0].mxu0 %v3017
    %v3489 = vpop.f32.mrb[0].mxu0
    %v3490 = vadd.f32 %v3088, %v3489
    %v3491 = vpop.f32.mrb[0].mxu0
    %v3492 = vadd.f32 %v3092, %v3491
    %v3493 = vpop.f32.mrb[0].mxu0
    %v3494 = vadd.f32 %v3088, %v3493
    %v3495 = vpop.f32.mrb[0].mxu0
    %v3496 = vadd.f32 %v3092, %v3495
    %3497 = vdwg.mxu0
    %3498 = vmatprep.subr.bf16.mxu0 %v3300
    %3499 = vmatpush1.bf16.msra.mxu0 %v3299
    %3500 = vmatprep.subr.bf16.mxu0 %v3304
    %3501 = vmatpush1.bf16.msra.mxu0 %v3303
    %3502 = vmatprep.subr.bf16.mxu0 %v3308
    %3503 = vmatpush1.bf16.msra.mxu0 %v3307
    %3504 = vmatprep.subr.bf16.mxu0 %v3312
    %3505 = vmatpush1.bf16.msra.mxu0 %v3311
    %3506 = vmatprep.subr.bf16.mxu0 %v3316
    %3507 = vmatpush1.bf16.msra.mxu0 %v3315
    %3508 = vmatprep.subr.bf16.mxu0 %v3320
    %3509 = vmatpush1.bf16.msra.mxu0 %v3319
    %3510 = vmatprep.subr.bf16.mxu0 %v3324
    %3511 = vmatpush1.bf16.msra.mxu0 %v3323
    %3512 = vmatprep.subr.bf16.mxu0 %v3328
    %3513 = vmatpush1.bf16.msra.mxu0 %v3327
    %3514 = vmatprep.subr.bf16.mxu0 %v3332
    %3515 = vmatpush1.bf16.msra.mxu0 %v3331
    %3516 = vmatprep.subr.bf16.mxu0 %v3336
    %3517 = vmatpush1.bf16.msra.mxu0 %v3335
    %3518 = vmatprep.subr.bf16.mxu0 %v3340
    %3519 = vmatpush1.bf16.msra.mxu0 %v3339
    %3520 = vmatprep.subr.bf16.mxu0 %v3344
    %3521 = vmatpush1.bf16.msra.mxu0 %v3343
    %3522 = vmatprep.subr.bf16.mxu0 %v3348
    %3523 = vmatpush1.bf16.msra.mxu0 %v3347
    %3524 = vmatprep.subr.bf16.mxu0 %v3352
    %3525 = vmatpush1.bf16.msra.mxu0 %v3351
    %3526 = vmatprep.subr.bf16.mxu0 %v3356
    %3527 = vmatpush1.bf16.msra.mxu0 %v3355
    %3528 = vmatprep.subr.bf16.mxu0 %v3360
    %3529 = vmatpush1.bf16.msra.mxu0 %v3359
    %3530 = vmatprep.mubr.bf16.mxu0 %v3012
    %3531 = vmatmul.mubr.bf16.gmra.mrb[0].mxu0 %v3011
    %v3532 = vpop.f32.mrb[0].mxu0
    %v3533 = vadd.f32 %v3096, %v3532
    %v3534 = vpop.f32.mrb[0].mxu0
    %v3535 = vadd.f32 %v3100, %v3534
    %v3536 = vpop.f32.mrb[0].mxu0
    %v3537 = vadd.f32 %v3096, %v3536
    %v3538 = vpop.f32.mrb[0].mxu0
    %v3539 = vadd.f32 %v3100, %v3538
    %3540 = vmatprep.mubr.bf16.mxu0 %v3014
    %3541 = vmatmul.mubr.bf16.gmra.mrb[0].mxu0 %v3013
    %v3542 = vpop.f32.mrb[0].mxu0
    %v3543 = vadd.f32 %v3096, %v3542
    %v3544 = vpop.f32.mrb[0].mxu0
    %v3545 = vadd.f32 %v3100, %v3544
    %v3546 = vpop.f32.mrb[0].mxu0
    %v3547 = vadd.f32 %v3096, %v3546
    %v3548 = vpop.f32.mrb[0].mxu0
    %v3549 = vadd.f32 %v3100, %v3548
    %3550 = vmatprep.mubr.bf16.mxu0 %v3016
    %3551 = vmatmul.mubr.bf16.gmra.mrb[0].mxu0 %v3015
    %v3552 = vpop.f32.mrb[0].mxu0
    %v3553 = vadd.f32 %v3096, %v3552
    %v3554 = vpop.f32.mrb[0].mxu0
    %v3555 = vadd.f32 %v3100, %v3554
    %v3556 = vpop.f32.mrb[0].mxu0
    %v3557 = vadd.f32 %v3096, %v3556
    %v3558 = vpop.f32.mrb[0].mxu0
    %v3559 = vadd.f32 %v3100, %v3558
    %3560 = vmatprep.mubr.bf16.mxu0 %v3018
    %3561 = vmatmul.mubr.bf16.gmra.mrb[0].mxu0 %v3017
    %v3562 = vpop.f32.mrb[0].mxu0
    %v3563 = vadd.f32 %v3096, %v3562
    %v3564 = vpop.f32.mrb[0].mxu0
    %v3565 = vadd.f32 %v3100, %v3564
    %v3566 = vpop.f32.mrb[0].mxu0
    %v3567 = vadd.f32 %v3096, %v3566
    %v3568 = vpop.f32.mrb[0].mxu0
    %v3569 = vadd.f32 %v3100, %v3568
    %3570 = vdwg.mxu0
    %3571 = vst [vmem:[#allocation4] sm:$0xff] %v3460
    %3572 = vst [vmem:[#allocation4 + $0x8] sm:$0xff] %v3462
    %3573 = vst [vmem:[#allocation4 + $0x10] sm:$0xff] %v3533
    %3574 = vst [vmem:[#allocation4 + $0x18] sm:$0xff] %v3535
    %3575 = vst [vmem:[#allocation4 + $0x20] sm:$0xff] %v3464
    %3576 = vst [vmem:[#allocation4 + $0x28] sm:$0xff] %v3466
    %3577 = vst [vmem:[#allocation4 + $0x30] sm:$0xff] %v3537
    %3578 = vst [vmem:[#allocation4 + $0x38] sm:$0xff] %v3539
    %3579 = vst [vmem:[#allocation4 + $0x40] sm:$0xff] %v3470
    %3580 = vst [vmem:[#allocation4 + $0x48] sm:$0xff] %v3472
    %3581 = vst [vmem:[#allocation4 + $0x50] sm:$0xff] %v3543
    %3582 = vst [vmem:[#allocation4 + $0x58] sm:$0xff] %v3545
    %3583 = vst [vmem:[#allocation4 + $0x60] sm:$0xff] %v3474
    %3584 = vst [vmem:[#allocation4 + $0x68] sm:$0xff] %v3476
    %3585 = vst [vmem:[#allocation4 + $0x70] sm:$0xff] %v3547
    %3586 = vst [vmem:[#allocation4 + $0x78] sm:$0xff] %v3549
    %3587 = vst [vmem:[#allocation4 + $0x80] sm:$0xff] %v3480
    %3588 = vst [vmem:[#allocation4 + $0x88] sm:$0xff] %v3482
    %3589 = vst [vmem:[#allocation4 + $0x90] sm:$0xff] %v3553
    %3590 = vst [vmem:[#allocation4 + $0x98] sm:$0xff] %v3555
    %3591 = vst [vmem:[#allocation4 + $0xa0] sm:$0xff] %v3484
    %3592 = vst [vmem:[#allocation4 + $0xa8] sm:$0xff] %v3486
    %3593 = vst [vmem:[#allocation4 + $0xb0] sm:$0xff] %v3557
    %3594 = vst [vmem:[#allocation4 + $0xb8] sm:$0xff] %v3559
    %3595 = vst [vmem:[#allocation4 + $0xc0] sm:$0xff] %v3490
    %3596 = vst [vmem:[#allocation4 + $0xc8] sm:$0xff] %v3492
    %3597 = vst [vmem:[#allocation4 + $0xd0] sm:$0xff] %v3563
    %3598 = vst [vmem:[#allocation4 + $0xd8] sm:$0xff] %v3565
    %3599 = vst [vmem:[#allocation4 + $0xe0] sm:$0xff] %v3494
    %3600 = vst [vmem:[#allocation4 + $0xe8] sm:$0xff] %v3496
    %3601 = vst [vmem:[#allocation4 + $0xf0] sm:$0xff] %v3567
    %3602 = vst [vmem:[#allocation4 + $0xf8] sm:$0xff] %v3569
    %v3603 = vld [vmem:[#allocation9] sm:$0xff]
    %v3604 = vld [vmem:[#allocation9 + $0x8] sm:$0xff]
    %v3605 = vld [vmem:[#allocation9 + $0x10] sm:$0xff]
    %v3606 = vld [vmem:[#allocation9 + $0x18] sm:$0xff]
    %v3607 = vld [vmem:[#allocation9 + $0x20] sm:$0xff]
    %v3608 = vld [vmem:[#allocation9 + $0x28] sm:$0xff]
    %v3609 = vld [vmem:[#allocation9 + $0x30] sm:$0xff]
    %v3610 = vld [vmem:[#allocation9 + $0x38] sm:$0xff]
    %v3611 = vld [vmem:[#allocation9 + $0x40] sm:$0xff]
    %v3612 = vld [vmem:[#allocation9 + $0x48] sm:$0xff]
    %v3613 = vld [vmem:[#allocation9 + $0x50] sm:$0xff]
    %v3614 = vld [vmem:[#allocation9 + $0x58] sm:$0xff]
    %v3615 = vld [vmem:[#allocation9 + $0x60] sm:$0xff]
    %v3616 = vld [vmem:[#allocation9 + $0x68] sm:$0xff]
    %v3617 = vld [vmem:[#allocation9 + $0x70] sm:$0xff]
    %v3618 = vld [vmem:[#allocation9 + $0x78] sm:$0xff]
    %v3619 = vld [vmem:[#allocation9 + $0x80] sm:$0xff]
    %v3620 = vld [vmem:[#allocation9 + $0x88] sm:$0xff]
    %v3621 = vld [vmem:[#allocation9 + $0x90] sm:$0xff]
    %v3622 = vld [vmem:[#allocation9 + $0x98] sm:$0xff]
    %v3623 = vld [vmem:[#allocation9 + $0xa0] sm:$0xff]
    %v3624 = vld [vmem:[#allocation9 + $0xa8] sm:$0xff]
    %v3625 = vld [vmem:[#allocation9 + $0xb0] sm:$0xff]
    %v3626 = vld [vmem:[#allocation9 + $0xb8] sm:$0xff]
    %v3627 = vld [vmem:[#allocation9 + $0xc0] sm:$0xff]
    %v3628 = vld [vmem:[#allocation9 + $0xc8] sm:$0xff]
    %v3629 = vld [vmem:[#allocation9 + $0xd0] sm:$0xff]
    %v3630 = vld [vmem:[#allocation9 + $0xd8] sm:$0xff]
    %v3631 = vld [vmem:[#allocation9 + $0xe0] sm:$0xff]
    %v3632 = vld [vmem:[#allocation9 + $0xe8] sm:$0xff]
    %v3633 = vld [vmem:[#allocation9 + $0xf0] sm:$0xff]
    %v3634 = vld [vmem:[#allocation9 + $0xf8] sm:$0xff]
    %v3635 = vld [vmem:[#allocation4] sm:$0xff]
    %v3636 = vld [vmem:[#allocation4 + $0x8] sm:$0xff]
    %v3637 = vld [vmem:[#allocation4 + $0x10] sm:$0xff]
    %v3638 = vld [vmem:[#allocation4 + $0x18] sm:$0xff]
    %v3639 = vtanh.pop %v3635
    %v3640 = vtanh.pop %v3636
    %v3641 = vtanh.pop %v3637
    %v3642 = vtanh.pop %v3638
    %v3643 = vmul.f32 %v3639, 0.5
    %v3644 = vadd.f32 %v3643, 0.5
    %v3645 = vmul.f32 %v3640, 0.5
    %v3646 = vadd.f32 %v3645, 0.5
    %v3647 = vmul.f32 %v3642, 0.5
    %v3648 = vadd.f32 %v3647, 0.5
    %v3649 = vmul.f32 %v3646, 0.0
    %v3650 = vmul.f32 %v3644, %v3641
    %v3651 = vadd.f32 %v3649, %v3650
    %v3652 = vtanh.pop %v3651
    %v3653 = vmul.f32 %v3648, %v3652
    %v3654 = vld [vmem:[#allocation4 + $0x20] sm:$0xff]
    %v3655 = vld [vmem:[#allocation4 + $0x28] sm:$0xff]
    %v3656 = vld [vmem:[#allocation4 + $0x30] sm:$0xff]
    %v3657 = vld [vmem:[#allocation4 + $0x38] sm:$0xff]
    %v3658 = vpack.c.bf16 %v3653, %v3653
    %v3691 = vunpack.c.l.b16 %v3603
    %v3692 = vunpack.c.h.b16 %v3603
    %v3693 = vunpack.c.l.b16 %v3604
    %v3694 = vunpack.c.h.b16 %v3604
    %v3695 = vunpack.c.l.b16 %v3605
    %v3696 = vunpack.c.h.b16 %v3605
    %v3697 = vunpack.c.l.b16 %v3606
    %v3698 = vunpack.c.h.b16 %v3606
    %v3699 = vunpack.c.l.b16 %v3607
    %v3700 = vunpack.c.h.b16 %v3607
    %v3701 = vunpack.c.l.b16 %v3608
    %v3702 = vunpack.c.h.b16 %v3608
    %v3703 = vunpack.c.l.b16 %v3609
    %v3704 = vunpack.c.h.b16 %v3609
    %v3705 = vunpack.c.l.b16 %v3610
    %v3706 = vunpack.c.h.b16 %v3610
    %v3707 = vunpack.c.l.b16 %v3611
    %v3708 = vunpack.c.h.b16 %v3611
    %v3709 = vunpack.c.l.b16 %v3612
    %v3710 = vunpack.c.h.b16 %v3612
    %v3711 = vunpack.c.l.b16 %v3613
    %v3712 = vunpack.c.h.b16 %v3613
    %v3713 = vunpack.c.l.b16 %v3614
    %v3714 = vunpack.c.h.b16 %v3614
    %v3715 = vunpack.c.l.b16 %v3615
    %v3716 = vunpack.c.h.b16 %v3615
    %v3717 = vunpack.c.l.b16 %v3616
    %v3718 = vunpack.c.h.b16 %v3616
    %v3719 = vunpack.c.l.b16 %v3617
    %v3720 = vunpack.c.h.b16 %v3617
    %v3721 = vunpack.c.l.b16 %v3618
    %v3722 = vunpack.c.h.b16 %v3618
    %v3723 = vunpack.c.l.b16 %v3619
    %v3724 = vunpack.c.h.b16 %v3619
    %v3725 = vunpack.c.l.b16 %v3620
    %v3726 = vunpack.c.h.b16 %v3620
    %v3727 = vunpack.c.l.b16 %v3621
    %v3728 = vunpack.c.h.b16 %v3621
    %v3729 = vunpack.c.l.b16 %v3622
    %v3730 = vunpack.c.h.b16 %v3622
    %v3731 = vunpack.c.l.b16 %v3623
    %v3732 = vunpack.c.h.b16 %v3623
    %v3733 = vunpack.c.l.b16 %v3624
    %v3734 = vunpack.c.h.b16 %v3624
    %v3735 = vunpack.c.l.b16 %v3625
    %v3736 = vunpack.c.h.b16 %v3625
    %v3737 = vunpack.c.l.b16 %v3626
    %v3738 = vunpack.c.h.b16 %v3626
    %v3739 = vunpack.c.l.b16 %v3627
    %v3740 = vunpack.c.h.b16 %v3627
    %v3741 = vunpack.c.l.b16 %v3628
    %v3742 = vunpack.c.h.b16 %v3628
    %v3743 = vunpack.c.l.b16 %v3629
    %v3744 = vunpack.c.h.b16 %v3629
    %v3745 = vunpack.c.l.b16 %v3630
    %v3746 = vunpack.c.h.b16 %v3630
    %v3747 = vunpack.c.l.b16 %v3631
    %v3748 = vunpack.c.h.b16 %v3631
    %v3749 = vunpack.c.l.b16 %v3632
    %v3750 = vunpack.c.h.b16 %v3632
    %v3751 = vunpack.c.l.b16 %v3633
    %v3752 = vunpack.c.h.b16 %v3633
    %v3753 = vunpack.c.l.b16 %v3634
    %v3754 = vunpack.c.h.b16 %v3634
    %v3755 = vpack.c.b16 %v3695, %v3691
    %v3756 = vpack.c.b16 %v3696, %v3692
    %v3757 = vpack.c.b16 %v3697, %v3693
    %v3758 = vpack.c.b16 %v3698, %v3694
    %v3759 = vpack.c.b16 %v3703, %v3699
    %v3760 = vpack.c.b16 %v3704, %v3700
    %v3761 = vpack.c.b16 %v3705, %v3701
    %v3762 = vpack.c.b16 %v3706, %v3702
    %v3763 = vpack.c.b16 %v3711, %v3707
    %v3764 = vpack.c.b16 %v3712, %v3708
    %v3765 = vpack.c.b16 %v3713, %v3709
    %v3766 = vpack.c.b16 %v3714, %v3710
    %v3767 = vpack.c.b16 %v3719, %v3715
    %v3768 = vpack.c.b16 %v3720, %v3716
    %v3769 = vpack.c.b16 %v3721, %v3717
    %v3770 = vpack.c.b16 %v3722, %v3718
    %v3771 = vpack.c.b16 %v3727, %v3723
    %v3772 = vpack.c.b16 %v3728, %v3724
    %v3773 = vpack.c.b16 %v3729, %v3725
    %v3774 = vpack.c.b16 %v3730, %v3726
    %v3775 = vpack.c.b16 %v3735, %v3731
    %v3776 = vpack.c.b16 %v3736, %v3732
    %v3777 = vpack.c.b16 %v3737, %v3733
    %v3778 = vpack.c.b16 %v3738, %v3734
    %v3779 = vpack.c.b16 %v3743, %v3739
    %v3780 = vpack.c.b16 %v3744, %v3740
    %v3781 = vpack.c.b16 %v3745, %v3741
    %v3782 = vpack.c.b16 %v3746, %v3742
    %v3783 = vpack.c.b16 %v3751, %v3747
    %v3784 = vpack.c.b16 %v3752, %v3748
    %v3785 = vpack.c.b16 %v3753, %v3749
    %v3786 = vpack.c.b16 %v3754, %v3750
    %3819 = vmatprep.subr.bf16.mxu0 %v3756
    %3820 = vmatpush1.bf16.msra.mxu0 %v3755
    %3821 = vmatprep.subr.bf16.mxu0 %v3760
    %3822 = vmatpush1.bf16.msra.mxu0 %v3759
    %3823 = vmatprep.subr.bf16.mxu0 %v3764
    %3824 = vmatpush1.bf16.msra.mxu0 %v3763
    %3825 = vmatprep.subr.bf16.mxu0 %v3768
    %3826 = vmatpush1.bf16.msra.mxu0 %v3767
    %3827 = vmatprep.subr.bf16.mxu0 %v3772
    %3828 = vmatpush1.bf16.msra.mxu0 %v3771
    %3829 = vmatprep.subr.bf16.mxu0 %v3776
    %3830 = vmatpush1.bf16.msra.mxu0 %v3775
    %3831 = vmatprep.subr.bf16.mxu0 %v3780
    %3832 = vmatpush1.bf16.msra.mxu0 %v3779
    %3833 = vmatprep.subr.bf16.mxu0 %v3784
    %3834 = vmatpush1.bf16.msra.mxu0 %v3783
    %3835 = vmatprep.subr.bf16.mxu0 0
    %3836 = vmatpush1.bf16.msra.mxu0 0
    %3837 = vmatprep.subr.bf16.mxu0 0
    %3838 = vmatpush1.bf16.msra.mxu0 0
    %3839 = vmatprep.subr.bf16.mxu0 0
    %3840 = vmatpush1.bf16.msra.mxu0 0
    %3841 = vmatprep.subr.bf16.mxu0 0
    %3842 = vmatpush1.bf16.msra.mxu0 0
    %3843 = vmatprep.subr.bf16.mxu0 0
    %3844 = vmatpush1.bf16.msra.mxu0 0
    %3845 = vmatprep.subr.bf16.mxu0 0
    %3846 = vmatpush1.bf16.msra.mxu0 0
    %3847 = vmatprep.subr.bf16.mxu0 0
    %3848 = vmatpush1.bf16.msra.mxu0 0
    %3849 = vmatprep.subr.bf16.mxu0 0
    %3850 = vmatpush1.bf16.msra.mxu0 0
    %3851 = vmatprep.mubr.bf16.mxu0 0
    %3852 = vmatmul.mubr.bf16.gmra.mrb[0].mxu0 %v3658
    %v3853 = vpop.f32.mrb[0].mxu0
    %v3854 = vadd.f32 0.0, %v3853
    %v3855 = vpop.f32.mrb[0].mxu0
    %v3856 = vadd.f32 0.0, %v3855
    %v3857 = vpop.f32.mrb[0].mxu0
    %v3858 = vpop.f32.mrb[0].mxu0
    %3859 = vdwg.mxu0
    %3860 = vmatprep.subr.bf16.mxu0 %v3758
    %3861 = vmatpush1.bf16.msra.mxu0 %v3757
    %3862 = vmatprep.subr.bf16.mxu0 %v3762
    %3863 = vmatpush1.bf16.msra.mxu0 %v3761
    %3864 = vmatprep.subr.bf16.mxu0 %v3766
    %3865 = vmatpush1.bf16.msra.mxu0 %v3765
    %3866 = vmatprep.subr.bf16.mxu0 %v3770
    %3867 = vmatpush1.bf16.msra.mxu0 %v3769
    %3868 = vmatprep.subr.bf16.mxu0 %v3774
    %3869 = vmatpush1.bf16.msra.mxu0 %v3773
    %3870 = vmatprep.subr.bf16.mxu0 %v3778
    %3871 = vmatpush1.bf16.msra.mxu0 %v3777
    %3872 = vmatprep.subr.bf16.mxu0 %v3782
    %3873 = vmatpush1.bf16.msra.mxu0 %v3781
    %3874 = vmatprep.subr.bf16.mxu0 %v3786
    %3875 = vmatpush1.bf16.msra.mxu0 %v3785
    %3876 = vmatprep.subr.bf16.mxu0 0
    %3877 = vmatpush1.bf16.msra.mxu0 0
    %3878 = vmatprep.subr.bf16.mxu0 0
    %3879 = vmatpush1.bf16.msra.mxu0 0
    %3880 = vmatprep.subr.bf16.mxu0 0
    %3881 = vmatpush1.bf16.msra.mxu0 0
    %3882 = vmatprep.subr.bf16.mxu0 0
    %3883 = vmatpush1.bf16.msra.mxu0 0
    %3884 = vmatprep.subr.bf16.mxu0 0
    %3885 = vmatpush1.bf16.msra.mxu0 0
    %3886 = vmatprep.subr.bf16.mxu0 0
    %3887 = vmatpush1.bf16.msra.mxu0 0
    %3888 = vmatprep.subr.bf16.mxu0 0
    %3889 = vmatpush1.bf16.msra.mxu0 0
    %3890 = vmatprep.subr.bf16.mxu0 0
    %3891 = vmatpush1.bf16.msra.mxu0 0
    %3892 = vmatprep.mubr.bf16.mxu0 0
    %3893 = vmatmul.mubr.bf16.gmra.mrb[0].mxu0 %v3658
    %v3894 = vpop.f32.mrb[0].mxu0
    %v3895 = vadd.f32 0.0, %v3894
    %v3896 = vpop.f32.mrb[0].mxu0
    %v3897 = vadd.f32 0.0, %v3896
    %v3898 = vpop.f32.mrb[0].mxu0
    %v3899 = vpop.f32.mrb[0].mxu0
    %3900 = vdwg.mxu0
    %v3901 = vadd.f32 %v3654, %v3854
    %v3902 = vadd.f32 %v3655, %v3856
    %v3903 = vadd.f32 %v3656, %v3895
    %v3904 = vadd.f32 %v3657, %v3897
    %v3905 = vtanh.pop %v3901
    %v3906 = vtanh.pop %v3902
    %v3907 = vtanh.pop %v3903
    %v3908 = vtanh.pop %v3904
    %v3909 = vmul.f32 %v3905, 0.5
    %v3910 = vadd.f32 %v3909, 0.5
    %v3911 = vmul.f32 %v3906, 0.5
    %v3912 = vadd.f32 %v3911, 0.5
    %v3913 = vmul.f32 %v3908, 0.5
    %v3914 = vadd.f32 %v3913, 0.5
    %v3915 = vmul.f32 %v3912, %v3651
    %v3916 = vmul.f32 %v3910, %v3907
    %v3917 = vadd.f32 %v3915, %v3916
    %v3918 = vtanh.pop %v3917
    %v3919 = vmul.f32 %v3914, %v3918
    %v3920 = vld [vmem:[#allocation4 + $0x40] sm:$0xff]
    %v3921 = vld [vmem:[#allocation4 + $0x48] sm:$0xff]
    %v3922 = vld [vmem:[#allocation4 + $0x50] sm:$0xff]
    %v3923 = vld [vmem:[#allocation4 + $0x58] sm:$0xff]
    %v3924 = vpack.c.bf16 %v3919, %v3919
    %3925 = vmatprep.subr.bf16.mxu0 %v3756
    %3926 = vmatpush1.bf16.msra.mxu0 %v3755
    %3927 = vmatprep.subr.bf16.mxu0 %v3760
    %3928 = vmatpush1.bf16.msra.mxu0 %v3759
    %3929 = vmatprep.subr.bf16.mxu0 %v3764
    %3930 = vmatpush1.bf16.msra.mxu0 %v3763
    %3931 = vmatprep.subr.bf16.mxu0 %v3768
    %3932 = vmatpush1.bf16.msra.mxu0 %v3767
    %3933 = vmatprep.subr.bf16.mxu0 %v3772
    %3934 = vmatpush1.bf16.msra.mxu0 %v3771
    %3935 = vmatprep.subr.bf16.mxu0 %v3776
    %3936 = vmatpush1.bf16.msra.mxu0 %v3775
    %3937 = vmatprep.subr.bf16.mxu0 %v3780
    %3938 = vmatpush1.bf16.msra.mxu0 %v3779
    %3939 = vmatprep.subr.bf16.mxu0 %v3784
    %3940 = vmatpush1.bf16.msra.mxu0 %v3783
    %3941 = vmatprep.subr.bf16.mxu0 0
    %3942 = vmatpush1.bf16.msra.mxu0 0
    %3943 = vmatprep.subr.bf16.mxu0 0
    %3944 = vmatpush1.bf16.msra.mxu0 0
    %3945 = vmatprep.subr.bf16.mxu0 0
    %3946 = vmatpush1.bf16.msra.mxu0 0
    %3947 = vmatprep.subr.bf16.mxu0 0
    %3948 = vmatpush1.bf16.msra.mxu0 0
    %3949 = vmatprep.subr.bf16.mxu0 0
    %3950 = vmatpush1.bf16.msra.mxu0 0
    %3951 = vmatprep.subr.bf16.mxu0 0
    %3952 = vmatpush1.bf16.msra.mxu0 0
    %3953 = vmatprep.subr.bf16.mxu0 0
    %3954 = vmatpush1.bf16.msra.mxu0 0
    %3955 = vmatprep.subr.bf16.mxu0 0
    %3956 = vmatpush1.bf16.msra.mxu0 0
    %3957 = vmatprep.mubr.bf16.mxu0 0
    %3958 = vmatmul.mubr.bf16.gmra.mrb[0].mxu0 %v3924
    %v3959 = vpop.f32.mrb[0].mxu0
    %v3960 = vadd.f32 0.0, %v3959
    %v3961 = vpop.f32.mrb[0].mxu0
    %v3962 = vadd.f32 0.0, %v3961
    %v3963 = vpop.f32.mrb[0].mxu0
    %v3964 = vpop.f32.mrb[0].mxu0
    %3965 = vdwg.mxu0
    %3966 = vmatprep.subr.bf16.mxu0 %v3758
    %3967 = vmatpush1.bf16.msra.mxu0 %v3757
    %3968 = vmatprep.subr.bf16.mxu0 %v3762
    %3969 = vmatpush1.bf16.msra.mxu0 %v3761
    %3970 = vmatprep.subr.bf16.mxu0 %v3766
    %3971 = vmatpush1.bf16.msra.mxu0 %v3765
    %3972 = vmatprep.subr.bf16.mxu0 %v3770
    %3973 = vmatpush1.bf16.msra.mxu0 %v3769
    %3974 = vmatprep.subr.bf16.mxu0 %v3774
    %3975 = vmatpush1.bf16.msra.mxu0 %v3773
    %3976 = vmatprep.subr.bf16.mxu0 %v3778
    %3977 = vmatpush1.bf16.msra.mxu0 %v3777
    %3978 = vmatprep.subr.bf16.mxu0 %v3782
    %3979 = vmatpush1.bf16.msra.mxu0 %v3781
    %3980 = vmatprep.subr.bf16.mxu0 %v3786
    %3981 = vmatpush1.bf16.msra.mxu0 %v3785
    %3982 = vmatprep.subr.bf16.mxu0 0
    %3983 = vmatpush1.bf16.msra.mxu0 0
    %3984 = vmatprep.subr.bf16.mxu0 0
    %3985 = vmatpush1.bf16.msra.mxu0 0
    %3986 = vmatprep.subr.bf16.mxu0 0
    %3987 = vmatpush1.bf16.msra.mxu0 0
    %3988 = vmatprep.subr.bf16.mxu0 0
    %3989 = vmatpush1.bf16.msra.mxu0 0
    %3990 = vmatprep.subr.bf16.mxu0 0
    %3991 = vmatpush1.bf16.msra.mxu0 0
    %3992 = vmatprep.subr.bf16.mxu0 0
    %3993 = vmatpush1.bf16.msra.mxu0 0
    %3994 = vmatprep.subr.bf16.mxu0 0
    %3995 = vmatpush1.bf16.msra.mxu0 0
    %3996 = vmatprep.subr.bf16.mxu0 0
    %3997 = vmatpush1.bf16.msra.mxu0 0
    %3998 = vmatprep.mubr.bf16.mxu0 0
    %3999 = vmatmul.mubr.bf16.gmra.mrb[0].mxu0 %v3924
    %v4000 = vpop.f32.mrb[0].mxu0
    %v4001 = vadd.f32 0.0, %v4000
    %v4002 = vpop.f32.mrb[0].mxu0
    %v4003 = vadd.f32 0.0, %v4002
    %v4004 = vpop.f32.mrb[0].mxu0
    %v4005 = vpop.f32.mrb[0].mxu0
    %4006 = vdwg.mxu0
    %v4007 = vadd.f32 %v3920, %v3960
    %v4008 = vadd.f32 %v3921, %v3962
    %v4009 = vadd.f32 %v3922, %v4001
    %v4010 = vadd.f32 %v3923, %v4003
    %v4011 = vtanh.pop %v4007
    %v4012 = vtanh.pop %v4008
    %v4013 = vtanh.pop %v4009
    %v4014 = vtanh.pop %v4010
    %v4015 = vmul.f32 %v4011, 0.5
    %v4016 = vadd.f32 %v4015, 0.5
    %v4017 = vmul.f32 %v4012, 0.5
    %v4018 = vadd.f32 %v4017, 0.5
    %v4019 = vmul.f32 %v4014, 0.5
    %v4020 = vadd.f32 %v4019, 0.5
    %v4021 = vmul.f32 %v4018, %v3917
    %v4022 = vmul.f32 %v4016, %v4013
    %v4023 = vadd.f32 %v4021, %v4022
    %v4024 = vtanh.pop %v4023
    %v4025 = vmul.f32 %v4020, %v4024
    %v4026 = vld [vmem:[#allocation4 + $0x60] sm:$0xff]
    %v4027 = vld [vmem:[#allocation4 + $0x68] sm:$0xff]
    %v4028 = vld [vmem:[#allocation4 + $0x70] sm:$0xff]
    %v4029 = vld [vmem:[#allocation4 + $0x78] sm:$0xff]
    %v4030 = vpack.c.bf16 %v4025, %v4025
    %4031 = vmatprep.subr.bf16.mxu0 %v3756
    %4032 = vmatpush1.bf16.msra.mxu0 %v3755
    %4033 = vmatprep.subr.bf16.mxu0 %v3760
    %4034 = vmatpush1.bf16.msra.mxu0 %v3759
    %4035 = vmatprep.subr.bf16.mxu0 %v3764
    %4036 = vmatpush1.bf16.msra.mxu0 %v3763
    %4037 = vmatprep.subr.bf16.mxu0 %v3768
    %4038 = vmatpush1.bf16.msra.mxu0 %v3767
    %4039 = vmatprep.subr.bf16.mxu0 %v3772
    %4040 = vmatpush1.bf16.msra.mxu0 %v3771
    %4041 = vmatprep.subr.bf16.mxu0 %v3776
    %4042 = vmatpush1.bf16.msra.mxu0 %v3775
    %4043 = vmatprep.subr.bf16.mxu0 %v3780
    %4044 = vmatpush1.bf16.msra.mxu0 %v3779
    %4045 = vmatprep.subr.bf16.mxu0 %v3784
    %4046 = vmatpush1.bf16.msra.mxu0 %v3783
    %4047 = vmatprep.subr.bf16.mxu0 0
    %4048 = vmatpush1.bf16.msra.mxu0 0
    %4049 = vmatprep.subr.bf16.mxu0 0
    %4050 = vmatpush1.bf16.msra.mxu0 0
    %4051 = vmatprep.subr.bf16.mxu0 0
    %4052 = vmatpush1.bf16.msra.mxu0 0
    %4053 = vmatprep.subr.bf16.mxu0 0
    %4054 = vmatpush1.bf16.msra.mxu0 0
    %4055 = vmatprep.subr.bf16.mxu0 0
    %4056 = vmatpush1.bf16.msra.mxu0 0
    %4057 = vmatprep.subr.bf16.mxu0 0
    %4058 = vmatpush1.bf16.msra.mxu0 0
    %4059 = vmatprep.subr.bf16.mxu0 0
    %4060 = vmatpush1.bf16.msra.mxu0 0
    %4061 = vmatprep.subr.bf16.mxu0 0
    %4062 = vmatpush1.bf16.msra.mxu0 0
    %4063 = vmatprep.mubr.bf16.mxu0 0
    %4064 = vmatmul.mubr.bf16.gmra.mrb[0].mxu0 %v4030
    %v4065 = vpop.f32.mrb[0].mxu0
    %v4066 = vadd.f32 0.0, %v4065
    %v4067 = vpop.f32.mrb[0].mxu0
    %v4068 = vadd.f32 0.0, %v4067
    %v4069 = vpop.f32.mrb[0].mxu0
    %v4070 = vpop.f32.mrb[0].mxu0
    %4071 = vdwg.mxu0
    %4072 = vmatprep.subr.bf16.mxu0 %v3758
    %4073 = vmatpush1.bf16.msra.mxu0 %v3757
    %4074 = vmatprep.subr.bf16.mxu0 %v3762
    %4075 = vmatpush1.bf16.msra.mxu0 %v3761
    %4076 = vmatprep.subr.bf16.mxu0 %v3766
    %4077 = vmatpush1.bf16.msra.mxu0 %v3765
    %4078 = vmatprep.subr.bf16.mxu0 %v3770
    %4079 = vmatpush1.bf16.msra.mxu0 %v3769
    %4080 = vmatprep.subr.bf16.mxu0 %v3774
    %4081 = vmatpush1.bf16.msra.mxu0 %v3773
    %4082 = vmatprep.subr.bf16.mxu0 %v3778
    %4083 = vmatpush1.bf16.msra.mxu0 %v3777
    %4084 = vmatprep.subr.bf16.mxu0 %v3782
    %4085 = vmatpush1.bf16.msra.mxu0 %v3781
    %4086 = vmatprep.subr.bf16.mxu0 %v3786
    %4087 = vmatpush1.bf16.msra.mxu0 %v3785
    %4088 = vmatprep.subr.bf16.mxu0 0
    %4089 = vmatpush1.bf16.msra.mxu0 0
    %4090 = vmatprep.subr.bf16.mxu0 0
    %4091 = vmatpush1.bf16.msra.mxu0 0
    %4092 = vmatprep.subr.bf16.mxu0 0
    %4093 = vmatpush1.bf16.msra.mxu0 0
    %4094 = vmatprep.subr.bf16.mxu0 0
    %4095 = vmatpush1.bf16.msra.mxu0 0
    %4096 = vmatprep.subr.bf16.mxu0 0
    %4097 = vmatpush1.bf16.msra.mxu0 0
    %4098 = vmatprep.subr.bf16.mxu0 0
    %4099 = vmatpush1.bf16.msra.mxu0 0
    %4100 = vmatprep.subr.bf16.mxu0 0
    %4101 = vmatpush1.bf16.msra.mxu0 0
    %4102 = vmatprep.subr.bf16.mxu0 0
    %4103 = vmatpush1.bf16.msra.mxu0 0
    %4104 = vmatprep.mubr.bf16.mxu0 0
    %4105 = vmatmul.mubr.bf16.gmra.mrb[0].mxu0 %v4030
    %v4106 = vpop.f32.mrb[0].mxu0
    %v4107 = vadd.f32 0.0, %v4106
    %v4108 = vpop.f32.mrb[0].mxu0
    %v4109 = vadd.f32 0.0, %v4108
    %v4110 = vpop.f32.mrb[0].mxu0
    %v4111 = vpop.f32.mrb[0].mxu0
    %4112 = vdwg.mxu0
    %v4113 = vadd.f32 %v4026, %v4066
    %v4114 = vadd.f32 %v4027, %v4068
    %v4115 = vadd.f32 %v4028, %v4107
    %v4116 = vadd.f32 %v4029, %v4109
    %v4117 = vtanh.pop %v4113
    %v4118 = vtanh.pop %v4114
    %v4119 = vtanh.pop %v4115
    %v4120 = vtanh.pop %v4116
    %v4121 = vmul.f32 %v4117, 0.5
    %v4122 = vadd.f32 %v4121, 0.5
    %v4123 = vmul.f32 %v4118, 0.5
    %v4124 = vadd.f32 %v4123, 0.5
    %v4125 = vmul.f32 %v4120, 0.5
    %v4126 = vadd.f32 %v4125, 0.5
    %v4127 = vmul.f32 %v4124, %v4023
    %v4128 = vmul.f32 %v4122, %v4119
    %v4129 = vadd.f32 %v4127, %v4128
    %v4130 = vtanh.pop %v4129
    %v4131 = vmul.f32 %v4126, %v4130
    %v4132 = vld [vmem:[#allocation4 + $0x80] sm:$0xff]
    %v4133 = vld [vmem:[#allocation4 + $0x88] sm:$0xff]
    %v4134 = vld [vmem:[#allocation4 + $0x90] sm:$0xff]
    %v4135 = vld [vmem:[#allocation4 + $0x98] sm:$0xff]
    %v4136 = vpack.c.bf16 %v4131, %v4131
    %4137 = vmatprep.subr.bf16.mxu0 %v3756
    %4138 = vmatpush1.bf16.msra.mxu0 %v3755
    %4139 = vmatprep.subr.bf16.mxu0 %v3760
    %4140 = vmatpush1.bf16.msra.mxu0 %v3759
    %4141 = vmatprep.subr.bf16.mxu0 %v3764
    %4142 = vmatpush1.bf16.msra.mxu0 %v3763
    %4143 = vmatprep.subr.bf16.mxu0 %v3768
    %4144 = vmatpush1.bf16.msra.mxu0 %v3767
    %4145 = vmatprep.subr.bf16.mxu0 %v3772
    %4146 = vmatpush1.bf16.msra.mxu0 %v3771
    %4147 = vmatprep.subr.bf16.mxu0 %v3776
    %4148 = vmatpush1.bf16.msra.mxu0 %v3775
    %4149 = vmatprep.subr.bf16.mxu0 %v3780
    %4150 = vmatpush1.bf16.msra.mxu0 %v3779
    %4151 = vmatprep.subr.bf16.mxu0 %v3784
    %4152 = vmatpush1.bf16.msra.mxu0 %v3783
    %4153 = vmatprep.subr.bf16.mxu0 0
    %4154 = vmatpush1.bf16.msra.mxu0 0
    %4155 = vmatprep.subr.bf16.mxu0 0
    %4156 = vmatpush1.bf16.msra.mxu0 0
    %4157 = vmatprep.subr.bf16.mxu0 0
    %4158 = vmatpush1.bf16.msra.mxu0 0
    %4159 = vmatprep.subr.bf16.mxu0 0
    %4160 = vmatpush1.bf16.msra.mxu0 0
    %4161 = vmatprep.subr.bf16.mxu0 0
    %4162 = vmatpush1.bf16.msra.mxu0 0
    %4163 = vmatprep.subr.bf16.mxu0 0
    %4164 = vmatpush1.bf16.msra.mxu0 0
    %4165 = vmatprep.subr.bf16.mxu0 0
    %4166 = vmatpush1.bf16.msra.mxu0 0
    %4167 = vmatprep.subr.bf16.mxu0 0
    %4168 = vmatpush1.bf16.msra.mxu0 0
    %4169 = vmatprep.mubr.bf16.mxu0 0
    %4170 = vmatmul.mubr.bf16.gmra.mrb[0].mxu0 %v4136
    %v4171 = vpop.f32.mrb[0].mxu0
    %v4172 = vadd.f32 0.0, %v4171
    %v4173 = vpop.f32.mrb[0].mxu0
    %v4174 = vadd.f32 0.0, %v4173
    %v4175 = vpop.f32.mrb[0].mxu0
    %v4176 = vpop.f32.mrb[0].mxu0
    %4177 = vdwg.mxu0
    %4178 = vmatprep.subr.bf16.mxu0 %v3758
    %4179 = vmatpush1.bf16.msra.mxu0 %v3757
    %4180 = vmatprep.subr.bf16.mxu0 %v3762
    %4181 = vmatpush1.bf16.msra.mxu0 %v3761
    %4182 = vmatprep.subr.bf16.mxu0 %v3766
    %4183 = vmatpush1.bf16.msra.mxu0 %v3765
    %4184 = vmatprep.subr.bf16.mxu0 %v3770
    %4185 = vmatpush1.bf16.msra.mxu0 %v3769
    %4186 = vmatprep.subr.bf16.mxu0 %v3774
    %4187 = vmatpush1.bf16.msra.mxu0 %v3773
    %4188 = vmatprep.subr.bf16.mxu0 %v3778
    %4189 = vmatpush1.bf16.msra.mxu0 %v3777
    %4190 = vmatprep.subr.bf16.mxu0 %v3782
    %4191 = vmatpush1.bf16.msra.mxu0 %v3781
    %4192 = vmatprep.subr.bf16.mxu0 %v3786
    %4193 = vmatpush1.bf16.msra.mxu0 %v3785
    %4194 = vmatprep.subr.bf16.mxu0 0
    %4195 = vmatpush1.bf16.msra.mxu0 0
    %4196 = vmatprep.subr.bf16.mxu0 0
    %4197 = vmatpush1.bf16.msra.mxu0 0
    %4198 = vmatprep.subr.bf16.mxu0 0
    %4199 = vmatpush1.bf16.msra.mxu0 0
    %4200 = vmatprep.subr.bf16.mxu0 0
    %4201 = vmatpush1.bf16.msra.mxu0 0
    %4202 = vmatprep.subr.bf16.mxu0 0
    %4203 = vmatpush1.bf16.msra.mxu0 0
    %4204 = vmatprep.subr.bf16.mxu0 0
    %4205 = vmatpush1.bf16.msra.mxu0 0
    %4206 = vmatprep.subr.bf16.mxu0 0
    %4207 = vmatpush1.bf16.msra.mxu0 0
    %4208 = vmatprep.subr.bf16.mxu0 0
    %4209 = vmatpush1.bf16.msra.mxu0 0
    %4210 = vmatprep.mubr.bf16.mxu0 0
    %4211 = vmatmul.mubr.bf16.gmra.mrb[0].mxu0 %v4136
    %v4212 = vpop.f32.mrb[0].mxu0
    %v4213 = vadd.f32 0.0, %v4212
    %v4214 = vpop.f32.mrb[0].mxu0
    %v4215 = vadd.f32 0.0, %v4214
    %v4216 = vpop.f32.mrb[0].mxu0
    %v4217 = vpop.f32.mrb[0].mxu0
    %4218 = vdwg.mxu0
    %v4219 = vadd.f32 %v4132, %v4172
    %v4220 = vadd.f32 %v4133, %v4174
    %v4221 = vadd.f32 %v4134, %v4213
    %v4222 = vadd.f32 %v4135, %v4215
    %v4223 = vtanh.pop %v4219
    %v4224 = vtanh.pop %v4220
    %v4225 = vtanh.pop %v4221
    %v4226 = vtanh.pop %v4222
    %v4227 = vmul.f32 %v4223, 0.5
    %v4228 = vadd.f32 %v4227, 0.5
    %v4229 = vmul.f32 %v4224, 0.5
    %v4230 = vadd.f32 %v4229, 0.5
    %v4231 = vmul.f32 %v4226, 0.5
    %v4232 = vadd.f32 %v4231, 0.5
    %v4233 = vmul.f32 %v4230, %v4129
    %v4234 = vmul.f32 %v4228, %v4225
    %v4235 = vadd.f32 %v4233, %v4234
    %v4236 = vtanh.pop %v4235
    %v4237 = vmul.f32 %v4232, %v4236
    %v4238 = vld [vmem:[#allocation4 + $0xa0] sm:$0xff]
    %v4239 = vld [vmem:[#allocation4 + $0xa8] sm:$0xff]
    %v4240 = vld [vmem:[#allocation4 + $0xb0] sm:$0xff]
    %v4241 = vld [vmem:[#allocation4 + $0xb8] sm:$0xff]
    %v4242 = vpack.c.bf16 %v4237, %v4237
    %4243 = vmatprep.subr.bf16.mxu0 %v3756
    %4244 = vmatpush1.bf16.msra.mxu0 %v3755
    %4245 = vmatprep.subr.bf16.mxu0 %v3760
    %4246 = vmatpush1.bf16.msra.mxu0 %v3759
    %4247 = vmatprep.subr.bf16.mxu0 %v3764
    %4248 = vmatpush1.bf16.msra.mxu0 %v3763
    %4249 = vmatprep.subr.bf16.mxu0 %v3768
    %4250 = vmatpush1.bf16.msra.mxu0 %v3767
    %4251 = vmatprep.subr.bf16.mxu0 %v3772
    %4252 = vmatpush1.bf16.msra.mxu0 %v3771
    %4253 = vmatprep.subr.bf16.mxu0 %v3776
    %4254 = vmatpush1.bf16.msra.mxu0 %v3775
    %4255 = vmatprep.subr.bf16.mxu0 %v3780
    %4256 = vmatpush1.bf16.msra.mxu0 %v3779
    %4257 = vmatprep.subr.bf16.mxu0 %v3784
    %4258 = vmatpush1.bf16.msra.mxu0 %v3783
    %4259 = vmatprep.subr.bf16.mxu0 0
    %4260 = vmatpush1.bf16.msra.mxu0 0
    %4261 = vmatprep.subr.bf16.mxu0 0
    %4262 = vmatpush1.bf16.msra.mxu0 0
    %4263 = vmatprep.subr.bf16.mxu0 0
    %4264 = vmatpush1.bf16.msra.mxu0 0
    %4265 = vmatprep.subr.bf16.mxu0 0
    %4266 = vmatpush1.bf16.msra.mxu0 0
    %4267 = vmatprep.subr.bf16.mxu0 0
    %4268 = vmatpush1.bf16.msra.mxu0 0
    %4269 = vmatprep.subr.bf16.mxu0 0
    %4270 = vmatpush1.bf16.msra.mxu0 0
    %4271 = vmatprep.subr.bf16.mxu0 0
    %4272 = vmatpush1.bf16.msra.mxu0 0
    %4273 = vmatprep.subr.bf16.mxu0 0
    %4274 = vmatpush1.bf16.msra.mxu0 0
    %4275 = vmatprep.mubr.bf16.mxu0 0
    %4276 = vmatmul.mubr.bf16.gmra.mrb[0].mxu0 %v4242
    %v4277 = vpop.f32.mrb[0].mxu0
    %v4278 = vadd.f32 0.0, %v4277
    %v4279 = vpop.f32.mrb[0].mxu0
    %v4280 = vadd.f32 0.0, %v4279
    %v4281 = vpop.f32.mrb[0].mxu0
    %v4282 = vpop.f32.mrb[0].mxu0
    %4283 = vdwg.mxu0
    %4284 = vmatprep.subr.bf16.mxu0 %v3758
    %4285 = vmatpush1.bf16.msra.mxu0 %v3757
    %4286 = vmatprep.subr.bf16.mxu0 %v3762
    %4287 = vmatpush1.bf16.msra.mxu0 %v3761
    %4288 = vmatprep.subr.bf16.mxu0 %v3766
    %4289 = vmatpush1.bf16.msra.mxu0 %v3765
    %4290 = vmatprep.subr.bf16.mxu0 %v3770
    %4291 = vmatpush1.bf16.msra.mxu0 %v3769
    %4292 = vmatprep.subr.bf16.mxu0 %v3774
    %4293 = vmatpush1.bf16.msra.mxu0 %v3773
    %4294 = vmatprep.subr.bf16.mxu0 %v3778
    %4295 = vmatpush1.bf16.msra.mxu0 %v3777
    %4296 = vmatprep.subr.bf16.mxu0 %v3782
    %4297 = vmatpush1.bf16.msra.mxu0 %v3781
    %4298 = vmatprep.subr.bf16.mxu0 %v3786
    %4299 = vmatpush1.bf16.msra.mxu0 %v3785
    %4300 = vmatprep.subr.bf16.mxu0 0
    %4301 = vmatpush1.bf16.msra.mxu0 0
    %4302 = vmatprep.subr.bf16.mxu0 0
    %4303 = vmatpush1.bf16.msra.mxu0 0
    %4304 = vmatprep.subr.bf16.mxu0 0
    %4305 = vmatpush1.bf16.msra.mxu0 0
    %4306 = vmatprep.subr.bf16.mxu0 0
    %4307 = vmatpush1.bf16.msra.mxu0 0
    %4308 = vmatprep.subr.bf16.mxu0 0
    %4309 = vmatpush1.bf16.msra.mxu0 0
    %4310 = vmatprep.subr.bf16.mxu0 0
    %4311 = vmatpush1.bf16.msra.mxu0 0
    %4312 = vmatprep.subr.bf16.mxu0 0
    %4313 = vmatpush1.bf16.msra.mxu0 0
    %4314 = vmatprep.subr.bf16.mxu0 0
    %4315 = vmatpush1.bf16.msra.mxu0 0
    %4316 = vmatprep.mubr.bf16.mxu0 0
    %4317 = vmatmul.mubr.bf16.gmra.mrb[0].mxu0 %v4242
    %v4318 = vpop.f32.mrb[0].mxu0
    %v4319 = vadd.f32 0.0, %v4318
    %v4320 = vpop.f32.mrb[0].mxu0
    %v4321 = vadd.f32 0.0, %v4320
    %v4322 = vpop.f32.mrb[0].mxu0
    %v4323 = vpop.f32.mrb[0].mxu0
    %4324 = vdwg.mxu0
    %v4325 = vadd.f32 %v4238, %v4278
    %v4326 = vadd.f32 %v4239, %v4280
    %v4327 = vadd.f32 %v4240, %v4319
    %v4328 = vadd.f32 %v4241, %v4321
    %v4329 = vtanh.pop %v4325
    %v4330 = vtanh.pop %v4326
    %v4331 = vtanh.pop %v4327
    %v4332 = vtanh.pop %v4328
    %v4333 = vmul.f32 %v4329, 0.5
    %v4334 = vadd.f32 %v4333, 0.5
    %v4335 = vmul.f32 %v4330, 0.5
    %v4336 = vadd.f32 %v4335, 0.5
    %v4337 = vmul.f32 %v4332, 0.5
    %v4338 = vadd.f32 %v4337, 0.5
    %v4339 = vmul.f32 %v4336, %v4235
    %v4340 = vmul.f32 %v4334, %v4331
    %v4341 = vadd.f32 %v4339, %v4340
    %v4342 = vtanh.pop %v4341
    %v4343 = vmul.f32 %v4338, %v4342
    %v4344 = vld [vmem:[#allocation4 + $0xc0] sm:$0xff]
    %v4345 = vld [vmem:[#allocation4 + $0xc8] sm:$0xff]
    %v4346 = vld [vmem:[#allocation4 + $0xd0] sm:$0xff]
    %v4347 = vld [vmem:[#allocation4 + $0xd8] sm:$0xff]
    %v4348 = vpack.c.bf16 %v4343, %v4343
    %4349 = vmatprep.subr.bf16.mxu0 %v3756
    %4350 = vmatpush1.bf16.msra.mxu0 %v3755
    %4351 = vmatprep.subr.bf16.mxu0 %v3760
    %4352 = vmatpush1.bf16.msra.mxu0 %v3759
    %4353 = vmatprep.subr.bf16.mxu0 %v3764
    %4354 = vmatpush1.bf16.msra.mxu0 %v3763
    %4355 = vmatprep.subr.bf16.mxu0 %v3768
    %4356 = vmatpush1.bf16.msra.mxu0 %v3767
    %4357 = vmatprep.subr.bf16.mxu0 %v3772
    %4358 = vmatpush1.bf16.msra.mxu0 %v3771
    %4359 = vmatprep.subr.bf16.mxu0 %v3776
    %4360 = vmatpush1.bf16.msra.mxu0 %v3775
    %4361 = vmatprep.subr.bf16.mxu0 %v3780
    %4362 = vmatpush1.bf16.msra.mxu0 %v3779
    %4363 = vmatprep.subr.bf16.mxu0 %v3784
    %4364 = vmatpush1.bf16.msra.mxu0 %v3783
    %4365 = vmatprep.subr.bf16.mxu0 0
    %4366 = vmatpush1.bf16.msra.mxu0 0
    %4367 = vmatprep.subr.bf16.mxu0 0
    %4368 = vmatpush1.bf16.msra.mxu0 0
    %4369 = vmatprep.subr.bf16.mxu0 0
    %4370 = vmatpush1.bf16.msra.mxu0 0
    %4371 = vmatprep.subr.bf16.mxu0 0
    %4372 = vmatpush1.bf16.msra.mxu0 0
    %4373 = vmatprep.subr.bf16.mxu0 0
    %4374 = vmatpush1.bf16.msra.mxu0 0
    %4375 = vmatprep.subr.bf16.mxu0 0
    %4376 = vmatpush1.bf16.msra.mxu0 0
    %4377 = vmatprep.subr.bf16.mxu0 0
    %4378 = vmatpush1.bf16.msra.mxu0 0
    %4379 = vmatprep.subr.bf16.mxu0 0
    %4380 = vmatpush1.bf16.msra.mxu0 0
    %4381 = vmatprep.mubr.bf16.mxu0 0
    %4382 = vmatmul.mubr.bf16.gmra.mrb[0].mxu0 %v4348
    %v4383 = vpop.f32.mrb[0].mxu0
    %v4384 = vadd.f32 0.0, %v4383
    %v4385 = vpop.f32.mrb[0].mxu0
    %v4386 = vadd.f32 0.0, %v4385
    %v4387 = vpop.f32.mrb[0].mxu0
    %v4388 = vpop.f32.mrb[0].mxu0
    %4389 = vdwg.mxu0
    %4390 = vmatprep.subr.bf16.mxu0 %v3758
    %4391 = vmatpush1.bf16.msra.mxu0 %v3757
    %4392 = vmatprep.subr.bf16.mxu0 %v3762
    %4393 = vmatpush1.bf16.msra.mxu0 %v3761
    %4394 = vmatprep.subr.bf16.mxu0 %v3766
    %4395 = vmatpush1.bf16.msra.mxu0 %v3765
    %4396 = vmatprep.subr.bf16.mxu0 %v3770
    %4397 = vmatpush1.bf16.msra.mxu0 %v3769
    %4398 = vmatprep.subr.bf16.mxu0 %v3774
    %4399 = vmatpush1.bf16.msra.mxu0 %v3773
    %4400 = vmatprep.subr.bf16.mxu0 %v3778
    %4401 = vmatpush1.bf16.msra.mxu0 %v3777
    %4402 = vmatprep.subr.bf16.mxu0 %v3782
    %4403 = vmatpush1.bf16.msra.mxu0 %v3781
    %4404 = vmatprep.subr.bf16.mxu0 %v3786
    %4405 = vmatpush1.bf16.msra.mxu0 %v3785
    %4406 = vmatprep.subr.bf16.mxu0 0
    %4407 = vmatpush1.bf16.msra.mxu0 0
    %4408 = vmatprep.subr.bf16.mxu0 0
    %4409 = vmatpush1.bf16.msra.mxu0 0
    %4410 = vmatprep.subr.bf16.mxu0 0
    %4411 = vmatpush1.bf16.msra.mxu0 0
    %4412 = vmatprep.subr.bf16.mxu0 0
    %4413 = vmatpush1.bf16.msra.mxu0 0
    %4414 = vmatprep.subr.bf16.mxu0 0
    %4415 = vmatpush1.bf16.msra.mxu0 0
    %4416 = vmatprep.subr.bf16.mxu0 0
    %4417 = vmatpush1.bf16.msra.mxu0 0
    %4418 = vmatprep.subr.bf16.mxu0 0
    %4419 = vmatpush1.bf16.msra.mxu0 0
    %4420 = vmatprep.subr.bf16.mxu0 0
    %4421 = vmatpush1.bf16.msra.mxu0 0
    %4422 = vmatprep.mubr.bf16.mxu0 0
    %4423 = vmatmul.mubr.bf16.gmra.mrb[0].mxu0 %v4348
    %v4424 = vpop.f32.mrb[0].mxu0
    %v4425 = vadd.f32 0.0, %v4424
    %v4426 = vpop.f32.mrb[0].mxu0
    %v4427 = vadd.f32 0.0, %v4426
    %v4428 = vpop.f32.mrb[0].mxu0
    %v4429 = vpop.f32.mrb[0].mxu0
    %4430 = vdwg.mxu0
    %v4431 = vadd.f32 %v4344, %v4384
    %v4432 = vadd.f32 %v4345, %v4386
    %v4433 = vadd.f32 %v4346, %v4425
    %v4434 = vadd.f32 %v4347, %v4427
    %v4435 = vtanh.pop %v4431
    %v4436 = vtanh.pop %v4432
    %v4437 = vtanh.pop %v4433
    %v4438 = vtanh.pop %v4434
    %v4439 = vmul.f32 %v4435, 0.5
    %v4440 = vadd.f32 %v4439, 0.5
    %v4441 = vmul.f32 %v4436, 0.5
    %v4442 = vadd.f32 %v4441, 0.5
    %v4443 = vmul.f32 %v4438, 0.5
    %v4444 = vadd.f32 %v4443, 0.5
    %v4445 = vmul.f32 %v4442, %v4341
    %v4446 = vmul.f32 %v4440, %v4437
    %v4447 = vadd.f32 %v4445, %v4446
    %v4448 = vtanh.pop %v4447
    %v4449 = vmul.f32 %v4444, %v4448
    %v4450 = vld [vmem:[#allocation4 + $0xe0] sm:$0xff]
    %v4451 = vld [vmem:[#allocation4 + $0xe8] sm:$0xff]
    %v4452 = vld [vmem:[#allocation4 + $0xf0] sm:$0xff]
    %v4453 = vld [vmem:[#allocation4 + $0xf8] sm:$0xff]
    %v4454 = vpack.c.bf16 %v4449, %v4449
    %4455 = vmatprep.subr.bf16.mxu0 %v3756
    %4456 = vmatpush1.bf16.msra.mxu0 %v3755
    %4457 = vmatprep.subr.bf16.mxu0 %v3760
    %4458 = vmatpush1.bf16.msra.mxu0 %v3759
    %4459 = vmatprep.subr.bf16.mxu0 %v3764
    %4460 = vmatpush1.bf16.msra.mxu0 %v3763
    %4461 = vmatprep.subr.bf16.mxu0 %v3768
    %4462 = vmatpush1.bf16.msra.mxu0 %v3767
    %4463 = vmatprep.subr.bf16.mxu0 %v3772
    %4464 = vmatpush1.bf16.msra.mxu0 %v3771
    %4465 = vmatprep.subr.bf16.mxu0 %v3776
    %4466 = vmatpush1.bf16.msra.mxu0 %v3775
    %4467 = vmatprep.subr.bf16.mxu0 %v3780
    %4468 = vmatpush1.bf16.msra.mxu0 %v3779
    %4469 = vmatprep.subr.bf16.mxu0 %v3784
    %4470 = vmatpush1.bf16.msra.mxu0 %v3783
    %4471 = vmatprep.subr.bf16.mxu0 0
    %4472 = vmatpush1.bf16.msra.mxu0 0
    %4473 = vmatprep.subr.bf16.mxu0 0
    %4474 = vmatpush1.bf16.msra.mxu0 0
    %4475 = vmatprep.subr.bf16.mxu0 0
    %4476 = vmatpush1.bf16.msra.mxu0 0
    %4477 = vmatprep.subr.bf16.mxu0 0
    %4478 = vmatpush1.bf16.msra.mxu0 0
    %4479 = vmatprep.subr.bf16.mxu0 0
    %4480 = vmatpush1.bf16.msra.mxu0 0
    %4481 = vmatprep.subr.bf16.mxu0 0
    %4482 = vmatpush1.bf16.msra.mxu0 0
    %4483 = vmatprep.subr.bf16.mxu0 0
    %4484 = vmatpush1.bf16.msra.mxu0 0
    %4485 = vmatprep.subr.bf16.mxu0 0
    %4486 = vmatpush1.bf16.msra.mxu0 0
    %4487 = vmatprep.mubr.bf16.mxu0 0
    %4488 = vmatmul.mubr.bf16.gmra.mrb[0].mxu0 %v4454
    %v4489 = vpop.f32.mrb[0].mxu0
    %v4490 = vadd.f32 0.0, %v4489
    %v4491 = vpop.f32.mrb[0].mxu0
    %v4492 = vadd.f32 0.0, %v4491
    %v4493 = vpop.f32.mrb[0].mxu0
    %v4494 = vpop.f32.mrb[0].mxu0
    %4495 = vdwg.mxu0
    %4496 = vmatprep.subr.bf16.mxu0 %v3758
    %4497 = vmatpush1.bf16.msra.mxu0 %v3757
    %4498 = vmatprep.subr.bf16.mxu0 %v3762
    %4499 = vmatpush1.bf16.msra.mxu0 %v3761
    %4500 = vmatprep.subr.bf16.mxu0 %v3766
    %4501 = vmatpush1.bf16.msra.mxu0 %v3765
    %4502 = vmatprep.subr.bf16.mxu0 %v3770
    %4503 = vmatpush1.bf16.msra.mxu0 %v3769
    %4504 = vmatprep.subr.bf16.mxu0 %v3774
    %4505 = vmatpush1.bf16.msra.mxu0 %v3773
    %4506 = vmatprep.subr.bf16.mxu0 %v3778
    %4507 = vmatpush1.bf16.msra.mxu0 %v3777
    %4508 = vmatprep.subr.bf16.mxu0 %v3782
    %4509 = vmatpush1.bf16.msra.mxu0 %v3781
    %4510 = vmatprep.subr.bf16.mxu0 %v3786
    %4511 = vmatpush1.bf16.msra.mxu0 %v3785
    %4512 = vmatprep.subr.bf16.mxu0 0
    %4513 = vmatpush1.bf16.msra.mxu0 0
    %4514 = vmatprep.subr.bf16.mxu0 0
    %4515 = vmatpush1.bf16.msra.mxu0 0
    %4516 = vmatprep.subr.bf16.mxu0 0
    %4517 = vmatpush1.bf16.msra.mxu0 0
    %4518 = vmatprep.subr.bf16.mxu0 0
    %4519 = vmatpush1.bf16.msra.mxu0 0
    %4520 = vmatprep.subr.bf16.mxu0 0
    %4521 = vmatpush1.bf16.msra.mxu0 0
    %4522 = vmatprep.subr.bf16.mxu0 0
    %4523 = vmatpush1.bf16.msra.mxu0 0
    %4524 = vmatprep.subr.bf16.mxu0 0
    %4525 = vmatpush1.bf16.msra.mxu0 0
    %4526 = vmatprep.subr.bf16.mxu0 0
    %4527 = vmatpush1.bf16.msra.mxu0 0
    %4528 = vmatprep.mubr.bf16.mxu0 0
    %4529 = vmatmul.mubr.bf16.gmra.mrb[0].mxu0 %v4454
    %v4530 = vpop.f32.mrb[0].mxu0
    %v4531 = vadd.f32 0.0, %v4530
    %v4532 = vpop.f32.mrb[0].mxu0
    %v4533 = vadd.f32 0.0, %v4532
    %v4534 = vpop.f32.mrb[0].mxu0
    %v4535 = vpop.f32.mrb[0].mxu0
    %4536 = vdwg.mxu0
    %v4537 = vadd.f32 %v4450, %v4490
    %v4538 = vadd.f32 %v4451, %v4492
    %v4539 = vadd.f32 %v4452, %v4531
    %v4540 = vadd.f32 %v4453, %v4533
    %v4541 = vtanh.pop %v4537
    %v4542 = vtanh.pop %v4538
    %v4543 = vtanh.pop %v4539
    %v4544 = vtanh.pop %v4540
    %v4545 = vmul.f32 %v4541, 0.5
    %v4546 = vadd.f32 %v4545, 0.5
    %v4547 = vmul.f32 %v4542, 0.5
    %v4548 = vadd.f32 %v4547, 0.5
    %v4549 = vmul.f32 %v4544, 0.5
    %v4550 = vadd.f32 %v4549, 0.5
    %v4551 = vmul.f32 %v4548, %v4447
    %v4552 = vmul.f32 %v4546, %v4543
    %v4553 = vadd.f32 %v4551, %v4552
    %v4554 = vtanh.pop %v4553
    %v4555 = vmul.f32 %v4550, %v4554
    %v4556 = vld [vmem:[#allocation3 + $0x70] sm:$0xff]
    %v4557 = vld [vmem:[#allocation3 + $0x78] sm:$0xff]
    %v4558 = vpack.c.bf16 %v4556, %v4556
    %v4559 = vpack.c.bf16 %v4557, %v4557
    %s4560 = scalar_lea.vmem [#allocation7], 512
    %v4561 = vld [vmem:[%s4560] sm:$0xff]
    %v4562 = vld [vmem:[%s4560 + $0x8] sm:$0xff]
    %v4563 = vld [vmem:[%s4560 + $0x10] sm:$0xff]
    %v4564 = vld [vmem:[%s4560 + $0x18] sm:$0xff]
    %v4565 = vld [vmem:[%s4560 + $0x20] sm:$0xff]
    %v4566 = vld [vmem:[%s4560 + $0x28] sm:$0xff]
    %v4567 = vld [vmem:[%s4560 + $0x30] sm:$0xff]
    %v4568 = vld [vmem:[%s4560 + $0x38] sm:$0xff]
    %v4569 = vld [vmem:[%s4560 + $0x40] sm:$0xff]
    %v4570 = vld [vmem:[%s4560 + $0x48] sm:$0xff]
    %v4571 = vld [vmem:[%s4560 + $0x50] sm:$0xff]
    %v4572 = vld [vmem:[%s4560 + $0x58] sm:$0xff]
    %v4573 = vld [vmem:[%s4560 + $0x60] sm:$0xff]
    %v4574 = vld [vmem:[%s4560 + $0x68] sm:$0xff]
    %v4575 = vld [vmem:[%s4560 + $0x70] sm:$0xff]
    %v4576 = vld [vmem:[%s4560 + $0x78] sm:$0xff]
    %v4577 = vld [vmem:[%s4560 + $0x80] sm:$0xff]
    %v4578 = vld [vmem:[%s4560 + $0x88] sm:$0xff]
    %v4579 = vld [vmem:[%s4560 + $0x90] sm:$0xff]
    %v4580 = vld [vmem:[%s4560 + $0x98] sm:$0xff]
    %v4581 = vld [vmem:[%s4560 + $0xa0] sm:$0xff]
    %v4582 = vld [vmem:[%s4560 + $0xa8] sm:$0xff]
    %v4583 = vld [vmem:[%s4560 + $0xb0] sm:$0xff]
    %v4584 = vld [vmem:[%s4560 + $0xb8] sm:$0xff]
    %v4585 = vld [vmem:[%s4560 + $0xc0] sm:$0xff]
    %v4586 = vld [vmem:[%s4560 + $0xc8] sm:$0xff]
    %v4587 = vld [vmem:[%s4560 + $0xd0] sm:$0xff]
    %v4588 = vld [vmem:[%s4560 + $0xd8] sm:$0xff]
    %v4589 = vld [vmem:[%s4560 + $0xe0] sm:$0xff]
    %v4590 = vld [vmem:[%s4560 + $0xe8] sm:$0xff]
    %v4591 = vld [vmem:[%s4560 + $0xf0] sm:$0xff]
    %v4592 = vld [vmem:[%s4560 + $0xf8] sm:$0xff]
    %v4593 = vld [vmem:[%s4560 + $0x100] sm:$0xff]
    %v4594 = vld [vmem:[%s4560 + $0x108] sm:$0xff]
    %v4595 = vld [vmem:[%s4560 + $0x110] sm:$0xff]
    %v4596 = vld [vmem:[%s4560 + $0x118] sm:$0xff]
    %v4597 = vld [vmem:[%s4560 + $0x120] sm:$0xff]
    %v4598 = vld [vmem:[%s4560 + $0x128] sm:$0xff]
    %v4599 = vld [vmem:[%s4560 + $0x130] sm:$0xff]
    %v4600 = vld [vmem:[%s4560 + $0x138] sm:$0xff]
    %v4601 = vld [vmem:[%s4560 + $0x140] sm:$0xff]
    %v4602 = vld [vmem:[%s4560 + $0x148] sm:$0xff]
    %v4603 = vld [vmem:[%s4560 + $0x150] sm:$0xff]
    %v4604 = vld [vmem:[%s4560 + $0x158] sm:$0xff]
    %v4605 = vld [vmem:[%s4560 + $0x160] sm:$0xff]
    %v4606 = vld [vmem:[%s4560 + $0x168] sm:$0xff]
    %v4607 = vld [vmem:[%s4560 + $0x170] sm:$0xff]
    %v4608 = vld [vmem:[%s4560 + $0x178] sm:$0xff]
    %v4609 = vld [vmem:[%s4560 + $0x180] sm:$0xff]
    %v4610 = vld [vmem:[%s4560 + $0x188] sm:$0xff]
    %v4611 = vld [vmem:[%s4560 + $0x190] sm:$0xff]
    %v4612 = vld [vmem:[%s4560 + $0x198] sm:$0xff]
    %v4613 = vld [vmem:[%s4560 + $0x1a0] sm:$0xff]
    %v4614 = vld [vmem:[%s4560 + $0x1a8] sm:$0xff]
    %v4615 = vld [vmem:[%s4560 + $0x1b0] sm:$0xff]
    %v4616 = vld [vmem:[%s4560 + $0x1b8] sm:$0xff]
    %v4617 = vld [vmem:[%s4560 + $0x1c0] sm:$0xff]
    %v4618 = vld [vmem:[%s4560 + $0x1c8] sm:$0xff]
    %v4619 = vld [vmem:[%s4560 + $0x1d0] sm:$0xff]
    %v4620 = vld [vmem:[%s4560 + $0x1d8] sm:$0xff]
    %v4621 = vld [vmem:[%s4560 + $0x1e0] sm:$0xff]
    %v4622 = vld [vmem:[%s4560 + $0x1e8] sm:$0xff]
    %v4623 = vld [vmem:[%s4560 + $0x1f0] sm:$0xff]
    %v4624 = vld [vmem:[%s4560 + $0x1f8] sm:$0xff]
    %s4625 = scalar_lea.vmem %s5, 4
    %v4626 = vld [vmem:[%s4625] sm:$0xf]
    %v4628 = vlaneseq
    %v4629 = vshrl.u32 %v4628, 7
    %v4630 = vsub.s32 0, %v4629
    %v4631 = vrot.slane %v4626, %v4630
    %v4632 = vlaneseq
    %v4633 = vshrl.u32 %v4632, 7
    %v4634 = vsub.s32 2, %v4633
    %v4635 = vrot.slane %v4626, %v4634
    %v4636 = vlaneseq
    %v4637 = vshrl.u32 %v4636, 7
    %v4638 = vsub.s32 3, %v4637
    %v4639 = vrot.slane %v4626, %v4638
    %v4707 = vunpack.c.l.b16 %v4561
    %v4708 = vunpack.c.h.b16 %v4561
    %v4709 = vunpack.c.l.b16 %v4562
    %v4710 = vunpack.c.h.b16 %v4562
    %v4711 = vunpack.c.l.b16 %v4563
    %v4712 = vunpack.c.h.b16 %v4563
    %v4713 = vunpack.c.l.b16 %v4564
    %v4714 = vunpack.c.h.b16 %v4564
    %v4715 = vunpack.c.l.b16 %v4565
    %v4716 = vunpack.c.h.b16 %v4565
    %v4717 = vunpack.c.l.b16 %v4566
    %v4718 = vunpack.c.h.b16 %v4566
    %v4719 = vunpack.c.l.b16 %v4567
    %v4720 = vunpack.c.h.b16 %v4567
    %v4721 = vunpack.c.l.b16 %v4568
    %v4722 = vunpack.c.h.b16 %v4568
    %v4723 = vunpack.c.l.b16 %v4569
    %v4724 = vunpack.c.h.b16 %v4569
    %v4725 = vunpack.c.l.b16 %v4570
    %v4726 = vunpack.c.h.b16 %v4570
    %v4727 = vunpack.c.l.b16 %v4571
    %v4728 = vunpack.c.h.b16 %v4571
    %v4729 = vunpack.c.l.b16 %v4572
    %v4730 = vunpack.c.h.b16 %v4572
    %v4731 = vunpack.c.l.b16 %v4573
    %v4732 = vunpack.c.h.b16 %v4573
    %v4733 = vunpack.c.l.b16 %v4574
    %v4734 = vunpack.c.h.b16 %v4574
    %v4735 = vunpack.c.l.b16 %v4575
    %v4736 = vunpack.c.h.b16 %v4575
    %v4737 = vunpack.c.l.b16 %v4576
    %v4738 = vunpack.c.h.b16 %v4576
    %v4739 = vunpack.c.l.b16 %v4577
    %v4740 = vunpack.c.h.b16 %v4577
    %v4741 = vunpack.c.l.b16 %v4578
    %v4742 = vunpack.c.h.b16 %v4578
    %v4743 = vunpack.c.l.b16 %v4579
    %v4744 = vunpack.c.h.b16 %v4579
    %v4745 = vunpack.c.l.b16 %v4580
    %v4746 = vunpack.c.h.b16 %v4580
    %v4747 = vunpack.c.l.b16 %v4581
    %v4748 = vunpack.c.h.b16 %v4581
    %v4749 = vunpack.c.l.b16 %v4582
    %v4750 = vunpack.c.h.b16 %v4582
    %v4751 = vunpack.c.l.b16 %v4583
    %v4752 = vunpack.c.h.b16 %v4583
    %v4753 = vunpack.c.l.b16 %v4584
    %v4754 = vunpack.c.h.b16 %v4584
    %v4755 = vunpack.c.l.b16 %v4585
    %v4756 = vunpack.c.h.b16 %v4585
    %v4757 = vunpack.c.l.b16 %v4586
    %v4758 = vunpack.c.h.b16 %v4586
    %v4759 = vunpack.c.l.b16 %v4587
    %v4760 = vunpack.c.h.b16 %v4587
    %v4761 = vunpack.c.l.b16 %v4588
    %v4762 = vunpack.c.h.b16 %v4588
    %v4763 = vunpack.c.l.b16 %v4589
    %v4764 = vunpack.c.h.b16 %v4589
    %v4765 = vunpack.c.l.b16 %v4590
    %v4766 = vunpack.c.h.b16 %v4590
    %v4767 = vunpack.c.l.b16 %v4591
    %v4768 = vunpack.c.h.b16 %v4591
    %v4769 = vunpack.c.l.b16 %v4592
    %v4770 = vunpack.c.h.b16 %v4592
    %v4771 = vunpack.c.l.b16 %v4593
    %v4772 = vunpack.c.h.b16 %v4593
    %v4773 = vunpack.c.l.b16 %v4594
    %v4774 = vunpack.c.h.b16 %v4594
    %v4775 = vunpack.c.l.b16 %v4595
    %v4776 = vunpack.c.h.b16 %v4595
    %v4777 = vunpack.c.l.b16 %v4596
    %v4778 = vunpack.c.h.b16 %v4596
    %v4779 = vunpack.c.l.b16 %v4597
    %v4780 = vunpack.c.h.b16 %v4597
    %v4781 = vunpack.c.l.b16 %v4598
    %v4782 = vunpack.c.h.b16 %v4598
    %v4783 = vunpack.c.l.b16 %v4599
    %v4784 = vunpack.c.h.b16 %v4599
    %v4785 = vunpack.c.l.b16 %v4600
    %v4786 = vunpack.c.h.b16 %v4600
    %v4787 = vunpack.c.l.b16 %v4601
    %v4788 = vunpack.c.h.b16 %v4601
    %v4789 = vunpack.c.l.b16 %v4602
    %v4790 = vunpack.c.h.b16 %v4602
    %v4791 = vunpack.c.l.b16 %v4603
    %v4792 = vunpack.c.h.b16 %v4603
    %v4793 = vunpack.c.l.b16 %v4604
    %v4794 = vunpack.c.h.b16 %v4604
    %v4795 = vunpack.c.l.b16 %v4605
    %v4796 = vunpack.c.h.b16 %v4605
    %v4797 = vunpack.c.l.b16 %v4606
    %v4798 = vunpack.c.h.b16 %v4606
    %v4799 = vunpack.c.l.b16 %v4607
    %v4800 = vunpack.c.h.b16 %v4607
    %v4801 = vunpack.c.l.b16 %v4608
    %v4802 = vunpack.c.h.b16 %v4608
    %v4803 = vunpack.c.l.b16 %v4609
    %v4804 = vunpack.c.h.b16 %v4609
    %v4805 = vunpack.c.l.b16 %v4610
    %v4806 = vunpack.c.h.b16 %v4610
    %v4807 = vunpack.c.l.b16 %v4611
    %v4808 = vunpack.c.h.b16 %v4611
    %v4809 = vunpack.c.l.b16 %v4612
    %v4810 = vunpack.c.h.b16 %v4612
    %v4811 = vunpack.c.l.b16 %v4613
    %v4812 = vunpack.c.h.b16 %v4613
    %v4813 = vunpack.c.l.b16 %v4614
    %v4814 = vunpack.c.h.b16 %v4614
    %v4815 = vunpack.c.l.b16 %v4615
    %v4816 = vunpack.c.h.b16 %v4615
    %v4817 = vunpack.c.l.b16 %v4616
    %v4818 = vunpack.c.h.b16 %v4616
    %v4819 = vunpack.c.l.b16 %v4617
    %v4820 = vunpack.c.h.b16 %v4617
    %v4821 = vunpack.c.l.b16 %v4618
    %v4822 = vunpack.c.h.b16 %v4618
    %v4823 = vunpack.c.l.b16 %v4619
    %v4824 = vunpack.c.h.b16 %v4619
    %v4825 = vunpack.c.l.b16 %v4620
    %v4826 = vunpack.c.h.b16 %v4620
    %v4827 = vunpack.c.l.b16 %v4621
    %v4828 = vunpack.c.h.b16 %v4621
    %v4829 = vunpack.c.l.b16 %v4622
    %v4830 = vunpack.c.h.b16 %v4622
    %v4831 = vunpack.c.l.b16 %v4623
    %v4832 = vunpack.c.h.b16 %v4623
    %v4833 = vunpack.c.l.b16 %v4624
    %v4834 = vunpack.c.h.b16 %v4624
    %v4835 = vpack.c.b16 %v4711, %v4707
    %v4836 = vpack.c.b16 %v4712, %v4708
    %v4837 = vpack.c.b16 %v4713, %v4709
    %v4838 = vpack.c.b16 %v4714, %v4710
    %v4839 = vpack.c.b16 %v4719, %v4715
    %v4840 = vpack.c.b16 %v4720, %v4716
    %v4841 = vpack.c.b16 %v4721, %v4717
    %v4842 = vpack.c.b16 %v4722, %v4718
    %v4843 = vpack.c.b16 %v4727, %v4723
    %v4844 = vpack.c.b16 %v4728, %v4724
    %v4845 = vpack.c.b16 %v4729, %v4725
    %v4846 = vpack.c.b16 %v4730, %v4726
    %v4847 = vpack.c.b16 %v4735, %v4731
    %v4848 = vpack.c.b16 %v4736, %v4732
    %v4849 = vpack.c.b16 %v4737, %v4733
    %v4850 = vpack.c.b16 %v4738, %v4734
    %v4851 = vpack.c.b16 %v4743, %v4739
    %v4852 = vpack.c.b16 %v4744, %v4740
    %v4853 = vpack.c.b16 %v4745, %v4741
    %v4854 = vpack.c.b16 %v4746, %v4742
    %v4855 = vpack.c.b16 %v4751, %v4747
    %v4856 = vpack.c.b16 %v4752, %v4748
    %v4857 = vpack.c.b16 %v4753, %v4749
    %v4858 = vpack.c.b16 %v4754, %v4750
    %v4859 = vpack.c.b16 %v4759, %v4755
    %v4860 = vpack.c.b16 %v4760, %v4756
    %v4861 = vpack.c.b16 %v4761, %v4757
    %v4862 = vpack.c.b16 %v4762, %v4758
    %v4863 = vpack.c.b16 %v4767, %v4763
    %v4864 = vpack.c.b16 %v4768, %v4764
    %v4865 = vpack.c.b16 %v4769, %v4765
    %v4866 = vpack.c.b16 %v4770, %v4766
    %v4867 = vpack.c.b16 %v4775, %v4771
    %v4868 = vpack.c.b16 %v4776, %v4772
    %v4869 = vpack.c.b16 %v4777, %v4773
    %v4870 = vpack.c.b16 %v4778, %v4774
    %v4871 = vpack.c.b16 %v4783, %v4779
    %v4872 = vpack.c.b16 %v4784, %v4780
    %v4873 = vpack.c.b16 %v4785, %v4781
    %v4874 = vpack.c.b16 %v4786, %v4782
    %v4875 = vpack.c.b16 %v4791, %v4787
    %v4876 = vpack.c.b16 %v4792, %v4788
    %v4877 = vpack.c.b16 %v4793, %v4789
    %v4878 = vpack.c.b16 %v4794, %v4790
    %v4879 = vpack.c.b16 %v4799, %v4795
    %v4880 = vpack.c.b16 %v4800, %v4796
    %v4881 = vpack.c.b16 %v4801, %v4797
    %v4882 = vpack.c.b16 %v4802, %v4798
    %v4883 = vpack.c.b16 %v4807, %v4803
    %v4884 = vpack.c.b16 %v4808, %v4804
    %v4885 = vpack.c.b16 %v4809, %v4805
    %v4886 = vpack.c.b16 %v4810, %v4806
    %v4887 = vpack.c.b16 %v4815, %v4811
    %v4888 = vpack.c.b16 %v4816, %v4812
    %v4889 = vpack.c.b16 %v4817, %v4813
    %v4890 = vpack.c.b16 %v4818, %v4814
    %v4891 = vpack.c.b16 %v4823, %v4819
    %v4892 = vpack.c.b16 %v4824, %v4820
    %v4893 = vpack.c.b16 %v4825, %v4821
    %v4894 = vpack.c.b16 %v4826, %v4822
    %v4895 = vpack.c.b16 %v4831, %v4827
    %v4896 = vpack.c.b16 %v4832, %v4828
    %v4897 = vpack.c.b16 %v4833, %v4829
    %v4898 = vpack.c.b16 %v4834, %v4830
    %4963 = vmatprep.subr.bf16.mxu0 %v4836
    %4964 = vmatpush1.bf16.msra.mxu0 %v4835
    %4965 = vmatprep.subr.bf16.mxu0 %v4840
    %4966 = vmatpush1.bf16.msra.mxu0 %v4839
    %4967 = vmatprep.subr.bf16.mxu0 %v4844
    %4968 = vmatpush1.bf16.msra.mxu0 %v4843
    %4969 = vmatprep.subr.bf16.mxu0 %v4848
    %4970 = vmatpush1.bf16.msra.mxu0 %v4847
    %4971 = vmatprep.subr.bf16.mxu0 %v4852
    %4972 = vmatpush1.bf16.msra.mxu0 %v4851
    %4973 = vmatprep.subr.bf16.mxu0 %v4856
    %4974 = vmatpush1.bf16.msra.mxu0 %v4855
    %4975 = vmatprep.subr.bf16.mxu0 %v4860
    %4976 = vmatpush1.bf16.msra.mxu0 %v4859
    %4977 = vmatprep.subr.bf16.mxu0 %v4864
    %4978 = vmatpush1.bf16.msra.mxu0 %v4863
    %4979 = vmatprep.subr.bf16.mxu0 %v4868
    %4980 = vmatpush1.bf16.msra.mxu0 %v4867
    %4981 = vmatprep.subr.bf16.mxu0 %v4872
    %4982 = vmatpush1.bf16.msra.mxu0 %v4871
    %4983 = vmatprep.subr.bf16.mxu0 %v4876
    %4984 = vmatpush1.bf16.msra.mxu0 %v4875
    %4985 = vmatprep.subr.bf16.mxu0 %v4880
    %4986 = vmatpush1.bf16.msra.mxu0 %v4879
    %4987 = vmatprep.subr.bf16.mxu0 %v4884
    %4988 = vmatpush1.bf16.msra.mxu0 %v4883
    %4989 = vmatprep.subr.bf16.mxu0 %v4888
    %4990 = vmatpush1.bf16.msra.mxu0 %v4887
    %4991 = vmatprep.subr.bf16.mxu0 %v4892
    %4992 = vmatpush1.bf16.msra.mxu0 %v4891
    %4993 = vmatprep.subr.bf16.mxu0 %v4896
    %4994 = vmatpush1.bf16.msra.mxu0 %v4895
    %4995 = vmatprep.mubr.bf16.mxu0 %v4559
    %4996 = vmatmul.mubr.bf16.gmra.mrb[0].mxu0 %v4558
    %v4997 = vpop.f32.mrb[0].mxu0
    %v4998 = vadd.f32 %v4631, %v4997
    %v4999 = vpop.f32.mrb[0].mxu0
    %v5000 = vpop.f32.mrb[0].mxu0
    %v5001 = vpop.f32.mrb[0].mxu0
    %5002 = vdwg.mxu0
    %5003 = vmatprep.subr.bf16.mxu0 %v4838
    %5004 = vmatpush1.bf16.msra.mxu0 %v4837
    %5005 = vmatprep.subr.bf16.mxu0 %v4842
    %5006 = vmatpush1.bf16.msra.mxu0 %v4841
    %5007 = vmatprep.subr.bf16.mxu0 %v4846
    %5008 = vmatpush1.bf16.msra.mxu0 %v4845
    %5009 = vmatprep.subr.bf16.mxu0 %v4850
    %5010 = vmatpush1.bf16.msra.mxu0 %v4849
    %5011 = vmatprep.subr.bf16.mxu0 %v4854
    %5012 = vmatpush1.bf16.msra.mxu0 %v4853
    %5013 = vmatprep.subr.bf16.mxu0 %v4858
    %5014 = vmatpush1.bf16.msra.mxu0 %v4857
    %5015 = vmatprep.subr.bf16.mxu0 %v4862
    %5016 = vmatpush1.bf16.msra.mxu0 %v4861
    %5017 = vmatprep.subr.bf16.mxu0 %v4866
    %5018 = vmatpush1.bf16.msra.mxu0 %v4865
    %5019 = vmatprep.subr.bf16.mxu0 %v4870
    %5020 = vmatpush1.bf16.msra.mxu0 %v4869
    %5021 = vmatprep.subr.bf16.mxu0 %v4874
    %5022 = vmatpush1.bf16.msra.mxu0 %v4873
    %5023 = vmatprep.subr.bf16.mxu0 %v4878
    %5024 = vmatpush1.bf16.msra.mxu0 %v4877
    %5025 = vmatprep.subr.bf16.mxu0 %v4882
    %5026 = vmatpush1.bf16.msra.mxu0 %v4881
    %5027 = vmatprep.subr.bf16.mxu0 %v4886
    %5028 = vmatpush1.bf16.msra.mxu0 %v4885
    %5029 = vmatprep.subr.bf16.mxu0 %v4890
    %5030 = vmatpush1.bf16.msra.mxu0 %v4889
    %5031 = vmatprep.subr.bf16.mxu0 %v4894
    %5032 = vmatpush1.bf16.msra.mxu0 %v4893
    %5033 = vmatprep.subr.bf16.mxu0 %v4898
    %5034 = vmatpush1.bf16.msra.mxu0 %v4897
    %5035 = vmatprep.mubr.bf16.mxu0 %v4559
    %5036 = vmatmul.mubr.bf16.gmra.mrb[0].mxu0 %v4558
    %v5037 = vpop.f32.mrb[0].mxu0
    %v5038 = vadd.f32 %v4635, %v5037
    %v5039 = vpop.f32.mrb[0].mxu0
    %v5040 = vadd.f32 %v4639, %v5039
    %v5041 = vpop.f32.mrb[0].mxu0
    %v5042 = vpop.f32.mrb[0].mxu0
    %5043 = vdwg.mxu0
    %v5044 = vtanh.pop %v4998
    %v5045 = vtanh.pop %v5038
    %v5046 = vtanh.pop %v5040
    %v5047 = vmul.f32 %v5044, 0.5
    %v5048 = vadd.f32 %v5047, 0.5
    %v5049 = vmul.f32 %v5046, 0.5
    %v5050 = vadd.f32 %v5049, 0.5
    %v5051 = vmul.f32 %v5048, %v5045
    %v5052 = vtanh.pop %v5051
    %v5053 = vmul.f32 %v5050, %v5052
    %v5054 = vpack.c.bf16 %v4555, %v4555
    %v5055 = vpack.c.bf16 %v5053, %v5053
    %v5056 = vld [vmem:[#allocation10] sm:$0xf]
    %v5057 = vld [vmem:[#allocation10 + $0x4] sm:$0xf]
    %v5058 = vld [vmem:[#allocation10 + $0x8] sm:$0xf]
    %v5059 = vld [vmem:[#allocation10 + $0xc] sm:$0xf]
    %v5060 = vld [vmem:[#allocation10 + $0x10] sm:$0xf]
    %v5061 = vld [vmem:[#allocation10 + $0x14] sm:$0xf]
    %v5062 = vld [vmem:[#allocation10 + $0x18] sm:$0xf]
    %v5063 = vld [vmem:[#allocation10 + $0x1c] sm:$0xf]
    %v5064 = vld [vmem:[#allocation10 + $0x20] sm:$0xf]
    %v5065 = vld [vmem:[#allocation10 + $0x24] sm:$0xf]
    %v5066 = vld [vmem:[#allocation10 + $0x28] sm:$0xf]
    %v5067 = vld [vmem:[#allocation10 + $0x2c] sm:$0xf]
    %v5068 = vld [vmem:[#allocation10 + $0x30] sm:$0xf]
    %v5069 = vld [vmem:[#allocation10 + $0x34] sm:$0xf]
    %v5070 = vld [vmem:[#allocation10 + $0x38] sm:$0xf]
    %v5071 = vld [vmem:[#allocation10 + $0x3c] sm:$0xf]
    %v5072 = vld [vmem:[#allocation10 + $0x40] sm:$0xf]
    %v5073 = vld [vmem:[#allocation10 + $0x44] sm:$0xf]
    %v5074 = vld [vmem:[#allocation10 + $0x48] sm:$0xf]
    %v5075 = vld [vmem:[#allocation10 + $0x4c] sm:$0xf]
    %v5076 = vld [vmem:[#allocation10 + $0x50] sm:$0xf]
    %v5077 = vld [vmem:[#allocation10 + $0x54] sm:$0xf]
    %v5078 = vld [vmem:[#allocation10 + $0x58] sm:$0xf]
    %v5079 = vld [vmem:[#allocation10 + $0x5c] sm:$0xf]
    %v5080 = vld [vmem:[#allocation10 + $0x60] sm:$0xf]
    %v5081 = vld [vmem:[#allocation10 + $0x64] sm:$0xf]
    %v5082 = vld [vmem:[#allocation10 + $0x68] sm:$0xf]
    %v5083 = vld [vmem:[#allocation10 + $0x6c] sm:$0xf]
    %v5084 = vld [vmem:[#allocation10 + $0x70] sm:$0xf]
    %v5085 = vld [vmem:[#allocation10 + $0x74] sm:$0xf]
    %v5086 = vld [vmem:[#allocation10 + $0x78] sm:$0xf]
    %v5087 = vld [vmem:[#allocation10 + $0x7c] sm:$0xf]
    %v5088 = vld [vmem:[%s8] sm:$0x1]
    %v5090 = vlaneseq
    %v5091 = vshrl.u32 %v5090, 7
    %v5092 = vsub.s32 0, %v5091
    %v5093 = vrot.slane %v5088, %v5092
    %v5127 = vunpack.c.l.b16 %v5056
    %v5128 = vunpack.c.l.b16 %v5057
    %v5129 = vunpack.c.l.b16 %v5058
    %v5130 = vunpack.c.l.b16 %v5059
    %v5131 = vunpack.c.l.b16 %v5060
    %v5132 = vunpack.c.l.b16 %v5061
    %v5133 = vunpack.c.l.b16 %v5062
    %v5134 = vunpack.c.l.b16 %v5063
    %v5135 = vunpack.c.l.b16 %v5064
    %v5136 = vunpack.c.l.b16 %v5065
    %v5137 = vunpack.c.l.b16 %v5066
    %v5138 = vunpack.c.l.b16 %v5067
    %v5139 = vunpack.c.l.b16 %v5068
    %v5140 = vunpack.c.l.b16 %v5069
    %v5141 = vunpack.c.l.b16 %v5070
    %v5142 = vunpack.c.l.b16 %v5071
    %v5143 = vunpack.c.l.b16 %v5072
    %v5144 = vunpack.c.l.b16 %v5073
    %v5145 = vunpack.c.l.b16 %v5074
    %v5146 = vunpack.c.l.b16 %v5075
    %v5147 = vunpack.c.l.b16 %v5076
    %v5148 = vunpack.c.l.b16 %v5077
    %v5149 = vunpack.c.l.b16 %v5078
    %v5150 = vunpack.c.l.b16 %v5079
    %v5151 = vunpack.c.l.b16 %v5080
    %v5152 = vunpack.c.l.b16 %v5081
    %v5153 = vunpack.c.l.b16 %v5082
    %v5154 = vunpack.c.l.b16 %v5083
    %v5155 = vunpack.c.l.b16 %v5084
    %v5156 = vunpack.c.l.b16 %v5085
    %v5157 = vunpack.c.l.b16 %v5086
    %v5158 = vunpack.c.l.b16 %v5087
    %v5159 = vpack.c.b16 %v5128, %v5127
    %v5160 = vpack.c.b16 %v5130, %v5129
    %v5161 = vpack.c.b16 %v5132, %v5131
    %v5162 = vpack.c.b16 %v5134, %v5133
    %v5163 = vpack.c.b16 %v5136, %v5135
    %v5164 = vpack.c.b16 %v5138, %v5137
    %v5165 = vpack.c.b16 %v5140, %v5139
    %v5166 = vpack.c.b16 %v5142, %v5141
    %v5167 = vpack.c.b16 %v5144, %v5143
    %v5168 = vpack.c.b16 %v5146, %v5145
    %v5169 = vpack.c.b16 %v5148, %v5147
    %v5170 = vpack.c.b16 %v5150, %v5149
    %v5171 = vpack.c.b16 %v5152, %v5151
    %v5172 = vpack.c.b16 %v5154, %v5153
    %v5173 = vpack.c.b16 %v5156, %v5155
    %v5174 = vpack.c.b16 %v5158, %v5157
    %5191 = vmatprep.subr.bf16.mxu0 0
    %5192 = vmatpush1.bf16.msra.mxu0 %v5159
    %5193 = vmatprep.subr.bf16.mxu0 0
    %5194 = vmatpush1.bf16.msra.mxu0 %v5160
    %5195 = vmatprep.subr.bf16.mxu0 0
    %5196 = vmatpush1.bf16.msra.mxu0 %v5161
    %5197 = vmatprep.subr.bf16.mxu0 0
    %5198 = vmatpush1.bf16.msra.mxu0 %v5162
    %5199 = vmatprep.subr.bf16.mxu0 0
    %5200 = vmatpush1.bf16.msra.mxu0 %v5163
    %5201 = vmatprep.subr.bf16.mxu0 0
    %5202 = vmatpush1.bf16.msra.mxu0 %v5164
    %5203 = vmatprep.subr.bf16.mxu0 0
    %5204 = vmatpush1.bf16.msra.mxu0 %v5165
    %5205 = vmatprep.subr.bf16.mxu0 0
    %5206 = vmatpush1.bf16.msra.mxu0 %v5166
    %5207 = vmatprep.subr.bf16.mxu0 0
    %5208 = vmatpush1.bf16.msra.mxu0 %v5167
    %5209 = vmatprep.subr.bf16.mxu0 0
    %5210 = vmatpush1.bf16.msra.mxu0 %v5168
    %5211 = vmatprep.subr.bf16.mxu0 0
    %5212 = vmatpush1.bf16.msra.mxu0 %v5169
    %5213 = vmatprep.subr.bf16.mxu0 0
    %5214 = vmatpush1.bf16.msra.mxu0 %v5170
    %5215 = vmatprep.subr.bf16.mxu0 0
    %5216 = vmatpush1.bf16.msra.mxu0 %v5171
    %5217 = vmatprep.subr.bf16.mxu0 0
    %5218 = vmatpush1.bf16.msra.mxu0 %v5172
    %5219 = vmatprep.subr.bf16.mxu0 0
    %5220 = vmatpush1.bf16.msra.mxu0 %v5173
    %5221 = vmatprep.subr.bf16.mxu0 0
    %5222 = vmatpush1.bf16.msra.mxu0 %v5174
    %5223 = vmatprep.mubr.bf16.mxu0 %v5055
    %5224 = vmatmul.mubr.bf16.gmra.mrb[0].mxu0 %v5054
    %v5225 = vpop.f32.mrb[0].mxu0
    %v5226 = vadd.f32 %v5093, %v5225
    %v5227 = vpop.f32.mrb[0].mxu0
    %v5228 = vpop.f32.mrb[0].mxu0
    %v5229 = vpop.f32.mrb[0].mxu0
    %5230 = vdwg.mxu0
    %5231 = vst [vmem:[%s9] sm:$0xff] %v5226
    %v5232 = vlaneseq
    %v5233 = vand.u32 %v5232, 127
    %vm5234 = vcmp.lt.s32.totalorder %v5233, 5
    %v5235 = vsel %vm5234, %v5226, -1e+30
    %5236 = vmax.xlane.f32.xlu0 %v5235
    %v5237 = vpop.xlane.xlu0 %5236
    %v5238 = vsub.f32 %v5235, %v5237
    %v5239 = vmul.f32 %v5238, 1.442695
    %v5240 = vpow.pop %v5239
    %5241 = vadd.xlane.f32.xlu0 %v5240
    %v5242 = vpop.xlane.xlu0 %5241
    %v5243 = vlog2.pop %v5242
    %v5244 = vmul.f32 %v5243, 0.6931472
    %v5245 = vsub.f32 %v5238, %v5244
    %5246 = vst [vmem:[%s10] sm:$0xff] %v5245
    // Predicated region
    $region54: #{lstm_b1_forward.1} parent=1 // pred_check
      _
    $region55: #{lstm_b1_forward.1} parent=1 // pred_check_branch
      %5248 = sbr.rel (0) target = $region57
    $region56: #{lstm_b1_forward.1} parent=1 // pred_region
      _
    $region57: #{lstm_b1_forward.1} parent=1 // pred_fallthru
      _
    // Predicated region
    $region58: #{lstm_b1_forward.1} parent=1 // pred_check
      _
    $region59: #{lstm_b1_forward.1} parent=1 // pred_check_branch
      %5250 = sbr.rel (0) target = $region61
    $region60: #{lstm_b1_forward.1} parent=1 // pred_region
      _
    $region61: #{lstm_b1_forward.1} parent=1 // pred_fallthru
      _
    // Predicated region
    $region62: #{lstm_b1_forward.1} parent=1 // pred_check
      _
    $region63: #{lstm_b1_forward.1} parent=1 // pred_check_branch
      %5252 = sbr.rel (0) target = $region65
    $region64: #{lstm_b1_forward.1} parent=1 // pred_region
      _
    $region65: #{lstm_b1_forward.1} parent=1 // pred_fallthru
      _
    // Predicated region
    $region66: #{lstm_b1_forward.1} parent=1 // pred_check
      _
    $region67: #{lstm_b1_forward.1} parent=1 // pred_check_branch
      %5254 = sbr.rel (0) target = $region69
    $region68: #{lstm_b1_forward.1} parent=1 // pred_region
      _
    $region69: #{lstm_b1_forward.1} parent=1 // pred_fallthru
      _
    %5255 = vsyncpa [#allocation6], 1
    %5256 = vsyncpa [#allocation8], 1
    %5257 = vsyncpa [#allocation11], 1

</llo_original>
